<compile_context>
chip_gen: v7x
topology: tpu7x:2x2x1
jax: 0.10.0
libtpu: 0.0.40
codegen_flags: <defaults>
</compile_context>

<pallas_src>
import math

import jax
import jax.numpy as jnp
from jax.experimental import pallas as pl
from jax.experimental.pallas import tpu as pltpu

# ---------------- configuration (down-scaled DistilBERT) ----------------
BATCH = 2
SEQ = 8
HIDDEN = 64          # DistilBERT: 768
N_HEADS = 4          # DistilBERT: 12
HEAD_DIM = HIDDEN // N_HEADS
FFN = 128            # DistilBERT: 3072
N_LAYERS = 2         # DistilBERT: 6
VOCAB = 128          # DistilBERT: 30522
MAX_POS = 32         # DistilBERT: 512
N_CLASSES = 14
OUT_PAD = 128        # lane-dense padded classifier output width
LN_EPS = 1e-12

N_FIXED = 6          # ids, attn_bias, word_emb, pos(tiled), emb_ln_g, emb_ln_b
PER_LAYER = 16       # params per transformer layer (see init_params)


# ---------------- in-kernel helpers ----------------
def _layernorm(x, gamma, beta):
    mean = jnp.mean(x, axis=-1, keepdims=True)
    var = jnp.mean((x - mean) ** 2, axis=-1, keepdims=True)
    return (x - mean) * jax.lax.rsqrt(var + LN_EPS) * gamma + beta


# ---------------- fused Pallas kernel ----------------
def fused_forward_kernel(*refs):
    # inputs: [ids, attn_bias, word_emb, pos, emb_g, emb_b,
    #          N_LAYERS * 16 layer params..., cls_w, cls_b]  then 1 output ref.
    ids_ref, bias_ref, we_ref, pos_ref, eg_ref, eb_ref = refs[:N_FIXED]
    cls_w_ref = refs[N_FIXED + N_LAYERS * PER_LAYER]
    cls_b_ref = refs[N_FIXED + N_LAYERS * PER_LAYER + 1]
    out_ref = refs[-1]

    BS = BATCH * SEQ

    # ---- embeddings: one-hot gather on the MXU + positions + LayerNorm ----
    ids = ids_ref[...]                                              # (BS, 1) int32
    vocab_iota = jax.lax.broadcasted_iota(jnp.int32, (BS, VOCAB), 1)
    onehot = (vocab_iota == ids).astype(jnp.float32)                # (BS, VOCAB)
    x = jnp.dot(onehot, we_ref[...], preferred_element_type=jnp.float32)  # (BS, H)
    x = x + pos_ref[...]                                            # pos pre-tiled to (BS, H)
    x = _layernorm(x, eg_ref[...], eb_ref[...])

    # mask bias hoisted out of the layer/head loops: (B, 1, S) additive -inf bias
    attn_bias = bias_ref[...]
    scale = 1.0 / math.sqrt(HEAD_DIM)

    for li in range(N_LAYERS):
        base = N_FIXED + li * PER_LAYER
        (wq_ref, bq_ref, wk_ref, bk_ref, wv_ref, bv_ref,
         wo_ref, bo_ref, gsa_ref, bsa_ref,
         w1_ref, b1_ref, w2_ref, b2_ref, gout_ref, bout_ref) = refs[base:base + PER_LAYER]

        # --- multi-head self attention ---
        # Weights are pre-split per head in the wrapper, so there is no lane
        # slicing and no head concatenation inside the kernel; the output
        # projection is accumulated per head (distributive over the concat).
        attn_out = jnp.zeros((BS, HIDDEN), jnp.float32)
        for h in range(N_HEADS):
            qh = jnp.dot(x, wq_ref[h], preferred_element_type=jnp.float32) + bq_ref[h]
            kh = jnp.dot(x, wk_ref[h], preferred_element_type=jnp.float32) + bk_ref[h]
            vh = jnp.dot(x, wv_ref[h], preferred_element_type=jnp.float32) + bv_ref[h]
            qh = qh.reshape(BATCH, SEQ, HEAD_DIM)
            kh = kh.reshape(BATCH, SEQ, HEAD_DIM)
            vh = vh.reshape(BATCH, SEQ, HEAD_DIM)

            s = jnp.einsum('bqd,bkd->bqk', qh, kh,
                           preferred_element_type=jnp.float32) * scale
            s = s + attn_bias                                    # key-padding mask
            m = jnp.max(s, axis=-1, keepdims=True)
            e = jnp.exp(s - m)
            p = e * pl.reciprocal(jnp.sum(e, axis=-1, keepdims=True), approx=True)

            ctx = jnp.einsum('bqk,bkd->bqd', p, vh,
                             preferred_element_type=jnp.float32)  # (B, S, HD)
            attn_out = attn_out + jnp.dot(ctx.reshape(BS, HEAD_DIM), wo_ref[h],
                                          preferred_element_type=jnp.float32)
        attn_out = attn_out + bo_ref[...]
        x = _layernorm(attn_out + x, gsa_ref[...], bsa_ref[...])

        # --- feed forward ---
        h1 = jnp.dot(x, w1_ref[...], preferred_element_type=jnp.float32) + b1_ref[...]
        # TODO(synk): PyTorch/HF DistilBERT use the exact erf GELU; tanh
        # approximation is used here for a guaranteed Mosaic lowering.
        h1 = jax.nn.gelu(h1, approximate=True)
        h2 = jnp.dot(h1, w2_ref[...], preferred_element_type=jnp.float32) + b2_ref[...]
        x = _layernorm(h2 + x, gout_ref[...], bout_ref[...])

    # ---- head: mean pool over seq -> (dropout=identity) -> Linear -> ReLU ----
    pooled = jnp.mean(x.reshape(BATCH, SEQ, HIDDEN), axis=1)        # (B, H), unmasked mean
    # TODO(synk): nn.Dropout(0.5) is identity at inference; no stochastic drop here.
    logits = jnp.dot(pooled, cls_w_ref[...],
                     preferred_element_type=jnp.float32) + cls_b_ref[...]  # (B, 128) lane-dense
    out_ref[...] = jnp.maximum(logits, 0.0)                         # ReLU


# ---------------- parameter construction (deterministic) ----------------
def init_params(key):
    def normal(k, shape, std=0.02):
        return std * jax.random.normal(k, shape, dtype=jnp.float32)

    keys = jax.random.split(key, 4 + N_LAYERS)
    cls_w = normal(keys[2], (HIDDEN, N_CLASSES))
    params = {
        'word_emb': normal(keys[0], (VOCAB, HIDDEN)),
        'pos_emb': normal(keys[1], (MAX_POS, HIDDEN)),
        'emb_ln_g': jnp.ones((1, HIDDEN), jnp.float32),
        'emb_ln_b': jnp.zeros((1, HIDDEN), jnp.float32),
        # lane-dense classifier: pad (H, 14) -> (H, 128); padded logits are 0.
        'cls_w': jnp.pad(cls_w, ((0, 0), (0, OUT_PAD - N_CLASSES))),
        'cls_b': jnp.zeros((1, OUT_PAD), jnp.float32),
        'layers': [],
    }
    for li in range(N_LAYERS):
        lk = jax.random.split(keys[4 + li], 6)
        wq = normal(lk[0], (HIDDEN, HIDDEN))
        wk = normal(lk[1], (HIDDEN, HIDDEN))
        wv = normal(lk[2], (HIDDEN, HIDDEN))
        wo = normal(lk[3], (HIDDEN, HIDDEN))
        layer = (
            # per-head Q/K/V weights: (NH, H, HD) == W.reshape(H, NH, HD) transposed
            wq.reshape(HIDDEN, N_HEADS, HEAD_DIM).transpose(1, 0, 2),
            jnp.zeros((N_HEADS, 1, HEAD_DIM), jnp.float32),
            wk.reshape(HIDDEN, N_HEADS, HEAD_DIM).transpose(1, 0, 2),
            jnp.zeros((N_HEADS, 1, HEAD_DIM), jnp.float32),
            wv.reshape(HIDDEN, N_HEADS, HEAD_DIM).transpose(1, 0, 2),
            jnp.zeros((N_HEADS, 1, HEAD_DIM), jnp.float32),
            # per-head rows of the output projection: (NH, HD, H)
            wo.reshape(N_HEADS, HEAD_DIM, HIDDEN),
            jnp.zeros((1, HIDDEN), jnp.float32),                                   # bo
            jnp.ones((1, HIDDEN), jnp.float32), jnp.zeros((1, HIDDEN), jnp.float32),  # sa LN
            normal(lk[4], (HIDDEN, FFN)), jnp.zeros((1, FFN), jnp.float32),        # w1, b1
            normal(lk[5], (FFN, HIDDEN)), jnp.zeros((1, HIDDEN), jnp.float32),     # w2, b2
            jnp.ones((1, HIDDEN), jnp.float32), jnp.zeros((1, HIDDEN), jnp.float32),  # out LN
        )
        params['layers'].append(layer)
    return params


# ---------------- forward pass (single fused pallas_call) ----------------
@jax.jit
def distilbert_classifier_forward(params, input_ids, attention_mask):
    B, S = input_ids.shape

    # cheap layout plumbing in the wrapper (weights / tiny tensors only)
    ids2d = input_ids.reshape(B * S, 1).astype(jnp.int32)            # (B*S, 1)
    pos_bsh = jnp.tile(params['pos_emb'][:S], (B, 1))                # (B*S, H)
    neg = jnp.finfo(jnp.float32).min
    attn_bias = jnp.where(attention_mask[:, None, :] == 0, neg, 0.0).astype(jnp.float32)  # (B,1,S)

    flat_inputs = [ids2d, attn_bias, params['word_emb'], pos_bsh,
                   params['emb_ln_g'], params['emb_ln_b']]
    for layer in params['layers']:
        flat_inputs.extend(layer)
    flat_inputs.extend([params['cls_w'], params['cls_b']])

    out_padded = pl.pallas_call(
        fused_forward_kernel,
        out_shape=jax.ShapeDtypeStruct((B, OUT_PAD), jnp.float32),
        in_specs=[pl.BlockSpec(memory_space=pltpu.MemorySpace.VMEM)] * len(flat_inputs),
        out_specs=pl.BlockSpec(memory_space=pltpu.MemorySpace.VMEM),
        compiler_params=pltpu.CompilerParams(vmem_limit_bytes=16 * 1024 * 1024),
        cost_estimate=pl.CostEstimate(flops=3_000_000,
                                      transcendentals=16_000,
                                      bytes_accessed=600_000),
    )(*flat_inputs)

    return out_padded[:, :N_CLASSES]                                 # (B, 14)


# ---------------- main ----------------
if __name__ == "__main__":
    key = jax.random.PRNGKey(0)
    pkey, ikey = jax.random.split(key)

    params = init_params(pkey)

    input_ids = jax.random.randint(ikey, (BATCH, SEQ), 0, VOCAB, dtype=jnp.int32)
    attention_mask = jnp.ones((BATCH, SEQ), dtype=jnp.int32)
    attention_mask = attention_mask.at[1, SEQ - 2:].set(0)   # pad tail of batch 1

    out = distilbert_classifier_forward(params, input_ids, attention_mask)
    out = jax.block_until_ready(out)

    assert out.shape == (BATCH, N_CLASSES)
    assert out.dtype == jnp.float32
    assert bool(jnp.all(out >= 0.0))          # ReLU output
    assert bool(jnp.all(jnp.isfinite(out)))

    print("KERNEL_OK")
</pallas_src>

<mosaic_0001>
module attributes {stable_mosaic.version = 11 : i64} {
  func.func @fused_forward_kernel(%arg0: memref<16x1xi32, #tpu.memory_space<vmem>>, %arg1: memref<2x1x8xf32, #tpu.memory_space<vmem>>, %arg2: memref<128x64xf32, #tpu.memory_space<vmem>>, %arg3: memref<16x64xf32, #tpu.memory_space<vmem>>, %arg4: memref<1x64xf32, #tpu.memory_space<vmem>>, %arg5: memref<1x64xf32, #tpu.memory_space<vmem>>, %arg6: memref<4x64x16xf32, #tpu.memory_space<vmem>>, %arg7: memref<4x1x16xf32, #tpu.memory_space<vmem>>, %arg8: memref<4x64x16xf32, #tpu.memory_space<vmem>>, %arg9: memref<4x1x16xf32, #tpu.memory_space<vmem>>, %arg10: memref<4x64x16xf32, #tpu.memory_space<vmem>>, %arg11: memref<4x1x16xf32, #tpu.memory_space<vmem>>, %arg12: memref<4x16x64xf32, #tpu.memory_space<vmem>>, %arg13: memref<1x64xf32, #tpu.memory_space<vmem>>, %arg14: memref<1x64xf32, #tpu.memory_space<vmem>>, %arg15: memref<1x64xf32, #tpu.memory_space<vmem>>, %arg16: memref<64x128xf32, #tpu.memory_space<vmem>>, %arg17: memref<1x128xf32, #tpu.memory_space<vmem>>, %arg18: memref<128x64xf32, #tpu.memory_space<vmem>>, %arg19: memref<1x64xf32, #tpu.memory_space<vmem>>, %arg20: memref<1x64xf32, #tpu.memory_space<vmem>>, %arg21: memref<1x64xf32, #tpu.memory_space<vmem>>, %arg22: memref<4x64x16xf32, #tpu.memory_space<vmem>>, %arg23: memref<4x1x16xf32, #tpu.memory_space<vmem>>, %arg24: memref<4x64x16xf32, #tpu.memory_space<vmem>>, %arg25: memref<4x1x16xf32, #tpu.memory_space<vmem>>, %arg26: memref<4x64x16xf32, #tpu.memory_space<vmem>>, %arg27: memref<4x1x16xf32, #tpu.memory_space<vmem>>, %arg28: memref<4x16x64xf32, #tpu.memory_space<vmem>>, %arg29: memref<1x64xf32, #tpu.memory_space<vmem>>, %arg30: memref<1x64xf32, #tpu.memory_space<vmem>>, %arg31: memref<1x64xf32, #tpu.memory_space<vmem>>, %arg32: memref<64x128xf32, #tpu.memory_space<vmem>>, %arg33: memref<1x128xf32, #tpu.memory_space<vmem>>, %arg34: memref<128x64xf32, #tpu.memory_space<vmem>>, %arg35: memref<1x64xf32, #tpu.memory_space<vmem>>, %arg36: memref<1x64xf32, #tpu.memory_space<vmem>>, %arg37: memref<1x64xf32, #tpu.memory_space<vmem>>, %arg38: memref<64x128xf32, #tpu.memory_space<vmem>>, %arg39: memref<1x128xf32, #tpu.memory_space<vmem>>, %arg40: memref<2x128xf32, #tpu.memory_space<vmem>>) attributes {dimension_semantics = [], scalar_prefetch = 0 : i64, scratch_operands = 0 : i64, tpu.core_type = #tpu.core_type<tc>} {
    %c0 = arith.constant 0 : index
    %c0_0 = arith.constant 0 : index
    %0 = vector.load %arg0[%c0, %c0_0] : memref<16x1xi32, #tpu.memory_space<vmem>>, vector<16x1xi32>
    %1 = tpu.iota {dimensions = array<i32: 1>} : vector<16x128xi32>
    %2 = vector.broadcast %0 : vector<16x1xi32> to vector<16x128xi32>
    %3 = arith.cmpi eq, %1, %2 : vector<16x128xi32>
    %4 = arith.extui %3 : vector<16x128xi1> to vector<16x128xi32>
    %5 = arith.sitofp %4 : vector<16x128xi32> to vector<16x128xf32>
    %c0_1 = arith.constant 0 : index
    %c0_2 = arith.constant 0 : index
    %6 = vector.load %arg2[%c0_1, %c0_2] : memref<128x64xf32, #tpu.memory_space<vmem>>, vector<128x64xf32>
    %cst = arith.constant dense<0.000000e+00> : vector<16x64xf32>
    %7 = tpu.matmul %5, %6, %cst {dimension_numbers = #tpu.dot_dimension_numbers<[1], [0], [0], [1], [0, 0, 1, 1], [], []>} : vector<16x128xf32>, vector<128x64xf32>, vector<16x64xf32> -> vector<16x64xf32>
    %c0_3 = arith.constant 0 : index
    %c0_4 = arith.constant 0 : index
    %8 = vector.load %arg3[%c0_3, %c0_4] : memref<16x64xf32, #tpu.memory_space<vmem>>, vector<16x64xf32>
    %9 = arith.addf %7, %8 : vector<16x64xf32>
    %c0_5 = arith.constant 0 : index
    %c0_6 = arith.constant 0 : index
    %10 = vector.load %arg4[%c0_5, %c0_6] : memref<1x64xf32, #tpu.memory_space<vmem>>, vector<1x64xf32>
    %c0_7 = arith.constant 0 : index
    %c0_8 = arith.constant 0 : index
    %11 = vector.load %arg5[%c0_7, %c0_8] : memref<1x64xf32, #tpu.memory_space<vmem>>, vector<1x64xf32>
    %cst_9 = arith.constant dense<0.000000e+00> : vector<16xf32>
    %12 = vector.multi_reduction <add>, %9, %cst_9 [1] : vector<16x64xf32> to vector<16xf32>
    %13 = vector.shape_cast %12 : vector<16xf32> to vector<16x1xf32>
    %cst_10 = arith.constant 6.400000e+01 : f32
    %14 = vector.broadcast %cst_10 : f32 to vector<16x1xf32>
    %15 = arith.divf %13, %14 : vector<16x1xf32>
    %16 = vector.broadcast %15 : vector<16x1xf32> to vector<16x64xf32>
    %17 = arith.subf %9, %16 : vector<16x64xf32>
    %18 = arith.mulf %17, %17 : vector<16x64xf32>
    %cst_11 = arith.constant dense<0.000000e+00> : vector<16xf32>
    %19 = vector.multi_reduction <add>, %18, %cst_11 [1] : vector<16x64xf32> to vector<16xf32>
    %20 = vector.shape_cast %19 : vector<16xf32> to vector<16x1xf32>
    %cst_12 = arith.constant 6.400000e+01 : f32
    %21 = vector.broadcast %cst_12 : f32 to vector<16x1xf32>
    %22 = arith.divf %20, %21 : vector<16x1xf32>
    %23 = vector.broadcast %15 : vector<16x1xf32> to vector<16x64xf32>
    %24 = arith.subf %9, %23 : vector<16x64xf32>
    %cst_13 = arith.constant 9.99999996E-13 : f32
    %25 = vector.broadcast %cst_13 : f32 to vector<16x1xf32>
    %26 = arith.addf %22, %25 : vector<16x1xf32>
    %27 = math.rsqrt %26 : vector<16x1xf32>
    %28 = vector.broadcast %27 : vector<16x1xf32> to vector<16x64xf32>
    %29 = arith.mulf %24, %28 : vector<16x64xf32>
    %30 = vector.broadcast %10 : vector<1x64xf32> to vector<16x64xf32>
    %31 = arith.mulf %29, %30 : vector<16x64xf32>
    %32 = vector.broadcast %11 : vector<1x64xf32> to vector<16x64xf32>
    %33 = arith.addf %31, %32 : vector<16x64xf32>
    %c0_14 = arith.constant 0 : index
    %c0_15 = arith.constant 0 : index
    %c0_16 = arith.constant 0 : index
    %34 = vector.load %arg1[%c0_14, %c0_15, %c0_16] : memref<2x1x8xf32, #tpu.memory_space<vmem>>, vector<2x1x8xf32>
    %cst_17 = arith.constant 0.000000e+00 : f32
    %35 = vector.broadcast %cst_17 : f32 to vector<16x64xf32>
    %c0_18 = arith.constant 0 : index
    %c0_19 = arith.constant 0 : index
    %c0_20 = arith.constant 0 : index
    %36 = vector.load %arg6[%c0_18, %c0_19, %c0_20] : memref<4x64x16xf32, #tpu.memory_space<vmem>>, vector<1x64x16xf32>
    %37 = vector.shape_cast %36 : vector<1x64x16xf32> to vector<64x16xf32>
    %cst_21 = arith.constant dense<0.000000e+00> : vector<16x16xf32>
    %38 = tpu.matmul %33, %37, %cst_21 {dimension_numbers = #tpu.dot_dimension_numbers<[1], [0], [0], [1], [0, 0, 1, 1], [], []>} : vector<16x64xf32>, vector<64x16xf32>, vector<16x16xf32> -> vector<16x16xf32>
    %c0_22 = arith.constant 0 : index
    %c0_23 = arith.constant 0 : index
    %c0_24 = arith.constant 0 : index
    %39 = vector.load %arg7[%c0_22, %c0_23, %c0_24] : memref<4x1x16xf32, #tpu.memory_space<vmem>>, vector<1x1x16xf32>
    %40 = vector.shape_cast %39 : vector<1x1x16xf32> to vector<1x16xf32>
    %41 = vector.broadcast %40 : vector<1x16xf32> to vector<16x16xf32>
    %42 = arith.addf %38, %41 : vector<16x16xf32>
    %c0_25 = arith.constant 0 : index
    %c0_26 = arith.constant 0 : index
    %c0_27 = arith.constant 0 : index
    %43 = vector.load %arg8[%c0_25, %c0_26, %c0_27] : memref<4x64x16xf32, #tpu.memory_space<vmem>>, vector<1x64x16xf32>
    %44 = vector.shape_cast %43 : vector<1x64x16xf32> to vector<64x16xf32>
    %cst_28 = arith.constant dense<0.000000e+00> : vector<16x16xf32>
    %45 = tpu.matmul %33, %44, %cst_28 {dimension_numbers = #tpu.dot_dimension_numbers<[1], [0], [0], [1], [0, 0, 1, 1], [], []>} : vector<16x64xf32>, vector<64x16xf32>, vector<16x16xf32> -> vector<16x16xf32>
    %c0_29 = arith.constant 0 : index
    %c0_30 = arith.constant 0 : index
    %c0_31 = arith.constant 0 : index
    %46 = vector.load %arg9[%c0_29, %c0_30, %c0_31] : memref<4x1x16xf32, #tpu.memory_space<vmem>>, vector<1x1x16xf32>
    %47 = vector.shape_cast %46 : vector<1x1x16xf32> to vector<1x16xf32>
    %48 = vector.broadcast %47 : vector<1x16xf32> to vector<16x16xf32>
    %49 = arith.addf %45, %48 : vector<16x16xf32>
    %c0_32 = arith.constant 0 : index
    %c0_33 = arith.constant 0 : index
    %c0_34 = arith.constant 0 : index
    %50 = vector.load %arg10[%c0_32, %c0_33, %c0_34] : memref<4x64x16xf32, #tpu.memory_space<vmem>>, vector<1x64x16xf32>
    %51 = vector.shape_cast %50 : vector<1x64x16xf32> to vector<64x16xf32>
    %cst_35 = arith.constant dense<0.000000e+00> : vector<16x16xf32>
    %52 = tpu.matmul %33, %51, %cst_35 {dimension_numbers = #tpu.dot_dimension_numbers<[1], [0], [0], [1], [0, 0, 1, 1], [], []>} : vector<16x64xf32>, vector<64x16xf32>, vector<16x16xf32> -> vector<16x16xf32>
    %c0_36 = arith.constant 0 : index
    %c0_37 = arith.constant 0 : index
    %c0_38 = arith.constant 0 : index
    %53 = vector.load %arg11[%c0_36, %c0_37, %c0_38] : memref<4x1x16xf32, #tpu.memory_space<vmem>>, vector<1x1x16xf32>
    %54 = vector.shape_cast %53 : vector<1x1x16xf32> to vector<1x16xf32>
    %55 = vector.broadcast %54 : vector<1x16xf32> to vector<16x16xf32>
    %56 = arith.addf %52, %55 : vector<16x16xf32>
    %57 = vector.shape_cast %42 : vector<16x16xf32> to vector<2x8x16xf32>
    %58 = vector.shape_cast %49 : vector<16x16xf32> to vector<2x8x16xf32>
    %59 = vector.shape_cast %56 : vector<16x16xf32> to vector<2x8x16xf32>
    "tpu.trace_start"() <{level = 10 : i32, message = "bqd,bkd->bqk"}> : () -> ()
    %cst_39 = arith.constant dense<0.000000e+00> : vector<2x8x8xf32>
    %60 = tpu.matmul %57, %58, %cst_39 {dimension_numbers = #tpu.dot_dimension_numbers<[2], [2], [1], [1], [0, 0, 0, 1, 1, 1], [0], [0]>} : vector<2x8x16xf32>, vector<2x8x16xf32>, vector<2x8x8xf32> -> vector<2x8x8xf32>
    "tpu.trace_stop"() : () -> ()
    %cst_40 = arith.constant 2.500000e-01 : f32
    %61 = vector.broadcast %cst_40 : f32 to vector<2x8x8xf32>
    %62 = arith.mulf %60, %61 : vector<2x8x8xf32>
    %63 = vector.broadcast %34 : vector<2x1x8xf32> to vector<2x8x8xf32>
    %64 = arith.addf %62, %63 : vector<2x8x8xf32>
    %cst_41 = arith.constant dense<0xFF800000> : vector<2x8xf32>
    %65 = vector.multi_reduction <maximumf>, %64, %cst_41 [2] : vector<2x8x8xf32> to vector<2x8xf32>
    %66 = vector.shape_cast %65 : vector<2x8xf32> to vector<2x8x1xf32>
    %67 = vector.broadcast %66 : vector<2x8x1xf32> to vector<2x8x8xf32>
    %68 = arith.subf %64, %67 : vector<2x8x8xf32>
    %69 = math.exp %68 : vector<2x8x8xf32>
    %cst_42 = arith.constant dense<0.000000e+00> : vector<2x8xf32>
    %70 = vector.multi_reduction <add>, %69, %cst_42 [2] : vector<2x8x8xf32> to vector<2x8xf32>
    %71 = vector.shape_cast %70 : vector<2x8xf32> to vector<2x8x1xf32>
    %72 = tpu.reciprocal %71 {approx = true} : vector<2x8x1xf32> -> vector<2x8x1xf32>
    %73 = vector.broadcast %72 : vector<2x8x1xf32> to vector<2x8x8xf32>
    %74 = arith.mulf %69, %73 : vector<2x8x8xf32>
    "tpu.trace_start"() <{level = 10 : i32, message = "bqk,bkd->bqd"}> : () -> ()
    %cst_43 = arith.constant dense<0.000000e+00> : vector<2x8x16xf32>
    %75 = tpu.matmul %74, %59, %cst_43 {dimension_numbers = #tpu.dot_dimension_numbers<[2], [1], [1], [2], [0, 0, 0, 1, 1, 2], [0], [0]>} : vector<2x8x8xf32>, vector<2x8x16xf32>, vector<2x8x16xf32> -> vector<2x8x16xf32>
    "tpu.trace_stop"() : () -> ()
    %76 = vector.shape_cast %75 : vector<2x8x16xf32> to vector<16x16xf32>
    %c0_44 = arith.constant 0 : index
    %c0_45 = arith.constant 0 : index
    %c0_46 = arith.constant 0 : index
    %77 = vector.load %arg12[%c0_44, %c0_45, %c0_46] : memref<4x16x64xf32, #tpu.memory_space<vmem>>, vector<1x16x64xf32>
    %78 = vector.shape_cast %77 : vector<1x16x64xf32> to vector<16x64xf32>
    %cst_47 = arith.constant dense<0.000000e+00> : vector<16x64xf32>
    %79 = tpu.matmul %76, %78, %cst_47 {dimension_numbers = #tpu.dot_dimension_numbers<[1], [0], [0], [1], [0, 0, 1, 1], [], []>} : vector<16x16xf32>, vector<16x64xf32>, vector<16x64xf32> -> vector<16x64xf32>
    %80 = arith.addf %35, %79 : vector<16x64xf32>
    %c1 = arith.constant 1 : index
    %c0_48 = arith.constant 0 : index
    %c0_49 = arith.constant 0 : index
    %81 = vector.load %arg6[%c1, %c0_48, %c0_49] : memref<4x64x16xf32, #tpu.memory_space<vmem>>, vector<1x64x16xf32>
    %82 = vector.shape_cast %81 : vector<1x64x16xf32> to vector<64x16xf32>
    %cst_50 = arith.constant dense<0.000000e+00> : vector<16x16xf32>
    %83 = tpu.matmul %33, %82, %cst_50 {dimension_numbers = #tpu.dot_dimension_numbers<[1], [0], [0], [1], [0, 0, 1, 1], [], []>} : vector<16x64xf32>, vector<64x16xf32>, vector<16x16xf32> -> vector<16x16xf32>
    %c1_51 = arith.constant 1 : index
    %c0_52 = arith.constant 0 : index
    %c0_53 = arith.constant 0 : index
    %84 = vector.load %arg7[%c1_51, %c0_52, %c0_53] : memref<4x1x16xf32, #tpu.memory_space<vmem>>, vector<1x1x16xf32>
    %85 = vector.shape_cast %84 : vector<1x1x16xf32> to vector<1x16xf32>
    %86 = vector.broadcast %85 : vector<1x16xf32> to vector<16x16xf32>
    %87 = arith.addf %83, %86 : vector<16x16xf32>
    %c1_54 = arith.constant 1 : index
    %c0_55 = arith.constant 0 : index
    %c0_56 = arith.constant 0 : index
    %88 = vector.load %arg8[%c1_54, %c0_55, %c0_56] : memref<4x64x16xf32, #tpu.memory_space<vmem>>, vector<1x64x16xf32>
    %89 = vector.shape_cast %88 : vector<1x64x16xf32> to vector<64x16xf32>
    %cst_57 = arith.constant dense<0.000000e+00> : vector<16x16xf32>
    %90 = tpu.matmul %33, %89, %cst_57 {dimension_numbers = #tpu.dot_dimension_numbers<[1], [0], [0], [1], [0, 0, 1, 1], [], []>} : vector<16x64xf32>, vector<64x16xf32>, vector<16x16xf32> -> vector<16x16xf32>
    %c1_58 = arith.constant 1 : index
    %c0_59 = arith.constant 0 : index
    %c0_60 = arith.constant 0 : index
    %91 = vector.load %arg9[%c1_58, %c0_59, %c0_60] : memref<4x1x16xf32, #tpu.memory_space<vmem>>, vector<1x1x16xf32>
    %92 = vector.shape_cast %91 : vector<1x1x16xf32> to vector<1x16xf32>
    %93 = vector.broadcast %92 : vector<1x16xf32> to vector<16x16xf32>
    %94 = arith.addf %90, %93 : vector<16x16xf32>
    %c1_61 = arith.constant 1 : index
    %c0_62 = arith.constant 0 : index
    %c0_63 = arith.constant 0 : index
    %95 = vector.load %arg10[%c1_61, %c0_62, %c0_63] : memref<4x64x16xf32, #tpu.memory_space<vmem>>, vector<1x64x16xf32>
    %96 = vector.shape_cast %95 : vector<1x64x16xf32> to vector<64x16xf32>
    %cst_64 = arith.constant dense<0.000000e+00> : vector<16x16xf32>
    %97 = tpu.matmul %33, %96, %cst_64 {dimension_numbers = #tpu.dot_dimension_numbers<[1], [0], [0], [1], [0, 0, 1, 1], [], []>} : vector<16x64xf32>, vector<64x16xf32>, vector<16x16xf32> -> vector<16x16xf32>
    %c1_65 = arith.constant 1 : index
    %c0_66 = arith.constant 0 : index
    %c0_67 = arith.constant 0 : index
    %98 = vector.load %arg11[%c1_65, %c0_66, %c0_67] : memref<4x1x16xf32, #tpu.memory_space<vmem>>, vector<1x1x16xf32>
    %99 = vector.shape_cast %98 : vector<1x1x16xf32> to vector<1x16xf32>
    %100 = vector.broadcast %99 : vector<1x16xf32> to vector<16x16xf32>
    %101 = arith.addf %97, %100 : vector<16x16xf32>
    %102 = vector.shape_cast %87 : vector<16x16xf32> to vector<2x8x16xf32>
    %103 = vector.shape_cast %94 : vector<16x16xf32> to vector<2x8x16xf32>
    %104 = vector.shape_cast %101 : vector<16x16xf32> to vector<2x8x16xf32>
    "tpu.trace_start"() <{level = 10 : i32, message = "bqd,bkd->bqk"}> : () -> ()
    %cst_68 = arith.constant dense<0.000000e+00> : vector<2x8x8xf32>
    %105 = tpu.matmul %102, %103, %cst_68 {dimension_numbers = #tpu.dot_dimension_numbers<[2], [2], [1], [1], [0, 0, 0, 1, 1, 1], [0], [0]>} : vector<2x8x16xf32>, vector<2x8x16xf32>, vector<2x8x8xf32> -> vector<2x8x8xf32>
    "tpu.trace_stop"() : () -> ()
    %cst_69 = arith.constant 2.500000e-01 : f32
    %106 = vector.broadcast %cst_69 : f32 to vector<2x8x8xf32>
    %107 = arith.mulf %105, %106 : vector<2x8x8xf32>
    %108 = vector.broadcast %34 : vector<2x1x8xf32> to vector<2x8x8xf32>
    %109 = arith.addf %107, %108 : vector<2x8x8xf32>
    %cst_70 = arith.constant dense<0xFF800000> : vector<2x8xf32>
    %110 = vector.multi_reduction <maximumf>, %109, %cst_70 [2] : vector<2x8x8xf32> to vector<2x8xf32>
    %111 = vector.shape_cast %110 : vector<2x8xf32> to vector<2x8x1xf32>
    %112 = vector.broadcast %111 : vector<2x8x1xf32> to vector<2x8x8xf32>
    %113 = arith.subf %109, %112 : vector<2x8x8xf32>
    %114 = math.exp %113 : vector<2x8x8xf32>
    %cst_71 = arith.constant dense<0.000000e+00> : vector<2x8xf32>
    %115 = vector.multi_reduction <add>, %114, %cst_71 [2] : vector<2x8x8xf32> to vector<2x8xf32>
    %116 = vector.shape_cast %115 : vector<2x8xf32> to vector<2x8x1xf32>
    %117 = tpu.reciprocal %116 {approx = true} : vector<2x8x1xf32> -> vector<2x8x1xf32>
    %118 = vector.broadcast %117 : vector<2x8x1xf32> to vector<2x8x8xf32>
    %119 = arith.mulf %114, %118 : vector<2x8x8xf32>
    "tpu.trace_start"() <{level = 10 : i32, message = "bqk,bkd->bqd"}> : () -> ()
    %cst_72 = arith.constant dense<0.000000e+00> : vector<2x8x16xf32>
    %120 = tpu.matmul %119, %104, %cst_72 {dimension_numbers = #tpu.dot_dimension_numbers<[2], [1], [1], [2], [0, 0, 0, 1, 1, 2], [0], [0]>} : vector<2x8x8xf32>, vector<2x8x16xf32>, vector<2x8x16xf32> -> vector<2x8x16xf32>
    "tpu.trace_stop"() : () -> ()
    %121 = vector.shape_cast %120 : vector<2x8x16xf32> to vector<16x16xf32>
    %c1_73 = arith.constant 1 : index
    %c0_74 = arith.constant 0 : index
    %c0_75 = arith.constant 0 : index
    %122 = vector.load %arg12[%c1_73, %c0_74, %c0_75] : memref<4x16x64xf32, #tpu.memory_space<vmem>>, vector<1x16x64xf32>
    %123 = vector.shape_cast %122 : vector<1x16x64xf32> to vector<16x64xf32>
    %cst_76 = arith.constant dense<0.000000e+00> : vector<16x64xf32>
    %124 = tpu.matmul %121, %123, %cst_76 {dimension_numbers = #tpu.dot_dimension_numbers<[1], [0], [0], [1], [0, 0, 1, 1], [], []>} : vector<16x16xf32>, vector<16x64xf32>, vector<16x64xf32> -> vector<16x64xf32>
    %125 = arith.addf %80, %124 : vector<16x64xf32>
    %c2 = arith.constant 2 : index
    %c0_77 = arith.constant 0 : index
    %c0_78 = arith.constant 0 : index
    %126 = vector.load %arg6[%c2, %c0_77, %c0_78] : memref<4x64x16xf32, #tpu.memory_space<vmem>>, vector<1x64x16xf32>
    %127 = vector.shape_cast %126 : vector<1x64x16xf32> to vector<64x16xf32>
    %cst_79 = arith.constant dense<0.000000e+00> : vector<16x16xf32>
    %128 = tpu.matmul %33, %127, %cst_79 {dimension_numbers = #tpu.dot_dimension_numbers<[1], [0], [0], [1], [0, 0, 1, 1], [], []>} : vector<16x64xf32>, vector<64x16xf32>, vector<16x16xf32> -> vector<16x16xf32>
    %c2_80 = arith.constant 2 : index
    %c0_81 = arith.constant 0 : index
    %c0_82 = arith.constant 0 : index
    %129 = vector.load %arg7[%c2_80, %c0_81, %c0_82] : memref<4x1x16xf32, #tpu.memory_space<vmem>>, vector<1x1x16xf32>
    %130 = vector.shape_cast %129 : vector<1x1x16xf32> to vector<1x16xf32>
    %131 = vector.broadcast %130 : vector<1x16xf32> to vector<16x16xf32>
    %132 = arith.addf %128, %131 : vector<16x16xf32>
    %c2_83 = arith.constant 2 : index
    %c0_84 = arith.constant 0 : index
    %c0_85 = arith.constant 0 : index
    %133 = vector.load %arg8[%c2_83, %c0_84, %c0_85] : memref<4x64x16xf32, #tpu.memory_space<vmem>>, vector<1x64x16xf32>
    %134 = vector.shape_cast %133 : vector<1x64x16xf32> to vector<64x16xf32>
    %cst_86 = arith.constant dense<0.000000e+00> : vector<16x16xf32>
    %135 = tpu.matmul %33, %134, %cst_86 {dimension_numbers = #tpu.dot_dimension_numbers<[1], [0], [0], [1], [0, 0, 1, 1], [], []>} : vector<16x64xf32>, vector<64x16xf32>, vector<16x16xf32> -> vector<16x16xf32>
    %c2_87 = arith.constant 2 : index
    %c0_88 = arith.constant 0 : index
    %c0_89 = arith.constant 0 : index
    %136 = vector.load %arg9[%c2_87, %c0_88, %c0_89] : memref<4x1x16xf32, #tpu.memory_space<vmem>>, vector<1x1x16xf32>
    %137 = vector.shape_cast %136 : vector<1x1x16xf32> to vector<1x16xf32>
    %138 = vector.broadcast %137 : vector<1x16xf32> to vector<16x16xf32>
    %139 = arith.addf %135, %138 : vector<16x16xf32>
    %c2_90 = arith.constant 2 : index
    %c0_91 = arith.constant 0 : index
    %c0_92 = arith.constant 0 : index
    %140 = vector.load %arg10[%c2_90, %c0_91, %c0_92] : memref<4x64x16xf32, #tpu.memory_space<vmem>>, vector<1x64x16xf32>
    %141 = vector.shape_cast %140 : vector<1x64x16xf32> to vector<64x16xf32>
    %cst_93 = arith.constant dense<0.000000e+00> : vector<16x16xf32>
    %142 = tpu.matmul %33, %141, %cst_93 {dimension_numbers = #tpu.dot_dimension_numbers<[1], [0], [0], [1], [0, 0, 1, 1], [], []>} : vector<16x64xf32>, vector<64x16xf32>, vector<16x16xf32> -> vector<16x16xf32>
    %c2_94 = arith.constant 2 : index
    %c0_95 = arith.constant 0 : index
    %c0_96 = arith.constant 0 : index
    %143 = vector.load %arg11[%c2_94, %c0_95, %c0_96] : memref<4x1x16xf32, #tpu.memory_space<vmem>>, vector<1x1x16xf32>
    %144 = vector.shape_cast %143 : vector<1x1x16xf32> to vector<1x16xf32>
    %145 = vector.broadcast %144 : vector<1x16xf32> to vector<16x16xf32>
    %146 = arith.addf %142, %145 : vector<16x16xf32>
    %147 = vector.shape_cast %132 : vector<16x16xf32> to vector<2x8x16xf32>
    %148 = vector.shape_cast %139 : vector<16x16xf32> to vector<2x8x16xf32>
    %149 = vector.shape_cast %146 : vector<16x16xf32> to vector<2x8x16xf32>
    "tpu.trace_start"() <{level = 10 : i32, message = "bqd,bkd->bqk"}> : () -> ()
    %cst_97 = arith.constant dense<0.000000e+00> : vector<2x8x8xf32>
    %150 = tpu.matmul %147, %148, %cst_97 {dimension_numbers = #tpu.dot_dimension_numbers<[2], [2], [1], [1], [0, 0, 0, 1, 1, 1], [0], [0]>} : vector<2x8x16xf32>, vector<2x8x16xf32>, vector<2x8x8xf32> -> vector<2x8x8xf32>
    "tpu.trace_stop"() : () -> ()
    %cst_98 = arith.constant 2.500000e-01 : f32
    %151 = vector.broadcast %cst_98 : f32 to vector<2x8x8xf32>
    %152 = arith.mulf %150, %151 : vector<2x8x8xf32>
    %153 = vector.broadcast %34 : vector<2x1x8xf32> to vector<2x8x8xf32>
    %154 = arith.addf %152, %153 : vector<2x8x8xf32>
    %cst_99 = arith.constant dense<0xFF800000> : vector<2x8xf32>
    %155 = vector.multi_reduction <maximumf>, %154, %cst_99 [2] : vector<2x8x8xf32> to vector<2x8xf32>
    %156 = vector.shape_cast %155 : vector<2x8xf32> to vector<2x8x1xf32>
    %157 = vector.broadcast %156 : vector<2x8x1xf32> to vector<2x8x8xf32>
    %158 = arith.subf %154, %157 : vector<2x8x8xf32>
    %159 = math.exp %158 : vector<2x8x8xf32>
    %cst_100 = arith.constant dense<0.000000e+00> : vector<2x8xf32>
    %160 = vector.multi_reduction <add>, %159, %cst_100 [2] : vector<2x8x8xf32> to vector<2x8xf32>
    %161 = vector.shape_cast %160 : vector<2x8xf32> to vector<2x8x1xf32>
    %162 = tpu.reciprocal %161 {approx = true} : vector<2x8x1xf32> -> vector<2x8x1xf32>
    %163 = vector.broadcast %162 : vector<2x8x1xf32> to vector<2x8x8xf32>
    %164 = arith.mulf %159, %163 : vector<2x8x8xf32>
    "tpu.trace_start"() <{level = 10 : i32, message = "bqk,bkd->bqd"}> : () -> ()
    %cst_101 = arith.constant dense<0.000000e+00> : vector<2x8x16xf32>
    %165 = tpu.matmul %164, %149, %cst_101 {dimension_numbers = #tpu.dot_dimension_numbers<[2], [1], [1], [2], [0, 0, 0, 1, 1, 2], [0], [0]>} : vector<2x8x8xf32>, vector<2x8x16xf32>, vector<2x8x16xf32> -> vector<2x8x16xf32>
    "tpu.trace_stop"() : () -> ()
    %166 = vector.shape_cast %165 : vector<2x8x16xf32> to vector<16x16xf32>
    %c2_102 = arith.constant 2 : index
    %c0_103 = arith.constant 0 : index
    %c0_104 = arith.constant 0 : index
    %167 = vector.load %arg12[%c2_102, %c0_103, %c0_104] : memref<4x16x64xf32, #tpu.memory_space<vmem>>, vector<1x16x64xf32>
    %168 = vector.shape_cast %167 : vector<1x16x64xf32> to vector<16x64xf32>
    %cst_105 = arith.constant dense<0.000000e+00> : vector<16x64xf32>
    %169 = tpu.matmul %166, %168, %cst_105 {dimension_numbers = #tpu.dot_dimension_numbers<[1], [0], [0], [1], [0, 0, 1, 1], [], []>} : vector<16x16xf32>, vector<16x64xf32>, vector<16x64xf32> -> vector<16x64xf32>
    %170 = arith.addf %125, %169 : vector<16x64xf32>
    %c3 = arith.constant 3 : index
    %c0_106 = arith.constant 0 : index
    %c0_107 = arith.constant 0 : index
    %171 = vector.load %arg6[%c3, %c0_106, %c0_107] : memref<4x64x16xf32, #tpu.memory_space<vmem>>, vector<1x64x16xf32>
    %172 = vector.shape_cast %171 : vector<1x64x16xf32> to vector<64x16xf32>
    %cst_108 = arith.constant dense<0.000000e+00> : vector<16x16xf32>
    %173 = tpu.matmul %33, %172, %cst_108 {dimension_numbers = #tpu.dot_dimension_numbers<[1], [0], [0], [1], [0, 0, 1, 1], [], []>} : vector<16x64xf32>, vector<64x16xf32>, vector<16x16xf32> -> vector<16x16xf32>
    %c3_109 = arith.constant 3 : index
    %c0_110 = arith.constant 0 : index
    %c0_111 = arith.constant 0 : index
    %174 = vector.load %arg7[%c3_109, %c0_110, %c0_111] : memref<4x1x16xf32, #tpu.memory_space<vmem>>, vector<1x1x16xf32>
    %175 = vector.shape_cast %174 : vector<1x1x16xf32> to vector<1x16xf32>
    %176 = vector.broadcast %175 : vector<1x16xf32> to vector<16x16xf32>
    %177 = arith.addf %173, %176 : vector<16x16xf32>
    %c3_112 = arith.constant 3 : index
    %c0_113 = arith.constant 0 : index
    %c0_114 = arith.constant 0 : index
    %178 = vector.load %arg8[%c3_112, %c0_113, %c0_114] : memref<4x64x16xf32, #tpu.memory_space<vmem>>, vector<1x64x16xf32>
    %179 = vector.shape_cast %178 : vector<1x64x16xf32> to vector<64x16xf32>
    %cst_115 = arith.constant dense<0.000000e+00> : vector<16x16xf32>
    %180 = tpu.matmul %33, %179, %cst_115 {dimension_numbers = #tpu.dot_dimension_numbers<[1], [0], [0], [1], [0, 0, 1, 1], [], []>} : vector<16x64xf32>, vector<64x16xf32>, vector<16x16xf32> -> vector<16x16xf32>
    %c3_116 = arith.constant 3 : index
    %c0_117 = arith.constant 0 : index
    %c0_118 = arith.constant 0 : index
    %181 = vector.load %arg9[%c3_116, %c0_117, %c0_118] : memref<4x1x16xf32, #tpu.memory_space<vmem>>, vector<1x1x16xf32>
    %182 = vector.shape_cast %181 : vector<1x1x16xf32> to vector<1x16xf32>
    %183 = vector.broadcast %182 : vector<1x16xf32> to vector<16x16xf32>
    %184 = arith.addf %180, %183 : vector<16x16xf32>
    %c3_119 = arith.constant 3 : index
    %c0_120 = arith.constant 0 : index
    %c0_121 = arith.constant 0 : index
    %185 = vector.load %arg10[%c3_119, %c0_120, %c0_121] : memref<4x64x16xf32, #tpu.memory_space<vmem>>, vector<1x64x16xf32>
    %186 = vector.shape_cast %185 : vector<1x64x16xf32> to vector<64x16xf32>
    %cst_122 = arith.constant dense<0.000000e+00> : vector<16x16xf32>
    %187 = tpu.matmul %33, %186, %cst_122 {dimension_numbers = #tpu.dot_dimension_numbers<[1], [0], [0], [1], [0, 0, 1, 1], [], []>} : vector<16x64xf32>, vector<64x16xf32>, vector<16x16xf32> -> vector<16x16xf32>
    %c3_123 = arith.constant 3 : index
    %c0_124 = arith.constant 0 : index
    %c0_125 = arith.constant 0 : index
    %188 = vector.load %arg11[%c3_123, %c0_124, %c0_125] : memref<4x1x16xf32, #tpu.memory_space<vmem>>, vector<1x1x16xf32>
    %189 = vector.shape_cast %188 : vector<1x1x16xf32> to vector<1x16xf32>
    %190 = vector.broadcast %189 : vector<1x16xf32> to vector<16x16xf32>
    %191 = arith.addf %187, %190 : vector<16x16xf32>
    %192 = vector.shape_cast %177 : vector<16x16xf32> to vector<2x8x16xf32>
    %193 = vector.shape_cast %184 : vector<16x16xf32> to vector<2x8x16xf32>
    %194 = vector.shape_cast %191 : vector<16x16xf32> to vector<2x8x16xf32>
    "tpu.trace_start"() <{level = 10 : i32, message = "bqd,bkd->bqk"}> : () -> ()
    %cst_126 = arith.constant dense<0.000000e+00> : vector<2x8x8xf32>
    %195 = tpu.matmul %192, %193, %cst_126 {dimension_numbers = #tpu.dot_dimension_numbers<[2], [2], [1], [1], [0, 0, 0, 1, 1, 1], [0], [0]>} : vector<2x8x16xf32>, vector<2x8x16xf32>, vector<2x8x8xf32> -> vector<2x8x8xf32>
    "tpu.trace_stop"() : () -> ()
    %cst_127 = arith.constant 2.500000e-01 : f32
    %196 = vector.broadcast %cst_127 : f32 to vector<2x8x8xf32>
    %197 = arith.mulf %195, %196 : vector<2x8x8xf32>
    %198 = vector.broadcast %34 : vector<2x1x8xf32> to vector<2x8x8xf32>
    %199 = arith.addf %197, %198 : vector<2x8x8xf32>
    %cst_128 = arith.constant dense<0xFF800000> : vector<2x8xf32>
    %200 = vector.multi_reduction <maximumf>, %199, %cst_128 [2] : vector<2x8x8xf32> to vector<2x8xf32>
    %201 = vector.shape_cast %200 : vector<2x8xf32> to vector<2x8x1xf32>
    %202 = vector.broadcast %201 : vector<2x8x1xf32> to vector<2x8x8xf32>
    %203 = arith.subf %199, %202 : vector<2x8x8xf32>
    %204 = math.exp %203 : vector<2x8x8xf32>
    %cst_129 = arith.constant dense<0.000000e+00> : vector<2x8xf32>
    %205 = vector.multi_reduction <add>, %204, %cst_129 [2] : vector<2x8x8xf32> to vector<2x8xf32>
    %206 = vector.shape_cast %205 : vector<2x8xf32> to vector<2x8x1xf32>
    %207 = tpu.reciprocal %206 {approx = true} : vector<2x8x1xf32> -> vector<2x8x1xf32>
    %208 = vector.broadcast %207 : vector<2x8x1xf32> to vector<2x8x8xf32>
    %209 = arith.mulf %204, %208 : vector<2x8x8xf32>
    "tpu.trace_start"() <{level = 10 : i32, message = "bqk,bkd->bqd"}> : () -> ()
    %cst_130 = arith.constant dense<0.000000e+00> : vector<2x8x16xf32>
    %210 = tpu.matmul %209, %194, %cst_130 {dimension_numbers = #tpu.dot_dimension_numbers<[2], [1], [1], [2], [0, 0, 0, 1, 1, 2], [0], [0]>} : vector<2x8x8xf32>, vector<2x8x16xf32>, vector<2x8x16xf32> -> vector<2x8x16xf32>
    "tpu.trace_stop"() : () -> ()
    %211 = vector.shape_cast %210 : vector<2x8x16xf32> to vector<16x16xf32>
    %c3_131 = arith.constant 3 : index
    %c0_132 = arith.constant 0 : index
    %c0_133 = arith.constant 0 : index
    %212 = vector.load %arg12[%c3_131, %c0_132, %c0_133] : memref<4x16x64xf32, #tpu.memory_space<vmem>>, vector<1x16x64xf32>
    %213 = vector.shape_cast %212 : vector<1x16x64xf32> to vector<16x64xf32>
    %cst_134 = arith.constant dense<0.000000e+00> : vector<16x64xf32>
    %214 = tpu.matmul %211, %213, %cst_134 {dimension_numbers = #tpu.dot_dimension_numbers<[1], [0], [0], [1], [0, 0, 1, 1], [], []>} : vector<16x16xf32>, vector<16x64xf32>, vector<16x64xf32> -> vector<16x64xf32>
    %215 = arith.addf %170, %214 : vector<16x64xf32>
    %c0_135 = arith.constant 0 : index
    %c0_136 = arith.constant 0 : index
    %216 = vector.load %arg13[%c0_135, %c0_136] : memref<1x64xf32, #tpu.memory_space<vmem>>, vector<1x64xf32>
    %217 = vector.broadcast %216 : vector<1x64xf32> to vector<16x64xf32>
    %218 = arith.addf %215, %217 : vector<16x64xf32>
    %219 = arith.addf %218, %33 : vector<16x64xf32>
    %c0_137 = arith.constant 0 : index
    %c0_138 = arith.constant 0 : index
    %220 = vector.load %arg14[%c0_137, %c0_138] : memref<1x64xf32, #tpu.memory_space<vmem>>, vector<1x64xf32>
    %c0_139 = arith.constant 0 : index
    %c0_140 = arith.constant 0 : index
    %221 = vector.load %arg15[%c0_139, %c0_140] : memref<1x64xf32, #tpu.memory_space<vmem>>, vector<1x64xf32>
    %cst_141 = arith.constant dense<0.000000e+00> : vector<16xf32>
    %222 = vector.multi_reduction <add>, %219, %cst_141 [1] : vector<16x64xf32> to vector<16xf32>
    %223 = vector.shape_cast %222 : vector<16xf32> to vector<16x1xf32>
    %cst_142 = arith.constant 6.400000e+01 : f32
    %224 = vector.broadcast %cst_142 : f32 to vector<16x1xf32>
    %225 = arith.divf %223, %224 : vector<16x1xf32>
    %226 = vector.broadcast %225 : vector<16x1xf32> to vector<16x64xf32>
    %227 = arith.subf %219, %226 : vector<16x64xf32>
    %228 = arith.mulf %227, %227 : vector<16x64xf32>
    %cst_143 = arith.constant dense<0.000000e+00> : vector<16xf32>
    %229 = vector.multi_reduction <add>, %228, %cst_143 [1] : vector<16x64xf32> to vector<16xf32>
    %230 = vector.shape_cast %229 : vector<16xf32> to vector<16x1xf32>
    %cst_144 = arith.constant 6.400000e+01 : f32
    %231 = vector.broadcast %cst_144 : f32 to vector<16x1xf32>
    %232 = arith.divf %230, %231 : vector<16x1xf32>
    %233 = vector.broadcast %225 : vector<16x1xf32> to vector<16x64xf32>
    %234 = arith.subf %219, %233 : vector<16x64xf32>
    %cst_145 = arith.constant 9.99999996E-13 : f32
    %235 = vector.broadcast %cst_145 : f32 to vector<16x1xf32>
    %236 = arith.addf %232, %235 : vector<16x1xf32>
    %237 = math.rsqrt %236 : vector<16x1xf32>
    %238 = vector.broadcast %237 : vector<16x1xf32> to vector<16x64xf32>
    %239 = arith.mulf %234, %238 : vector<16x64xf32>
    %240 = vector.broadcast %220 : vector<1x64xf32> to vector<16x64xf32>
    %241 = arith.mulf %239, %240 : vector<16x64xf32>
    %242 = vector.broadcast %221 : vector<1x64xf32> to vector<16x64xf32>
    %243 = arith.addf %241, %242 : vector<16x64xf32>
    %c0_146 = arith.constant 0 : index
    %c0_147 = arith.constant 0 : index
    %244 = vector.load %arg16[%c0_146, %c0_147] : memref<64x128xf32, #tpu.memory_space<vmem>>, vector<64x128xf32>
    %cst_148 = arith.constant dense<0.000000e+00> : vector<16x128xf32>
    %245 = tpu.matmul %243, %244, %cst_148 {dimension_numbers = #tpu.dot_dimension_numbers<[1], [0], [0], [1], [0, 0, 1, 1], [], []>} : vector<16x64xf32>, vector<64x128xf32>, vector<16x128xf32> -> vector<16x128xf32>
    %c0_149 = arith.constant 0 : index
    %c0_150 = arith.constant 0 : index
    %246 = vector.load %arg17[%c0_149, %c0_150] : memref<1x128xf32, #tpu.memory_space<vmem>>, vector<1x128xf32>
    %247 = vector.broadcast %246 : vector<1x128xf32> to vector<16x128xf32>
    %248 = arith.addf %245, %247 : vector<16x128xf32>
    %249 = arith.mulf %248, %248 : vector<16x128xf32>
    %250 = arith.mulf %248, %249 : vector<16x128xf32>
    %cst_151 = arith.constant 4.471500e-02 : f32
    %251 = vector.broadcast %cst_151 : f32 to vector<16x128xf32>
    %252 = arith.mulf %251, %250 : vector<16x128xf32>
    %253 = arith.addf %248, %252 : vector<16x128xf32>
    %cst_152 = arith.constant 0.797884583 : f32
    %254 = vector.broadcast %cst_152 : f32 to vector<16x128xf32>
    %255 = arith.mulf %254, %253 : vector<16x128xf32>
    %256 = math.tanh %255 : vector<16x128xf32>
    %cst_153 = arith.constant 1.000000e+00 : f32
    %257 = vector.broadcast %cst_153 : f32 to vector<16x128xf32>
    %258 = arith.addf %257, %256 : vector<16x128xf32>
    %cst_154 = arith.constant 5.000000e-01 : f32
    %259 = vector.broadcast %cst_154 : f32 to vector<16x128xf32>
    %260 = arith.mulf %259, %258 : vector<16x128xf32>
    %261 = arith.mulf %248, %260 : vector<16x128xf32>
    %c0_155 = arith.constant 0 : index
    %c0_156 = arith.constant 0 : index
    %262 = vector.load %arg18[%c0_155, %c0_156] : memref<128x64xf32, #tpu.memory_space<vmem>>, vector<128x64xf32>
    %cst_157 = arith.constant dense<0.000000e+00> : vector<16x64xf32>
    %263 = tpu.matmul %261, %262, %cst_157 {dimension_numbers = #tpu.dot_dimension_numbers<[1], [0], [0], [1], [0, 0, 1, 1], [], []>} : vector<16x128xf32>, vector<128x64xf32>, vector<16x64xf32> -> vector<16x64xf32>
    %c0_158 = arith.constant 0 : index
    %c0_159 = arith.constant 0 : index
    %264 = vector.load %arg19[%c0_158, %c0_159] : memref<1x64xf32, #tpu.memory_space<vmem>>, vector<1x64xf32>
    %265 = vector.broadcast %264 : vector<1x64xf32> to vector<16x64xf32>
    %266 = arith.addf %263, %265 : vector<16x64xf32>
    %267 = arith.addf %266, %243 : vector<16x64xf32>
    %c0_160 = arith.constant 0 : index
    %c0_161 = arith.constant 0 : index
    %268 = vector.load %arg20[%c0_160, %c0_161] : memref<1x64xf32, #tpu.memory_space<vmem>>, vector<1x64xf32>
    %c0_162 = arith.constant 0 : index
    %c0_163 = arith.constant 0 : index
    %269 = vector.load %arg21[%c0_162, %c0_163] : memref<1x64xf32, #tpu.memory_space<vmem>>, vector<1x64xf32>
    %cst_164 = arith.constant dense<0.000000e+00> : vector<16xf32>
    %270 = vector.multi_reduction <add>, %267, %cst_164 [1] : vector<16x64xf32> to vector<16xf32>
    %271 = vector.shape_cast %270 : vector<16xf32> to vector<16x1xf32>
    %cst_165 = arith.constant 6.400000e+01 : f32
    %272 = vector.broadcast %cst_165 : f32 to vector<16x1xf32>
    %273 = arith.divf %271, %272 : vector<16x1xf32>
    %274 = vector.broadcast %273 : vector<16x1xf32> to vector<16x64xf32>
    %275 = arith.subf %267, %274 : vector<16x64xf32>
    %276 = arith.mulf %275, %275 : vector<16x64xf32>
    %cst_166 = arith.constant dense<0.000000e+00> : vector<16xf32>
    %277 = vector.multi_reduction <add>, %276, %cst_166 [1] : vector<16x64xf32> to vector<16xf32>
    %278 = vector.shape_cast %277 : vector<16xf32> to vector<16x1xf32>
    %cst_167 = arith.constant 6.400000e+01 : f32
    %279 = vector.broadcast %cst_167 : f32 to vector<16x1xf32>
    %280 = arith.divf %278, %279 : vector<16x1xf32>
    %281 = vector.broadcast %273 : vector<16x1xf32> to vector<16x64xf32>
    %282 = arith.subf %267, %281 : vector<16x64xf32>
    %cst_168 = arith.constant 9.99999996E-13 : f32
    %283 = vector.broadcast %cst_168 : f32 to vector<16x1xf32>
    %284 = arith.addf %280, %283 : vector<16x1xf32>
    %285 = math.rsqrt %284 : vector<16x1xf32>
    %286 = vector.broadcast %285 : vector<16x1xf32> to vector<16x64xf32>
    %287 = arith.mulf %282, %286 : vector<16x64xf32>
    %288 = vector.broadcast %268 : vector<1x64xf32> to vector<16x64xf32>
    %289 = arith.mulf %287, %288 : vector<16x64xf32>
    %290 = vector.broadcast %269 : vector<1x64xf32> to vector<16x64xf32>
    %291 = arith.addf %289, %290 : vector<16x64xf32>
    %cst_169 = arith.constant 0.000000e+00 : f32
    %292 = vector.broadcast %cst_169 : f32 to vector<16x64xf32>
    %c0_170 = arith.constant 0 : index
    %c0_171 = arith.constant 0 : index
    %c0_172 = arith.constant 0 : index
    %293 = vector.load %arg22[%c0_170, %c0_171, %c0_172] : memref<4x64x16xf32, #tpu.memory_space<vmem>>, vector<1x64x16xf32>
    %294 = vector.shape_cast %293 : vector<1x64x16xf32> to vector<64x16xf32>
    %cst_173 = arith.constant dense<0.000000e+00> : vector<16x16xf32>
    %295 = tpu.matmul %291, %294, %cst_173 {dimension_numbers = #tpu.dot_dimension_numbers<[1], [0], [0], [1], [0, 0, 1, 1], [], []>} : vector<16x64xf32>, vector<64x16xf32>, vector<16x16xf32> -> vector<16x16xf32>
    %c0_174 = arith.constant 0 : index
    %c0_175 = arith.constant 0 : index
    %c0_176 = arith.constant 0 : index
    %296 = vector.load %arg23[%c0_174, %c0_175, %c0_176] : memref<4x1x16xf32, #tpu.memory_space<vmem>>, vector<1x1x16xf32>
    %297 = vector.shape_cast %296 : vector<1x1x16xf32> to vector<1x16xf32>
    %298 = vector.broadcast %297 : vector<1x16xf32> to vector<16x16xf32>
    %299 = arith.addf %295, %298 : vector<16x16xf32>
    %c0_177 = arith.constant 0 : index
    %c0_178 = arith.constant 0 : index
    %c0_179 = arith.constant 0 : index
    %300 = vector.load %arg24[%c0_177, %c0_178, %c0_179] : memref<4x64x16xf32, #tpu.memory_space<vmem>>, vector<1x64x16xf32>
    %301 = vector.shape_cast %300 : vector<1x64x16xf32> to vector<64x16xf32>
    %cst_180 = arith.constant dense<0.000000e+00> : vector<16x16xf32>
    %302 = tpu.matmul %291, %301, %cst_180 {dimension_numbers = #tpu.dot_dimension_numbers<[1], [0], [0], [1], [0, 0, 1, 1], [], []>} : vector<16x64xf32>, vector<64x16xf32>, vector<16x16xf32> -> vector<16x16xf32>
    %c0_181 = arith.constant 0 : index
    %c0_182 = arith.constant 0 : index
    %c0_183 = arith.constant 0 : index
    %303 = vector.load %arg25[%c0_181, %c0_182, %c0_183] : memref<4x1x16xf32, #tpu.memory_space<vmem>>, vector<1x1x16xf32>
    %304 = vector.shape_cast %303 : vector<1x1x16xf32> to vector<1x16xf32>
    %305 = vector.broadcast %304 : vector<1x16xf32> to vector<16x16xf32>
    %306 = arith.addf %302, %305 : vector<16x16xf32>
    %c0_184 = arith.constant 0 : index
    %c0_185 = arith.constant 0 : index
    %c0_186 = arith.constant 0 : index
    %307 = vector.load %arg26[%c0_184, %c0_185, %c0_186] : memref<4x64x16xf32, #tpu.memory_space<vmem>>, vector<1x64x16xf32>
    %308 = vector.shape_cast %307 : vector<1x64x16xf32> to vector<64x16xf32>
    %cst_187 = arith.constant dense<0.000000e+00> : vector<16x16xf32>
    %309 = tpu.matmul %291, %308, %cst_187 {dimension_numbers = #tpu.dot_dimension_numbers<[1], [0], [0], [1], [0, 0, 1, 1], [], []>} : vector<16x64xf32>, vector<64x16xf32>, vector<16x16xf32> -> vector<16x16xf32>
    %c0_188 = arith.constant 0 : index
    %c0_189 = arith.constant 0 : index
    %c0_190 = arith.constant 0 : index
    %310 = vector.load %arg27[%c0_188, %c0_189, %c0_190] : memref<4x1x16xf32, #tpu.memory_space<vmem>>, vector<1x1x16xf32>
    %311 = vector.shape_cast %310 : vector<1x1x16xf32> to vector<1x16xf32>
    %312 = vector.broadcast %311 : vector<1x16xf32> to vector<16x16xf32>
    %313 = arith.addf %309, %312 : vector<16x16xf32>
    %314 = vector.shape_cast %299 : vector<16x16xf32> to vector<2x8x16xf32>
    %315 = vector.shape_cast %306 : vector<16x16xf32> to vector<2x8x16xf32>
    %316 = vector.shape_cast %313 : vector<16x16xf32> to vector<2x8x16xf32>
    "tpu.trace_start"() <{level = 10 : i32, message = "bqd,bkd->bqk"}> : () -> ()
    %cst_191 = arith.constant dense<0.000000e+00> : vector<2x8x8xf32>
    %317 = tpu.matmul %314, %315, %cst_191 {dimension_numbers = #tpu.dot_dimension_numbers<[2], [2], [1], [1], [0, 0, 0, 1, 1, 1], [0], [0]>} : vector<2x8x16xf32>, vector<2x8x16xf32>, vector<2x8x8xf32> -> vector<2x8x8xf32>
    "tpu.trace_stop"() : () -> ()
    %cst_192 = arith.constant 2.500000e-01 : f32
    %318 = vector.broadcast %cst_192 : f32 to vector<2x8x8xf32>
    %319 = arith.mulf %317, %318 : vector<2x8x8xf32>
    %320 = vector.broadcast %34 : vector<2x1x8xf32> to vector<2x8x8xf32>
    %321 = arith.addf %319, %320 : vector<2x8x8xf32>
    %cst_193 = arith.constant dense<0xFF800000> : vector<2x8xf32>
    %322 = vector.multi_reduction <maximumf>, %321, %cst_193 [2] : vector<2x8x8xf32> to vector<2x8xf32>
    %323 = vector.shape_cast %322 : vector<2x8xf32> to vector<2x8x1xf32>
    %324 = vector.broadcast %323 : vector<2x8x1xf32> to vector<2x8x8xf32>
    %325 = arith.subf %321, %324 : vector<2x8x8xf32>
    %326 = math.exp %325 : vector<2x8x8xf32>
    %cst_194 = arith.constant dense<0.000000e+00> : vector<2x8xf32>
    %327 = vector.multi_reduction <add>, %326, %cst_194 [2] : vector<2x8x8xf32> to vector<2x8xf32>
    %328 = vector.shape_cast %327 : vector<2x8xf32> to vector<2x8x1xf32>
    %329 = tpu.reciprocal %328 {approx = true} : vector<2x8x1xf32> -> vector<2x8x1xf32>
    %330 = vector.broadcast %329 : vector<2x8x1xf32> to vector<2x8x8xf32>
    %331 = arith.mulf %326, %330 : vector<2x8x8xf32>
    "tpu.trace_start"() <{level = 10 : i32, message = "bqk,bkd->bqd"}> : () -> ()
    %cst_195 = arith.constant dense<0.000000e+00> : vector<2x8x16xf32>
    %332 = tpu.matmul %331, %316, %cst_195 {dimension_numbers = #tpu.dot_dimension_numbers<[2], [1], [1], [2], [0, 0, 0, 1, 1, 2], [0], [0]>} : vector<2x8x8xf32>, vector<2x8x16xf32>, vector<2x8x16xf32> -> vector<2x8x16xf32>
    "tpu.trace_stop"() : () -> ()
    %333 = vector.shape_cast %332 : vector<2x8x16xf32> to vector<16x16xf32>
    %c0_196 = arith.constant 0 : index
    %c0_197 = arith.constant 0 : index
    %c0_198 = arith.constant 0 : index
    %334 = vector.load %arg28[%c0_196, %c0_197, %c0_198] : memref<4x16x64xf32, #tpu.memory_space<vmem>>, vector<1x16x64xf32>
    %335 = vector.shape_cast %334 : vector<1x16x64xf32> to vector<16x64xf32>
    %cst_199 = arith.constant dense<0.000000e+00> : vector<16x64xf32>
    %336 = tpu.matmul %333, %335, %cst_199 {dimension_numbers = #tpu.dot_dimension_numbers<[1], [0], [0], [1], [0, 0, 1, 1], [], []>} : vector<16x16xf32>, vector<16x64xf32>, vector<16x64xf32> -> vector<16x64xf32>
    %337 = arith.addf %292, %336 : vector<16x64xf32>
    %c1_200 = arith.constant 1 : index
    %c0_201 = arith.constant 0 : index
    %c0_202 = arith.constant 0 : index
    %338 = vector.load %arg22[%c1_200, %c0_201, %c0_202] : memref<4x64x16xf32, #tpu.memory_space<vmem>>, vector<1x64x16xf32>
    %339 = vector.shape_cast %338 : vector<1x64x16xf32> to vector<64x16xf32>
    %cst_203 = arith.constant dense<0.000000e+00> : vector<16x16xf32>
    %340 = tpu.matmul %291, %339, %cst_203 {dimension_numbers = #tpu.dot_dimension_numbers<[1], [0], [0], [1], [0, 0, 1, 1], [], []>} : vector<16x64xf32>, vector<64x16xf32>, vector<16x16xf32> -> vector<16x16xf32>
    %c1_204 = arith.constant 1 : index
    %c0_205 = arith.constant 0 : index
    %c0_206 = arith.constant 0 : index
    %341 = vector.load %arg23[%c1_204, %c0_205, %c0_206] : memref<4x1x16xf32, #tpu.memory_space<vmem>>, vector<1x1x16xf32>
    %342 = vector.shape_cast %341 : vector<1x1x16xf32> to vector<1x16xf32>
    %343 = vector.broadcast %342 : vector<1x16xf32> to vector<16x16xf32>
    %344 = arith.addf %340, %343 : vector<16x16xf32>
    %c1_207 = arith.constant 1 : index
    %c0_208 = arith.constant 0 : index
    %c0_209 = arith.constant 0 : index
    %345 = vector.load %arg24[%c1_207, %c0_208, %c0_209] : memref<4x64x16xf32, #tpu.memory_space<vmem>>, vector<1x64x16xf32>
    %346 = vector.shape_cast %345 : vector<1x64x16xf32> to vector<64x16xf32>
    %cst_210 = arith.constant dense<0.000000e+00> : vector<16x16xf32>
    %347 = tpu.matmul %291, %346, %cst_210 {dimension_numbers = #tpu.dot_dimension_numbers<[1], [0], [0], [1], [0, 0, 1, 1], [], []>} : vector<16x64xf32>, vector<64x16xf32>, vector<16x16xf32> -> vector<16x16xf32>
    %c1_211 = arith.constant 1 : index
    %c0_212 = arith.constant 0 : index
    %c0_213 = arith.constant 0 : index
    %348 = vector.load %arg25[%c1_211, %c0_212, %c0_213] : memref<4x1x16xf32, #tpu.memory_space<vmem>>, vector<1x1x16xf32>
    %349 = vector.shape_cast %348 : vector<1x1x16xf32> to vector<1x16xf32>
    %350 = vector.broadcast %349 : vector<1x16xf32> to vector<16x16xf32>
    %351 = arith.addf %347, %350 : vector<16x16xf32>
    %c1_214 = arith.constant 1 : index
    %c0_215 = arith.constant 0 : index
    %c0_216 = arith.constant 0 : index
    %352 = vector.load %arg26[%c1_214, %c0_215, %c0_216] : memref<4x64x16xf32, #tpu.memory_space<vmem>>, vector<1x64x16xf32>
    %353 = vector.shape_cast %352 : vector<1x64x16xf32> to vector<64x16xf32>
    %cst_217 = arith.constant dense<0.000000e+00> : vector<16x16xf32>
    %354 = tpu.matmul %291, %353, %cst_217 {dimension_numbers = #tpu.dot_dimension_numbers<[1], [0], [0], [1], [0, 0, 1, 1], [], []>} : vector<16x64xf32>, vector<64x16xf32>, vector<16x16xf32> -> vector<16x16xf32>
    %c1_218 = arith.constant 1 : index
    %c0_219 = arith.constant 0 : index
    %c0_220 = arith.constant 0 : index
    %355 = vector.load %arg27[%c1_218, %c0_219, %c0_220] : memref<4x1x16xf32, #tpu.memory_space<vmem>>, vector<1x1x16xf32>
    %356 = vector.shape_cast %355 : vector<1x1x16xf32> to vector<1x16xf32>
    %357 = vector.broadcast %356 : vector<1x16xf32> to vector<16x16xf32>
    %358 = arith.addf %354, %357 : vector<16x16xf32>
    %359 = vector.shape_cast %344 : vector<16x16xf32> to vector<2x8x16xf32>
    %360 = vector.shape_cast %351 : vector<16x16xf32> to vector<2x8x16xf32>
    %361 = vector.shape_cast %358 : vector<16x16xf32> to vector<2x8x16xf32>
    "tpu.trace_start"() <{level = 10 : i32, message = "bqd,bkd->bqk"}> : () -> ()
    %cst_221 = arith.constant dense<0.000000e+00> : vector<2x8x8xf32>
    %362 = tpu.matmul %359, %360, %cst_221 {dimension_numbers = #tpu.dot_dimension_numbers<[2], [2], [1], [1], [0, 0, 0, 1, 1, 1], [0], [0]>} : vector<2x8x16xf32>, vector<2x8x16xf32>, vector<2x8x8xf32> -> vector<2x8x8xf32>
    "tpu.trace_stop"() : () -> ()
    %cst_222 = arith.constant 2.500000e-01 : f32
    %363 = vector.broadcast %cst_222 : f32 to vector<2x8x8xf32>
    %364 = arith.mulf %362, %363 : vector<2x8x8xf32>
    %365 = vector.broadcast %34 : vector<2x1x8xf32> to vector<2x8x8xf32>
    %366 = arith.addf %364, %365 : vector<2x8x8xf32>
    %cst_223 = arith.constant dense<0xFF800000> : vector<2x8xf32>
    %367 = vector.multi_reduction <maximumf>, %366, %cst_223 [2] : vector<2x8x8xf32> to vector<2x8xf32>
    %368 = vector.shape_cast %367 : vector<2x8xf32> to vector<2x8x1xf32>
    %369 = vector.broadcast %368 : vector<2x8x1xf32> to vector<2x8x8xf32>
    %370 = arith.subf %366, %369 : vector<2x8x8xf32>
    %371 = math.exp %370 : vector<2x8x8xf32>
    %cst_224 = arith.constant dense<0.000000e+00> : vector<2x8xf32>
    %372 = vector.multi_reduction <add>, %371, %cst_224 [2] : vector<2x8x8xf32> to vector<2x8xf32>
    %373 = vector.shape_cast %372 : vector<2x8xf32> to vector<2x8x1xf32>
    %374 = tpu.reciprocal %373 {approx = true} : vector<2x8x1xf32> -> vector<2x8x1xf32>
    %375 = vector.broadcast %374 : vector<2x8x1xf32> to vector<2x8x8xf32>
    %376 = arith.mulf %371, %375 : vector<2x8x8xf32>
    "tpu.trace_start"() <{level = 10 : i32, message = "bqk,bkd->bqd"}> : () -> ()
    %cst_225 = arith.constant dense<0.000000e+00> : vector<2x8x16xf32>
    %377 = tpu.matmul %376, %361, %cst_225 {dimension_numbers = #tpu.dot_dimension_numbers<[2], [1], [1], [2], [0, 0, 0, 1, 1, 2], [0], [0]>} : vector<2x8x8xf32>, vector<2x8x16xf32>, vector<2x8x16xf32> -> vector<2x8x16xf32>
    "tpu.trace_stop"() : () -> ()
    %378 = vector.shape_cast %377 : vector<2x8x16xf32> to vector<16x16xf32>
    %c1_226 = arith.constant 1 : index
    %c0_227 = arith.constant 0 : index
    %c0_228 = arith.constant 0 : index
    %379 = vector.load %arg28[%c1_226, %c0_227, %c0_228] : memref<4x16x64xf32, #tpu.memory_space<vmem>>, vector<1x16x64xf32>
    %380 = vector.shape_cast %379 : vector<1x16x64xf32> to vector<16x64xf32>
    %cst_229 = arith.constant dense<0.000000e+00> : vector<16x64xf32>
    %381 = tpu.matmul %378, %380, %cst_229 {dimension_numbers = #tpu.dot_dimension_numbers<[1], [0], [0], [1], [0, 0, 1, 1], [], []>} : vector<16x16xf32>, vector<16x64xf32>, vector<16x64xf32> -> vector<16x64xf32>
    %382 = arith.addf %337, %381 : vector<16x64xf32>
    %c2_230 = arith.constant 2 : index
    %c0_231 = arith.constant 0 : index
    %c0_232 = arith.constant 0 : index
    %383 = vector.load %arg22[%c2_230, %c0_231, %c0_232] : memref<4x64x16xf32, #tpu.memory_space<vmem>>, vector<1x64x16xf32>
    %384 = vector.shape_cast %383 : vector<1x64x16xf32> to vector<64x16xf32>
    %cst_233 = arith.constant dense<0.000000e+00> : vector<16x16xf32>
    %385 = tpu.matmul %291, %384, %cst_233 {dimension_numbers = #tpu.dot_dimension_numbers<[1], [0], [0], [1], [0, 0, 1, 1], [], []>} : vector<16x64xf32>, vector<64x16xf32>, vector<16x16xf32> -> vector<16x16xf32>
    %c2_234 = arith.constant 2 : index
    %c0_235 = arith.constant 0 : index
    %c0_236 = arith.constant 0 : index
    %386 = vector.load %arg23[%c2_234, %c0_235, %c0_236] : memref<4x1x16xf32, #tpu.memory_space<vmem>>, vector<1x1x16xf32>
    %387 = vector.shape_cast %386 : vector<1x1x16xf32> to vector<1x16xf32>
    %388 = vector.broadcast %387 : vector<1x16xf32> to vector<16x16xf32>
    %389 = arith.addf %385, %388 : vector<16x16xf32>
    %c2_237 = arith.constant 2 : index
    %c0_238 = arith.constant 0 : index
    %c0_239 = arith.constant 0 : index
    %390 = vector.load %arg24[%c2_237, %c0_238, %c0_239] : memref<4x64x16xf32, #tpu.memory_space<vmem>>, vector<1x64x16xf32>
    %391 = vector.shape_cast %390 : vector<1x64x16xf32> to vector<64x16xf32>
    %cst_240 = arith.constant dense<0.000000e+00> : vector<16x16xf32>
    %392 = tpu.matmul %291, %391, %cst_240 {dimension_numbers = #tpu.dot_dimension_numbers<[1], [0], [0], [1], [0, 0, 1, 1], [], []>} : vector<16x64xf32>, vector<64x16xf32>, vector<16x16xf32> -> vector<16x16xf32>
    %c2_241 = arith.constant 2 : index
    %c0_242 = arith.constant 0 : index
    %c0_243 = arith.constant 0 : index
    %393 = vector.load %arg25[%c2_241, %c0_242, %c0_243] : memref<4x1x16xf32, #tpu.memory_space<vmem>>, vector<1x1x16xf32>
    %394 = vector.shape_cast %393 : vector<1x1x16xf32> to vector<1x16xf32>
    %395 = vector.broadcast %394 : vector<1x16xf32> to vector<16x16xf32>
    %396 = arith.addf %392, %395 : vector<16x16xf32>
    %c2_244 = arith.constant 2 : index
    %c0_245 = arith.constant 0 : index
    %c0_246 = arith.constant 0 : index
    %397 = vector.load %arg26[%c2_244, %c0_245, %c0_246] : memref<4x64x16xf32, #tpu.memory_space<vmem>>, vector<1x64x16xf32>
    %398 = vector.shape_cast %397 : vector<1x64x16xf32> to vector<64x16xf32>
    %cst_247 = arith.constant dense<0.000000e+00> : vector<16x16xf32>
    %399 = tpu.matmul %291, %398, %cst_247 {dimension_numbers = #tpu.dot_dimension_numbers<[1], [0], [0], [1], [0, 0, 1, 1], [], []>} : vector<16x64xf32>, vector<64x16xf32>, vector<16x16xf32> -> vector<16x16xf32>
    %c2_248 = arith.constant 2 : index
    %c0_249 = arith.constant 0 : index
    %c0_250 = arith.constant 0 : index
    %400 = vector.load %arg27[%c2_248, %c0_249, %c0_250] : memref<4x1x16xf32, #tpu.memory_space<vmem>>, vector<1x1x16xf32>
    %401 = vector.shape_cast %400 : vector<1x1x16xf32> to vector<1x16xf32>
    %402 = vector.broadcast %401 : vector<1x16xf32> to vector<16x16xf32>
    %403 = arith.addf %399, %402 : vector<16x16xf32>
    %404 = vector.shape_cast %389 : vector<16x16xf32> to vector<2x8x16xf32>
    %405 = vector.shape_cast %396 : vector<16x16xf32> to vector<2x8x16xf32>
    %406 = vector.shape_cast %403 : vector<16x16xf32> to vector<2x8x16xf32>
    "tpu.trace_start"() <{level = 10 : i32, message = "bqd,bkd->bqk"}> : () -> ()
    %cst_251 = arith.constant dense<0.000000e+00> : vector<2x8x8xf32>
    %407 = tpu.matmul %404, %405, %cst_251 {dimension_numbers = #tpu.dot_dimension_numbers<[2], [2], [1], [1], [0, 0, 0, 1, 1, 1], [0], [0]>} : vector<2x8x16xf32>, vector<2x8x16xf32>, vector<2x8x8xf32> -> vector<2x8x8xf32>
    "tpu.trace_stop"() : () -> ()
    %cst_252 = arith.constant 2.500000e-01 : f32
    %408 = vector.broadcast %cst_252 : f32 to vector<2x8x8xf32>
    %409 = arith.mulf %407, %408 : vector<2x8x8xf32>
    %410 = vector.broadcast %34 : vector<2x1x8xf32> to vector<2x8x8xf32>
    %411 = arith.addf %409, %410 : vector<2x8x8xf32>
    %cst_253 = arith.constant dense<0xFF800000> : vector<2x8xf32>
    %412 = vector.multi_reduction <maximumf>, %411, %cst_253 [2] : vector<2x8x8xf32> to vector<2x8xf32>
    %413 = vector.shape_cast %412 : vector<2x8xf32> to vector<2x8x1xf32>
    %414 = vector.broadcast %413 : vector<2x8x1xf32> to vector<2x8x8xf32>
    %415 = arith.subf %411, %414 : vector<2x8x8xf32>
    %416 = math.exp %415 : vector<2x8x8xf32>
    %cst_254 = arith.constant dense<0.000000e+00> : vector<2x8xf32>
    %417 = vector.multi_reduction <add>, %416, %cst_254 [2] : vector<2x8x8xf32> to vector<2x8xf32>
    %418 = vector.shape_cast %417 : vector<2x8xf32> to vector<2x8x1xf32>
    %419 = tpu.reciprocal %418 {approx = true} : vector<2x8x1xf32> -> vector<2x8x1xf32>
    %420 = vector.broadcast %419 : vector<2x8x1xf32> to vector<2x8x8xf32>
    %421 = arith.mulf %416, %420 : vector<2x8x8xf32>
    "tpu.trace_start"() <{level = 10 : i32, message = "bqk,bkd->bqd"}> : () -> ()
    %cst_255 = arith.constant dense<0.000000e+00> : vector<2x8x16xf32>
    %422 = tpu.matmul %421, %406, %cst_255 {dimension_numbers = #tpu.dot_dimension_numbers<[2], [1], [1], [2], [0, 0, 0, 1, 1, 2], [0], [0]>} : vector<2x8x8xf32>, vector<2x8x16xf32>, vector<2x8x16xf32> -> vector<2x8x16xf32>
    "tpu.trace_stop"() : () -> ()
    %423 = vector.shape_cast %422 : vector<2x8x16xf32> to vector<16x16xf32>
    %c2_256 = arith.constant 2 : index
    %c0_257 = arith.constant 0 : index
    %c0_258 = arith.constant 0 : index
    %424 = vector.load %arg28[%c2_256, %c0_257, %c0_258] : memref<4x16x64xf32, #tpu.memory_space<vmem>>, vector<1x16x64xf32>
    %425 = vector.shape_cast %424 : vector<1x16x64xf32> to vector<16x64xf32>
    %cst_259 = arith.constant dense<0.000000e+00> : vector<16x64xf32>
    %426 = tpu.matmul %423, %425, %cst_259 {dimension_numbers = #tpu.dot_dimension_numbers<[1], [0], [0], [1], [0, 0, 1, 1], [], []>} : vector<16x16xf32>, vector<16x64xf32>, vector<16x64xf32> -> vector<16x64xf32>
    %427 = arith.addf %382, %426 : vector<16x64xf32>
    %c3_260 = arith.constant 3 : index
    %c0_261 = arith.constant 0 : index
    %c0_262 = arith.constant 0 : index
    %428 = vector.load %arg22[%c3_260, %c0_261, %c0_262] : memref<4x64x16xf32, #tpu.memory_space<vmem>>, vector<1x64x16xf32>
    %429 = vector.shape_cast %428 : vector<1x64x16xf32> to vector<64x16xf32>
    %cst_263 = arith.constant dense<0.000000e+00> : vector<16x16xf32>
    %430 = tpu.matmul %291, %429, %cst_263 {dimension_numbers = #tpu.dot_dimension_numbers<[1], [0], [0], [1], [0, 0, 1, 1], [], []>} : vector<16x64xf32>, vector<64x16xf32>, vector<16x16xf32> -> vector<16x16xf32>
    %c3_264 = arith.constant 3 : index
    %c0_265 = arith.constant 0 : index
    %c0_266 = arith.constant 0 : index
    %431 = vector.load %arg23[%c3_264, %c0_265, %c0_266] : memref<4x1x16xf32, #tpu.memory_space<vmem>>, vector<1x1x16xf32>
    %432 = vector.shape_cast %431 : vector<1x1x16xf32> to vector<1x16xf32>
    %433 = vector.broadcast %432 : vector<1x16xf32> to vector<16x16xf32>
    %434 = arith.addf %430, %433 : vector<16x16xf32>
    %c3_267 = arith.constant 3 : index
    %c0_268 = arith.constant 0 : index
    %c0_269 = arith.constant 0 : index
    %435 = vector.load %arg24[%c3_267, %c0_268, %c0_269] : memref<4x64x16xf32, #tpu.memory_space<vmem>>, vector<1x64x16xf32>
    %436 = vector.shape_cast %435 : vector<1x64x16xf32> to vector<64x16xf32>
    %cst_270 = arith.constant dense<0.000000e+00> : vector<16x16xf32>
    %437 = tpu.matmul %291, %436, %cst_270 {dimension_numbers = #tpu.dot_dimension_numbers<[1], [0], [0], [1], [0, 0, 1, 1], [], []>} : vector<16x64xf32>, vector<64x16xf32>, vector<16x16xf32> -> vector<16x16xf32>
    %c3_271 = arith.constant 3 : index
    %c0_272 = arith.constant 0 : index
    %c0_273 = arith.constant 0 : index
    %438 = vector.load %arg25[%c3_271, %c0_272, %c0_273] : memref<4x1x16xf32, #tpu.memory_space<vmem>>, vector<1x1x16xf32>
    %439 = vector.shape_cast %438 : vector<1x1x16xf32> to vector<1x16xf32>
    %440 = vector.broadcast %439 : vector<1x16xf32> to vector<16x16xf32>
    %441 = arith.addf %437, %440 : vector<16x16xf32>
    %c3_274 = arith.constant 3 : index
    %c0_275 = arith.constant 0 : index
    %c0_276 = arith.constant 0 : index
    %442 = vector.load %arg26[%c3_274, %c0_275, %c0_276] : memref<4x64x16xf32, #tpu.memory_space<vmem>>, vector<1x64x16xf32>
    %443 = vector.shape_cast %442 : vector<1x64x16xf32> to vector<64x16xf32>
    %cst_277 = arith.constant dense<0.000000e+00> : vector<16x16xf32>
    %444 = tpu.matmul %291, %443, %cst_277 {dimension_numbers = #tpu.dot_dimension_numbers<[1], [0], [0], [1], [0, 0, 1, 1], [], []>} : vector<16x64xf32>, vector<64x16xf32>, vector<16x16xf32> -> vector<16x16xf32>
    %c3_278 = arith.constant 3 : index
    %c0_279 = arith.constant 0 : index
    %c0_280 = arith.constant 0 : index
    %445 = vector.load %arg27[%c3_278, %c0_279, %c0_280] : memref<4x1x16xf32, #tpu.memory_space<vmem>>, vector<1x1x16xf32>
    %446 = vector.shape_cast %445 : vector<1x1x16xf32> to vector<1x16xf32>
    %447 = vector.broadcast %446 : vector<1x16xf32> to vector<16x16xf32>
    %448 = arith.addf %444, %447 : vector<16x16xf32>
    %449 = vector.shape_cast %434 : vector<16x16xf32> to vector<2x8x16xf32>
    %450 = vector.shape_cast %441 : vector<16x16xf32> to vector<2x8x16xf32>
    %451 = vector.shape_cast %448 : vector<16x16xf32> to vector<2x8x16xf32>
    "tpu.trace_start"() <{level = 10 : i32, message = "bqd,bkd->bqk"}> : () -> ()
    %cst_281 = arith.constant dense<0.000000e+00> : vector<2x8x8xf32>
    %452 = tpu.matmul %449, %450, %cst_281 {dimension_numbers = #tpu.dot_dimension_numbers<[2], [2], [1], [1], [0, 0, 0, 1, 1, 1], [0], [0]>} : vector<2x8x16xf32>, vector<2x8x16xf32>, vector<2x8x8xf32> -> vector<2x8x8xf32>
    "tpu.trace_stop"() : () -> ()
    %cst_282 = arith.constant 2.500000e-01 : f32
    %453 = vector.broadcast %cst_282 : f32 to vector<2x8x8xf32>
    %454 = arith.mulf %452, %453 : vector<2x8x8xf32>
    %455 = vector.broadcast %34 : vector<2x1x8xf32> to vector<2x8x8xf32>
    %456 = arith.addf %454, %455 : vector<2x8x8xf32>
    %cst_283 = arith.constant dense<0xFF800000> : vector<2x8xf32>
    %457 = vector.multi_reduction <maximumf>, %456, %cst_283 [2] : vector<2x8x8xf32> to vector<2x8xf32>
    %458 = vector.shape_cast %457 : vector<2x8xf32> to vector<2x8x1xf32>
    %459 = vector.broadcast %458 : vector<2x8x1xf32> to vector<2x8x8xf32>
    %460 = arith.subf %456, %459 : vector<2x8x8xf32>
    %461 = math.exp %460 : vector<2x8x8xf32>
    %cst_284 = arith.constant dense<0.000000e+00> : vector<2x8xf32>
    %462 = vector.multi_reduction <add>, %461, %cst_284 [2] : vector<2x8x8xf32> to vector<2x8xf32>
    %463 = vector.shape_cast %462 : vector<2x8xf32> to vector<2x8x1xf32>
    %464 = tpu.reciprocal %463 {approx = true} : vector<2x8x1xf32> -> vector<2x8x1xf32>
    %465 = vector.broadcast %464 : vector<2x8x1xf32> to vector<2x8x8xf32>
    %466 = arith.mulf %461, %465 : vector<2x8x8xf32>
    "tpu.trace_start"() <{level = 10 : i32, message = "bqk,bkd->bqd"}> : () -> ()
    %cst_285 = arith.constant dense<0.000000e+00> : vector<2x8x16xf32>
    %467 = tpu.matmul %466, %451, %cst_285 {dimension_numbers = #tpu.dot_dimension_numbers<[2], [1], [1], [2], [0, 0, 0, 1, 1, 2], [0], [0]>} : vector<2x8x8xf32>, vector<2x8x16xf32>, vector<2x8x16xf32> -> vector<2x8x16xf32>
    "tpu.trace_stop"() : () -> ()
    %468 = vector.shape_cast %467 : vector<2x8x16xf32> to vector<16x16xf32>
    %c3_286 = arith.constant 3 : index
    %c0_287 = arith.constant 0 : index
    %c0_288 = arith.constant 0 : index
    %469 = vector.load %arg28[%c3_286, %c0_287, %c0_288] : memref<4x16x64xf32, #tpu.memory_space<vmem>>, vector<1x16x64xf32>
    %470 = vector.shape_cast %469 : vector<1x16x64xf32> to vector<16x64xf32>
    %cst_289 = arith.constant dense<0.000000e+00> : vector<16x64xf32>
    %471 = tpu.matmul %468, %470, %cst_289 {dimension_numbers = #tpu.dot_dimension_numbers<[1], [0], [0], [1], [0, 0, 1, 1], [], []>} : vector<16x16xf32>, vector<16x64xf32>, vector<16x64xf32> -> vector<16x64xf32>
    %472 = arith.addf %427, %471 : vector<16x64xf32>
    %c0_290 = arith.constant 0 : index
    %c0_291 = arith.constant 0 : index
    %473 = vector.load %arg29[%c0_290, %c0_291] : memref<1x64xf32, #tpu.memory_space<vmem>>, vector<1x64xf32>
    %474 = vector.broadcast %473 : vector<1x64xf32> to vector<16x64xf32>
    %475 = arith.addf %472, %474 : vector<16x64xf32>
    %476 = arith.addf %475, %291 : vector<16x64xf32>
    %c0_292 = arith.constant 0 : index
    %c0_293 = arith.constant 0 : index
    %477 = vector.load %arg30[%c0_292, %c0_293] : memref<1x64xf32, #tpu.memory_space<vmem>>, vector<1x64xf32>
    %c0_294 = arith.constant 0 : index
    %c0_295 = arith.constant 0 : index
    %478 = vector.load %arg31[%c0_294, %c0_295] : memref<1x64xf32, #tpu.memory_space<vmem>>, vector<1x64xf32>
    %cst_296 = arith.constant dense<0.000000e+00> : vector<16xf32>
    %479 = vector.multi_reduction <add>, %476, %cst_296 [1] : vector<16x64xf32> to vector<16xf32>
    %480 = vector.shape_cast %479 : vector<16xf32> to vector<16x1xf32>
    %cst_297 = arith.constant 6.400000e+01 : f32
    %481 = vector.broadcast %cst_297 : f32 to vector<16x1xf32>
    %482 = arith.divf %480, %481 : vector<16x1xf32>
    %483 = vector.broadcast %482 : vector<16x1xf32> to vector<16x64xf32>
    %484 = arith.subf %476, %483 : vector<16x64xf32>
    %485 = arith.mulf %484, %484 : vector<16x64xf32>
    %cst_298 = arith.constant dense<0.000000e+00> : vector<16xf32>
    %486 = vector.multi_reduction <add>, %485, %cst_298 [1] : vector<16x64xf32> to vector<16xf32>
    %487 = vector.shape_cast %486 : vector<16xf32> to vector<16x1xf32>
    %cst_299 = arith.constant 6.400000e+01 : f32
    %488 = vector.broadcast %cst_299 : f32 to vector<16x1xf32>
    %489 = arith.divf %487, %488 : vector<16x1xf32>
    %490 = vector.broadcast %482 : vector<16x1xf32> to vector<16x64xf32>
    %491 = arith.subf %476, %490 : vector<16x64xf32>
    %cst_300 = arith.constant 9.99999996E-13 : f32
    %492 = vector.broadcast %cst_300 : f32 to vector<16x1xf32>
    %493 = arith.addf %489, %492 : vector<16x1xf32>
    %494 = math.rsqrt %493 : vector<16x1xf32>
    %495 = vector.broadcast %494 : vector<16x1xf32> to vector<16x64xf32>
    %496 = arith.mulf %491, %495 : vector<16x64xf32>
    %497 = vector.broadcast %477 : vector<1x64xf32> to vector<16x64xf32>
    %498 = arith.mulf %496, %497 : vector<16x64xf32>
    %499 = vector.broadcast %478 : vector<1x64xf32> to vector<16x64xf32>
    %500 = arith.addf %498, %499 : vector<16x64xf32>
    %c0_301 = arith.constant 0 : index
    %c0_302 = arith.constant 0 : index
    %501 = vector.load %arg32[%c0_301, %c0_302] : memref<64x128xf32, #tpu.memory_space<vmem>>, vector<64x128xf32>
    %cst_303 = arith.constant dense<0.000000e+00> : vector<16x128xf32>
    %502 = tpu.matmul %500, %501, %cst_303 {dimension_numbers = #tpu.dot_dimension_numbers<[1], [0], [0], [1], [0, 0, 1, 1], [], []>} : vector<16x64xf32>, vector<64x128xf32>, vector<16x128xf32> -> vector<16x128xf32>
    %c0_304 = arith.constant 0 : index
    %c0_305 = arith.constant 0 : index
    %503 = vector.load %arg33[%c0_304, %c0_305] : memref<1x128xf32, #tpu.memory_space<vmem>>, vector<1x128xf32>
    %504 = vector.broadcast %503 : vector<1x128xf32> to vector<16x128xf32>
    %505 = arith.addf %502, %504 : vector<16x128xf32>
    %506 = arith.mulf %505, %505 : vector<16x128xf32>
    %507 = arith.mulf %505, %506 : vector<16x128xf32>
    %cst_306 = arith.constant 4.471500e-02 : f32
    %508 = vector.broadcast %cst_306 : f32 to vector<16x128xf32>
    %509 = arith.mulf %508, %507 : vector<16x128xf32>
    %510 = arith.addf %505, %509 : vector<16x128xf32>
    %cst_307 = arith.constant 0.797884583 : f32
    %511 = vector.broadcast %cst_307 : f32 to vector<16x128xf32>
    %512 = arith.mulf %511, %510 : vector<16x128xf32>
    %513 = math.tanh %512 : vector<16x128xf32>
    %cst_308 = arith.constant 1.000000e+00 : f32
    %514 = vector.broadcast %cst_308 : f32 to vector<16x128xf32>
    %515 = arith.addf %514, %513 : vector<16x128xf32>
    %cst_309 = arith.constant 5.000000e-01 : f32
    %516 = vector.broadcast %cst_309 : f32 to vector<16x128xf32>
    %517 = arith.mulf %516, %515 : vector<16x128xf32>
    %518 = arith.mulf %505, %517 : vector<16x128xf32>
    %c0_310 = arith.constant 0 : index
    %c0_311 = arith.constant 0 : index
    %519 = vector.load %arg34[%c0_310, %c0_311] : memref<128x64xf32, #tpu.memory_space<vmem>>, vector<128x64xf32>
    %cst_312 = arith.constant dense<0.000000e+00> : vector<16x64xf32>
    %520 = tpu.matmul %518, %519, %cst_312 {dimension_numbers = #tpu.dot_dimension_numbers<[1], [0], [0], [1], [0, 0, 1, 1], [], []>} : vector<16x128xf32>, vector<128x64xf32>, vector<16x64xf32> -> vector<16x64xf32>
    %c0_313 = arith.constant 0 : index
    %c0_314 = arith.constant 0 : index
    %521 = vector.load %arg35[%c0_313, %c0_314] : memref<1x64xf32, #tpu.memory_space<vmem>>, vector<1x64xf32>
    %522 = vector.broadcast %521 : vector<1x64xf32> to vector<16x64xf32>
    %523 = arith.addf %520, %522 : vector<16x64xf32>
    %524 = arith.addf %523, %500 : vector<16x64xf32>
    %c0_315 = arith.constant 0 : index
    %c0_316 = arith.constant 0 : index
    %525 = vector.load %arg36[%c0_315, %c0_316] : memref<1x64xf32, #tpu.memory_space<vmem>>, vector<1x64xf32>
    %c0_317 = arith.constant 0 : index
    %c0_318 = arith.constant 0 : index
    %526 = vector.load %arg37[%c0_317, %c0_318] : memref<1x64xf32, #tpu.memory_space<vmem>>, vector<1x64xf32>
    %cst_319 = arith.constant dense<0.000000e+00> : vector<16xf32>
    %527 = vector.multi_reduction <add>, %524, %cst_319 [1] : vector<16x64xf32> to vector<16xf32>
    %528 = vector.shape_cast %527 : vector<16xf32> to vector<16x1xf32>
    %cst_320 = arith.constant 6.400000e+01 : f32
    %529 = vector.broadcast %cst_320 : f32 to vector<16x1xf32>
    %530 = arith.divf %528, %529 : vector<16x1xf32>
    %531 = vector.broadcast %530 : vector<16x1xf32> to vector<16x64xf32>
    %532 = arith.subf %524, %531 : vector<16x64xf32>
    %533 = arith.mulf %532, %532 : vector<16x64xf32>
    %cst_321 = arith.constant dense<0.000000e+00> : vector<16xf32>
    %534 = vector.multi_reduction <add>, %533, %cst_321 [1] : vector<16x64xf32> to vector<16xf32>
    %535 = vector.shape_cast %534 : vector<16xf32> to vector<16x1xf32>
    %cst_322 = arith.constant 6.400000e+01 : f32
    %536 = vector.broadcast %cst_322 : f32 to vector<16x1xf32>
    %537 = arith.divf %535, %536 : vector<16x1xf32>
    %538 = vector.broadcast %530 : vector<16x1xf32> to vector<16x64xf32>
    %539 = arith.subf %524, %538 : vector<16x64xf32>
    %cst_323 = arith.constant 9.99999996E-13 : f32
    %540 = vector.broadcast %cst_323 : f32 to vector<16x1xf32>
    %541 = arith.addf %537, %540 : vector<16x1xf32>
    %542 = math.rsqrt %541 : vector<16x1xf32>
    %543 = vector.broadcast %542 : vector<16x1xf32> to vector<16x64xf32>
    %544 = arith.mulf %539, %543 : vector<16x64xf32>
    %545 = vector.broadcast %525 : vector<1x64xf32> to vector<16x64xf32>
    %546 = arith.mulf %544, %545 : vector<16x64xf32>
    %547 = vector.broadcast %526 : vector<1x64xf32> to vector<16x64xf32>
    %548 = arith.addf %546, %547 : vector<16x64xf32>
    %549 = vector.shape_cast %548 : vector<16x64xf32> to vector<2x8x64xf32>
    %cst_324 = arith.constant dense<0.000000e+00> : vector<2x64xf32>
    %550 = vector.multi_reduction <add>, %549, %cst_324 [1] : vector<2x8x64xf32> to vector<2x64xf32>
    %cst_325 = arith.constant 8.000000e+00 : f32
    %551 = vector.broadcast %cst_325 : f32 to vector<2x64xf32>
    %552 = arith.divf %550, %551 : vector<2x64xf32>
    %c0_326 = arith.constant 0 : index
    %c0_327 = arith.constant 0 : index
    %553 = vector.load %arg38[%c0_326, %c0_327] : memref<64x128xf32, #tpu.memory_space<vmem>>, vector<64x128xf32>
    %cst_328 = arith.constant dense<0.000000e+00> : vector<2x128xf32>
    %554 = tpu.matmul %552, %553, %cst_328 {dimension_numbers = #tpu.dot_dimension_numbers<[1], [0], [0], [1], [0, 0, 1, 1], [], []>} : vector<2x64xf32>, vector<64x128xf32>, vector<2x128xf32> -> vector<2x128xf32>
    %c0_329 = arith.constant 0 : index
    %c0_330 = arith.constant 0 : index
    %555 = vector.load %arg39[%c0_329, %c0_330] : memref<1x128xf32, #tpu.memory_space<vmem>>, vector<1x128xf32>
    %556 = vector.broadcast %555 : vector<1x128xf32> to vector<2x128xf32>
    %557 = arith.addf %554, %556 : vector<2x128xf32>
    %cst_331 = arith.constant 0.000000e+00 : f32
    %558 = vector.broadcast %cst_331 : f32 to vector<2x128xf32>
    %559 = arith.maximumf %557, %558 : vector<2x128xf32>
    %c0_332 = arith.constant 0 : index
    %c0_333 = arith.constant 0 : index
    %560 = vector.load %arg40[%c0_332, %c0_333] : memref<2x128xf32, #tpu.memory_space<vmem>>, vector<2x128xf32>
    tpu.vector_store %arg40[%c0_332, %c0_333], %559 {strides = array<i32>} : memref<2x128xf32, #tpu.memory_space<vmem>>, vector<2x128xf32>,
    return
  }
}

</mosaic_0001>

<llo_original>
// kernel: distilbert_classifier_forward.1
$region0: #{distilbert_classifier_forward.1}
  #allocation0 [shape = 'u32[]', space=smem, size = 0x4, offset = 0x4, fixed_abs, tag = 'smem constant byte address 0x4 - core index']
  #allocation1 [shape = 'u32[144,128]{1,0:T(1,128)}', space=vmem, size = 0x12000, scoped, tag = 'internal scratch']
  %s0 = inlined_call_operand.smem [shape: u32[41], index: -1, kind: input, shape index: {}]
  %s1 = sld [smem:[%s0]]
  %s2 = scalar_lea.smem %s0, 1
  %s3 = sld [smem:[%s2]]
  %s4 = scalar_lea.smem %s0, 2
  %s5 = sld [smem:[%s4]]
  %s6 = scalar_lea.smem %s0, 3
  %s7 = sld [smem:[%s6]]
  %s8 = scalar_lea.smem %s0, 4
  %s9 = sld [smem:[%s8]]
  %s10 = scalar_lea.smem %s0, 5
  %s11 = sld [smem:[%s10]]
  %s12 = scalar_lea.smem %s0, 6
  %s13 = sld [smem:[%s12]]
  %s14 = scalar_lea.smem %s0, 7
  %s15 = sld [smem:[%s14]]
  %s16 = scalar_lea.smem %s0, 8
  %s17 = sld [smem:[%s16]]
  %s18 = scalar_lea.smem %s0, 9
  %s19 = sld [smem:[%s18]]
  %s20 = scalar_lea.smem %s0, 10
  %s21 = sld [smem:[%s20]]
  %s22 = scalar_lea.smem %s0, 11
  %s23 = sld [smem:[%s22]]
  %s24 = scalar_lea.smem %s0, 12
  %s25 = sld [smem:[%s24]]
  %s26 = scalar_lea.smem %s0, 13
  %s27 = sld [smem:[%s26]]
  %s28 = scalar_lea.smem %s0, 14
  %s29 = sld [smem:[%s28]]
  %s30 = scalar_lea.smem %s0, 15
  %s31 = sld [smem:[%s30]]
  %s32 = scalar_lea.smem %s0, 16
  %s33 = sld [smem:[%s32]]
  %s34 = scalar_lea.smem %s0, 17
  %s35 = sld [smem:[%s34]]
  %s36 = scalar_lea.smem %s0, 18
  %s37 = sld [smem:[%s36]]
  %s38 = scalar_lea.smem %s0, 19
  %s39 = sld [smem:[%s38]]
  %s40 = scalar_lea.smem %s0, 20
  %s41 = sld [smem:[%s40]]
  %s42 = scalar_lea.smem %s0, 21
  %s43 = sld [smem:[%s42]]
  %s44 = scalar_lea.smem %s0, 22
  %s45 = sld [smem:[%s44]]
  %s46 = scalar_lea.smem %s0, 23
  %s47 = sld [smem:[%s46]]
  %s48 = scalar_lea.smem %s0, 24
  %s49 = sld [smem:[%s48]]
  %s50 = scalar_lea.smem %s0, 25
  %s51 = sld [smem:[%s50]]
  %s52 = scalar_lea.smem %s0, 26
  %s53 = sld [smem:[%s52]]
  %s54 = scalar_lea.smem %s0, 27
  %s55 = sld [smem:[%s54]]
  %s56 = scalar_lea.smem %s0, 28
  %s57 = sld [smem:[%s56]]
  %s58 = scalar_lea.smem %s0, 29
  %s59 = sld [smem:[%s58]]
  %s60 = scalar_lea.smem %s0, 30
  %s61 = sld [smem:[%s60]]
  %s62 = scalar_lea.smem %s0, 31
  %s63 = sld [smem:[%s62]]
  %s64 = scalar_lea.smem %s0, 32
  %s65 = sld [smem:[%s64]]
  %s66 = scalar_lea.smem %s0, 33
  %s67 = sld [smem:[%s66]]
  %s68 = scalar_lea.smem %s0, 34
  %s69 = sld [smem:[%s68]]
  %s70 = scalar_lea.smem %s0, 35
  %s71 = sld [smem:[%s70]]
  %s72 = scalar_lea.smem %s0, 36
  %s73 = sld [smem:[%s72]]
  %s74 = scalar_lea.smem %s0, 37
  %s75 = sld [smem:[%s74]]
  %s76 = scalar_lea.smem %s0, 38
  %s77 = sld [smem:[%s76]]
  %s78 = scalar_lea.smem %s0, 39
  %s79 = sld [smem:[%s78]]
  %s80 = scalar_lea.smem %s0, 40
  %s81 = sld [smem:[%s80]]
  %s82 = sld [smem:[#allocation0]]
  $region170: #{distilbert_classifier_forward.1} parent=0
    _
  %s84 = ssub.s32 1, %s82
  %s85 = scalar_select 0, %s84, %s82
  $region1: #{distilbert_classifier_forward.1} parent=0
    #allocation2 [shape = 'u8[1024]{0}', space=vmem, size = 0x400, scoped, tag = 'output window, operand 0, single buffered']
    #allocation3 [shape = 's32[1]{0}', space=sflag, size = 0x4, scoped, tag = 'scoped memory for distilbert_classifier_forward.1']
    %86 = vsyncpa [#allocation3], 0
    // Predicated region
    $region2: #{distilbert_classifier_forward.1} parent=1 // pred_check
      _
    $region3: #{distilbert_classifier_forward.1} parent=1 // pred_check_branch
      %88 = sbr.rel (0) target = $region5
    $region4: #{distilbert_classifier_forward.1} parent=1 // pred_region
      _
    $region5: #{distilbert_classifier_forward.1} parent=1 // pred_fallthru
      _
    // Predicated region
    $region6: #{distilbert_classifier_forward.1} parent=1 // pred_check
      _
    $region7: #{distilbert_classifier_forward.1} parent=1 // pred_check_branch
      %90 = sbr.rel (0) target = $region9
    $region8: #{distilbert_classifier_forward.1} parent=1 // pred_region
      _
    $region9: #{distilbert_classifier_forward.1} parent=1 // pred_fallthru
      _
    // Predicated region
    $region10: #{distilbert_classifier_forward.1} parent=1 // pred_check
      _
    $region11: #{distilbert_classifier_forward.1} parent=1 // pred_check_branch
      %92 = sbr.rel (0) target = $region13
    $region12: #{distilbert_classifier_forward.1} parent=1 // pred_region
      _
    $region13: #{distilbert_classifier_forward.1} parent=1 // pred_fallthru
      _
    // Predicated region
    $region14: #{distilbert_classifier_forward.1} parent=1 // pred_check
      _
    $region15: #{distilbert_classifier_forward.1} parent=1 // pred_check_branch
      %94 = sbr.rel (0) target = $region17
    $region16: #{distilbert_classifier_forward.1} parent=1 // pred_region
      _
    $region17: #{distilbert_classifier_forward.1} parent=1 // pred_fallthru
      _
    // Predicated region
    $region18: #{distilbert_classifier_forward.1} parent=1 // pred_check
      _
    $region19: #{distilbert_classifier_forward.1} parent=1 // pred_check_branch
      %96 = sbr.rel (0) target = $region21
    $region20: #{distilbert_classifier_forward.1} parent=1 // pred_region
      _
    $region21: #{distilbert_classifier_forward.1} parent=1 // pred_fallthru
      _
    // Predicated region
    $region22: #{distilbert_classifier_forward.1} parent=1 // pred_check
      _
    $region23: #{distilbert_classifier_forward.1} parent=1 // pred_check_branch
      %98 = sbr.rel (0) target = $region25
    $region24: #{distilbert_classifier_forward.1} parent=1 // pred_region
      _
    $region25: #{distilbert_classifier_forward.1} parent=1 // pred_fallthru
      _
    // Predicated region
    $region26: #{distilbert_classifier_forward.1} parent=1 // pred_check
      _
    $region27: #{distilbert_classifier_forward.1} parent=1 // pred_check_branch
      %100 = sbr.rel (0) target = $region29
    $region28: #{distilbert_classifier_forward.1} parent=1 // pred_region
      _
    $region29: #{distilbert_classifier_forward.1} parent=1 // pred_fallthru
      _
    // Predicated region
    $region30: #{distilbert_classifier_forward.1} parent=1 // pred_check
      _
    $region31: #{distilbert_classifier_forward.1} parent=1 // pred_check_branch
      %102 = sbr.rel (0) target = $region33
    $region32: #{distilbert_classifier_forward.1} parent=1 // pred_region
      _
    $region33: #{distilbert_classifier_forward.1} parent=1 // pred_fallthru
      _
    // Predicated region
    $region34: #{distilbert_classifier_forward.1} parent=1 // pred_check
      _
    $region35: #{distilbert_classifier_forward.1} parent=1 // pred_check_branch
      %104 = sbr.rel (0) target = $region37
    $region36: #{distilbert_classifier_forward.1} parent=1 // pred_region
      _
    $region37: #{distilbert_classifier_forward.1} parent=1 // pred_fallthru
      _
    // Predicated region
    $region38: #{distilbert_classifier_forward.1} parent=1 // pred_check
      _
    $region39: #{distilbert_classifier_forward.1} parent=1 // pred_check_branch
      %106 = sbr.rel (0) target = $region41
    $region40: #{distilbert_classifier_forward.1} parent=1 // pred_region
      _
    $region41: #{distilbert_classifier_forward.1} parent=1 // pred_fallthru
      _
    // Predicated region
    $region42: #{distilbert_classifier_forward.1} parent=1 // pred_check
      _
    $region43: #{distilbert_classifier_forward.1} parent=1 // pred_check_branch
      %108 = sbr.rel (0) target = $region45
    $region44: #{distilbert_classifier_forward.1} parent=1 // pred_region
      _
    $region45: #{distilbert_classifier_forward.1} parent=1 // pred_fallthru
      _
    // Predicated region
    $region46: #{distilbert_classifier_forward.1} parent=1 // pred_check
      _
    $region47: #{distilbert_classifier_forward.1} parent=1 // pred_check_branch
      %110 = sbr.rel (0) target = $region49
    $region48: #{distilbert_classifier_forward.1} parent=1 // pred_region
      _
    $region49: #{distilbert_classifier_forward.1} parent=1 // pred_fallthru
      _
    // Predicated region
    $region50: #{distilbert_classifier_forward.1} parent=1 // pred_check
      _
    $region51: #{distilbert_classifier_forward.1} parent=1 // pred_check_branch
      %112 = sbr.rel (0) target = $region53
    $region52: #{distilbert_classifier_forward.1} parent=1 // pred_region
      _
    $region53: #{distilbert_classifier_forward.1} parent=1 // pred_fallthru
      _
    // Predicated region
    $region54: #{distilbert_classifier_forward.1} parent=1 // pred_check
      _
    $region55: #{distilbert_classifier_forward.1} parent=1 // pred_check_branch
      %114 = sbr.rel (0) target = $region57
    $region56: #{distilbert_classifier_forward.1} parent=1 // pred_region
      _
    $region57: #{distilbert_classifier_forward.1} parent=1 // pred_fallthru
      _
    // Predicated region
    $region58: #{distilbert_classifier_forward.1} parent=1 // pred_check
      _
    $region59: #{distilbert_classifier_forward.1} parent=1 // pred_check_branch
      %116 = sbr.rel (0) target = $region61
    $region60: #{distilbert_classifier_forward.1} parent=1 // pred_region
      _
    $region61: #{distilbert_classifier_forward.1} parent=1 // pred_fallthru
      _
    // Predicated region
    $region62: #{distilbert_classifier_forward.1} parent=1 // pred_check
      _
    $region63: #{distilbert_classifier_forward.1} parent=1 // pred_check_branch
      %118 = sbr.rel (0) target = $region65
    $region64: #{distilbert_classifier_forward.1} parent=1 // pred_region
      _
    $region65: #{distilbert_classifier_forward.1} parent=1 // pred_fallthru
      _
    // Predicated region
    $region66: #{distilbert_classifier_forward.1} parent=1 // pred_check
      _
    $region67: #{distilbert_classifier_forward.1} parent=1 // pred_check_branch
      %120 = sbr.rel (0) target = $region69
    $region68: #{distilbert_classifier_forward.1} parent=1 // pred_region
      _
    $region69: #{distilbert_classifier_forward.1} parent=1 // pred_fallthru
      _
    // Predicated region
    $region70: #{distilbert_classifier_forward.1} parent=1 // pred_check
      _
    $region71: #{distilbert_classifier_forward.1} parent=1 // pred_check_branch
      %122 = sbr.rel (0) target = $region73
    $region72: #{distilbert_classifier_forward.1} parent=1 // pred_region
      _
    $region73: #{distilbert_classifier_forward.1} parent=1 // pred_fallthru
      _
    // Predicated region
    $region74: #{distilbert_classifier_forward.1} parent=1 // pred_check
      _
    $region75: #{distilbert_classifier_forward.1} parent=1 // pred_check_branch
      %124 = sbr.rel (0) target = $region77
    $region76: #{distilbert_classifier_forward.1} parent=1 // pred_region
      _
    $region77: #{distilbert_classifier_forward.1} parent=1 // pred_fallthru
      _
    // Predicated region
    $region78: #{distilbert_classifier_forward.1} parent=1 // pred_check
      _
    $region79: #{distilbert_classifier_forward.1} parent=1 // pred_check_branch
      %126 = sbr.rel (0) target = $region81
    $region80: #{distilbert_classifier_forward.1} parent=1 // pred_region
      _
    $region81: #{distilbert_classifier_forward.1} parent=1 // pred_fallthru
      _
    // Predicated region
    $region82: #{distilbert_classifier_forward.1} parent=1 // pred_check
      _
    $region83: #{distilbert_classifier_forward.1} parent=1 // pred_check_branch
      %128 = sbr.rel (0) target = $region85
    $region84: #{distilbert_classifier_forward.1} parent=1 // pred_region
      _
    $region85: #{distilbert_classifier_forward.1} parent=1 // pred_fallthru
      _
    // Predicated region
    $region86: #{distilbert_classifier_forward.1} parent=1 // pred_check
      _
    $region87: #{distilbert_classifier_forward.1} parent=1 // pred_check_branch
      %130 = sbr.rel (0) target = $region89
    $region88: #{distilbert_classifier_forward.1} parent=1 // pred_region
      _
    $region89: #{distilbert_classifier_forward.1} parent=1 // pred_fallthru
      _
    // Predicated region
    $region90: #{distilbert_classifier_forward.1} parent=1 // pred_check
      _
    $region91: #{distilbert_classifier_forward.1} parent=1 // pred_check_branch
      %132 = sbr.rel (0) target = $region93
    $region92: #{distilbert_classifier_forward.1} parent=1 // pred_region
      _
    $region93: #{distilbert_classifier_forward.1} parent=1 // pred_fallthru
      _
    // Predicated region
    $region94: #{distilbert_classifier_forward.1} parent=1 // pred_check
      _
    $region95: #{distilbert_classifier_forward.1} parent=1 // pred_check_branch
      %134 = sbr.rel (0) target = $region97
    $region96: #{distilbert_classifier_forward.1} parent=1 // pred_region
      _
    $region97: #{distilbert_classifier_forward.1} parent=1 // pred_fallthru
      _
    // Predicated region
    $region98: #{distilbert_classifier_forward.1} parent=1 // pred_check
      _
    $region99: #{distilbert_classifier_forward.1} parent=1 // pred_check_branch
      %136 = sbr.rel (0) target = $region101
    $region100: #{distilbert_classifier_forward.1} parent=1 // pred_region
      _
    $region101: #{distilbert_classifier_forward.1} parent=1 // pred_fallthru
      _
    // Predicated region
    $region102: #{distilbert_classifier_forward.1} parent=1 // pred_check
      _
    $region103: #{distilbert_classifier_forward.1} parent=1 // pred_check_branch
      %138 = sbr.rel (0) target = $region105
    $region104: #{distilbert_classifier_forward.1} parent=1 // pred_region
      _
    $region105: #{distilbert_classifier_forward.1} parent=1 // pred_fallthru
      _
    // Predicated region
    $region106: #{distilbert_classifier_forward.1} parent=1 // pred_check
      _
    $region107: #{distilbert_classifier_forward.1} parent=1 // pred_check_branch
      %140 = sbr.rel (0) target = $region109
    $region108: #{distilbert_classifier_forward.1} parent=1 // pred_region
      _
    $region109: #{distilbert_classifier_forward.1} parent=1 // pred_fallthru
      _
    // Predicated region
    $region110: #{distilbert_classifier_forward.1} parent=1 // pred_check
      _
    $region111: #{distilbert_classifier_forward.1} parent=1 // pred_check_branch
      %142 = sbr.rel (0) target = $region113
    $region112: #{distilbert_classifier_forward.1} parent=1 // pred_region
      _
    $region113: #{distilbert_classifier_forward.1} parent=1 // pred_fallthru
      _
    // Predicated region
    $region114: #{distilbert_classifier_forward.1} parent=1 // pred_check
      _
    $region115: #{distilbert_classifier_forward.1} parent=1 // pred_check_branch
      %144 = sbr.rel (0) target = $region117
    $region116: #{distilbert_classifier_forward.1} parent=1 // pred_region
      _
    $region117: #{distilbert_classifier_forward.1} parent=1 // pred_fallthru
      _
    // Predicated region
    $region118: #{distilbert_classifier_forward.1} parent=1 // pred_check
      _
    $region119: #{distilbert_classifier_forward.1} parent=1 // pred_check_branch
      %146 = sbr.rel (0) target = $region121
    $region120: #{distilbert_classifier_forward.1} parent=1 // pred_region
      _
    $region121: #{distilbert_classifier_forward.1} parent=1 // pred_fallthru
      _
    // Predicated region
    $region122: #{distilbert_classifier_forward.1} parent=1 // pred_check
      _
    $region123: #{distilbert_classifier_forward.1} parent=1 // pred_check_branch
      %148 = sbr.rel (0) target = $region125
    $region124: #{distilbert_classifier_forward.1} parent=1 // pred_region
      _
    $region125: #{distilbert_classifier_forward.1} parent=1 // pred_fallthru
      _
    // Predicated region
    $region126: #{distilbert_classifier_forward.1} parent=1 // pred_check
      _
    $region127: #{distilbert_classifier_forward.1} parent=1 // pred_check_branch
      %150 = sbr.rel (0) target = $region129
    $region128: #{distilbert_classifier_forward.1} parent=1 // pred_region
      _
    $region129: #{distilbert_classifier_forward.1} parent=1 // pred_fallthru
      _
    // Predicated region
    $region130: #{distilbert_classifier_forward.1} parent=1 // pred_check
      _
    $region131: #{distilbert_classifier_forward.1} parent=1 // pred_check_branch
      %152 = sbr.rel (0) target = $region133
    $region132: #{distilbert_classifier_forward.1} parent=1 // pred_region
      _
    $region133: #{distilbert_classifier_forward.1} parent=1 // pred_fallthru
      _
    // Predicated region
    $region134: #{distilbert_classifier_forward.1} parent=1 // pred_check
      _
    $region135: #{distilbert_classifier_forward.1} parent=1 // pred_check_branch
      %154 = sbr.rel (0) target = $region137
    $region136: #{distilbert_classifier_forward.1} parent=1 // pred_region
      _
    $region137: #{distilbert_classifier_forward.1} parent=1 // pred_fallthru
      _
    // Predicated region
    $region138: #{distilbert_classifier_forward.1} parent=1 // pred_check
      _
    $region139: #{distilbert_classifier_forward.1} parent=1 // pred_check_branch
      %156 = sbr.rel (0) target = $region141
    $region140: #{distilbert_classifier_forward.1} parent=1 // pred_region
      _
    $region141: #{distilbert_classifier_forward.1} parent=1 // pred_fallthru
      _
    // Predicated region
    $region142: #{distilbert_classifier_forward.1} parent=1 // pred_check
      _
    $region143: #{distilbert_classifier_forward.1} parent=1 // pred_check_branch
      %158 = sbr.rel (0) target = $region145
    $region144: #{distilbert_classifier_forward.1} parent=1 // pred_region
      _
    $region145: #{distilbert_classifier_forward.1} parent=1 // pred_fallthru
      _
    // Predicated region
    $region146: #{distilbert_classifier_forward.1} parent=1 // pred_check
      _
    $region147: #{distilbert_classifier_forward.1} parent=1 // pred_check_branch
      %160 = sbr.rel (0) target = $region149
    $region148: #{distilbert_classifier_forward.1} parent=1 // pred_region
      _
    $region149: #{distilbert_classifier_forward.1} parent=1 // pred_fallthru
      _
    // Predicated region
    $region150: #{distilbert_classifier_forward.1} parent=1 // pred_check
      _
    $region151: #{distilbert_classifier_forward.1} parent=1 // pred_check_branch
      %162 = sbr.rel (0) target = $region153
    $region152: #{distilbert_classifier_forward.1} parent=1 // pred_region
      _
    $region153: #{distilbert_classifier_forward.1} parent=1 // pred_fallthru
      _
    // Predicated region
    $region154: #{distilbert_classifier_forward.1} parent=1 // pred_check
      _
    $region155: #{distilbert_classifier_forward.1} parent=1 // pred_check_branch
      %164 = sbr.rel (0) target = $region157
    $region156: #{distilbert_classifier_forward.1} parent=1 // pred_region
      _
    $region157: #{distilbert_classifier_forward.1} parent=1 // pred_fallthru
      _
    // Predicated region
    $region158: #{distilbert_classifier_forward.1} parent=1 // pred_check
      _
    $region159: #{distilbert_classifier_forward.1} parent=1 // pred_check_branch
      %166 = sbr.rel (0) target = $region161
    $region160: #{distilbert_classifier_forward.1} parent=1 // pred_region
      _
    $region161: #{distilbert_classifier_forward.1} parent=1 // pred_fallthru
      _
    %v167 = vld [vmem:[%s1] sm:$0xff]
    %v168 = vld [vmem:[%s1 + $0x8] sm:$0xff]
    %v169 = vlaneseq
    %v170 = vand.u32 %v169, 127
    %171 = vset.pattern.permute.xlu0 0
    %172 = vperm.xlu0 %171, %v167
    %v173 = vpop.permute.xlu0 %172
    %174 = vset.pattern.permute.xlu0 0
    %175 = vperm.xlu0 %174, %v168
    %v176 = vpop.permute.xlu0 %175
    %vm177 = vcmp.eq.s32.totalorder %v170, %v173
    %vm178 = vcmp.eq.s32.totalorder %v170, %v176
    %v179 = vsel %vm177, 1, 0
    %v180 = vsel %vm178, 1, 0
    %v181 = vcvt.s32.f32 %v179
    %v182 = vcvt.s32.f32 %v180
    %v183 = vld [vmem:[%s5] sm:$0xff]
    %v184 = vld [vmem:[%s5 + $0x8] sm:$0xff]
    %v185 = vld [vmem:[%s5 + $0x10] sm:$0xff]
    %v186 = vld [vmem:[%s5 + $0x18] sm:$0xff]
    %v187 = vld [vmem:[%s5 + $0x20] sm:$0xff]
    %v188 = vld [vmem:[%s5 + $0x28] sm:$0xff]
    %v189 = vld [vmem:[%s5 + $0x30] sm:$0xff]
    %v190 = vld [vmem:[%s5 + $0x38] sm:$0xff]
    %v191 = vld [vmem:[%s5 + $0x40] sm:$0xff]
    %v192 = vld [vmem:[%s5 + $0x48] sm:$0xff]
    %v193 = vld [vmem:[%s5 + $0x50] sm:$0xff]
    %v194 = vld [vmem:[%s5 + $0x58] sm:$0xff]
    %v195 = vld [vmem:[%s5 + $0x60] sm:$0xff]
    %v196 = vld [vmem:[%s5 + $0x68] sm:$0xff]
    %v197 = vld [vmem:[%s5 + $0x70] sm:$0xff]
    %v198 = vld [vmem:[%s5 + $0x78] sm:$0xff]
    %v199 = vld [vmem:[%s7] sm:$0xff]
    %v200 = vld [vmem:[%s7 + $0x8] sm:$0xff]
    %201 = vmatprep.subr.mxu0 0.0
    %202 = vmatpush1.msra.mxu0 %v183
    %203 = vmatprep.subr.mxu0 0.0
    %204 = vmatpush1.msra.mxu0 %v184
    %205 = vmatprep.subr.mxu0 0.0
    %206 = vmatpush1.msra.mxu0 %v185
    %207 = vmatprep.subr.mxu0 0.0
    %208 = vmatpush1.msra.mxu0 %v186
    %209 = vmatprep.subr.mxu0 0.0
    %210 = vmatpush1.msra.mxu0 %v187
    %211 = vmatprep.subr.mxu0 0.0
    %212 = vmatpush1.msra.mxu0 %v188
    %213 = vmatprep.subr.mxu0 0.0
    %214 = vmatpush1.msra.mxu0 %v189
    %215 = vmatprep.subr.mxu0 0.0
    %216 = vmatpush1.msra.mxu0 %v190
    %217 = vmatprep.subr.mxu0 0.0
    %218 = vmatpush1.msra.mxu0 %v191
    %219 = vmatprep.subr.mxu0 0.0
    %220 = vmatpush1.msra.mxu0 %v192
    %221 = vmatprep.subr.mxu0 0.0
    %222 = vmatpush1.msra.mxu0 %v193
    %223 = vmatprep.subr.mxu0 0.0
    %224 = vmatpush1.msra.mxu0 %v194
    %225 = vmatprep.subr.mxu0 0.0
    %226 = vmatpush1.msra.mxu0 %v195
    %227 = vmatprep.subr.mxu0 0.0
    %228 = vmatpush1.msra.mxu0 %v196
    %229 = vmatprep.subr.mxu0 0.0
    %230 = vmatpush1.msra.mxu0 %v197
    %231 = vmatprep.subr.mxu0 0.0
    %232 = vmatpush1.msra.mxu0 %v198
    %233 = vmatprep.subr.mxu0 0.0
    %234 = vmatpush1.msra.mxu0 0.0
    %235 = vmatprep.subr.mxu0 0.0
    %236 = vmatpush1.msra.mxu0 0.0
    %237 = vmatprep.subr.mxu0 0.0
    %238 = vmatpush1.msra.mxu0 0.0
    %239 = vmatprep.subr.mxu0 0.0
    %240 = vmatpush1.msra.mxu0 0.0
    %241 = vmatprep.subr.mxu0 0.0
    %242 = vmatpush1.msra.mxu0 0.0
    %243 = vmatprep.subr.mxu0 0.0
    %244 = vmatpush1.msra.mxu0 0.0
    %245 = vmatprep.subr.mxu0 0.0
    %246 = vmatpush1.msra.mxu0 0.0
    %247 = vmatprep.subr.mxu0 0.0
    %248 = vmatpush1.msra.mxu0 0.0
    %249 = vmatprep.subr.mxu0 0.0
    %250 = vmatpush1.msra.mxu0 0.0
    %251 = vmatprep.subr.mxu0 0.0
    %252 = vmatpush1.msra.mxu0 0.0
    %253 = vmatprep.subr.mxu0 0.0
    %254 = vmatpush1.msra.mxu0 0.0
    %255 = vmatprep.subr.mxu0 0.0
    %256 = vmatpush1.msra.mxu0 0.0
    %257 = vmatprep.subr.mxu0 0.0
    %258 = vmatpush1.msra.mxu0 0.0
    %259 = vmatprep.subr.mxu0 0.0
    %260 = vmatpush1.msra.mxu0 0.0
    %261 = vmatprep.subr.mxu0 0.0
    %262 = vmatpush1.msra.mxu0 0.0
    %263 = vmatprep.subr.mxu0 0.0
    %264 = vmatpush1.msra.mxu0 0.0
    %265 = vmatprep.mubr.f32.mxu0 0.0
    %266 = vmatmul.mubr.f32.gmra.mrb[0].mxu0 %v181
    %v267 = vpop.f32.mrb[0].mxu0
    %v268 = vadd.f32 %v199, %v267
    %v269 = vpop.f32.mrb[0].mxu0
    %270 = vmatprep.mubr.f32.mxu0 0.0
    %271 = vmatmul.mubr.f32.gmra.mrb[0].mxu0 %v182
    %v272 = vpop.f32.mrb[0].mxu0
    %v273 = vadd.f32 %v200, %v272
    %v274 = vpop.f32.mrb[0].mxu0
    %275 = vdwg.mxu0
    %v276 = vld [vmem:[%s9] sm:$0x1]
    %v277 = vld [vmem:[%s11] sm:$0x1]
    %vm278 = vcmask 523264
    %v279 = vsel %vm278, %v268, 0.0
    %280 = vadd.xlane.f32.xlu0 %v279
    %v281 = vpop.xlane.xlu0 %280
    %v282 = vsel %vm278, %v273, 0.0
    %283 = vadd.xlane.f32.xlu0 %v282
    %v284 = vpop.xlane.xlu0 %283
    %v285 = vrcp.pop 64.0
    %v286 = vmul.f32 %v281, %v285
    %v287 = vmul.f32 %v284, %v285
    %v288 = vsub.f32 %v268, %v286
    %v289 = vsub.f32 %v273, %v287
    %v290 = vmul.f32 %v288, %v288
    %v291 = vmul.f32 %v289, %v289
    %v292 = vsel %vm278, %v290, 0.0
    %293 = vadd.xlane.f32.xlu0 %v292
    %v294 = vpop.xlane.xlu0 %293
    %v295 = vsel %vm278, %v291, 0.0
    %296 = vadd.xlane.f32.xlu0 %v295
    %v297 = vpop.xlane.xlu0 %296
    %v298 = vmul.f32 %v294, %v285
    %v299 = vmul.f32 %v297, %v285
    %v300 = vadd.f32 %v298, 1e-12
    %v301 = vadd.f32 %v299, 1e-12
    %v302 = vrsqrt.pop %v300
    %v303 = vrsqrt.pop %v301
    %v304 = vmul.f32 %v288, %v302
    %v305 = vmul.f32 %v289, %v303
    %v307 = vlaneseq
    %v308 = vshrl.u32 %v307, 7
    %v309 = vsub.s32 0, %v308
    %v310 = vrot.slane %v276, %v309
    %v312 = vmul.f32 %v304, %v310
    %v313 = vmul.f32 %v305, %v310
    %v315 = vlaneseq
    %v316 = vshrl.u32 %v315, 7
    %v317 = vsub.s32 0, %v316
    %v318 = vrot.slane %v277, %v317
    %v320 = vadd.f32 %v312, %v318
    %v321 = vadd.f32 %v313, %v318
    %v322 = vld [vmem:[%s3] sm:$0x1]
    %v323 = vld [vmem:[%s3 + $0x1] sm:$0x1]
    %v324 = vld [vmem:[%s13] sm:$0xff]
    %v325 = vld [vmem:[%s13 + $0x8] sm:$0xff]
    %v326 = vld [vmem:[%s13 + $0x10] sm:$0xff]
    %v327 = vld [vmem:[%s13 + $0x18] sm:$0xff]
    %v328 = vld [vmem:[%s13 + $0x20] sm:$0xff]
    %v329 = vld [vmem:[%s13 + $0x28] sm:$0xff]
    %v330 = vld [vmem:[%s13 + $0x30] sm:$0xff]
    %v331 = vld [vmem:[%s13 + $0x38] sm:$0xff]
    %v332 = vld [vmem:[%s15] sm:$0x1]
    %v334 = vlaneseq
    %v335 = vshrl.u32 %v334, 7
    %v336 = vsub.s32 0, %v335
    %v337 = vrot.slane %v332, %v336
    %v340 = vsel %vm278, %v320, 0
    %v343 = vsel %vm278, %v321, 0
    %345 = vmatprep.subr.mxu0 0.0
    %346 = vmatpush1.msra.mxu0 %v324
    %347 = vmatprep.subr.mxu0 0.0
    %348 = vmatpush1.msra.mxu0 %v325
    %349 = vmatprep.subr.mxu0 0.0
    %350 = vmatpush1.msra.mxu0 %v326
    %351 = vmatprep.subr.mxu0 0.0
    %352 = vmatpush1.msra.mxu0 %v327
    %353 = vmatprep.subr.mxu0 0.0
    %354 = vmatpush1.msra.mxu0 %v328
    %355 = vmatprep.subr.mxu0 0.0
    %356 = vmatpush1.msra.mxu0 %v329
    %357 = vmatprep.subr.mxu0 0.0
    %358 = vmatpush1.msra.mxu0 %v330
    %359 = vmatprep.subr.mxu0 0.0
    %360 = vmatpush1.msra.mxu0 %v331
    %361 = vmatprep.subr.mxu0 0.0
    %362 = vmatpush1.msra.mxu0 0.0
    %363 = vmatprep.subr.mxu0 0.0
    %364 = vmatpush1.msra.mxu0 0.0
    %365 = vmatprep.subr.mxu0 0.0
    %366 = vmatpush1.msra.mxu0 0.0
    %367 = vmatprep.subr.mxu0 0.0
    %368 = vmatpush1.msra.mxu0 0.0
    %369 = vmatprep.subr.mxu0 0.0
    %370 = vmatpush1.msra.mxu0 0.0
    %371 = vmatprep.subr.mxu0 0.0
    %372 = vmatpush1.msra.mxu0 0.0
    %373 = vmatprep.subr.mxu0 0.0
    %374 = vmatpush1.msra.mxu0 0.0
    %375 = vmatprep.subr.mxu0 0.0
    %376 = vmatpush1.msra.mxu0 0.0
    %377 = vmatprep.subr.mxu0 0.0
    %378 = vmatpush1.msra.mxu0 0.0
    %379 = vmatprep.subr.mxu0 0.0
    %380 = vmatpush1.msra.mxu0 0.0
    %381 = vmatprep.subr.mxu0 0.0
    %382 = vmatpush1.msra.mxu0 0.0
    %383 = vmatprep.subr.mxu0 0.0
    %384 = vmatpush1.msra.mxu0 0.0
    %385 = vmatprep.subr.mxu0 0.0
    %386 = vmatpush1.msra.mxu0 0.0
    %387 = vmatprep.subr.mxu0 0.0
    %388 = vmatpush1.msra.mxu0 0.0
    %389 = vmatprep.subr.mxu0 0.0
    %390 = vmatpush1.msra.mxu0 0.0
    %391 = vmatprep.subr.mxu0 0.0
    %392 = vmatpush1.msra.mxu0 0.0
    %393 = vmatprep.subr.mxu0 0.0
    %394 = vmatpush1.msra.mxu0 0.0
    %395 = vmatprep.subr.mxu0 0.0
    %396 = vmatpush1.msra.mxu0 0.0
    %397 = vmatprep.subr.mxu0 0.0
    %398 = vmatpush1.msra.mxu0 0.0
    %399 = vmatprep.subr.mxu0 0.0
    %400 = vmatpush1.msra.mxu0 0.0
    %401 = vmatprep.subr.mxu0 0.0
    %402 = vmatpush1.msra.mxu0 0.0
    %403 = vmatprep.subr.mxu0 0.0
    %404 = vmatpush1.msra.mxu0 0.0
    %405 = vmatprep.subr.mxu0 0.0
    %406 = vmatpush1.msra.mxu0 0.0
    %407 = vmatprep.subr.mxu0 0.0
    %408 = vmatpush1.msra.mxu0 0.0
    %409 = vmatprep.mubr.f32.mxu0 0.0
    %410 = vmatmul.mubr.f32.gmra.mrb[0].mxu0 %v340
    %v411 = vpop.f32.mrb[0].mxu0
    %v412 = vadd.f32 %v337, %v411
    %v413 = vpop.f32.mrb[0].mxu0
    %414 = vmatprep.mubr.f32.mxu0 0.0
    %415 = vmatmul.mubr.f32.gmra.mrb[0].mxu0 %v343
    %v416 = vpop.f32.mrb[0].mxu0
    %v417 = vadd.f32 %v337, %v416
    %v418 = vpop.f32.mrb[0].mxu0
    %419 = vdwg.mxu0
    %v420 = vld [vmem:[%s17] sm:$0xff]
    %v421 = vld [vmem:[%s17 + $0x8] sm:$0xff]
    %v422 = vld [vmem:[%s17 + $0x10] sm:$0xff]
    %v423 = vld [vmem:[%s17 + $0x18] sm:$0xff]
    %v424 = vld [vmem:[%s17 + $0x20] sm:$0xff]
    %v425 = vld [vmem:[%s17 + $0x28] sm:$0xff]
    %v426 = vld [vmem:[%s17 + $0x30] sm:$0xff]
    %v427 = vld [vmem:[%s17 + $0x38] sm:$0xff]
    %v428 = vld [vmem:[%s19] sm:$0x1]
    %v430 = vlaneseq
    %v431 = vshrl.u32 %v430, 7
    %v432 = vsub.s32 0, %v431
    %v433 = vrot.slane %v428, %v432
    %435 = vmatprep.subr.mxu0 0.0
    %436 = vmatpush1.msra.mxu0 %v420
    %437 = vmatprep.subr.mxu0 0.0
    %438 = vmatpush1.msra.mxu0 %v421
    %439 = vmatprep.subr.mxu0 0.0
    %440 = vmatpush1.msra.mxu0 %v422
    %441 = vmatprep.subr.mxu0 0.0
    %442 = vmatpush1.msra.mxu0 %v423
    %443 = vmatprep.subr.mxu0 0.0
    %444 = vmatpush1.msra.mxu0 %v424
    %445 = vmatprep.subr.mxu0 0.0
    %446 = vmatpush1.msra.mxu0 %v425
    %447 = vmatprep.subr.mxu0 0.0
    %448 = vmatpush1.msra.mxu0 %v426
    %449 = vmatprep.subr.mxu0 0.0
    %450 = vmatpush1.msra.mxu0 %v427
    %451 = vmatprep.subr.mxu0 0.0
    %452 = vmatpush1.msra.mxu0 0.0
    %453 = vmatprep.subr.mxu0 0.0
    %454 = vmatpush1.msra.mxu0 0.0
    %455 = vmatprep.subr.mxu0 0.0
    %456 = vmatpush1.msra.mxu0 0.0
    %457 = vmatprep.subr.mxu0 0.0
    %458 = vmatpush1.msra.mxu0 0.0
    %459 = vmatprep.subr.mxu0 0.0
    %460 = vmatpush1.msra.mxu0 0.0
    %461 = vmatprep.subr.mxu0 0.0
    %462 = vmatpush1.msra.mxu0 0.0
    %463 = vmatprep.subr.mxu0 0.0
    %464 = vmatpush1.msra.mxu0 0.0
    %465 = vmatprep.subr.mxu0 0.0
    %466 = vmatpush1.msra.mxu0 0.0
    %467 = vmatprep.subr.mxu0 0.0
    %468 = vmatpush1.msra.mxu0 0.0
    %469 = vmatprep.subr.mxu0 0.0
    %470 = vmatpush1.msra.mxu0 0.0
    %471 = vmatprep.subr.mxu0 0.0
    %472 = vmatpush1.msra.mxu0 0.0
    %473 = vmatprep.subr.mxu0 0.0
    %474 = vmatpush1.msra.mxu0 0.0
    %475 = vmatprep.subr.mxu0 0.0
    %476 = vmatpush1.msra.mxu0 0.0
    %477 = vmatprep.subr.mxu0 0.0
    %478 = vmatpush1.msra.mxu0 0.0
    %479 = vmatprep.subr.mxu0 0.0
    %480 = vmatpush1.msra.mxu0 0.0
    %481 = vmatprep.subr.mxu0 0.0
    %482 = vmatpush1.msra.mxu0 0.0
    %483 = vmatprep.subr.mxu0 0.0
    %484 = vmatpush1.msra.mxu0 0.0
    %485 = vmatprep.subr.mxu0 0.0
    %486 = vmatpush1.msra.mxu0 0.0
    %487 = vmatprep.subr.mxu0 0.0
    %488 = vmatpush1.msra.mxu0 0.0
    %489 = vmatprep.subr.mxu0 0.0
    %490 = vmatpush1.msra.mxu0 0.0
    %491 = vmatprep.subr.mxu0 0.0
    %492 = vmatpush1.msra.mxu0 0.0
    %493 = vmatprep.subr.mxu0 0.0
    %494 = vmatpush1.msra.mxu0 0.0
    %495 = vmatprep.subr.mxu0 0.0
    %496 = vmatpush1.msra.mxu0 0.0
    %497 = vmatprep.subr.mxu0 0.0
    %498 = vmatpush1.msra.mxu0 0.0
    %499 = vmatprep.mubr.f32.mxu0 0.0
    %500 = vmatmul.mubr.f32.gmra.mrb[0].mxu0 %v340
    %v501 = vpop.f32.mrb[0].mxu0
    %v502 = vadd.f32 %v433, %v501
    %v503 = vpop.f32.mrb[0].mxu0
    %504 = vmatprep.mubr.f32.mxu0 0.0
    %505 = vmatmul.mubr.f32.gmra.mrb[0].mxu0 %v343
    %v506 = vpop.f32.mrb[0].mxu0
    %v507 = vadd.f32 %v433, %v506
    %v508 = vpop.f32.mrb[0].mxu0
    %509 = vdwg.mxu0
    %v510 = vld [vmem:[%s21] sm:$0xff]
    %v511 = vld [vmem:[%s21 + $0x8] sm:$0xff]
    %v512 = vld [vmem:[%s21 + $0x10] sm:$0xff]
    %v513 = vld [vmem:[%s21 + $0x18] sm:$0xff]
    %v514 = vld [vmem:[%s21 + $0x20] sm:$0xff]
    %v515 = vld [vmem:[%s21 + $0x28] sm:$0xff]
    %v516 = vld [vmem:[%s21 + $0x30] sm:$0xff]
    %v517 = vld [vmem:[%s21 + $0x38] sm:$0xff]
    %v518 = vld [vmem:[%s23] sm:$0x1]
    %v520 = vlaneseq
    %v521 = vshrl.u32 %v520, 7
    %v522 = vsub.s32 0, %v521
    %v523 = vrot.slane %v518, %v522
    %525 = vmatprep.subr.mxu0 0.0
    %526 = vmatpush1.msra.mxu0 %v510
    %527 = vmatprep.subr.mxu0 0.0
    %528 = vmatpush1.msra.mxu0 %v511
    %529 = vmatprep.subr.mxu0 0.0
    %530 = vmatpush1.msra.mxu0 %v512
    %531 = vmatprep.subr.mxu0 0.0
    %532 = vmatpush1.msra.mxu0 %v513
    %533 = vmatprep.subr.mxu0 0.0
    %534 = vmatpush1.msra.mxu0 %v514
    %535 = vmatprep.subr.mxu0 0.0
    %536 = vmatpush1.msra.mxu0 %v515
    %537 = vmatprep.subr.mxu0 0.0
    %538 = vmatpush1.msra.mxu0 %v516
    %539 = vmatprep.subr.mxu0 0.0
    %540 = vmatpush1.msra.mxu0 %v517
    %541 = vmatprep.subr.mxu0 0.0
    %542 = vmatpush1.msra.mxu0 0.0
    %543 = vmatprep.subr.mxu0 0.0
    %544 = vmatpush1.msra.mxu0 0.0
    %545 = vmatprep.subr.mxu0 0.0
    %546 = vmatpush1.msra.mxu0 0.0
    %547 = vmatprep.subr.mxu0 0.0
    %548 = vmatpush1.msra.mxu0 0.0
    %549 = vmatprep.subr.mxu0 0.0
    %550 = vmatpush1.msra.mxu0 0.0
    %551 = vmatprep.subr.mxu0 0.0
    %552 = vmatpush1.msra.mxu0 0.0
    %553 = vmatprep.subr.mxu0 0.0
    %554 = vmatpush1.msra.mxu0 0.0
    %555 = vmatprep.subr.mxu0 0.0
    %556 = vmatpush1.msra.mxu0 0.0
    %557 = vmatprep.subr.mxu0 0.0
    %558 = vmatpush1.msra.mxu0 0.0
    %559 = vmatprep.subr.mxu0 0.0
    %560 = vmatpush1.msra.mxu0 0.0
    %561 = vmatprep.subr.mxu0 0.0
    %562 = vmatpush1.msra.mxu0 0.0
    %563 = vmatprep.subr.mxu0 0.0
    %564 = vmatpush1.msra.mxu0 0.0
    %565 = vmatprep.subr.mxu0 0.0
    %566 = vmatpush1.msra.mxu0 0.0
    %567 = vmatprep.subr.mxu0 0.0
    %568 = vmatpush1.msra.mxu0 0.0
    %569 = vmatprep.subr.mxu0 0.0
    %570 = vmatpush1.msra.mxu0 0.0
    %571 = vmatprep.subr.mxu0 0.0
    %572 = vmatpush1.msra.mxu0 0.0
    %573 = vmatprep.subr.mxu0 0.0
    %574 = vmatpush1.msra.mxu0 0.0
    %575 = vmatprep.subr.mxu0 0.0
    %576 = vmatpush1.msra.mxu0 0.0
    %577 = vmatprep.subr.mxu0 0.0
    %578 = vmatpush1.msra.mxu0 0.0
    %579 = vmatprep.subr.mxu0 0.0
    %580 = vmatpush1.msra.mxu0 0.0
    %581 = vmatprep.subr.mxu0 0.0
    %582 = vmatpush1.msra.mxu0 0.0
    %583 = vmatprep.subr.mxu0 0.0
    %584 = vmatpush1.msra.mxu0 0.0
    %585 = vmatprep.subr.mxu0 0.0
    %586 = vmatpush1.msra.mxu0 0.0
    %587 = vmatprep.subr.mxu0 0.0
    %588 = vmatpush1.msra.mxu0 0.0
    %589 = vmatprep.mubr.f32.mxu0 0.0
    %590 = vmatmul.mubr.f32.gmra.mrb[0].mxu0 %v340
    %v591 = vpop.f32.mrb[0].mxu0
    %v592 = vadd.f32 %v523, %v591
    %v593 = vpop.f32.mrb[0].mxu0
    %594 = vmatprep.mubr.f32.mxu0 0.0
    %595 = vmatmul.mubr.f32.gmra.mrb[0].mxu0 %v343
    %v596 = vpop.f32.mrb[0].mxu0
    %v597 = vadd.f32 %v523, %v596
    %v598 = vpop.f32.mrb[0].mxu0
    %599 = vdwg.mxu0
    %vm600 = vcmask 130048
    %v602 = vsel %vm600, %v412, 0
    %v605 = vsel %vm600, %v502, 0
    %607 = vmatprep.subr.mxu0 0.0
    %608 = vmatpush1.xpose.msra.mxu0 %v605
    %609 = vmatprep.subr.mxu0 0.0
    %610 = vmatpush1.xpose.msra.mxu0 0.0
    %611 = vmatprep.subr.mxu0 0.0
    %612 = vmatpush1.xpose.msra.mxu0 0.0
    %613 = vmatprep.subr.mxu0 0.0
    %614 = vmatpush1.xpose.msra.mxu0 0.0
    %615 = vmatprep.subr.mxu0 0.0
    %616 = vmatpush1.xpose.msra.mxu0 0.0
    %617 = vmatprep.subr.mxu0 0.0
    %618 = vmatpush1.xpose.msra.mxu0 0.0
    %619 = vmatprep.subr.mxu0 0.0
    %620 = vmatpush1.xpose.msra.mxu0 0.0
    %621 = vmatprep.subr.mxu0 0.0
    %622 = vmatpush1.xpose.msra.mxu0 0.0
    %623 = vmatprep.subr.mxu0 0.0
    %624 = vmatpush1.xpose.msra.mxu0 0.0
    %625 = vmatprep.subr.mxu0 0.0
    %626 = vmatpush1.xpose.msra.mxu0 0.0
    %627 = vmatprep.subr.mxu0 0.0
    %628 = vmatpush1.xpose.msra.mxu0 0.0
    %629 = vmatprep.subr.mxu0 0.0
    %630 = vmatpush1.xpose.msra.mxu0 0.0
    %631 = vmatprep.subr.mxu0 0.0
    %632 = vmatpush1.xpose.msra.mxu0 0.0
    %633 = vmatprep.subr.mxu0 0.0
    %634 = vmatpush1.xpose.msra.mxu0 0.0
    %635 = vmatprep.subr.mxu0 0.0
    %636 = vmatpush1.xpose.msra.mxu0 0.0
    %637 = vmatprep.subr.mxu0 0.0
    %638 = vmatpush1.xpose.msra.mxu0 0.0
    %639 = vmatprep.subr.mxu0 0.0
    %640 = vmatpush1.xpose.msra.mxu0 0.0
    %641 = vmatprep.subr.mxu0 0.0
    %642 = vmatpush1.xpose.msra.mxu0 0.0
    %643 = vmatprep.subr.mxu0 0.0
    %644 = vmatpush1.xpose.msra.mxu0 0.0
    %645 = vmatprep.subr.mxu0 0.0
    %646 = vmatpush1.xpose.msra.mxu0 0.0
    %647 = vmatprep.subr.mxu0 0.0
    %648 = vmatpush1.xpose.msra.mxu0 0.0
    %649 = vmatprep.subr.mxu0 0.0
    %650 = vmatpush1.xpose.msra.mxu0 0.0
    %651 = vmatprep.subr.mxu0 0.0
    %652 = vmatpush1.xpose.msra.mxu0 0.0
    %653 = vmatprep.subr.mxu0 0.0
    %654 = vmatpush1.xpose.msra.mxu0 0.0
    %655 = vmatprep.subr.mxu0 0.0
    %656 = vmatpush1.xpose.msra.mxu0 0.0
    %657 = vmatprep.subr.mxu0 0.0
    %658 = vmatpush1.xpose.msra.mxu0 0.0
    %659 = vmatprep.subr.mxu0 0.0
    %660 = vmatpush1.xpose.msra.mxu0 0.0
    %661 = vmatprep.subr.mxu0 0.0
    %662 = vmatpush1.xpose.msra.mxu0 0.0
    %663 = vmatprep.subr.mxu0 0.0
    %664 = vmatpush1.xpose.msra.mxu0 0.0
    %665 = vmatprep.subr.mxu0 0.0
    %666 = vmatpush1.xpose.msra.mxu0 0.0
    %667 = vmatprep.subr.mxu0 0.0
    %668 = vmatpush1.xpose.msra.mxu0 0.0
    %669 = vmatprep.subr.mxu0 0.0
    %670 = vmatpush1.xpose.msra.mxu0 0.0
    %671 = vmatprep.mubr.f32.mxu0 0.0
    %672 = vmatmul.mubr.f32.gmra.mrb[0].mxu0 %v602
    %v673 = vpop.f32.mrb[0].mxu0
    %v674 = vadd.f32 0.0, %v673
    %v675 = vpop.f32.mrb[0].mxu0
    %676 = vdwg.mxu0
    %v678 = vsel %vm600, %v417, 0
    %v681 = vsel %vm600, %v507, 0
    %683 = vmatprep.subr.mxu0 0.0
    %684 = vmatpush1.xpose.msra.mxu0 %v681
    %685 = vmatprep.subr.mxu0 0.0
    %686 = vmatpush1.xpose.msra.mxu0 0.0
    %687 = vmatprep.subr.mxu0 0.0
    %688 = vmatpush1.xpose.msra.mxu0 0.0
    %689 = vmatprep.subr.mxu0 0.0
    %690 = vmatpush1.xpose.msra.mxu0 0.0
    %691 = vmatprep.subr.mxu0 0.0
    %692 = vmatpush1.xpose.msra.mxu0 0.0
    %693 = vmatprep.subr.mxu0 0.0
    %694 = vmatpush1.xpose.msra.mxu0 0.0
    %695 = vmatprep.subr.mxu0 0.0
    %696 = vmatpush1.xpose.msra.mxu0 0.0
    %697 = vmatprep.subr.mxu0 0.0
    %698 = vmatpush1.xpose.msra.mxu0 0.0
    %699 = vmatprep.subr.mxu0 0.0
    %700 = vmatpush1.xpose.msra.mxu0 0.0
    %701 = vmatprep.subr.mxu0 0.0
    %702 = vmatpush1.xpose.msra.mxu0 0.0
    %703 = vmatprep.subr.mxu0 0.0
    %704 = vmatpush1.xpose.msra.mxu0 0.0
    %705 = vmatprep.subr.mxu0 0.0
    %706 = vmatpush1.xpose.msra.mxu0 0.0
    %707 = vmatprep.subr.mxu0 0.0
    %708 = vmatpush1.xpose.msra.mxu0 0.0
    %709 = vmatprep.subr.mxu0 0.0
    %710 = vmatpush1.xpose.msra.mxu0 0.0
    %711 = vmatprep.subr.mxu0 0.0
    %712 = vmatpush1.xpose.msra.mxu0 0.0
    %713 = vmatprep.subr.mxu0 0.0
    %714 = vmatpush1.xpose.msra.mxu0 0.0
    %715 = vmatprep.subr.mxu0 0.0
    %716 = vmatpush1.xpose.msra.mxu0 0.0
    %717 = vmatprep.subr.mxu0 0.0
    %718 = vmatpush1.xpose.msra.mxu0 0.0
    %719 = vmatprep.subr.mxu0 0.0
    %720 = vmatpush1.xpose.msra.mxu0 0.0
    %721 = vmatprep.subr.mxu0 0.0
    %722 = vmatpush1.xpose.msra.mxu0 0.0
    %723 = vmatprep.subr.mxu0 0.0
    %724 = vmatpush1.xpose.msra.mxu0 0.0
    %725 = vmatprep.subr.mxu0 0.0
    %726 = vmatpush1.xpose.msra.mxu0 0.0
    %727 = vmatprep.subr.mxu0 0.0
    %728 = vmatpush1.xpose.msra.mxu0 0.0
    %729 = vmatprep.subr.mxu0 0.0
    %730 = vmatpush1.xpose.msra.mxu0 0.0
    %731 = vmatprep.subr.mxu0 0.0
    %732 = vmatpush1.xpose.msra.mxu0 0.0
    %733 = vmatprep.subr.mxu0 0.0
    %734 = vmatpush1.xpose.msra.mxu0 0.0
    %735 = vmatprep.subr.mxu0 0.0
    %736 = vmatpush1.xpose.msra.mxu0 0.0
    %737 = vmatprep.subr.mxu0 0.0
    %738 = vmatpush1.xpose.msra.mxu0 0.0
    %739 = vmatprep.subr.mxu0 0.0
    %740 = vmatpush1.xpose.msra.mxu0 0.0
    %741 = vmatprep.subr.mxu0 0.0
    %742 = vmatpush1.xpose.msra.mxu0 0.0
    %743 = vmatprep.subr.mxu0 0.0
    %744 = vmatpush1.xpose.msra.mxu0 0.0
    %745 = vmatprep.subr.mxu0 0.0
    %746 = vmatpush1.xpose.msra.mxu0 0.0
    %747 = vmatprep.mubr.f32.mxu0 0.0
    %748 = vmatmul.mubr.f32.gmra.mrb[0].mxu0 %v678
    %v749 = vpop.f32.mrb[0].mxu0
    %v750 = vadd.f32 0.0, %v749
    %v751 = vpop.f32.mrb[0].mxu0
    %752 = vdwg.mxu0
    %v753 = vmul.f32 %v674, 0.25
    %v754 = vmul.f32 %v750, 0.25
    %v757 = vlaneseq
    %v758 = vshrl.u32 %v757, 7
    %v759 = vsub.s32 0, %v758
    %v760 = vrot.slane %v322, %v759
    %v761 = vlaneseq
    %v762 = vshrl.u32 %v761, 7
    %v763 = vsub.s32 0, %v762
    %v764 = vrot.slane %v323, %v763
    %v767 = vadd.f32 %v753, %v760
    %v768 = vadd.f32 %v754, %v764
    %vm769 = vcmask 64512
    %v770 = vsel %vm769, %v767, -inf
    %771 = vmax.xlane.f32.xlu0 %v770
    %v772 = vpop.xlane.xlu0 %771
    %v773 = vsel %vm769, %v768, -inf
    %774 = vmax.xlane.f32.xlu0 %v773
    %v775 = vpop.xlane.xlu0 %774
    %v776 = vsub.f32 %v767, %v772
    %v777 = vsub.f32 %v768, %v775
    %v778 = vmul.f32 %v776, 1.442695
    %v779 = vpow.pop %v778
    %v780 = vmul.f32 %v777, 1.442695
    %v781 = vpow.pop %v780
    %v782 = vsel %vm769, %v779, 0.0
    %783 = vadd.xlane.f32.xlu0 %v782
    %v784 = vpop.xlane.xlu0 %783
    %v785 = vsel %vm769, %v781, 0.0
    %786 = vadd.xlane.f32.xlu0 %v785
    %v787 = vpop.xlane.xlu0 %786
    %v788 = vrcp.pop %v784
    %v789 = vrcp.pop %v787
    %v790 = vmul.f32 %v779, %v788
    %v791 = vmul.f32 %v781, %v789
    %v793 = vsel %vm769, %v790, 0
    %795 = vmatprep.subr.mxu0 0.0
    %796 = vmatpush1.msra.mxu0 %v592
    %797 = vmatprep.subr.mxu0 0.0
    %798 = vmatpush1.msra.mxu0 0.0
    %799 = vmatprep.subr.mxu0 0.0
    %800 = vmatpush1.msra.mxu0 0.0
    %801 = vmatprep.subr.mxu0 0.0
    %802 = vmatpush1.msra.mxu0 0.0
    %803 = vmatprep.subr.mxu0 0.0
    %804 = vmatpush1.msra.mxu0 0.0
    %805 = vmatprep.subr.mxu0 0.0
    %806 = vmatpush1.msra.mxu0 0.0
    %807 = vmatprep.subr.mxu0 0.0
    %808 = vmatpush1.msra.mxu0 0.0
    %809 = vmatprep.subr.mxu0 0.0
    %810 = vmatpush1.msra.mxu0 0.0
    %811 = vmatprep.subr.mxu0 0.0
    %812 = vmatpush1.msra.mxu0 0.0
    %813 = vmatprep.subr.mxu0 0.0
    %814 = vmatpush1.msra.mxu0 0.0
    %815 = vmatprep.subr.mxu0 0.0
    %816 = vmatpush1.msra.mxu0 0.0
    %817 = vmatprep.subr.mxu0 0.0
    %818 = vmatpush1.msra.mxu0 0.0
    %819 = vmatprep.subr.mxu0 0.0
    %820 = vmatpush1.msra.mxu0 0.0
    %821 = vmatprep.subr.mxu0 0.0
    %822 = vmatpush1.msra.mxu0 0.0
    %823 = vmatprep.subr.mxu0 0.0
    %824 = vmatpush1.msra.mxu0 0.0
    %825 = vmatprep.subr.mxu0 0.0
    %826 = vmatpush1.msra.mxu0 0.0
    %827 = vmatprep.subr.mxu0 0.0
    %828 = vmatpush1.msra.mxu0 0.0
    %829 = vmatprep.subr.mxu0 0.0
    %830 = vmatpush1.msra.mxu0 0.0
    %831 = vmatprep.subr.mxu0 0.0
    %832 = vmatpush1.msra.mxu0 0.0
    %833 = vmatprep.subr.mxu0 0.0
    %834 = vmatpush1.msra.mxu0 0.0
    %835 = vmatprep.subr.mxu0 0.0
    %836 = vmatpush1.msra.mxu0 0.0
    %837 = vmatprep.subr.mxu0 0.0
    %838 = vmatpush1.msra.mxu0 0.0
    %839 = vmatprep.subr.mxu0 0.0
    %840 = vmatpush1.msra.mxu0 0.0
    %841 = vmatprep.subr.mxu0 0.0
    %842 = vmatpush1.msra.mxu0 0.0
    %843 = vmatprep.subr.mxu0 0.0
    %844 = vmatpush1.msra.mxu0 0.0
    %845 = vmatprep.subr.mxu0 0.0
    %846 = vmatpush1.msra.mxu0 0.0
    %847 = vmatprep.subr.mxu0 0.0
    %848 = vmatpush1.msra.mxu0 0.0
    %849 = vmatprep.subr.mxu0 0.0
    %850 = vmatpush1.msra.mxu0 0.0
    %851 = vmatprep.subr.mxu0 0.0
    %852 = vmatpush1.msra.mxu0 0.0
    %853 = vmatprep.subr.mxu0 0.0
    %854 = vmatpush1.msra.mxu0 0.0
    %855 = vmatprep.subr.mxu0 0.0
    %856 = vmatpush1.msra.mxu0 0.0
    %857 = vmatprep.subr.mxu0 0.0
    %858 = vmatpush1.msra.mxu0 0.0
    %859 = vmatprep.mubr.f32.mxu0 0.0
    %860 = vmatmul.mubr.f32.gmra.mrb[0].mxu0 %v793
    %v861 = vpop.f32.mrb[0].mxu0
    %v862 = vadd.f32 0.0, %v861
    %v863 = vpop.f32.mrb[0].mxu0
    %864 = vdwg.mxu0
    %v866 = vsel %vm769, %v791, 0
    %868 = vmatprep.subr.mxu0 0.0
    %869 = vmatpush1.msra.mxu0 %v597
    %870 = vmatprep.subr.mxu0 0.0
    %871 = vmatpush1.msra.mxu0 0.0
    %872 = vmatprep.subr.mxu0 0.0
    %873 = vmatpush1.msra.mxu0 0.0
    %874 = vmatprep.subr.mxu0 0.0
    %875 = vmatpush1.msra.mxu0 0.0
    %876 = vmatprep.subr.mxu0 0.0
    %877 = vmatpush1.msra.mxu0 0.0
    %878 = vmatprep.subr.mxu0 0.0
    %879 = vmatpush1.msra.mxu0 0.0
    %880 = vmatprep.subr.mxu0 0.0
    %881 = vmatpush1.msra.mxu0 0.0
    %882 = vmatprep.subr.mxu0 0.0
    %883 = vmatpush1.msra.mxu0 0.0
    %884 = vmatprep.subr.mxu0 0.0
    %885 = vmatpush1.msra.mxu0 0.0
    %886 = vmatprep.subr.mxu0 0.0
    %887 = vmatpush1.msra.mxu0 0.0
    %888 = vmatprep.subr.mxu0 0.0
    %889 = vmatpush1.msra.mxu0 0.0
    %890 = vmatprep.subr.mxu0 0.0
    %891 = vmatpush1.msra.mxu0 0.0
    %892 = vmatprep.subr.mxu0 0.0
    %893 = vmatpush1.msra.mxu0 0.0
    %894 = vmatprep.subr.mxu0 0.0
    %895 = vmatpush1.msra.mxu0 0.0
    %896 = vmatprep.subr.mxu0 0.0
    %897 = vmatpush1.msra.mxu0 0.0
    %898 = vmatprep.subr.mxu0 0.0
    %899 = vmatpush1.msra.mxu0 0.0
    %900 = vmatprep.subr.mxu0 0.0
    %901 = vmatpush1.msra.mxu0 0.0
    %902 = vmatprep.subr.mxu0 0.0
    %903 = vmatpush1.msra.mxu0 0.0
    %904 = vmatprep.subr.mxu0 0.0
    %905 = vmatpush1.msra.mxu0 0.0
    %906 = vmatprep.subr.mxu0 0.0
    %907 = vmatpush1.msra.mxu0 0.0
    %908 = vmatprep.subr.mxu0 0.0
    %909 = vmatpush1.msra.mxu0 0.0
    %910 = vmatprep.subr.mxu0 0.0
    %911 = vmatpush1.msra.mxu0 0.0
    %912 = vmatprep.subr.mxu0 0.0
    %913 = vmatpush1.msra.mxu0 0.0
    %914 = vmatprep.subr.mxu0 0.0
    %915 = vmatpush1.msra.mxu0 0.0
    %916 = vmatprep.subr.mxu0 0.0
    %917 = vmatpush1.msra.mxu0 0.0
    %918 = vmatprep.subr.mxu0 0.0
    %919 = vmatpush1.msra.mxu0 0.0
    %920 = vmatprep.subr.mxu0 0.0
    %921 = vmatpush1.msra.mxu0 0.0
    %922 = vmatprep.subr.mxu0 0.0
    %923 = vmatpush1.msra.mxu0 0.0
    %924 = vmatprep.subr.mxu0 0.0
    %925 = vmatpush1.msra.mxu0 0.0
    %926 = vmatprep.subr.mxu0 0.0
    %927 = vmatpush1.msra.mxu0 0.0
    %928 = vmatprep.subr.mxu0 0.0
    %929 = vmatpush1.msra.mxu0 0.0
    %930 = vmatprep.subr.mxu0 0.0
    %931 = vmatpush1.msra.mxu0 0.0
    %932 = vmatprep.mubr.f32.mxu0 0.0
    %933 = vmatmul.mubr.f32.gmra.mrb[0].mxu0 %v866
    %v934 = vpop.f32.mrb[0].mxu0
    %v935 = vadd.f32 0.0, %v934
    %v936 = vpop.f32.mrb[0].mxu0
    %937 = vdwg.mxu0
    %v938 = vld [vmem:[%s25] sm:$0xff]
    %v939 = vld [vmem:[%s25 + $0x8] sm:$0xff]
    %s940 = scalar_lea.vmem %s13, 64
    %v941 = vld [vmem:[%s940] sm:$0xff]
    %v942 = vld [vmem:[%s940 + $0x8] sm:$0xff]
    %v943 = vld [vmem:[%s940 + $0x10] sm:$0xff]
    %v944 = vld [vmem:[%s940 + $0x18] sm:$0xff]
    %v945 = vld [vmem:[%s940 + $0x20] sm:$0xff]
    %v946 = vld [vmem:[%s940 + $0x28] sm:$0xff]
    %v947 = vld [vmem:[%s940 + $0x30] sm:$0xff]
    %v948 = vld [vmem:[%s940 + $0x38] sm:$0xff]
    %s949 = scalar_lea.vmem %s15, 1
    %v950 = vld [vmem:[%s949] sm:$0x1]
    %v952 = vlaneseq
    %v953 = vshrl.u32 %v952, 7
    %v954 = vsub.s32 0, %v953
    %v955 = vrot.slane %v950, %v954
    %957 = vmatprep.subr.mxu0 0.0
    %958 = vmatpush1.msra.mxu0 %v941
    %959 = vmatprep.subr.mxu0 0.0
    %960 = vmatpush1.msra.mxu0 %v942
    %961 = vmatprep.subr.mxu0 0.0
    %962 = vmatpush1.msra.mxu0 %v943
    %963 = vmatprep.subr.mxu0 0.0
    %964 = vmatpush1.msra.mxu0 %v944
    %965 = vmatprep.subr.mxu0 0.0
    %966 = vmatpush1.msra.mxu0 %v945
    %967 = vmatprep.subr.mxu0 0.0
    %968 = vmatpush1.msra.mxu0 %v946
    %969 = vmatprep.subr.mxu0 0.0
    %970 = vmatpush1.msra.mxu0 %v947
    %971 = vmatprep.subr.mxu0 0.0
    %972 = vmatpush1.msra.mxu0 %v948
    %973 = vmatprep.subr.mxu0 0.0
    %974 = vmatpush1.msra.mxu0 0.0
    %975 = vmatprep.subr.mxu0 0.0
    %976 = vmatpush1.msra.mxu0 0.0
    %977 = vmatprep.subr.mxu0 0.0
    %978 = vmatpush1.msra.mxu0 0.0
    %979 = vmatprep.subr.mxu0 0.0
    %980 = vmatpush1.msra.mxu0 0.0
    %981 = vmatprep.subr.mxu0 0.0
    %982 = vmatpush1.msra.mxu0 0.0
    %983 = vmatprep.subr.mxu0 0.0
    %984 = vmatpush1.msra.mxu0 0.0
    %985 = vmatprep.subr.mxu0 0.0
    %986 = vmatpush1.msra.mxu0 0.0
    %987 = vmatprep.subr.mxu0 0.0
    %988 = vmatpush1.msra.mxu0 0.0
    %989 = vmatprep.subr.mxu0 0.0
    %990 = vmatpush1.msra.mxu0 0.0
    %991 = vmatprep.subr.mxu0 0.0
    %992 = vmatpush1.msra.mxu0 0.0
    %993 = vmatprep.subr.mxu0 0.0
    %994 = vmatpush1.msra.mxu0 0.0
    %995 = vmatprep.subr.mxu0 0.0
    %996 = vmatpush1.msra.mxu0 0.0
    %997 = vmatprep.subr.mxu0 0.0
    %998 = vmatpush1.msra.mxu0 0.0
    %999 = vmatprep.subr.mxu0 0.0
    %1000 = vmatpush1.msra.mxu0 0.0
    %1001 = vmatprep.subr.mxu0 0.0
    %1002 = vmatpush1.msra.mxu0 0.0
    %1003 = vmatprep.subr.mxu0 0.0
    %1004 = vmatpush1.msra.mxu0 0.0
    %1005 = vmatprep.subr.mxu0 0.0
    %1006 = vmatpush1.msra.mxu0 0.0
    %1007 = vmatprep.subr.mxu0 0.0
    %1008 = vmatpush1.msra.mxu0 0.0
    %1009 = vmatprep.subr.mxu0 0.0
    %1010 = vmatpush1.msra.mxu0 0.0
    %1011 = vmatprep.subr.mxu0 0.0
    %1012 = vmatpush1.msra.mxu0 0.0
    %1013 = vmatprep.subr.mxu0 0.0
    %1014 = vmatpush1.msra.mxu0 0.0
    %1015 = vmatprep.subr.mxu0 0.0
    %1016 = vmatpush1.msra.mxu0 0.0
    %1017 = vmatprep.subr.mxu0 0.0
    %1018 = vmatpush1.msra.mxu0 0.0
    %1019 = vmatprep.subr.mxu0 0.0
    %1020 = vmatpush1.msra.mxu0 0.0
    %1021 = vmatprep.mubr.f32.mxu0 0.0
    %1022 = vmatmul.mubr.f32.gmra.mrb[0].mxu0 %v340
    %v1023 = vpop.f32.mrb[0].mxu0
    %v1024 = vadd.f32 %v955, %v1023
    %v1025 = vpop.f32.mrb[0].mxu0
    %1026 = vmatprep.mubr.f32.mxu0 0.0
    %1027 = vmatmul.mubr.f32.gmra.mrb[0].mxu0 %v343
    %v1028 = vpop.f32.mrb[0].mxu0
    %v1029 = vadd.f32 %v955, %v1028
    %v1030 = vpop.f32.mrb[0].mxu0
    %1031 = vdwg.mxu0
    %s1032 = scalar_lea.vmem %s17, 64
    %v1033 = vld [vmem:[%s1032] sm:$0xff]
    %v1034 = vld [vmem:[%s1032 + $0x8] sm:$0xff]
    %v1035 = vld [vmem:[%s1032 + $0x10] sm:$0xff]
    %v1036 = vld [vmem:[%s1032 + $0x18] sm:$0xff]
    %v1037 = vld [vmem:[%s1032 + $0x20] sm:$0xff]
    %v1038 = vld [vmem:[%s1032 + $0x28] sm:$0xff]
    %v1039 = vld [vmem:[%s1032 + $0x30] sm:$0xff]
    %v1040 = vld [vmem:[%s1032 + $0x38] sm:$0xff]
    %s1041 = scalar_lea.vmem %s19, 1
    %v1042 = vld [vmem:[%s1041] sm:$0x1]
    %v1044 = vlaneseq
    %v1045 = vshrl.u32 %v1044, 7
    %v1046 = vsub.s32 0, %v1045
    %v1047 = vrot.slane %v1042, %v1046
    %1049 = vmatprep.subr.mxu0 0.0
    %1050 = vmatpush1.msra.mxu0 %v1033
    %1051 = vmatprep.subr.mxu0 0.0
    %1052 = vmatpush1.msra.mxu0 %v1034
    %1053 = vmatprep.subr.mxu0 0.0
    %1054 = vmatpush1.msra.mxu0 %v1035
    %1055 = vmatprep.subr.mxu0 0.0
    %1056 = vmatpush1.msra.mxu0 %v1036
    %1057 = vmatprep.subr.mxu0 0.0
    %1058 = vmatpush1.msra.mxu0 %v1037
    %1059 = vmatprep.subr.mxu0 0.0
    %1060 = vmatpush1.msra.mxu0 %v1038
    %1061 = vmatprep.subr.mxu0 0.0
    %1062 = vmatpush1.msra.mxu0 %v1039
    %1063 = vmatprep.subr.mxu0 0.0
    %1064 = vmatpush1.msra.mxu0 %v1040
    %1065 = vmatprep.subr.mxu0 0.0
    %1066 = vmatpush1.msra.mxu0 0.0
    %1067 = vmatprep.subr.mxu0 0.0
    %1068 = vmatpush1.msra.mxu0 0.0
    %1069 = vmatprep.subr.mxu0 0.0
    %1070 = vmatpush1.msra.mxu0 0.0
    %1071 = vmatprep.subr.mxu0 0.0
    %1072 = vmatpush1.msra.mxu0 0.0
    %1073 = vmatprep.subr.mxu0 0.0
    %1074 = vmatpush1.msra.mxu0 0.0
    %1075 = vmatprep.subr.mxu0 0.0
    %1076 = vmatpush1.msra.mxu0 0.0
    %1077 = vmatprep.subr.mxu0 0.0
    %1078 = vmatpush1.msra.mxu0 0.0
    %1079 = vmatprep.subr.mxu0 0.0
    %1080 = vmatpush1.msra.mxu0 0.0
    %1081 = vmatprep.subr.mxu0 0.0
    %1082 = vmatpush1.msra.mxu0 0.0
    %1083 = vmatprep.subr.mxu0 0.0
    %1084 = vmatpush1.msra.mxu0 0.0
    %1085 = vmatprep.subr.mxu0 0.0
    %1086 = vmatpush1.msra.mxu0 0.0
    %1087 = vmatprep.subr.mxu0 0.0
    %1088 = vmatpush1.msra.mxu0 0.0
    %1089 = vmatprep.subr.mxu0 0.0
    %1090 = vmatpush1.msra.mxu0 0.0
    %1091 = vmatprep.subr.mxu0 0.0
    %1092 = vmatpush1.msra.mxu0 0.0
    %1093 = vmatprep.subr.mxu0 0.0
    %1094 = vmatpush1.msra.mxu0 0.0
    %1095 = vmatprep.subr.mxu0 0.0
    %1096 = vmatpush1.msra.mxu0 0.0
    %1097 = vmatprep.subr.mxu0 0.0
    %1098 = vmatpush1.msra.mxu0 0.0
    %1099 = vmatprep.subr.mxu0 0.0
    %1100 = vmatpush1.msra.mxu0 0.0
    %1101 = vmatprep.subr.mxu0 0.0
    %1102 = vmatpush1.msra.mxu0 0.0
    %1103 = vmatprep.subr.mxu0 0.0
    %1104 = vmatpush1.msra.mxu0 0.0
    %1105 = vmatprep.subr.mxu0 0.0
    %1106 = vmatpush1.msra.mxu0 0.0
    %1107 = vmatprep.subr.mxu0 0.0
    %1108 = vmatpush1.msra.mxu0 0.0
    %1109 = vmatprep.subr.mxu0 0.0
    %1110 = vmatpush1.msra.mxu0 0.0
    %1111 = vmatprep.subr.mxu0 0.0
    %1112 = vmatpush1.msra.mxu0 0.0
    %1113 = vmatprep.mubr.f32.mxu0 0.0
    %1114 = vmatmul.mubr.f32.gmra.mrb[0].mxu0 %v340
    %v1115 = vpop.f32.mrb[0].mxu0
    %v1116 = vadd.f32 %v1047, %v1115
    %v1117 = vpop.f32.mrb[0].mxu0
    %1118 = vmatprep.mubr.f32.mxu0 0.0
    %1119 = vmatmul.mubr.f32.gmra.mrb[0].mxu0 %v343
    %v1120 = vpop.f32.mrb[0].mxu0
    %v1121 = vadd.f32 %v1047, %v1120
    %v1122 = vpop.f32.mrb[0].mxu0
    %1123 = vdwg.mxu0
    %s1124 = scalar_lea.vmem %s21, 64
    %v1125 = vld [vmem:[%s1124] sm:$0xff]
    %v1126 = vld [vmem:[%s1124 + $0x8] sm:$0xff]
    %v1127 = vld [vmem:[%s1124 + $0x10] sm:$0xff]
    %v1128 = vld [vmem:[%s1124 + $0x18] sm:$0xff]
    %v1129 = vld [vmem:[%s1124 + $0x20] sm:$0xff]
    %v1130 = vld [vmem:[%s1124 + $0x28] sm:$0xff]
    %v1131 = vld [vmem:[%s1124 + $0x30] sm:$0xff]
    %v1132 = vld [vmem:[%s1124 + $0x38] sm:$0xff]
    %s1133 = scalar_lea.vmem %s23, 1
    %v1134 = vld [vmem:[%s1133] sm:$0x1]
    %v1136 = vlaneseq
    %v1137 = vshrl.u32 %v1136, 7
    %v1138 = vsub.s32 0, %v1137
    %v1139 = vrot.slane %v1134, %v1138
    %1141 = vmatprep.subr.mxu0 0.0
    %1142 = vmatpush1.msra.mxu0 %v1125
    %1143 = vmatprep.subr.mxu0 0.0
    %1144 = vmatpush1.msra.mxu0 %v1126
    %1145 = vmatprep.subr.mxu0 0.0
    %1146 = vmatpush1.msra.mxu0 %v1127
    %1147 = vmatprep.subr.mxu0 0.0
    %1148 = vmatpush1.msra.mxu0 %v1128
    %1149 = vmatprep.subr.mxu0 0.0
    %1150 = vmatpush1.msra.mxu0 %v1129
    %1151 = vmatprep.subr.mxu0 0.0
    %1152 = vmatpush1.msra.mxu0 %v1130
    %1153 = vmatprep.subr.mxu0 0.0
    %1154 = vmatpush1.msra.mxu0 %v1131
    %1155 = vmatprep.subr.mxu0 0.0
    %1156 = vmatpush1.msra.mxu0 %v1132
    %1157 = vmatprep.subr.mxu0 0.0
    %1158 = vmatpush1.msra.mxu0 0.0
    %1159 = vmatprep.subr.mxu0 0.0
    %1160 = vmatpush1.msra.mxu0 0.0
    %1161 = vmatprep.subr.mxu0 0.0
    %1162 = vmatpush1.msra.mxu0 0.0
    %1163 = vmatprep.subr.mxu0 0.0
    %1164 = vmatpush1.msra.mxu0 0.0
    %1165 = vmatprep.subr.mxu0 0.0
    %1166 = vmatpush1.msra.mxu0 0.0
    %1167 = vmatprep.subr.mxu0 0.0
    %1168 = vmatpush1.msra.mxu0 0.0
    %1169 = vmatprep.subr.mxu0 0.0
    %1170 = vmatpush1.msra.mxu0 0.0
    %1171 = vmatprep.subr.mxu0 0.0
    %1172 = vmatpush1.msra.mxu0 0.0
    %1173 = vmatprep.subr.mxu0 0.0
    %1174 = vmatpush1.msra.mxu0 0.0
    %1175 = vmatprep.subr.mxu0 0.0
    %1176 = vmatpush1.msra.mxu0 0.0
    %1177 = vmatprep.subr.mxu0 0.0
    %1178 = vmatpush1.msra.mxu0 0.0
    %1179 = vmatprep.subr.mxu0 0.0
    %1180 = vmatpush1.msra.mxu0 0.0
    %1181 = vmatprep.subr.mxu0 0.0
    %1182 = vmatpush1.msra.mxu0 0.0
    %1183 = vmatprep.subr.mxu0 0.0
    %1184 = vmatpush1.msra.mxu0 0.0
    %1185 = vmatprep.subr.mxu0 0.0
    %1186 = vmatpush1.msra.mxu0 0.0
    %1187 = vmatprep.subr.mxu0 0.0
    %1188 = vmatpush1.msra.mxu0 0.0
    %1189 = vmatprep.subr.mxu0 0.0
    %1190 = vmatpush1.msra.mxu0 0.0
    %1191 = vmatprep.subr.mxu0 0.0
    %1192 = vmatpush1.msra.mxu0 0.0
    %1193 = vmatprep.subr.mxu0 0.0
    %1194 = vmatpush1.msra.mxu0 0.0
    %1195 = vmatprep.subr.mxu0 0.0
    %1196 = vmatpush1.msra.mxu0 0.0
    %1197 = vmatprep.subr.mxu0 0.0
    %1198 = vmatpush1.msra.mxu0 0.0
    %1199 = vmatprep.subr.mxu0 0.0
    %1200 = vmatpush1.msra.mxu0 0.0
    %1201 = vmatprep.subr.mxu0 0.0
    %1202 = vmatpush1.msra.mxu0 0.0
    %1203 = vmatprep.subr.mxu0 0.0
    %1204 = vmatpush1.msra.mxu0 0.0
    %1205 = vmatprep.mubr.f32.mxu0 0.0
    %1206 = vmatmul.mubr.f32.gmra.mrb[0].mxu0 %v340
    %v1207 = vpop.f32.mrb[0].mxu0
    %v1208 = vadd.f32 %v1139, %v1207
    %v1209 = vpop.f32.mrb[0].mxu0
    %1210 = vmatprep.mubr.f32.mxu0 0.0
    %1211 = vmatmul.mubr.f32.gmra.mrb[0].mxu0 %v343
    %v1212 = vpop.f32.mrb[0].mxu0
    %v1213 = vadd.f32 %v1139, %v1212
    %v1214 = vpop.f32.mrb[0].mxu0
    %1215 = vdwg.mxu0
    %v1217 = vsel %vm600, %v1024, 0
    %v1220 = vsel %vm600, %v1116, 0
    %1222 = vmatprep.subr.mxu0 0.0
    %1223 = vmatpush1.xpose.msra.mxu0 %v1220
    %1224 = vmatprep.subr.mxu0 0.0
    %1225 = vmatpush1.xpose.msra.mxu0 0.0
    %1226 = vmatprep.subr.mxu0 0.0
    %1227 = vmatpush1.xpose.msra.mxu0 0.0
    %1228 = vmatprep.subr.mxu0 0.0
    %1229 = vmatpush1.xpose.msra.mxu0 0.0
    %1230 = vmatprep.subr.mxu0 0.0
    %1231 = vmatpush1.xpose.msra.mxu0 0.0
    %1232 = vmatprep.subr.mxu0 0.0
    %1233 = vmatpush1.xpose.msra.mxu0 0.0
    %1234 = vmatprep.subr.mxu0 0.0
    %1235 = vmatpush1.xpose.msra.mxu0 0.0
    %1236 = vmatprep.subr.mxu0 0.0
    %1237 = vmatpush1.xpose.msra.mxu0 0.0
    %1238 = vmatprep.subr.mxu0 0.0
    %1239 = vmatpush1.xpose.msra.mxu0 0.0
    %1240 = vmatprep.subr.mxu0 0.0
    %1241 = vmatpush1.xpose.msra.mxu0 0.0
    %1242 = vmatprep.subr.mxu0 0.0
    %1243 = vmatpush1.xpose.msra.mxu0 0.0
    %1244 = vmatprep.subr.mxu0 0.0
    %1245 = vmatpush1.xpose.msra.mxu0 0.0
    %1246 = vmatprep.subr.mxu0 0.0
    %1247 = vmatpush1.xpose.msra.mxu0 0.0
    %1248 = vmatprep.subr.mxu0 0.0
    %1249 = vmatpush1.xpose.msra.mxu0 0.0
    %1250 = vmatprep.subr.mxu0 0.0
    %1251 = vmatpush1.xpose.msra.mxu0 0.0
    %1252 = vmatprep.subr.mxu0 0.0
    %1253 = vmatpush1.xpose.msra.mxu0 0.0
    %1254 = vmatprep.subr.mxu0 0.0
    %1255 = vmatpush1.xpose.msra.mxu0 0.0
    %1256 = vmatprep.subr.mxu0 0.0
    %1257 = vmatpush1.xpose.msra.mxu0 0.0
    %1258 = vmatprep.subr.mxu0 0.0
    %1259 = vmatpush1.xpose.msra.mxu0 0.0
    %1260 = vmatprep.subr.mxu0 0.0
    %1261 = vmatpush1.xpose.msra.mxu0 0.0
    %1262 = vmatprep.subr.mxu0 0.0
    %1263 = vmatpush1.xpose.msra.mxu0 0.0
    %1264 = vmatprep.subr.mxu0 0.0
    %1265 = vmatpush1.xpose.msra.mxu0 0.0
    %1266 = vmatprep.subr.mxu0 0.0
    %1267 = vmatpush1.xpose.msra.mxu0 0.0
    %1268 = vmatprep.subr.mxu0 0.0
    %1269 = vmatpush1.xpose.msra.mxu0 0.0
    %1270 = vmatprep.subr.mxu0 0.0
    %1271 = vmatpush1.xpose.msra.mxu0 0.0
    %1272 = vmatprep.subr.mxu0 0.0
    %1273 = vmatpush1.xpose.msra.mxu0 0.0
    %1274 = vmatprep.subr.mxu0 0.0
    %1275 = vmatpush1.xpose.msra.mxu0 0.0
    %1276 = vmatprep.subr.mxu0 0.0
    %1277 = vmatpush1.xpose.msra.mxu0 0.0
    %1278 = vmatprep.subr.mxu0 0.0
    %1279 = vmatpush1.xpose.msra.mxu0 0.0
    %1280 = vmatprep.subr.mxu0 0.0
    %1281 = vmatpush1.xpose.msra.mxu0 0.0
    %1282 = vmatprep.subr.mxu0 0.0
    %1283 = vmatpush1.xpose.msra.mxu0 0.0
    %1284 = vmatprep.subr.mxu0 0.0
    %1285 = vmatpush1.xpose.msra.mxu0 0.0
    %1286 = vmatprep.mubr.f32.mxu0 0.0
    %1287 = vmatmul.mubr.f32.gmra.mrb[0].mxu0 %v1217
    %v1288 = vpop.f32.mrb[0].mxu0
    %v1289 = vadd.f32 0.0, %v1288
    %v1290 = vpop.f32.mrb[0].mxu0
    %1291 = vdwg.mxu0
    %v1293 = vsel %vm600, %v1029, 0
    %v1296 = vsel %vm600, %v1121, 0
    %1298 = vmatprep.subr.mxu0 0.0
    %1299 = vmatpush1.xpose.msra.mxu0 %v1296
    %1300 = vmatprep.subr.mxu0 0.0
    %1301 = vmatpush1.xpose.msra.mxu0 0.0
    %1302 = vmatprep.subr.mxu0 0.0
    %1303 = vmatpush1.xpose.msra.mxu0 0.0
    %1304 = vmatprep.subr.mxu0 0.0
    %1305 = vmatpush1.xpose.msra.mxu0 0.0
    %1306 = vmatprep.subr.mxu0 0.0
    %1307 = vmatpush1.xpose.msra.mxu0 0.0
    %1308 = vmatprep.subr.mxu0 0.0
    %1309 = vmatpush1.xpose.msra.mxu0 0.0
    %1310 = vmatprep.subr.mxu0 0.0
    %1311 = vmatpush1.xpose.msra.mxu0 0.0
    %1312 = vmatprep.subr.mxu0 0.0
    %1313 = vmatpush1.xpose.msra.mxu0 0.0
    %1314 = vmatprep.subr.mxu0 0.0
    %1315 = vmatpush1.xpose.msra.mxu0 0.0
    %1316 = vmatprep.subr.mxu0 0.0
    %1317 = vmatpush1.xpose.msra.mxu0 0.0
    %1318 = vmatprep.subr.mxu0 0.0
    %1319 = vmatpush1.xpose.msra.mxu0 0.0
    %1320 = vmatprep.subr.mxu0 0.0
    %1321 = vmatpush1.xpose.msra.mxu0 0.0
    %1322 = vmatprep.subr.mxu0 0.0
    %1323 = vmatpush1.xpose.msra.mxu0 0.0
    %1324 = vmatprep.subr.mxu0 0.0
    %1325 = vmatpush1.xpose.msra.mxu0 0.0
    %1326 = vmatprep.subr.mxu0 0.0
    %1327 = vmatpush1.xpose.msra.mxu0 0.0
    %1328 = vmatprep.subr.mxu0 0.0
    %1329 = vmatpush1.xpose.msra.mxu0 0.0
    %1330 = vmatprep.subr.mxu0 0.0
    %1331 = vmatpush1.xpose.msra.mxu0 0.0
    %1332 = vmatprep.subr.mxu0 0.0
    %1333 = vmatpush1.xpose.msra.mxu0 0.0
    %1334 = vmatprep.subr.mxu0 0.0
    %1335 = vmatpush1.xpose.msra.mxu0 0.0
    %1336 = vmatprep.subr.mxu0 0.0
    %1337 = vmatpush1.xpose.msra.mxu0 0.0
    %1338 = vmatprep.subr.mxu0 0.0
    %1339 = vmatpush1.xpose.msra.mxu0 0.0
    %1340 = vmatprep.subr.mxu0 0.0
    %1341 = vmatpush1.xpose.msra.mxu0 0.0
    %1342 = vmatprep.subr.mxu0 0.0
    %1343 = vmatpush1.xpose.msra.mxu0 0.0
    %1344 = vmatprep.subr.mxu0 0.0
    %1345 = vmatpush1.xpose.msra.mxu0 0.0
    %1346 = vmatprep.subr.mxu0 0.0
    %1347 = vmatpush1.xpose.msra.mxu0 0.0
    %1348 = vmatprep.subr.mxu0 0.0
    %1349 = vmatpush1.xpose.msra.mxu0 0.0
    %1350 = vmatprep.subr.mxu0 0.0
    %1351 = vmatpush1.xpose.msra.mxu0 0.0
    %1352 = vmatprep.subr.mxu0 0.0
    %1353 = vmatpush1.xpose.msra.mxu0 0.0
    %1354 = vmatprep.subr.mxu0 0.0
    %1355 = vmatpush1.xpose.msra.mxu0 0.0
    %1356 = vmatprep.subr.mxu0 0.0
    %1357 = vmatpush1.xpose.msra.mxu0 0.0
    %1358 = vmatprep.subr.mxu0 0.0
    %1359 = vmatpush1.xpose.msra.mxu0 0.0
    %1360 = vmatprep.subr.mxu0 0.0
    %1361 = vmatpush1.xpose.msra.mxu0 0.0
    %1362 = vmatprep.mubr.f32.mxu0 0.0
    %1363 = vmatmul.mubr.f32.gmra.mrb[0].mxu0 %v1293
    %v1364 = vpop.f32.mrb[0].mxu0
    %v1365 = vadd.f32 0.0, %v1364
    %v1366 = vpop.f32.mrb[0].mxu0
    %1367 = vdwg.mxu0
    %v1368 = vmul.f32 %v1289, 0.25
    %v1369 = vmul.f32 %v1365, 0.25
    %v1370 = vadd.f32 %v1368, %v760
    %v1371 = vadd.f32 %v1369, %v764
    %v1372 = vsel %vm769, %v1370, -inf
    %1373 = vmax.xlane.f32.xlu0 %v1372
    %v1374 = vpop.xlane.xlu0 %1373
    %v1375 = vsel %vm769, %v1371, -inf
    %1376 = vmax.xlane.f32.xlu0 %v1375
    %v1377 = vpop.xlane.xlu0 %1376
    %v1378 = vsub.f32 %v1370, %v1374
    %v1379 = vsub.f32 %v1371, %v1377
    %v1380 = vmul.f32 %v1378, 1.442695
    %v1381 = vpow.pop %v1380
    %v1382 = vmul.f32 %v1379, 1.442695
    %v1383 = vpow.pop %v1382
    %v1384 = vsel %vm769, %v1381, 0.0
    %1385 = vadd.xlane.f32.xlu0 %v1384
    %v1386 = vpop.xlane.xlu0 %1385
    %v1387 = vsel %vm769, %v1383, 0.0
    %1388 = vadd.xlane.f32.xlu0 %v1387
    %v1389 = vpop.xlane.xlu0 %1388
    %v1390 = vrcp.pop %v1386
    %v1391 = vrcp.pop %v1389
    %v1392 = vmul.f32 %v1381, %v1390
    %v1393 = vmul.f32 %v1383, %v1391
    %v1395 = vsel %vm769, %v1392, 0
    %1397 = vmatprep.subr.mxu0 0.0
    %1398 = vmatpush1.msra.mxu0 %v1208
    %1399 = vmatprep.subr.mxu0 0.0
    %1400 = vmatpush1.msra.mxu0 0.0
    %1401 = vmatprep.subr.mxu0 0.0
    %1402 = vmatpush1.msra.mxu0 0.0
    %1403 = vmatprep.subr.mxu0 0.0
    %1404 = vmatpush1.msra.mxu0 0.0
    %1405 = vmatprep.subr.mxu0 0.0
    %1406 = vmatpush1.msra.mxu0 0.0
    %1407 = vmatprep.subr.mxu0 0.0
    %1408 = vmatpush1.msra.mxu0 0.0
    %1409 = vmatprep.subr.mxu0 0.0
    %1410 = vmatpush1.msra.mxu0 0.0
    %1411 = vmatprep.subr.mxu0 0.0
    %1412 = vmatpush1.msra.mxu0 0.0
    %1413 = vmatprep.subr.mxu0 0.0
    %1414 = vmatpush1.msra.mxu0 0.0
    %1415 = vmatprep.subr.mxu0 0.0
    %1416 = vmatpush1.msra.mxu0 0.0
    %1417 = vmatprep.subr.mxu0 0.0
    %1418 = vmatpush1.msra.mxu0 0.0
    %1419 = vmatprep.subr.mxu0 0.0
    %1420 = vmatpush1.msra.mxu0 0.0
    %1421 = vmatprep.subr.mxu0 0.0
    %1422 = vmatpush1.msra.mxu0 0.0
    %1423 = vmatprep.subr.mxu0 0.0
    %1424 = vmatpush1.msra.mxu0 0.0
    %1425 = vmatprep.subr.mxu0 0.0
    %1426 = vmatpush1.msra.mxu0 0.0
    %1427 = vmatprep.subr.mxu0 0.0
    %1428 = vmatpush1.msra.mxu0 0.0
    %1429 = vmatprep.subr.mxu0 0.0
    %1430 = vmatpush1.msra.mxu0 0.0
    %1431 = vmatprep.subr.mxu0 0.0
    %1432 = vmatpush1.msra.mxu0 0.0
    %1433 = vmatprep.subr.mxu0 0.0
    %1434 = vmatpush1.msra.mxu0 0.0
    %1435 = vmatprep.subr.mxu0 0.0
    %1436 = vmatpush1.msra.mxu0 0.0
    %1437 = vmatprep.subr.mxu0 0.0
    %1438 = vmatpush1.msra.mxu0 0.0
    %1439 = vmatprep.subr.mxu0 0.0
    %1440 = vmatpush1.msra.mxu0 0.0
    %1441 = vmatprep.subr.mxu0 0.0
    %1442 = vmatpush1.msra.mxu0 0.0
    %1443 = vmatprep.subr.mxu0 0.0
    %1444 = vmatpush1.msra.mxu0 0.0
    %1445 = vmatprep.subr.mxu0 0.0
    %1446 = vmatpush1.msra.mxu0 0.0
    %1447 = vmatprep.subr.mxu0 0.0
    %1448 = vmatpush1.msra.mxu0 0.0
    %1449 = vmatprep.subr.mxu0 0.0
    %1450 = vmatpush1.msra.mxu0 0.0
    %1451 = vmatprep.subr.mxu0 0.0
    %1452 = vmatpush1.msra.mxu0 0.0
    %1453 = vmatprep.subr.mxu0 0.0
    %1454 = vmatpush1.msra.mxu0 0.0
    %1455 = vmatprep.subr.mxu0 0.0
    %1456 = vmatpush1.msra.mxu0 0.0
    %1457 = vmatprep.subr.mxu0 0.0
    %1458 = vmatpush1.msra.mxu0 0.0
    %1459 = vmatprep.subr.mxu0 0.0
    %1460 = vmatpush1.msra.mxu0 0.0
    %1461 = vmatprep.mubr.f32.mxu0 0.0
    %1462 = vmatmul.mubr.f32.gmra.mrb[0].mxu0 %v1395
    %v1463 = vpop.f32.mrb[0].mxu0
    %v1464 = vadd.f32 0.0, %v1463
    %v1465 = vpop.f32.mrb[0].mxu0
    %1466 = vdwg.mxu0
    %v1468 = vsel %vm769, %v1393, 0
    %1470 = vmatprep.subr.mxu0 0.0
    %1471 = vmatpush1.msra.mxu0 %v1213
    %1472 = vmatprep.subr.mxu0 0.0
    %1473 = vmatpush1.msra.mxu0 0.0
    %1474 = vmatprep.subr.mxu0 0.0
    %1475 = vmatpush1.msra.mxu0 0.0
    %1476 = vmatprep.subr.mxu0 0.0
    %1477 = vmatpush1.msra.mxu0 0.0
    %1478 = vmatprep.subr.mxu0 0.0
    %1479 = vmatpush1.msra.mxu0 0.0
    %1480 = vmatprep.subr.mxu0 0.0
    %1481 = vmatpush1.msra.mxu0 0.0
    %1482 = vmatprep.subr.mxu0 0.0
    %1483 = vmatpush1.msra.mxu0 0.0
    %1484 = vmatprep.subr.mxu0 0.0
    %1485 = vmatpush1.msra.mxu0 0.0
    %1486 = vmatprep.subr.mxu0 0.0
    %1487 = vmatpush1.msra.mxu0 0.0
    %1488 = vmatprep.subr.mxu0 0.0
    %1489 = vmatpush1.msra.mxu0 0.0
    %1490 = vmatprep.subr.mxu0 0.0
    %1491 = vmatpush1.msra.mxu0 0.0
    %1492 = vmatprep.subr.mxu0 0.0
    %1493 = vmatpush1.msra.mxu0 0.0
    %1494 = vmatprep.subr.mxu0 0.0
    %1495 = vmatpush1.msra.mxu0 0.0
    %1496 = vmatprep.subr.mxu0 0.0
    %1497 = vmatpush1.msra.mxu0 0.0
    %1498 = vmatprep.subr.mxu0 0.0
    %1499 = vmatpush1.msra.mxu0 0.0
    %1500 = vmatprep.subr.mxu0 0.0
    %1501 = vmatpush1.msra.mxu0 0.0
    %1502 = vmatprep.subr.mxu0 0.0
    %1503 = vmatpush1.msra.mxu0 0.0
    %1504 = vmatprep.subr.mxu0 0.0
    %1505 = vmatpush1.msra.mxu0 0.0
    %1506 = vmatprep.subr.mxu0 0.0
    %1507 = vmatpush1.msra.mxu0 0.0
    %1508 = vmatprep.subr.mxu0 0.0
    %1509 = vmatpush1.msra.mxu0 0.0
    %1510 = vmatprep.subr.mxu0 0.0
    %1511 = vmatpush1.msra.mxu0 0.0
    %1512 = vmatprep.subr.mxu0 0.0
    %1513 = vmatpush1.msra.mxu0 0.0
    %1514 = vmatprep.subr.mxu0 0.0
    %1515 = vmatpush1.msra.mxu0 0.0
    %1516 = vmatprep.subr.mxu0 0.0
    %1517 = vmatpush1.msra.mxu0 0.0
    %1518 = vmatprep.subr.mxu0 0.0
    %1519 = vmatpush1.msra.mxu0 0.0
    %1520 = vmatprep.subr.mxu0 0.0
    %1521 = vmatpush1.msra.mxu0 0.0
    %1522 = vmatprep.subr.mxu0 0.0
    %1523 = vmatpush1.msra.mxu0 0.0
    %1524 = vmatprep.subr.mxu0 0.0
    %1525 = vmatpush1.msra.mxu0 0.0
    %1526 = vmatprep.subr.mxu0 0.0
    %1527 = vmatpush1.msra.mxu0 0.0
    %1528 = vmatprep.subr.mxu0 0.0
    %1529 = vmatpush1.msra.mxu0 0.0
    %1530 = vmatprep.subr.mxu0 0.0
    %1531 = vmatpush1.msra.mxu0 0.0
    %1532 = vmatprep.subr.mxu0 0.0
    %1533 = vmatpush1.msra.mxu0 0.0
    %1534 = vmatprep.mubr.f32.mxu0 0.0
    %1535 = vmatmul.mubr.f32.gmra.mrb[0].mxu0 %v1468
    %v1536 = vpop.f32.mrb[0].mxu0
    %v1537 = vadd.f32 0.0, %v1536
    %v1538 = vpop.f32.mrb[0].mxu0
    %1539 = vdwg.mxu0
    %s1540 = scalar_lea.vmem %s25, 16
    %v1541 = vld [vmem:[%s1540] sm:$0xff]
    %v1542 = vld [vmem:[%s1540 + $0x8] sm:$0xff]
    %v1544 = vsel %vm600, %v1464, 0
    %v1547 = vsel %vm600, %v1537, 0
    %1549 = vmatprep.subr.mxu0 0.0
    %1550 = vmatpush1.msra.mxu0 %v1541
    %1551 = vmatprep.subr.mxu0 0.0
    %1552 = vmatpush1.msra.mxu0 %v1542
    %1553 = vmatprep.subr.mxu0 0.0
    %1554 = vmatpush1.msra.mxu0 0.0
    %1555 = vmatprep.subr.mxu0 0.0
    %1556 = vmatpush1.msra.mxu0 0.0
    %1557 = vmatprep.subr.mxu0 0.0
    %1558 = vmatpush1.msra.mxu0 0.0
    %1559 = vmatprep.subr.mxu0 0.0
    %1560 = vmatpush1.msra.mxu0 0.0
    %1561 = vmatprep.subr.mxu0 0.0
    %1562 = vmatpush1.msra.mxu0 0.0
    %1563 = vmatprep.subr.mxu0 0.0
    %1564 = vmatpush1.msra.mxu0 0.0
    %1565 = vmatprep.subr.mxu0 0.0
    %1566 = vmatpush1.msra.mxu0 0.0
    %1567 = vmatprep.subr.mxu0 0.0
    %1568 = vmatpush1.msra.mxu0 0.0
    %1569 = vmatprep.subr.mxu0 0.0
    %1570 = vmatpush1.msra.mxu0 0.0
    %1571 = vmatprep.subr.mxu0 0.0
    %1572 = vmatpush1.msra.mxu0 0.0
    %1573 = vmatprep.subr.mxu0 0.0
    %1574 = vmatpush1.msra.mxu0 0.0
    %1575 = vmatprep.subr.mxu0 0.0
    %1576 = vmatpush1.msra.mxu0 0.0
    %1577 = vmatprep.subr.mxu0 0.0
    %1578 = vmatpush1.msra.mxu0 0.0
    %1579 = vmatprep.subr.mxu0 0.0
    %1580 = vmatpush1.msra.mxu0 0.0
    %1581 = vmatprep.subr.mxu0 0.0
    %1582 = vmatpush1.msra.mxu0 0.0
    %1583 = vmatprep.subr.mxu0 0.0
    %1584 = vmatpush1.msra.mxu0 0.0
    %1585 = vmatprep.subr.mxu0 0.0
    %1586 = vmatpush1.msra.mxu0 0.0
    %1587 = vmatprep.subr.mxu0 0.0
    %1588 = vmatpush1.msra.mxu0 0.0
    %1589 = vmatprep.subr.mxu0 0.0
    %1590 = vmatpush1.msra.mxu0 0.0
    %1591 = vmatprep.subr.mxu0 0.0
    %1592 = vmatpush1.msra.mxu0 0.0
    %1593 = vmatprep.subr.mxu0 0.0
    %1594 = vmatpush1.msra.mxu0 0.0
    %1595 = vmatprep.subr.mxu0 0.0
    %1596 = vmatpush1.msra.mxu0 0.0
    %1597 = vmatprep.subr.mxu0 0.0
    %1598 = vmatpush1.msra.mxu0 0.0
    %1599 = vmatprep.subr.mxu0 0.0
    %1600 = vmatpush1.msra.mxu0 0.0
    %1601 = vmatprep.subr.mxu0 0.0
    %1602 = vmatpush1.msra.mxu0 0.0
    %1603 = vmatprep.subr.mxu0 0.0
    %1604 = vmatpush1.msra.mxu0 0.0
    %1605 = vmatprep.subr.mxu0 0.0
    %1606 = vmatpush1.msra.mxu0 0.0
    %1607 = vmatprep.subr.mxu0 0.0
    %1608 = vmatpush1.msra.mxu0 0.0
    %1609 = vmatprep.subr.mxu0 0.0
    %1610 = vmatpush1.msra.mxu0 0.0
    %1611 = vmatprep.subr.mxu0 0.0
    %1612 = vmatpush1.msra.mxu0 0.0
    %1613 = vmatprep.mubr.f32.mxu0 0.0
    %1614 = vmatmul.mubr.f32.gmra.mrb[0].mxu0 %v1544
    %v1615 = vpop.f32.mrb[0].mxu0
    %v1616 = vadd.f32 0.0, %v1615
    %v1617 = vpop.f32.mrb[0].mxu0
    %1618 = vmatprep.mubr.f32.mxu0 0.0
    %1619 = vmatmul.mubr.f32.gmra.mrb[0].mxu0 %v1547
    %v1620 = vpop.f32.mrb[0].mxu0
    %v1621 = vadd.f32 0.0, %v1620
    %v1622 = vpop.f32.mrb[0].mxu0
    %1623 = vdwg.mxu0
    %v1625 = vsel %vm600, %v862, 0
    %v1628 = vsel %vm600, %v935, 0
    %1630 = vmatprep.subr.mxu0 0.0
    %1631 = vmatpush1.msra.mxu0 %v938
    %1632 = vmatprep.subr.mxu0 0.0
    %1633 = vmatpush1.msra.mxu0 %v939
    %1634 = vmatprep.subr.mxu0 0.0
    %1635 = vmatpush1.msra.mxu0 0.0
    %1636 = vmatprep.subr.mxu0 0.0
    %1637 = vmatpush1.msra.mxu0 0.0
    %1638 = vmatprep.subr.mxu0 0.0
    %1639 = vmatpush1.msra.mxu0 0.0
    %1640 = vmatprep.subr.mxu0 0.0
    %1641 = vmatpush1.msra.mxu0 0.0
    %1642 = vmatprep.subr.mxu0 0.0
    %1643 = vmatpush1.msra.mxu0 0.0
    %1644 = vmatprep.subr.mxu0 0.0
    %1645 = vmatpush1.msra.mxu0 0.0
    %1646 = vmatprep.subr.mxu0 0.0
    %1647 = vmatpush1.msra.mxu0 0.0
    %1648 = vmatprep.subr.mxu0 0.0
    %1649 = vmatpush1.msra.mxu0 0.0
    %1650 = vmatprep.subr.mxu0 0.0
    %1651 = vmatpush1.msra.mxu0 0.0
    %1652 = vmatprep.subr.mxu0 0.0
    %1653 = vmatpush1.msra.mxu0 0.0
    %1654 = vmatprep.subr.mxu0 0.0
    %1655 = vmatpush1.msra.mxu0 0.0
    %1656 = vmatprep.subr.mxu0 0.0
    %1657 = vmatpush1.msra.mxu0 0.0
    %1658 = vmatprep.subr.mxu0 0.0
    %1659 = vmatpush1.msra.mxu0 0.0
    %1660 = vmatprep.subr.mxu0 0.0
    %1661 = vmatpush1.msra.mxu0 0.0
    %1662 = vmatprep.subr.mxu0 0.0
    %1663 = vmatpush1.msra.mxu0 0.0
    %1664 = vmatprep.subr.mxu0 0.0
    %1665 = vmatpush1.msra.mxu0 0.0
    %1666 = vmatprep.subr.mxu0 0.0
    %1667 = vmatpush1.msra.mxu0 0.0
    %1668 = vmatprep.subr.mxu0 0.0
    %1669 = vmatpush1.msra.mxu0 0.0
    %1670 = vmatprep.subr.mxu0 0.0
    %1671 = vmatpush1.msra.mxu0 0.0
    %1672 = vmatprep.subr.mxu0 0.0
    %1673 = vmatpush1.msra.mxu0 0.0
    %1674 = vmatprep.subr.mxu0 0.0
    %1675 = vmatpush1.msra.mxu0 0.0
    %1676 = vmatprep.subr.mxu0 0.0
    %1677 = vmatpush1.msra.mxu0 0.0
    %1678 = vmatprep.subr.mxu0 0.0
    %1679 = vmatpush1.msra.mxu0 0.0
    %1680 = vmatprep.subr.mxu0 0.0
    %1681 = vmatpush1.msra.mxu0 0.0
    %1682 = vmatprep.subr.mxu0 0.0
    %1683 = vmatpush1.msra.mxu0 0.0
    %1684 = vmatprep.subr.mxu0 0.0
    %1685 = vmatpush1.msra.mxu0 0.0
    %1686 = vmatprep.subr.mxu0 0.0
    %1687 = vmatpush1.msra.mxu0 0.0
    %1688 = vmatprep.subr.mxu0 0.0
    %1689 = vmatpush1.msra.mxu0 0.0
    %1690 = vmatprep.subr.mxu0 0.0
    %1691 = vmatpush1.msra.mxu0 0.0
    %1692 = vmatprep.subr.mxu0 0.0
    %1693 = vmatpush1.msra.mxu0 0.0
    %1694 = vmatprep.mubr.f32.mxu0 0.0
    %1695 = vmatmul.mubr.f32.gmra.mrb[0].mxu0 %v1625
    %v1696 = vpop.f32.mrb[0].mxu0
    %v1697 = vadd.f32 %v1616, %v1696
    %v1698 = vpop.f32.mrb[0].mxu0
    %1699 = vmatprep.mubr.f32.mxu0 0.0
    %1700 = vmatmul.mubr.f32.gmra.mrb[0].mxu0 %v1628
    %v1701 = vpop.f32.mrb[0].mxu0
    %v1702 = vadd.f32 %v1621, %v1701
    %v1703 = vpop.f32.mrb[0].mxu0
    %1704 = vdwg.mxu0
    %s1705 = scalar_lea.vmem %s13, 128
    %v1706 = vld [vmem:[%s1705] sm:$0xff]
    %v1707 = vld [vmem:[%s1705 + $0x8] sm:$0xff]
    %v1708 = vld [vmem:[%s1705 + $0x10] sm:$0xff]
    %v1709 = vld [vmem:[%s1705 + $0x18] sm:$0xff]
    %v1710 = vld [vmem:[%s1705 + $0x20] sm:$0xff]
    %v1711 = vld [vmem:[%s1705 + $0x28] sm:$0xff]
    %v1712 = vld [vmem:[%s1705 + $0x30] sm:$0xff]
    %v1713 = vld [vmem:[%s1705 + $0x38] sm:$0xff]
    %s1714 = scalar_lea.vmem %s15, 2
    %v1715 = vld [vmem:[%s1714] sm:$0x1]
    %v1717 = vlaneseq
    %v1718 = vshrl.u32 %v1717, 7
    %v1719 = vsub.s32 0, %v1718
    %v1720 = vrot.slane %v1715, %v1719
    %1722 = vmatprep.subr.mxu0 0.0
    %1723 = vmatpush1.msra.mxu0 %v1706
    %1724 = vmatprep.subr.mxu0 0.0
    %1725 = vmatpush1.msra.mxu0 %v1707
    %1726 = vmatprep.subr.mxu0 0.0
    %1727 = vmatpush1.msra.mxu0 %v1708
    %1728 = vmatprep.subr.mxu0 0.0
    %1729 = vmatpush1.msra.mxu0 %v1709
    %1730 = vmatprep.subr.mxu0 0.0
    %1731 = vmatpush1.msra.mxu0 %v1710
    %1732 = vmatprep.subr.mxu0 0.0
    %1733 = vmatpush1.msra.mxu0 %v1711
    %1734 = vmatprep.subr.mxu0 0.0
    %1735 = vmatpush1.msra.mxu0 %v1712
    %1736 = vmatprep.subr.mxu0 0.0
    %1737 = vmatpush1.msra.mxu0 %v1713
    %1738 = vmatprep.subr.mxu0 0.0
    %1739 = vmatpush1.msra.mxu0 0.0
    %1740 = vmatprep.subr.mxu0 0.0
    %1741 = vmatpush1.msra.mxu0 0.0
    %1742 = vmatprep.subr.mxu0 0.0
    %1743 = vmatpush1.msra.mxu0 0.0
    %1744 = vmatprep.subr.mxu0 0.0
    %1745 = vmatpush1.msra.mxu0 0.0
    %1746 = vmatprep.subr.mxu0 0.0
    %1747 = vmatpush1.msra.mxu0 0.0
    %1748 = vmatprep.subr.mxu0 0.0
    %1749 = vmatpush1.msra.mxu0 0.0
    %1750 = vmatprep.subr.mxu0 0.0
    %1751 = vmatpush1.msra.mxu0 0.0
    %1752 = vmatprep.subr.mxu0 0.0
    %1753 = vmatpush1.msra.mxu0 0.0
    %1754 = vmatprep.subr.mxu0 0.0
    %1755 = vmatpush1.msra.mxu0 0.0
    %1756 = vmatprep.subr.mxu0 0.0
    %1757 = vmatpush1.msra.mxu0 0.0
    %1758 = vmatprep.subr.mxu0 0.0
    %1759 = vmatpush1.msra.mxu0 0.0
    %1760 = vmatprep.subr.mxu0 0.0
    %1761 = vmatpush1.msra.mxu0 0.0
    %1762 = vmatprep.subr.mxu0 0.0
    %1763 = vmatpush1.msra.mxu0 0.0
    %1764 = vmatprep.subr.mxu0 0.0
    %1765 = vmatpush1.msra.mxu0 0.0
    %1766 = vmatprep.subr.mxu0 0.0
    %1767 = vmatpush1.msra.mxu0 0.0
    %1768 = vmatprep.subr.mxu0 0.0
    %1769 = vmatpush1.msra.mxu0 0.0
    %1770 = vmatprep.subr.mxu0 0.0
    %1771 = vmatpush1.msra.mxu0 0.0
    %1772 = vmatprep.subr.mxu0 0.0
    %1773 = vmatpush1.msra.mxu0 0.0
    %1774 = vmatprep.subr.mxu0 0.0
    %1775 = vmatpush1.msra.mxu0 0.0
    %1776 = vmatprep.subr.mxu0 0.0
    %1777 = vmatpush1.msra.mxu0 0.0
    %1778 = vmatprep.subr.mxu0 0.0
    %1779 = vmatpush1.msra.mxu0 0.0
    %1780 = vmatprep.subr.mxu0 0.0
    %1781 = vmatpush1.msra.mxu0 0.0
    %1782 = vmatprep.subr.mxu0 0.0
    %1783 = vmatpush1.msra.mxu0 0.0
    %1784 = vmatprep.subr.mxu0 0.0
    %1785 = vmatpush1.msra.mxu0 0.0
    %1786 = vmatprep.mubr.f32.mxu0 0.0
    %1787 = vmatmul.mubr.f32.gmra.mrb[0].mxu0 %v340
    %v1788 = vpop.f32.mrb[0].mxu0
    %v1789 = vadd.f32 %v1720, %v1788
    %v1790 = vpop.f32.mrb[0].mxu0
    %1791 = vmatprep.mubr.f32.mxu0 0.0
    %1792 = vmatmul.mubr.f32.gmra.mrb[0].mxu0 %v343
    %v1793 = vpop.f32.mrb[0].mxu0
    %v1794 = vadd.f32 %v1720, %v1793
    %v1795 = vpop.f32.mrb[0].mxu0
    %1796 = vdwg.mxu0
    %s1797 = scalar_lea.vmem %s17, 128
    %v1798 = vld [vmem:[%s1797] sm:$0xff]
    %v1799 = vld [vmem:[%s1797 + $0x8] sm:$0xff]
    %v1800 = vld [vmem:[%s1797 + $0x10] sm:$0xff]
    %v1801 = vld [vmem:[%s1797 + $0x18] sm:$0xff]
    %v1802 = vld [vmem:[%s1797 + $0x20] sm:$0xff]
    %v1803 = vld [vmem:[%s1797 + $0x28] sm:$0xff]
    %v1804 = vld [vmem:[%s1797 + $0x30] sm:$0xff]
    %v1805 = vld [vmem:[%s1797 + $0x38] sm:$0xff]
    %s1806 = scalar_lea.vmem %s19, 2
    %v1807 = vld [vmem:[%s1806] sm:$0x1]
    %v1809 = vlaneseq
    %v1810 = vshrl.u32 %v1809, 7
    %v1811 = vsub.s32 0, %v1810
    %v1812 = vrot.slane %v1807, %v1811
    %1814 = vmatprep.subr.mxu0 0.0
    %1815 = vmatpush1.msra.mxu0 %v1798
    %1816 = vmatprep.subr.mxu0 0.0
    %1817 = vmatpush1.msra.mxu0 %v1799
    %1818 = vmatprep.subr.mxu0 0.0
    %1819 = vmatpush1.msra.mxu0 %v1800
    %1820 = vmatprep.subr.mxu0 0.0
    %1821 = vmatpush1.msra.mxu0 %v1801
    %1822 = vmatprep.subr.mxu0 0.0
    %1823 = vmatpush1.msra.mxu0 %v1802
    %1824 = vmatprep.subr.mxu0 0.0
    %1825 = vmatpush1.msra.mxu0 %v1803
    %1826 = vmatprep.subr.mxu0 0.0
    %1827 = vmatpush1.msra.mxu0 %v1804
    %1828 = vmatprep.subr.mxu0 0.0
    %1829 = vmatpush1.msra.mxu0 %v1805
    %1830 = vmatprep.subr.mxu0 0.0
    %1831 = vmatpush1.msra.mxu0 0.0
    %1832 = vmatprep.subr.mxu0 0.0
    %1833 = vmatpush1.msra.mxu0 0.0
    %1834 = vmatprep.subr.mxu0 0.0
    %1835 = vmatpush1.msra.mxu0 0.0
    %1836 = vmatprep.subr.mxu0 0.0
    %1837 = vmatpush1.msra.mxu0 0.0
    %1838 = vmatprep.subr.mxu0 0.0
    %1839 = vmatpush1.msra.mxu0 0.0
    %1840 = vmatprep.subr.mxu0 0.0
    %1841 = vmatpush1.msra.mxu0 0.0
    %1842 = vmatprep.subr.mxu0 0.0
    %1843 = vmatpush1.msra.mxu0 0.0
    %1844 = vmatprep.subr.mxu0 0.0
    %1845 = vmatpush1.msra.mxu0 0.0
    %1846 = vmatprep.subr.mxu0 0.0
    %1847 = vmatpush1.msra.mxu0 0.0
    %1848 = vmatprep.subr.mxu0 0.0
    %1849 = vmatpush1.msra.mxu0 0.0
    %1850 = vmatprep.subr.mxu0 0.0
    %1851 = vmatpush1.msra.mxu0 0.0
    %1852 = vmatprep.subr.mxu0 0.0
    %1853 = vmatpush1.msra.mxu0 0.0
    %1854 = vmatprep.subr.mxu0 0.0
    %1855 = vmatpush1.msra.mxu0 0.0
    %1856 = vmatprep.subr.mxu0 0.0
    %1857 = vmatpush1.msra.mxu0 0.0
    %1858 = vmatprep.subr.mxu0 0.0
    %1859 = vmatpush1.msra.mxu0 0.0
    %1860 = vmatprep.subr.mxu0 0.0
    %1861 = vmatpush1.msra.mxu0 0.0
    %1862 = vmatprep.subr.mxu0 0.0
    %1863 = vmatpush1.msra.mxu0 0.0
    %1864 = vmatprep.subr.mxu0 0.0
    %1865 = vmatpush1.msra.mxu0 0.0
    %1866 = vmatprep.subr.mxu0 0.0
    %1867 = vmatpush1.msra.mxu0 0.0
    %1868 = vmatprep.subr.mxu0 0.0
    %1869 = vmatpush1.msra.mxu0 0.0
    %1870 = vmatprep.subr.mxu0 0.0
    %1871 = vmatpush1.msra.mxu0 0.0
    %1872 = vmatprep.subr.mxu0 0.0
    %1873 = vmatpush1.msra.mxu0 0.0
    %1874 = vmatprep.subr.mxu0 0.0
    %1875 = vmatpush1.msra.mxu0 0.0
    %1876 = vmatprep.subr.mxu0 0.0
    %1877 = vmatpush1.msra.mxu0 0.0
    %1878 = vmatprep.mubr.f32.mxu0 0.0
    %1879 = vmatmul.mubr.f32.gmra.mrb[0].mxu0 %v340
    %v1880 = vpop.f32.mrb[0].mxu0
    %v1881 = vadd.f32 %v1812, %v1880
    %v1882 = vpop.f32.mrb[0].mxu0
    %1883 = vmatprep.mubr.f32.mxu0 0.0
    %1884 = vmatmul.mubr.f32.gmra.mrb[0].mxu0 %v343
    %v1885 = vpop.f32.mrb[0].mxu0
    %v1886 = vadd.f32 %v1812, %v1885
    %v1887 = vpop.f32.mrb[0].mxu0
    %1888 = vdwg.mxu0
    %s1889 = scalar_lea.vmem %s21, 128
    %v1890 = vld [vmem:[%s1889] sm:$0xff]
    %v1891 = vld [vmem:[%s1889 + $0x8] sm:$0xff]
    %v1892 = vld [vmem:[%s1889 + $0x10] sm:$0xff]
    %v1893 = vld [vmem:[%s1889 + $0x18] sm:$0xff]
    %v1894 = vld [vmem:[%s1889 + $0x20] sm:$0xff]
    %v1895 = vld [vmem:[%s1889 + $0x28] sm:$0xff]
    %v1896 = vld [vmem:[%s1889 + $0x30] sm:$0xff]
    %v1897 = vld [vmem:[%s1889 + $0x38] sm:$0xff]
    %s1898 = scalar_lea.vmem %s23, 2
    %v1899 = vld [vmem:[%s1898] sm:$0x1]
    %v1901 = vlaneseq
    %v1902 = vshrl.u32 %v1901, 7
    %v1903 = vsub.s32 0, %v1902
    %v1904 = vrot.slane %v1899, %v1903
    %1906 = vmatprep.subr.mxu0 0.0
    %1907 = vmatpush1.msra.mxu0 %v1890
    %1908 = vmatprep.subr.mxu0 0.0
    %1909 = vmatpush1.msra.mxu0 %v1891
    %1910 = vmatprep.subr.mxu0 0.0
    %1911 = vmatpush1.msra.mxu0 %v1892
    %1912 = vmatprep.subr.mxu0 0.0
    %1913 = vmatpush1.msra.mxu0 %v1893
    %1914 = vmatprep.subr.mxu0 0.0
    %1915 = vmatpush1.msra.mxu0 %v1894
    %1916 = vmatprep.subr.mxu0 0.0
    %1917 = vmatpush1.msra.mxu0 %v1895
    %1918 = vmatprep.subr.mxu0 0.0
    %1919 = vmatpush1.msra.mxu0 %v1896
    %1920 = vmatprep.subr.mxu0 0.0
    %1921 = vmatpush1.msra.mxu0 %v1897
    %1922 = vmatprep.subr.mxu0 0.0
    %1923 = vmatpush1.msra.mxu0 0.0
    %1924 = vmatprep.subr.mxu0 0.0
    %1925 = vmatpush1.msra.mxu0 0.0
    %1926 = vmatprep.subr.mxu0 0.0
    %1927 = vmatpush1.msra.mxu0 0.0
    %1928 = vmatprep.subr.mxu0 0.0
    %1929 = vmatpush1.msra.mxu0 0.0
    %1930 = vmatprep.subr.mxu0 0.0
    %1931 = vmatpush1.msra.mxu0 0.0
    %1932 = vmatprep.subr.mxu0 0.0
    %1933 = vmatpush1.msra.mxu0 0.0
    %1934 = vmatprep.subr.mxu0 0.0
    %1935 = vmatpush1.msra.mxu0 0.0
    %1936 = vmatprep.subr.mxu0 0.0
    %1937 = vmatpush1.msra.mxu0 0.0
    %1938 = vmatprep.subr.mxu0 0.0
    %1939 = vmatpush1.msra.mxu0 0.0
    %1940 = vmatprep.subr.mxu0 0.0
    %1941 = vmatpush1.msra.mxu0 0.0
    %1942 = vmatprep.subr.mxu0 0.0
    %1943 = vmatpush1.msra.mxu0 0.0
    %1944 = vmatprep.subr.mxu0 0.0
    %1945 = vmatpush1.msra.mxu0 0.0
    %1946 = vmatprep.subr.mxu0 0.0
    %1947 = vmatpush1.msra.mxu0 0.0
    %1948 = vmatprep.subr.mxu0 0.0
    %1949 = vmatpush1.msra.mxu0 0.0
    %1950 = vmatprep.subr.mxu0 0.0
    %1951 = vmatpush1.msra.mxu0 0.0
    %1952 = vmatprep.subr.mxu0 0.0
    %1953 = vmatpush1.msra.mxu0 0.0
    %1954 = vmatprep.subr.mxu0 0.0
    %1955 = vmatpush1.msra.mxu0 0.0
    %1956 = vmatprep.subr.mxu0 0.0
    %1957 = vmatpush1.msra.mxu0 0.0
    %1958 = vmatprep.subr.mxu0 0.0
    %1959 = vmatpush1.msra.mxu0 0.0
    %1960 = vmatprep.subr.mxu0 0.0
    %1961 = vmatpush1.msra.mxu0 0.0
    %1962 = vmatprep.subr.mxu0 0.0
    %1963 = vmatpush1.msra.mxu0 0.0
    %1964 = vmatprep.subr.mxu0 0.0
    %1965 = vmatpush1.msra.mxu0 0.0
    %1966 = vmatprep.subr.mxu0 0.0
    %1967 = vmatpush1.msra.mxu0 0.0
    %1968 = vmatprep.subr.mxu0 0.0
    %1969 = vmatpush1.msra.mxu0 0.0
    %1970 = vmatprep.mubr.f32.mxu0 0.0
    %1971 = vmatmul.mubr.f32.gmra.mrb[0].mxu0 %v340
    %v1972 = vpop.f32.mrb[0].mxu0
    %v1973 = vadd.f32 %v1904, %v1972
    %v1974 = vpop.f32.mrb[0].mxu0
    %1975 = vmatprep.mubr.f32.mxu0 0.0
    %1976 = vmatmul.mubr.f32.gmra.mrb[0].mxu0 %v343
    %v1977 = vpop.f32.mrb[0].mxu0
    %v1978 = vadd.f32 %v1904, %v1977
    %v1979 = vpop.f32.mrb[0].mxu0
    %1980 = vdwg.mxu0
    %v1982 = vsel %vm600, %v1789, 0
    %v1985 = vsel %vm600, %v1881, 0
    %1987 = vmatprep.subr.mxu0 0.0
    %1988 = vmatpush1.xpose.msra.mxu0 %v1985
    %1989 = vmatprep.subr.mxu0 0.0
    %1990 = vmatpush1.xpose.msra.mxu0 0.0
    %1991 = vmatprep.subr.mxu0 0.0
    %1992 = vmatpush1.xpose.msra.mxu0 0.0
    %1993 = vmatprep.subr.mxu0 0.0
    %1994 = vmatpush1.xpose.msra.mxu0 0.0
    %1995 = vmatprep.subr.mxu0 0.0
    %1996 = vmatpush1.xpose.msra.mxu0 0.0
    %1997 = vmatprep.subr.mxu0 0.0
    %1998 = vmatpush1.xpose.msra.mxu0 0.0
    %1999 = vmatprep.subr.mxu0 0.0
    %2000 = vmatpush1.xpose.msra.mxu0 0.0
    %2001 = vmatprep.subr.mxu0 0.0
    %2002 = vmatpush1.xpose.msra.mxu0 0.0
    %2003 = vmatprep.subr.mxu0 0.0
    %2004 = vmatpush1.xpose.msra.mxu0 0.0
    %2005 = vmatprep.subr.mxu0 0.0
    %2006 = vmatpush1.xpose.msra.mxu0 0.0
    %2007 = vmatprep.subr.mxu0 0.0
    %2008 = vmatpush1.xpose.msra.mxu0 0.0
    %2009 = vmatprep.subr.mxu0 0.0
    %2010 = vmatpush1.xpose.msra.mxu0 0.0
    %2011 = vmatprep.subr.mxu0 0.0
    %2012 = vmatpush1.xpose.msra.mxu0 0.0
    %2013 = vmatprep.subr.mxu0 0.0
    %2014 = vmatpush1.xpose.msra.mxu0 0.0
    %2015 = vmatprep.subr.mxu0 0.0
    %2016 = vmatpush1.xpose.msra.mxu0 0.0
    %2017 = vmatprep.subr.mxu0 0.0
    %2018 = vmatpush1.xpose.msra.mxu0 0.0
    %2019 = vmatprep.subr.mxu0 0.0
    %2020 = vmatpush1.xpose.msra.mxu0 0.0
    %2021 = vmatprep.subr.mxu0 0.0
    %2022 = vmatpush1.xpose.msra.mxu0 0.0
    %2023 = vmatprep.subr.mxu0 0.0
    %2024 = vmatpush1.xpose.msra.mxu0 0.0
    %2025 = vmatprep.subr.mxu0 0.0
    %2026 = vmatpush1.xpose.msra.mxu0 0.0
    %2027 = vmatprep.subr.mxu0 0.0
    %2028 = vmatpush1.xpose.msra.mxu0 0.0
    %2029 = vmatprep.subr.mxu0 0.0
    %2030 = vmatpush1.xpose.msra.mxu0 0.0
    %2031 = vmatprep.subr.mxu0 0.0
    %2032 = vmatpush1.xpose.msra.mxu0 0.0
    %2033 = vmatprep.subr.mxu0 0.0
    %2034 = vmatpush1.xpose.msra.mxu0 0.0
    %2035 = vmatprep.subr.mxu0 0.0
    %2036 = vmatpush1.xpose.msra.mxu0 0.0
    %2037 = vmatprep.subr.mxu0 0.0
    %2038 = vmatpush1.xpose.msra.mxu0 0.0
    %2039 = vmatprep.subr.mxu0 0.0
    %2040 = vmatpush1.xpose.msra.mxu0 0.0
    %2041 = vmatprep.subr.mxu0 0.0
    %2042 = vmatpush1.xpose.msra.mxu0 0.0
    %2043 = vmatprep.subr.mxu0 0.0
    %2044 = vmatpush1.xpose.msra.mxu0 0.0
    %2045 = vmatprep.subr.mxu0 0.0
    %2046 = vmatpush1.xpose.msra.mxu0 0.0
    %2047 = vmatprep.subr.mxu0 0.0
    %2048 = vmatpush1.xpose.msra.mxu0 0.0
    %2049 = vmatprep.subr.mxu0 0.0
    %2050 = vmatpush1.xpose.msra.mxu0 0.0
    %2051 = vmatprep.mubr.f32.mxu0 0.0
    %2052 = vmatmul.mubr.f32.gmra.mrb[0].mxu0 %v1982
    %v2053 = vpop.f32.mrb[0].mxu0
    %v2054 = vadd.f32 0.0, %v2053
    %v2055 = vpop.f32.mrb[0].mxu0
    %2056 = vdwg.mxu0
    %v2058 = vsel %vm600, %v1794, 0
    %v2061 = vsel %vm600, %v1886, 0
    %2063 = vmatprep.subr.mxu0 0.0
    %2064 = vmatpush1.xpose.msra.mxu0 %v2061
    %2065 = vmatprep.subr.mxu0 0.0
    %2066 = vmatpush1.xpose.msra.mxu0 0.0
    %2067 = vmatprep.subr.mxu0 0.0
    %2068 = vmatpush1.xpose.msra.mxu0 0.0
    %2069 = vmatprep.subr.mxu0 0.0
    %2070 = vmatpush1.xpose.msra.mxu0 0.0
    %2071 = vmatprep.subr.mxu0 0.0
    %2072 = vmatpush1.xpose.msra.mxu0 0.0
    %2073 = vmatprep.subr.mxu0 0.0
    %2074 = vmatpush1.xpose.msra.mxu0 0.0
    %2075 = vmatprep.subr.mxu0 0.0
    %2076 = vmatpush1.xpose.msra.mxu0 0.0
    %2077 = vmatprep.subr.mxu0 0.0
    %2078 = vmatpush1.xpose.msra.mxu0 0.0
    %2079 = vmatprep.subr.mxu0 0.0
    %2080 = vmatpush1.xpose.msra.mxu0 0.0
    %2081 = vmatprep.subr.mxu0 0.0
    %2082 = vmatpush1.xpose.msra.mxu0 0.0
    %2083 = vmatprep.subr.mxu0 0.0
    %2084 = vmatpush1.xpose.msra.mxu0 0.0
    %2085 = vmatprep.subr.mxu0 0.0
    %2086 = vmatpush1.xpose.msra.mxu0 0.0
    %2087 = vmatprep.subr.mxu0 0.0
    %2088 = vmatpush1.xpose.msra.mxu0 0.0
    %2089 = vmatprep.subr.mxu0 0.0
    %2090 = vmatpush1.xpose.msra.mxu0 0.0
    %2091 = vmatprep.subr.mxu0 0.0
    %2092 = vmatpush1.xpose.msra.mxu0 0.0
    %2093 = vmatprep.subr.mxu0 0.0
    %2094 = vmatpush1.xpose.msra.mxu0 0.0
    %2095 = vmatprep.subr.mxu0 0.0
    %2096 = vmatpush1.xpose.msra.mxu0 0.0
    %2097 = vmatprep.subr.mxu0 0.0
    %2098 = vmatpush1.xpose.msra.mxu0 0.0
    %2099 = vmatprep.subr.mxu0 0.0
    %2100 = vmatpush1.xpose.msra.mxu0 0.0
    %2101 = vmatprep.subr.mxu0 0.0
    %2102 = vmatpush1.xpose.msra.mxu0 0.0
    %2103 = vmatprep.subr.mxu0 0.0
    %2104 = vmatpush1.xpose.msra.mxu0 0.0
    %2105 = vmatprep.subr.mxu0 0.0
    %2106 = vmatpush1.xpose.msra.mxu0 0.0
    %2107 = vmatprep.subr.mxu0 0.0
    %2108 = vmatpush1.xpose.msra.mxu0 0.0
    %2109 = vmatprep.subr.mxu0 0.0
    %2110 = vmatpush1.xpose.msra.mxu0 0.0
    %2111 = vmatprep.subr.mxu0 0.0
    %2112 = vmatpush1.xpose.msra.mxu0 0.0
    %2113 = vmatprep.subr.mxu0 0.0
    %2114 = vmatpush1.xpose.msra.mxu0 0.0
    %2115 = vmatprep.subr.mxu0 0.0
    %2116 = vmatpush1.xpose.msra.mxu0 0.0
    %2117 = vmatprep.subr.mxu0 0.0
    %2118 = vmatpush1.xpose.msra.mxu0 0.0
    %2119 = vmatprep.subr.mxu0 0.0
    %2120 = vmatpush1.xpose.msra.mxu0 0.0
    %2121 = vmatprep.subr.mxu0 0.0
    %2122 = vmatpush1.xpose.msra.mxu0 0.0
    %2123 = vmatprep.subr.mxu0 0.0
    %2124 = vmatpush1.xpose.msra.mxu0 0.0
    %2125 = vmatprep.subr.mxu0 0.0
    %2126 = vmatpush1.xpose.msra.mxu0 0.0
    %2127 = vmatprep.mubr.f32.mxu0 0.0
    %2128 = vmatmul.mubr.f32.gmra.mrb[0].mxu0 %v2058
    %v2129 = vpop.f32.mrb[0].mxu0
    %v2130 = vadd.f32 0.0, %v2129
    %v2131 = vpop.f32.mrb[0].mxu0
    %2132 = vdwg.mxu0
    %v2133 = vmul.f32 %v2054, 0.25
    %v2134 = vmul.f32 %v2130, 0.25
    %v2135 = vadd.f32 %v2133, %v760
    %v2136 = vadd.f32 %v2134, %v764
    %v2137 = vsel %vm769, %v2135, -inf
    %2138 = vmax.xlane.f32.xlu0 %v2137
    %v2139 = vpop.xlane.xlu0 %2138
    %v2140 = vsel %vm769, %v2136, -inf
    %2141 = vmax.xlane.f32.xlu0 %v2140
    %v2142 = vpop.xlane.xlu0 %2141
    %v2143 = vsub.f32 %v2135, %v2139
    %v2144 = vsub.f32 %v2136, %v2142
    %v2145 = vmul.f32 %v2143, 1.442695
    %v2146 = vpow.pop %v2145
    %v2147 = vmul.f32 %v2144, 1.442695
    %v2148 = vpow.pop %v2147
    %v2149 = vsel %vm769, %v2146, 0.0
    %2150 = vadd.xlane.f32.xlu0 %v2149
    %v2151 = vpop.xlane.xlu0 %2150
    %v2152 = vsel %vm769, %v2148, 0.0
    %2153 = vadd.xlane.f32.xlu0 %v2152
    %v2154 = vpop.xlane.xlu0 %2153
    %v2155 = vrcp.pop %v2151
    %v2156 = vrcp.pop %v2154
    %v2157 = vmul.f32 %v2146, %v2155
    %v2158 = vmul.f32 %v2148, %v2156
    %v2160 = vsel %vm769, %v2157, 0
    %2162 = vmatprep.subr.mxu0 0.0
    %2163 = vmatpush1.msra.mxu0 %v1973
    %2164 = vmatprep.subr.mxu0 0.0
    %2165 = vmatpush1.msra.mxu0 0.0
    %2166 = vmatprep.subr.mxu0 0.0
    %2167 = vmatpush1.msra.mxu0 0.0
    %2168 = vmatprep.subr.mxu0 0.0
    %2169 = vmatpush1.msra.mxu0 0.0
    %2170 = vmatprep.subr.mxu0 0.0
    %2171 = vmatpush1.msra.mxu0 0.0
    %2172 = vmatprep.subr.mxu0 0.0
    %2173 = vmatpush1.msra.mxu0 0.0
    %2174 = vmatprep.subr.mxu0 0.0
    %2175 = vmatpush1.msra.mxu0 0.0
    %2176 = vmatprep.subr.mxu0 0.0
    %2177 = vmatpush1.msra.mxu0 0.0
    %2178 = vmatprep.subr.mxu0 0.0
    %2179 = vmatpush1.msra.mxu0 0.0
    %2180 = vmatprep.subr.mxu0 0.0
    %2181 = vmatpush1.msra.mxu0 0.0
    %2182 = vmatprep.subr.mxu0 0.0
    %2183 = vmatpush1.msra.mxu0 0.0
    %2184 = vmatprep.subr.mxu0 0.0
    %2185 = vmatpush1.msra.mxu0 0.0
    %2186 = vmatprep.subr.mxu0 0.0
    %2187 = vmatpush1.msra.mxu0 0.0
    %2188 = vmatprep.subr.mxu0 0.0
    %2189 = vmatpush1.msra.mxu0 0.0
    %2190 = vmatprep.subr.mxu0 0.0
    %2191 = vmatpush1.msra.mxu0 0.0
    %2192 = vmatprep.subr.mxu0 0.0
    %2193 = vmatpush1.msra.mxu0 0.0
    %2194 = vmatprep.subr.mxu0 0.0
    %2195 = vmatpush1.msra.mxu0 0.0
    %2196 = vmatprep.subr.mxu0 0.0
    %2197 = vmatpush1.msra.mxu0 0.0
    %2198 = vmatprep.subr.mxu0 0.0
    %2199 = vmatpush1.msra.mxu0 0.0
    %2200 = vmatprep.subr.mxu0 0.0
    %2201 = vmatpush1.msra.mxu0 0.0
    %2202 = vmatprep.subr.mxu0 0.0
    %2203 = vmatpush1.msra.mxu0 0.0
    %2204 = vmatprep.subr.mxu0 0.0
    %2205 = vmatpush1.msra.mxu0 0.0
    %2206 = vmatprep.subr.mxu0 0.0
    %2207 = vmatpush1.msra.mxu0 0.0
    %2208 = vmatprep.subr.mxu0 0.0
    %2209 = vmatpush1.msra.mxu0 0.0
    %2210 = vmatprep.subr.mxu0 0.0
    %2211 = vmatpush1.msra.mxu0 0.0
    %2212 = vmatprep.subr.mxu0 0.0
    %2213 = vmatpush1.msra.mxu0 0.0
    %2214 = vmatprep.subr.mxu0 0.0
    %2215 = vmatpush1.msra.mxu0 0.0
    %2216 = vmatprep.subr.mxu0 0.0
    %2217 = vmatpush1.msra.mxu0 0.0
    %2218 = vmatprep.subr.mxu0 0.0
    %2219 = vmatpush1.msra.mxu0 0.0
    %2220 = vmatprep.subr.mxu0 0.0
    %2221 = vmatpush1.msra.mxu0 0.0
    %2222 = vmatprep.subr.mxu0 0.0
    %2223 = vmatpush1.msra.mxu0 0.0
    %2224 = vmatprep.subr.mxu0 0.0
    %2225 = vmatpush1.msra.mxu0 0.0
    %2226 = vmatprep.mubr.f32.mxu0 0.0
    %2227 = vmatmul.mubr.f32.gmra.mrb[0].mxu0 %v2160
    %v2228 = vpop.f32.mrb[0].mxu0
    %v2229 = vadd.f32 0.0, %v2228
    %v2230 = vpop.f32.mrb[0].mxu0
    %2231 = vdwg.mxu0
    %v2233 = vsel %vm769, %v2158, 0
    %2235 = vmatprep.subr.mxu0 0.0
    %2236 = vmatpush1.msra.mxu0 %v1978
    %2237 = vmatprep.subr.mxu0 0.0
    %2238 = vmatpush1.msra.mxu0 0.0
    %2239 = vmatprep.subr.mxu0 0.0
    %2240 = vmatpush1.msra.mxu0 0.0
    %2241 = vmatprep.subr.mxu0 0.0
    %2242 = vmatpush1.msra.mxu0 0.0
    %2243 = vmatprep.subr.mxu0 0.0
    %2244 = vmatpush1.msra.mxu0 0.0
    %2245 = vmatprep.subr.mxu0 0.0
    %2246 = vmatpush1.msra.mxu0 0.0
    %2247 = vmatprep.subr.mxu0 0.0
    %2248 = vmatpush1.msra.mxu0 0.0
    %2249 = vmatprep.subr.mxu0 0.0
    %2250 = vmatpush1.msra.mxu0 0.0
    %2251 = vmatprep.subr.mxu0 0.0
    %2252 = vmatpush1.msra.mxu0 0.0
    %2253 = vmatprep.subr.mxu0 0.0
    %2254 = vmatpush1.msra.mxu0 0.0
    %2255 = vmatprep.subr.mxu0 0.0
    %2256 = vmatpush1.msra.mxu0 0.0
    %2257 = vmatprep.subr.mxu0 0.0
    %2258 = vmatpush1.msra.mxu0 0.0
    %2259 = vmatprep.subr.mxu0 0.0
    %2260 = vmatpush1.msra.mxu0 0.0
    %2261 = vmatprep.subr.mxu0 0.0
    %2262 = vmatpush1.msra.mxu0 0.0
    %2263 = vmatprep.subr.mxu0 0.0
    %2264 = vmatpush1.msra.mxu0 0.0
    %2265 = vmatprep.subr.mxu0 0.0
    %2266 = vmatpush1.msra.mxu0 0.0
    %2267 = vmatprep.subr.mxu0 0.0
    %2268 = vmatpush1.msra.mxu0 0.0
    %2269 = vmatprep.subr.mxu0 0.0
    %2270 = vmatpush1.msra.mxu0 0.0
    %2271 = vmatprep.subr.mxu0 0.0
    %2272 = vmatpush1.msra.mxu0 0.0
    %2273 = vmatprep.subr.mxu0 0.0
    %2274 = vmatpush1.msra.mxu0 0.0
    %2275 = vmatprep.subr.mxu0 0.0
    %2276 = vmatpush1.msra.mxu0 0.0
    %2277 = vmatprep.subr.mxu0 0.0
    %2278 = vmatpush1.msra.mxu0 0.0
    %2279 = vmatprep.subr.mxu0 0.0
    %2280 = vmatpush1.msra.mxu0 0.0
    %2281 = vmatprep.subr.mxu0 0.0
    %2282 = vmatpush1.msra.mxu0 0.0
    %2283 = vmatprep.subr.mxu0 0.0
    %2284 = vmatpush1.msra.mxu0 0.0
    %2285 = vmatprep.subr.mxu0 0.0
    %2286 = vmatpush1.msra.mxu0 0.0
    %2287 = vmatprep.subr.mxu0 0.0
    %2288 = vmatpush1.msra.mxu0 0.0
    %2289 = vmatprep.subr.mxu0 0.0
    %2290 = vmatpush1.msra.mxu0 0.0
    %2291 = vmatprep.subr.mxu0 0.0
    %2292 = vmatpush1.msra.mxu0 0.0
    %2293 = vmatprep.subr.mxu0 0.0
    %2294 = vmatpush1.msra.mxu0 0.0
    %2295 = vmatprep.subr.mxu0 0.0
    %2296 = vmatpush1.msra.mxu0 0.0
    %2297 = vmatprep.subr.mxu0 0.0
    %2298 = vmatpush1.msra.mxu0 0.0
    %2299 = vmatprep.mubr.f32.mxu0 0.0
    %2300 = vmatmul.mubr.f32.gmra.mrb[0].mxu0 %v2233
    %v2301 = vpop.f32.mrb[0].mxu0
    %v2302 = vadd.f32 0.0, %v2301
    %v2303 = vpop.f32.mrb[0].mxu0
    %2304 = vdwg.mxu0
    %s2305 = scalar_lea.vmem %s25, 32
    %v2306 = vld [vmem:[%s2305] sm:$0xff]
    %v2307 = vld [vmem:[%s2305 + $0x8] sm:$0xff]
    %v2309 = vsel %vm600, %v2229, 0
    %v2312 = vsel %vm600, %v2302, 0
    %2314 = vmatprep.subr.mxu0 0.0
    %2315 = vmatpush1.msra.mxu0 %v2306
    %2316 = vmatprep.subr.mxu0 0.0
    %2317 = vmatpush1.msra.mxu0 %v2307
    %2318 = vmatprep.subr.mxu0 0.0
    %2319 = vmatpush1.msra.mxu0 0.0
    %2320 = vmatprep.subr.mxu0 0.0
    %2321 = vmatpush1.msra.mxu0 0.0
    %2322 = vmatprep.subr.mxu0 0.0
    %2323 = vmatpush1.msra.mxu0 0.0
    %2324 = vmatprep.subr.mxu0 0.0
    %2325 = vmatpush1.msra.mxu0 0.0
    %2326 = vmatprep.subr.mxu0 0.0
    %2327 = vmatpush1.msra.mxu0 0.0
    %2328 = vmatprep.subr.mxu0 0.0
    %2329 = vmatpush1.msra.mxu0 0.0
    %2330 = vmatprep.subr.mxu0 0.0
    %2331 = vmatpush1.msra.mxu0 0.0
    %2332 = vmatprep.subr.mxu0 0.0
    %2333 = vmatpush1.msra.mxu0 0.0
    %2334 = vmatprep.subr.mxu0 0.0
    %2335 = vmatpush1.msra.mxu0 0.0
    %2336 = vmatprep.subr.mxu0 0.0
    %2337 = vmatpush1.msra.mxu0 0.0
    %2338 = vmatprep.subr.mxu0 0.0
    %2339 = vmatpush1.msra.mxu0 0.0
    %2340 = vmatprep.subr.mxu0 0.0
    %2341 = vmatpush1.msra.mxu0 0.0
    %2342 = vmatprep.subr.mxu0 0.0
    %2343 = vmatpush1.msra.mxu0 0.0
    %2344 = vmatprep.subr.mxu0 0.0
    %2345 = vmatpush1.msra.mxu0 0.0
    %2346 = vmatprep.subr.mxu0 0.0
    %2347 = vmatpush1.msra.mxu0 0.0
    %2348 = vmatprep.subr.mxu0 0.0
    %2349 = vmatpush1.msra.mxu0 0.0
    %2350 = vmatprep.subr.mxu0 0.0
    %2351 = vmatpush1.msra.mxu0 0.0
    %2352 = vmatprep.subr.mxu0 0.0
    %2353 = vmatpush1.msra.mxu0 0.0
    %2354 = vmatprep.subr.mxu0 0.0
    %2355 = vmatpush1.msra.mxu0 0.0
    %2356 = vmatprep.subr.mxu0 0.0
    %2357 = vmatpush1.msra.mxu0 0.0
    %2358 = vmatprep.subr.mxu0 0.0
    %2359 = vmatpush1.msra.mxu0 0.0
    %2360 = vmatprep.subr.mxu0 0.0
    %2361 = vmatpush1.msra.mxu0 0.0
    %2362 = vmatprep.subr.mxu0 0.0
    %2363 = vmatpush1.msra.mxu0 0.0
    %2364 = vmatprep.subr.mxu0 0.0
    %2365 = vmatpush1.msra.mxu0 0.0
    %2366 = vmatprep.subr.mxu0 0.0
    %2367 = vmatpush1.msra.mxu0 0.0
    %2368 = vmatprep.subr.mxu0 0.0
    %2369 = vmatpush1.msra.mxu0 0.0
    %2370 = vmatprep.subr.mxu0 0.0
    %2371 = vmatpush1.msra.mxu0 0.0
    %2372 = vmatprep.subr.mxu0 0.0
    %2373 = vmatpush1.msra.mxu0 0.0
    %2374 = vmatprep.subr.mxu0 0.0
    %2375 = vmatpush1.msra.mxu0 0.0
    %2376 = vmatprep.subr.mxu0 0.0
    %2377 = vmatpush1.msra.mxu0 0.0
    %2378 = vmatprep.mubr.f32.mxu0 0.0
    %2379 = vmatmul.mubr.f32.gmra.mrb[0].mxu0 %v2309
    %v2380 = vpop.f32.mrb[0].mxu0
    %v2381 = vadd.f32 0.0, %v2380
    %v2382 = vpop.f32.mrb[0].mxu0
    %2383 = vmatprep.mubr.f32.mxu0 0.0
    %2384 = vmatmul.mubr.f32.gmra.mrb[0].mxu0 %v2312
    %v2385 = vpop.f32.mrb[0].mxu0
    %v2386 = vadd.f32 0.0, %v2385
    %v2387 = vpop.f32.mrb[0].mxu0
    %2388 = vdwg.mxu0
    %v2389 = vadd.f32 %v1697, %v2381
    %v2390 = vadd.f32 %v1702, %v2386
    %s2391 = scalar_lea.vmem %s13, 192
    %v2392 = vld [vmem:[%s2391] sm:$0xff]
    %v2393 = vld [vmem:[%s2391 + $0x8] sm:$0xff]
    %v2394 = vld [vmem:[%s2391 + $0x10] sm:$0xff]
    %v2395 = vld [vmem:[%s2391 + $0x18] sm:$0xff]
    %v2396 = vld [vmem:[%s2391 + $0x20] sm:$0xff]
    %v2397 = vld [vmem:[%s2391 + $0x28] sm:$0xff]
    %v2398 = vld [vmem:[%s2391 + $0x30] sm:$0xff]
    %v2399 = vld [vmem:[%s2391 + $0x38] sm:$0xff]
    %s2400 = scalar_lea.vmem %s15, 3
    %v2401 = vld [vmem:[%s2400] sm:$0x1]
    %v2403 = vlaneseq
    %v2404 = vshrl.u32 %v2403, 7
    %v2405 = vsub.s32 0, %v2404
    %v2406 = vrot.slane %v2401, %v2405
    %2408 = vmatprep.subr.mxu0 0.0
    %2409 = vmatpush1.msra.mxu0 %v2392
    %2410 = vmatprep.subr.mxu0 0.0
    %2411 = vmatpush1.msra.mxu0 %v2393
    %2412 = vmatprep.subr.mxu0 0.0
    %2413 = vmatpush1.msra.mxu0 %v2394
    %2414 = vmatprep.subr.mxu0 0.0
    %2415 = vmatpush1.msra.mxu0 %v2395
    %2416 = vmatprep.subr.mxu0 0.0
    %2417 = vmatpush1.msra.mxu0 %v2396
    %2418 = vmatprep.subr.mxu0 0.0
    %2419 = vmatpush1.msra.mxu0 %v2397
    %2420 = vmatprep.subr.mxu0 0.0
    %2421 = vmatpush1.msra.mxu0 %v2398
    %2422 = vmatprep.subr.mxu0 0.0
    %2423 = vmatpush1.msra.mxu0 %v2399
    %2424 = vmatprep.subr.mxu0 0.0
    %2425 = vmatpush1.msra.mxu0 0.0
    %2426 = vmatprep.subr.mxu0 0.0
    %2427 = vmatpush1.msra.mxu0 0.0
    %2428 = vmatprep.subr.mxu0 0.0
    %2429 = vmatpush1.msra.mxu0 0.0
    %2430 = vmatprep.subr.mxu0 0.0
    %2431 = vmatpush1.msra.mxu0 0.0
    %2432 = vmatprep.subr.mxu0 0.0
    %2433 = vmatpush1.msra.mxu0 0.0
    %2434 = vmatprep.subr.mxu0 0.0
    %2435 = vmatpush1.msra.mxu0 0.0
    %2436 = vmatprep.subr.mxu0 0.0
    %2437 = vmatpush1.msra.mxu0 0.0
    %2438 = vmatprep.subr.mxu0 0.0
    %2439 = vmatpush1.msra.mxu0 0.0
    %2440 = vmatprep.subr.mxu0 0.0
    %2441 = vmatpush1.msra.mxu0 0.0
    %2442 = vmatprep.subr.mxu0 0.0
    %2443 = vmatpush1.msra.mxu0 0.0
    %2444 = vmatprep.subr.mxu0 0.0
    %2445 = vmatpush1.msra.mxu0 0.0
    %2446 = vmatprep.subr.mxu0 0.0
    %2447 = vmatpush1.msra.mxu0 0.0
    %2448 = vmatprep.subr.mxu0 0.0
    %2449 = vmatpush1.msra.mxu0 0.0
    %2450 = vmatprep.subr.mxu0 0.0
    %2451 = vmatpush1.msra.mxu0 0.0
    %2452 = vmatprep.subr.mxu0 0.0
    %2453 = vmatpush1.msra.mxu0 0.0
    %2454 = vmatprep.subr.mxu0 0.0
    %2455 = vmatpush1.msra.mxu0 0.0
    %2456 = vmatprep.subr.mxu0 0.0
    %2457 = vmatpush1.msra.mxu0 0.0
    %2458 = vmatprep.subr.mxu0 0.0
    %2459 = vmatpush1.msra.mxu0 0.0
    %2460 = vmatprep.subr.mxu0 0.0
    %2461 = vmatpush1.msra.mxu0 0.0
    %2462 = vmatprep.subr.mxu0 0.0
    %2463 = vmatpush1.msra.mxu0 0.0
    %2464 = vmatprep.subr.mxu0 0.0
    %2465 = vmatpush1.msra.mxu0 0.0
    %2466 = vmatprep.subr.mxu0 0.0
    %2467 = vmatpush1.msra.mxu0 0.0
    %2468 = vmatprep.subr.mxu0 0.0
    %2469 = vmatpush1.msra.mxu0 0.0
    %2470 = vmatprep.subr.mxu0 0.0
    %2471 = vmatpush1.msra.mxu0 0.0
    %2472 = vmatprep.mubr.f32.mxu0 0.0
    %2473 = vmatmul.mubr.f32.gmra.mrb[0].mxu0 %v340
    %v2474 = vpop.f32.mrb[0].mxu0
    %v2475 = vadd.f32 %v2406, %v2474
    %v2476 = vpop.f32.mrb[0].mxu0
    %2477 = vmatprep.mubr.f32.mxu0 0.0
    %2478 = vmatmul.mubr.f32.gmra.mrb[0].mxu0 %v343
    %v2479 = vpop.f32.mrb[0].mxu0
    %v2480 = vadd.f32 %v2406, %v2479
    %v2481 = vpop.f32.mrb[0].mxu0
    %2482 = vdwg.mxu0
    %s2483 = scalar_lea.vmem %s17, 192
    %v2484 = vld [vmem:[%s2483] sm:$0xff]
    %v2485 = vld [vmem:[%s2483 + $0x8] sm:$0xff]
    %v2486 = vld [vmem:[%s2483 + $0x10] sm:$0xff]
    %v2487 = vld [vmem:[%s2483 + $0x18] sm:$0xff]
    %v2488 = vld [vmem:[%s2483 + $0x20] sm:$0xff]
    %v2489 = vld [vmem:[%s2483 + $0x28] sm:$0xff]
    %v2490 = vld [vmem:[%s2483 + $0x30] sm:$0xff]
    %v2491 = vld [vmem:[%s2483 + $0x38] sm:$0xff]
    %s2492 = scalar_lea.vmem %s19, 3
    %v2493 = vld [vmem:[%s2492] sm:$0x1]
    %v2495 = vlaneseq
    %v2496 = vshrl.u32 %v2495, 7
    %v2497 = vsub.s32 0, %v2496
    %v2498 = vrot.slane %v2493, %v2497
    %2500 = vmatprep.subr.mxu0 0.0
    %2501 = vmatpush1.msra.mxu0 %v2484
    %2502 = vmatprep.subr.mxu0 0.0
    %2503 = vmatpush1.msra.mxu0 %v2485
    %2504 = vmatprep.subr.mxu0 0.0
    %2505 = vmatpush1.msra.mxu0 %v2486
    %2506 = vmatprep.subr.mxu0 0.0
    %2507 = vmatpush1.msra.mxu0 %v2487
    %2508 = vmatprep.subr.mxu0 0.0
    %2509 = vmatpush1.msra.mxu0 %v2488
    %2510 = vmatprep.subr.mxu0 0.0
    %2511 = vmatpush1.msra.mxu0 %v2489
    %2512 = vmatprep.subr.mxu0 0.0
    %2513 = vmatpush1.msra.mxu0 %v2490
    %2514 = vmatprep.subr.mxu0 0.0
    %2515 = vmatpush1.msra.mxu0 %v2491
    %2516 = vmatprep.subr.mxu0 0.0
    %2517 = vmatpush1.msra.mxu0 0.0
    %2518 = vmatprep.subr.mxu0 0.0
    %2519 = vmatpush1.msra.mxu0 0.0
    %2520 = vmatprep.subr.mxu0 0.0
    %2521 = vmatpush1.msra.mxu0 0.0
    %2522 = vmatprep.subr.mxu0 0.0
    %2523 = vmatpush1.msra.mxu0 0.0
    %2524 = vmatprep.subr.mxu0 0.0
    %2525 = vmatpush1.msra.mxu0 0.0
    %2526 = vmatprep.subr.mxu0 0.0
    %2527 = vmatpush1.msra.mxu0 0.0
    %2528 = vmatprep.subr.mxu0 0.0
    %2529 = vmatpush1.msra.mxu0 0.0
    %2530 = vmatprep.subr.mxu0 0.0
    %2531 = vmatpush1.msra.mxu0 0.0
    %2532 = vmatprep.subr.mxu0 0.0
    %2533 = vmatpush1.msra.mxu0 0.0
    %2534 = vmatprep.subr.mxu0 0.0
    %2535 = vmatpush1.msra.mxu0 0.0
    %2536 = vmatprep.subr.mxu0 0.0
    %2537 = vmatpush1.msra.mxu0 0.0
    %2538 = vmatprep.subr.mxu0 0.0
    %2539 = vmatpush1.msra.mxu0 0.0
    %2540 = vmatprep.subr.mxu0 0.0
    %2541 = vmatpush1.msra.mxu0 0.0
    %2542 = vmatprep.subr.mxu0 0.0
    %2543 = vmatpush1.msra.mxu0 0.0
    %2544 = vmatprep.subr.mxu0 0.0
    %2545 = vmatpush1.msra.mxu0 0.0
    %2546 = vmatprep.subr.mxu0 0.0
    %2547 = vmatpush1.msra.mxu0 0.0
    %2548 = vmatprep.subr.mxu0 0.0
    %2549 = vmatpush1.msra.mxu0 0.0
    %2550 = vmatprep.subr.mxu0 0.0
    %2551 = vmatpush1.msra.mxu0 0.0
    %2552 = vmatprep.subr.mxu0 0.0
    %2553 = vmatpush1.msra.mxu0 0.0
    %2554 = vmatprep.subr.mxu0 0.0
    %2555 = vmatpush1.msra.mxu0 0.0
    %2556 = vmatprep.subr.mxu0 0.0
    %2557 = vmatpush1.msra.mxu0 0.0
    %2558 = vmatprep.subr.mxu0 0.0
    %2559 = vmatpush1.msra.mxu0 0.0
    %2560 = vmatprep.subr.mxu0 0.0
    %2561 = vmatpush1.msra.mxu0 0.0
    %2562 = vmatprep.subr.mxu0 0.0
    %2563 = vmatpush1.msra.mxu0 0.0
    %2564 = vmatprep.mubr.f32.mxu0 0.0
    %2565 = vmatmul.mubr.f32.gmra.mrb[0].mxu0 %v340
    %v2566 = vpop.f32.mrb[0].mxu0
    %v2567 = vadd.f32 %v2498, %v2566
    %v2568 = vpop.f32.mrb[0].mxu0
    %2569 = vmatprep.mubr.f32.mxu0 0.0
    %2570 = vmatmul.mubr.f32.gmra.mrb[0].mxu0 %v343
    %v2571 = vpop.f32.mrb[0].mxu0
    %v2572 = vadd.f32 %v2498, %v2571
    %v2573 = vpop.f32.mrb[0].mxu0
    %2574 = vdwg.mxu0
    %s2575 = scalar_lea.vmem %s21, 192
    %v2576 = vld [vmem:[%s2575] sm:$0xff]
    %v2577 = vld [vmem:[%s2575 + $0x8] sm:$0xff]
    %v2578 = vld [vmem:[%s2575 + $0x10] sm:$0xff]
    %v2579 = vld [vmem:[%s2575 + $0x18] sm:$0xff]
    %v2580 = vld [vmem:[%s2575 + $0x20] sm:$0xff]
    %v2581 = vld [vmem:[%s2575 + $0x28] sm:$0xff]
    %v2582 = vld [vmem:[%s2575 + $0x30] sm:$0xff]
    %v2583 = vld [vmem:[%s2575 + $0x38] sm:$0xff]
    %s2584 = scalar_lea.vmem %s23, 3
    %v2585 = vld [vmem:[%s2584] sm:$0x1]
    %v2587 = vlaneseq
    %v2588 = vshrl.u32 %v2587, 7
    %v2589 = vsub.s32 0, %v2588
    %v2590 = vrot.slane %v2585, %v2589
    %2592 = vmatprep.subr.mxu0 0.0
    %2593 = vmatpush1.msra.mxu0 %v2576
    %2594 = vmatprep.subr.mxu0 0.0
    %2595 = vmatpush1.msra.mxu0 %v2577
    %2596 = vmatprep.subr.mxu0 0.0
    %2597 = vmatpush1.msra.mxu0 %v2578
    %2598 = vmatprep.subr.mxu0 0.0
    %2599 = vmatpush1.msra.mxu0 %v2579
    %2600 = vmatprep.subr.mxu0 0.0
    %2601 = vmatpush1.msra.mxu0 %v2580
    %2602 = vmatprep.subr.mxu0 0.0
    %2603 = vmatpush1.msra.mxu0 %v2581
    %2604 = vmatprep.subr.mxu0 0.0
    %2605 = vmatpush1.msra.mxu0 %v2582
    %2606 = vmatprep.subr.mxu0 0.0
    %2607 = vmatpush1.msra.mxu0 %v2583
    %2608 = vmatprep.subr.mxu0 0.0
    %2609 = vmatpush1.msra.mxu0 0.0
    %2610 = vmatprep.subr.mxu0 0.0
    %2611 = vmatpush1.msra.mxu0 0.0
    %2612 = vmatprep.subr.mxu0 0.0
    %2613 = vmatpush1.msra.mxu0 0.0
    %2614 = vmatprep.subr.mxu0 0.0
    %2615 = vmatpush1.msra.mxu0 0.0
    %2616 = vmatprep.subr.mxu0 0.0
    %2617 = vmatpush1.msra.mxu0 0.0
    %2618 = vmatprep.subr.mxu0 0.0
    %2619 = vmatpush1.msra.mxu0 0.0
    %2620 = vmatprep.subr.mxu0 0.0
    %2621 = vmatpush1.msra.mxu0 0.0
    %2622 = vmatprep.subr.mxu0 0.0
    %2623 = vmatpush1.msra.mxu0 0.0
    %2624 = vmatprep.subr.mxu0 0.0
    %2625 = vmatpush1.msra.mxu0 0.0
    %2626 = vmatprep.subr.mxu0 0.0
    %2627 = vmatpush1.msra.mxu0 0.0
    %2628 = vmatprep.subr.mxu0 0.0
    %2629 = vmatpush1.msra.mxu0 0.0
    %2630 = vmatprep.subr.mxu0 0.0
    %2631 = vmatpush1.msra.mxu0 0.0
    %2632 = vmatprep.subr.mxu0 0.0
    %2633 = vmatpush1.msra.mxu0 0.0
    %2634 = vmatprep.subr.mxu0 0.0
    %2635 = vmatpush1.msra.mxu0 0.0
    %2636 = vmatprep.subr.mxu0 0.0
    %2637 = vmatpush1.msra.mxu0 0.0
    %2638 = vmatprep.subr.mxu0 0.0
    %2639 = vmatpush1.msra.mxu0 0.0
    %2640 = vmatprep.subr.mxu0 0.0
    %2641 = vmatpush1.msra.mxu0 0.0
    %2642 = vmatprep.subr.mxu0 0.0
    %2643 = vmatpush1.msra.mxu0 0.0
    %2644 = vmatprep.subr.mxu0 0.0
    %2645 = vmatpush1.msra.mxu0 0.0
    %2646 = vmatprep.subr.mxu0 0.0
    %2647 = vmatpush1.msra.mxu0 0.0
    %2648 = vmatprep.subr.mxu0 0.0
    %2649 = vmatpush1.msra.mxu0 0.0
    %2650 = vmatprep.subr.mxu0 0.0
    %2651 = vmatpush1.msra.mxu0 0.0
    %2652 = vmatprep.subr.mxu0 0.0
    %2653 = vmatpush1.msra.mxu0 0.0
    %2654 = vmatprep.subr.mxu0 0.0
    %2655 = vmatpush1.msra.mxu0 0.0
    %2656 = vmatprep.mubr.f32.mxu0 0.0
    %2657 = vmatmul.mubr.f32.gmra.mrb[0].mxu0 %v340
    %v2658 = vpop.f32.mrb[0].mxu0
    %v2659 = vadd.f32 %v2590, %v2658
    %v2660 = vpop.f32.mrb[0].mxu0
    %2661 = vmatprep.mubr.f32.mxu0 0.0
    %2662 = vmatmul.mubr.f32.gmra.mrb[0].mxu0 %v343
    %v2663 = vpop.f32.mrb[0].mxu0
    %v2664 = vadd.f32 %v2590, %v2663
    %v2665 = vpop.f32.mrb[0].mxu0
    %2666 = vdwg.mxu0
    %v2668 = vsel %vm600, %v2475, 0
    %v2671 = vsel %vm600, %v2567, 0
    %2673 = vmatprep.subr.mxu0 0.0
    %2674 = vmatpush1.xpose.msra.mxu0 %v2671
    %2675 = vmatprep.subr.mxu0 0.0
    %2676 = vmatpush1.xpose.msra.mxu0 0.0
    %2677 = vmatprep.subr.mxu0 0.0
    %2678 = vmatpush1.xpose.msra.mxu0 0.0
    %2679 = vmatprep.subr.mxu0 0.0
    %2680 = vmatpush1.xpose.msra.mxu0 0.0
    %2681 = vmatprep.subr.mxu0 0.0
    %2682 = vmatpush1.xpose.msra.mxu0 0.0
    %2683 = vmatprep.subr.mxu0 0.0
    %2684 = vmatpush1.xpose.msra.mxu0 0.0
    %2685 = vmatprep.subr.mxu0 0.0
    %2686 = vmatpush1.xpose.msra.mxu0 0.0
    %2687 = vmatprep.subr.mxu0 0.0
    %2688 = vmatpush1.xpose.msra.mxu0 0.0
    %2689 = vmatprep.subr.mxu0 0.0
    %2690 = vmatpush1.xpose.msra.mxu0 0.0
    %2691 = vmatprep.subr.mxu0 0.0
    %2692 = vmatpush1.xpose.msra.mxu0 0.0
    %2693 = vmatprep.subr.mxu0 0.0
    %2694 = vmatpush1.xpose.msra.mxu0 0.0
    %2695 = vmatprep.subr.mxu0 0.0
    %2696 = vmatpush1.xpose.msra.mxu0 0.0
    %2697 = vmatprep.subr.mxu0 0.0
    %2698 = vmatpush1.xpose.msra.mxu0 0.0
    %2699 = vmatprep.subr.mxu0 0.0
    %2700 = vmatpush1.xpose.msra.mxu0 0.0
    %2701 = vmatprep.subr.mxu0 0.0
    %2702 = vmatpush1.xpose.msra.mxu0 0.0
    %2703 = vmatprep.subr.mxu0 0.0
    %2704 = vmatpush1.xpose.msra.mxu0 0.0
    %2705 = vmatprep.subr.mxu0 0.0
    %2706 = vmatpush1.xpose.msra.mxu0 0.0
    %2707 = vmatprep.subr.mxu0 0.0
    %2708 = vmatpush1.xpose.msra.mxu0 0.0
    %2709 = vmatprep.subr.mxu0 0.0
    %2710 = vmatpush1.xpose.msra.mxu0 0.0
    %2711 = vmatprep.subr.mxu0 0.0
    %2712 = vmatpush1.xpose.msra.mxu0 0.0
    %2713 = vmatprep.subr.mxu0 0.0
    %2714 = vmatpush1.xpose.msra.mxu0 0.0
    %2715 = vmatprep.subr.mxu0 0.0
    %2716 = vmatpush1.xpose.msra.mxu0 0.0
    %2717 = vmatprep.subr.mxu0 0.0
    %2718 = vmatpush1.xpose.msra.mxu0 0.0
    %2719 = vmatprep.subr.mxu0 0.0
    %2720 = vmatpush1.xpose.msra.mxu0 0.0
    %2721 = vmatprep.subr.mxu0 0.0
    %2722 = vmatpush1.xpose.msra.mxu0 0.0
    %2723 = vmatprep.subr.mxu0 0.0
    %2724 = vmatpush1.xpose.msra.mxu0 0.0
    %2725 = vmatprep.subr.mxu0 0.0
    %2726 = vmatpush1.xpose.msra.mxu0 0.0
    %2727 = vmatprep.subr.mxu0 0.0
    %2728 = vmatpush1.xpose.msra.mxu0 0.0
    %2729 = vmatprep.subr.mxu0 0.0
    %2730 = vmatpush1.xpose.msra.mxu0 0.0
    %2731 = vmatprep.subr.mxu0 0.0
    %2732 = vmatpush1.xpose.msra.mxu0 0.0
    %2733 = vmatprep.subr.mxu0 0.0
    %2734 = vmatpush1.xpose.msra.mxu0 0.0
    %2735 = vmatprep.subr.mxu0 0.0
    %2736 = vmatpush1.xpose.msra.mxu0 0.0
    %2737 = vmatprep.mubr.f32.mxu0 0.0
    %2738 = vmatmul.mubr.f32.gmra.mrb[0].mxu0 %v2668
    %v2739 = vpop.f32.mrb[0].mxu0
    %v2740 = vadd.f32 0.0, %v2739
    %v2741 = vpop.f32.mrb[0].mxu0
    %2742 = vdwg.mxu0
    %v2744 = vsel %vm600, %v2480, 0
    %v2747 = vsel %vm600, %v2572, 0
    %2749 = vmatprep.subr.mxu0 0.0
    %2750 = vmatpush1.xpose.msra.mxu0 %v2747
    %2751 = vmatprep.subr.mxu0 0.0
    %2752 = vmatpush1.xpose.msra.mxu0 0.0
    %2753 = vmatprep.subr.mxu0 0.0
    %2754 = vmatpush1.xpose.msra.mxu0 0.0
    %2755 = vmatprep.subr.mxu0 0.0
    %2756 = vmatpush1.xpose.msra.mxu0 0.0
    %2757 = vmatprep.subr.mxu0 0.0
    %2758 = vmatpush1.xpose.msra.mxu0 0.0
    %2759 = vmatprep.subr.mxu0 0.0
    %2760 = vmatpush1.xpose.msra.mxu0 0.0
    %2761 = vmatprep.subr.mxu0 0.0
    %2762 = vmatpush1.xpose.msra.mxu0 0.0
    %2763 = vmatprep.subr.mxu0 0.0
    %2764 = vmatpush1.xpose.msra.mxu0 0.0
    %2765 = vmatprep.subr.mxu0 0.0
    %2766 = vmatpush1.xpose.msra.mxu0 0.0
    %2767 = vmatprep.subr.mxu0 0.0
    %2768 = vmatpush1.xpose.msra.mxu0 0.0
    %2769 = vmatprep.subr.mxu0 0.0
    %2770 = vmatpush1.xpose.msra.mxu0 0.0
    %2771 = vmatprep.subr.mxu0 0.0
    %2772 = vmatpush1.xpose.msra.mxu0 0.0
    %2773 = vmatprep.subr.mxu0 0.0
    %2774 = vmatpush1.xpose.msra.mxu0 0.0
    %2775 = vmatprep.subr.mxu0 0.0
    %2776 = vmatpush1.xpose.msra.mxu0 0.0
    %2777 = vmatprep.subr.mxu0 0.0
    %2778 = vmatpush1.xpose.msra.mxu0 0.0
    %2779 = vmatprep.subr.mxu0 0.0
    %2780 = vmatpush1.xpose.msra.mxu0 0.0
    %2781 = vmatprep.subr.mxu0 0.0
    %2782 = vmatpush1.xpose.msra.mxu0 0.0
    %2783 = vmatprep.subr.mxu0 0.0
    %2784 = vmatpush1.xpose.msra.mxu0 0.0
    %2785 = vmatprep.subr.mxu0 0.0
    %2786 = vmatpush1.xpose.msra.mxu0 0.0
    %2787 = vmatprep.subr.mxu0 0.0
    %2788 = vmatpush1.xpose.msra.mxu0 0.0
    %2789 = vmatprep.subr.mxu0 0.0
    %2790 = vmatpush1.xpose.msra.mxu0 0.0
    %2791 = vmatprep.subr.mxu0 0.0
    %2792 = vmatpush1.xpose.msra.mxu0 0.0
    %2793 = vmatprep.subr.mxu0 0.0
    %2794 = vmatpush1.xpose.msra.mxu0 0.0
    %2795 = vmatprep.subr.mxu0 0.0
    %2796 = vmatpush1.xpose.msra.mxu0 0.0
    %2797 = vmatprep.subr.mxu0 0.0
    %2798 = vmatpush1.xpose.msra.mxu0 0.0
    %2799 = vmatprep.subr.mxu0 0.0
    %2800 = vmatpush1.xpose.msra.mxu0 0.0
    %2801 = vmatprep.subr.mxu0 0.0
    %2802 = vmatpush1.xpose.msra.mxu0 0.0
    %2803 = vmatprep.subr.mxu0 0.0
    %2804 = vmatpush1.xpose.msra.mxu0 0.0
    %2805 = vmatprep.subr.mxu0 0.0
    %2806 = vmatpush1.xpose.msra.mxu0 0.0
    %2807 = vmatprep.subr.mxu0 0.0
    %2808 = vmatpush1.xpose.msra.mxu0 0.0
    %2809 = vmatprep.subr.mxu0 0.0
    %2810 = vmatpush1.xpose.msra.mxu0 0.0
    %2811 = vmatprep.subr.mxu0 0.0
    %2812 = vmatpush1.xpose.msra.mxu0 0.0
    %2813 = vmatprep.mubr.f32.mxu0 0.0
    %2814 = vmatmul.mubr.f32.gmra.mrb[0].mxu0 %v2744
    %v2815 = vpop.f32.mrb[0].mxu0
    %v2816 = vadd.f32 0.0, %v2815
    %v2817 = vpop.f32.mrb[0].mxu0
    %2818 = vdwg.mxu0
    %v2819 = vmul.f32 %v2740, 0.25
    %v2820 = vmul.f32 %v2816, 0.25
    %v2821 = vadd.f32 %v2819, %v760
    %v2822 = vadd.f32 %v2820, %v764
    %v2823 = vsel %vm769, %v2821, -inf
    %2824 = vmax.xlane.f32.xlu0 %v2823
    %v2825 = vpop.xlane.xlu0 %2824
    %v2826 = vsel %vm769, %v2822, -inf
    %2827 = vmax.xlane.f32.xlu0 %v2826
    %v2828 = vpop.xlane.xlu0 %2827
    %v2829 = vsub.f32 %v2821, %v2825
    %v2830 = vsub.f32 %v2822, %v2828
    %v2831 = vmul.f32 %v2829, 1.442695
    %v2832 = vpow.pop %v2831
    %v2833 = vmul.f32 %v2830, 1.442695
    %v2834 = vpow.pop %v2833
    %v2835 = vsel %vm769, %v2832, 0.0
    %2836 = vadd.xlane.f32.xlu0 %v2835
    %v2837 = vpop.xlane.xlu0 %2836
    %v2838 = vsel %vm769, %v2834, 0.0
    %2839 = vadd.xlane.f32.xlu0 %v2838
    %v2840 = vpop.xlane.xlu0 %2839
    %v2841 = vrcp.pop %v2837
    %v2842 = vrcp.pop %v2840
    %v2843 = vmul.f32 %v2832, %v2841
    %v2844 = vmul.f32 %v2834, %v2842
    %v2846 = vsel %vm769, %v2843, 0
    %2848 = vmatprep.subr.mxu0 0.0
    %2849 = vmatpush1.msra.mxu0 %v2659
    %2850 = vmatprep.subr.mxu0 0.0
    %2851 = vmatpush1.msra.mxu0 0.0
    %2852 = vmatprep.subr.mxu0 0.0
    %2853 = vmatpush1.msra.mxu0 0.0
    %2854 = vmatprep.subr.mxu0 0.0
    %2855 = vmatpush1.msra.mxu0 0.0
    %2856 = vmatprep.subr.mxu0 0.0
    %2857 = vmatpush1.msra.mxu0 0.0
    %2858 = vmatprep.subr.mxu0 0.0
    %2859 = vmatpush1.msra.mxu0 0.0
    %2860 = vmatprep.subr.mxu0 0.0
    %2861 = vmatpush1.msra.mxu0 0.0
    %2862 = vmatprep.subr.mxu0 0.0
    %2863 = vmatpush1.msra.mxu0 0.0
    %2864 = vmatprep.subr.mxu0 0.0
    %2865 = vmatpush1.msra.mxu0 0.0
    %2866 = vmatprep.subr.mxu0 0.0
    %2867 = vmatpush1.msra.mxu0 0.0
    %2868 = vmatprep.subr.mxu0 0.0
    %2869 = vmatpush1.msra.mxu0 0.0
    %2870 = vmatprep.subr.mxu0 0.0
    %2871 = vmatpush1.msra.mxu0 0.0
    %2872 = vmatprep.subr.mxu0 0.0
    %2873 = vmatpush1.msra.mxu0 0.0
    %2874 = vmatprep.subr.mxu0 0.0
    %2875 = vmatpush1.msra.mxu0 0.0
    %2876 = vmatprep.subr.mxu0 0.0
    %2877 = vmatpush1.msra.mxu0 0.0
    %2878 = vmatprep.subr.mxu0 0.0
    %2879 = vmatpush1.msra.mxu0 0.0
    %2880 = vmatprep.subr.mxu0 0.0
    %2881 = vmatpush1.msra.mxu0 0.0
    %2882 = vmatprep.subr.mxu0 0.0
    %2883 = vmatpush1.msra.mxu0 0.0
    %2884 = vmatprep.subr.mxu0 0.0
    %2885 = vmatpush1.msra.mxu0 0.0
    %2886 = vmatprep.subr.mxu0 0.0
    %2887 = vmatpush1.msra.mxu0 0.0
    %2888 = vmatprep.subr.mxu0 0.0
    %2889 = vmatpush1.msra.mxu0 0.0
    %2890 = vmatprep.subr.mxu0 0.0
    %2891 = vmatpush1.msra.mxu0 0.0
    %2892 = vmatprep.subr.mxu0 0.0
    %2893 = vmatpush1.msra.mxu0 0.0
    %2894 = vmatprep.subr.mxu0 0.0
    %2895 = vmatpush1.msra.mxu0 0.0
    %2896 = vmatprep.subr.mxu0 0.0
    %2897 = vmatpush1.msra.mxu0 0.0
    %2898 = vmatprep.subr.mxu0 0.0
    %2899 = vmatpush1.msra.mxu0 0.0
    %2900 = vmatprep.subr.mxu0 0.0
    %2901 = vmatpush1.msra.mxu0 0.0
    %2902 = vmatprep.subr.mxu0 0.0
    %2903 = vmatpush1.msra.mxu0 0.0
    %2904 = vmatprep.subr.mxu0 0.0
    %2905 = vmatpush1.msra.mxu0 0.0
    %2906 = vmatprep.subr.mxu0 0.0
    %2907 = vmatpush1.msra.mxu0 0.0
    %2908 = vmatprep.subr.mxu0 0.0
    %2909 = vmatpush1.msra.mxu0 0.0
    %2910 = vmatprep.subr.mxu0 0.0
    %2911 = vmatpush1.msra.mxu0 0.0
    %2912 = vmatprep.mubr.f32.mxu0 0.0
    %2913 = vmatmul.mubr.f32.gmra.mrb[0].mxu0 %v2846
    %v2914 = vpop.f32.mrb[0].mxu0
    %v2915 = vadd.f32 0.0, %v2914
    %v2916 = vpop.f32.mrb[0].mxu0
    %2917 = vdwg.mxu0
    %v2919 = vsel %vm769, %v2844, 0
    %2921 = vmatprep.subr.mxu0 0.0
    %2922 = vmatpush1.msra.mxu0 %v2664
    %2923 = vmatprep.subr.mxu0 0.0
    %2924 = vmatpush1.msra.mxu0 0.0
    %2925 = vmatprep.subr.mxu0 0.0
    %2926 = vmatpush1.msra.mxu0 0.0
    %2927 = vmatprep.subr.mxu0 0.0
    %2928 = vmatpush1.msra.mxu0 0.0
    %2929 = vmatprep.subr.mxu0 0.0
    %2930 = vmatpush1.msra.mxu0 0.0
    %2931 = vmatprep.subr.mxu0 0.0
    %2932 = vmatpush1.msra.mxu0 0.0
    %2933 = vmatprep.subr.mxu0 0.0
    %2934 = vmatpush1.msra.mxu0 0.0
    %2935 = vmatprep.subr.mxu0 0.0
    %2936 = vmatpush1.msra.mxu0 0.0
    %2937 = vmatprep.subr.mxu0 0.0
    %2938 = vmatpush1.msra.mxu0 0.0
    %2939 = vmatprep.subr.mxu0 0.0
    %2940 = vmatpush1.msra.mxu0 0.0
    %2941 = vmatprep.subr.mxu0 0.0
    %2942 = vmatpush1.msra.mxu0 0.0
    %2943 = vmatprep.subr.mxu0 0.0
    %2944 = vmatpush1.msra.mxu0 0.0
    %2945 = vmatprep.subr.mxu0 0.0
    %2946 = vmatpush1.msra.mxu0 0.0
    %2947 = vmatprep.subr.mxu0 0.0
    %2948 = vmatpush1.msra.mxu0 0.0
    %2949 = vmatprep.subr.mxu0 0.0
    %2950 = vmatpush1.msra.mxu0 0.0
    %2951 = vmatprep.subr.mxu0 0.0
    %2952 = vmatpush1.msra.mxu0 0.0
    %2953 = vmatprep.subr.mxu0 0.0
    %2954 = vmatpush1.msra.mxu0 0.0
    %2955 = vmatprep.subr.mxu0 0.0
    %2956 = vmatpush1.msra.mxu0 0.0
    %2957 = vmatprep.subr.mxu0 0.0
    %2958 = vmatpush1.msra.mxu0 0.0
    %2959 = vmatprep.subr.mxu0 0.0
    %2960 = vmatpush1.msra.mxu0 0.0
    %2961 = vmatprep.subr.mxu0 0.0
    %2962 = vmatpush1.msra.mxu0 0.0
    %2963 = vmatprep.subr.mxu0 0.0
    %2964 = vmatpush1.msra.mxu0 0.0
    %2965 = vmatprep.subr.mxu0 0.0
    %2966 = vmatpush1.msra.mxu0 0.0
    %2967 = vmatprep.subr.mxu0 0.0
    %2968 = vmatpush1.msra.mxu0 0.0
    %2969 = vmatprep.subr.mxu0 0.0
    %2970 = vmatpush1.msra.mxu0 0.0
    %2971 = vmatprep.subr.mxu0 0.0
    %2972 = vmatpush1.msra.mxu0 0.0
    %2973 = vmatprep.subr.mxu0 0.0
    %2974 = vmatpush1.msra.mxu0 0.0
    %2975 = vmatprep.subr.mxu0 0.0
    %2976 = vmatpush1.msra.mxu0 0.0
    %2977 = vmatprep.subr.mxu0 0.0
    %2978 = vmatpush1.msra.mxu0 0.0
    %2979 = vmatprep.subr.mxu0 0.0
    %2980 = vmatpush1.msra.mxu0 0.0
    %2981 = vmatprep.subr.mxu0 0.0
    %2982 = vmatpush1.msra.mxu0 0.0
    %2983 = vmatprep.subr.mxu0 0.0
    %2984 = vmatpush1.msra.mxu0 0.0
    %2985 = vmatprep.mubr.f32.mxu0 0.0
    %2986 = vmatmul.mubr.f32.gmra.mrb[0].mxu0 %v2919
    %v2987 = vpop.f32.mrb[0].mxu0
    %v2988 = vadd.f32 0.0, %v2987
    %v2989 = vpop.f32.mrb[0].mxu0
    %2990 = vdwg.mxu0
    %s2991 = scalar_lea.vmem %s25, 48
    %v2992 = vld [vmem:[%s2991] sm:$0xff]
    %v2993 = vld [vmem:[%s2991 + $0x8] sm:$0xff]
    %v2995 = vsel %vm600, %v2915, 0
    %v2998 = vsel %vm600, %v2988, 0
    %3000 = vmatprep.subr.mxu0 0.0
    %3001 = vmatpush1.msra.mxu0 %v2992
    %3002 = vmatprep.subr.mxu0 0.0
    %3003 = vmatpush1.msra.mxu0 %v2993
    %3004 = vmatprep.subr.mxu0 0.0
    %3005 = vmatpush1.msra.mxu0 0.0
    %3006 = vmatprep.subr.mxu0 0.0
    %3007 = vmatpush1.msra.mxu0 0.0
    %3008 = vmatprep.subr.mxu0 0.0
    %3009 = vmatpush1.msra.mxu0 0.0
    %3010 = vmatprep.subr.mxu0 0.0
    %3011 = vmatpush1.msra.mxu0 0.0
    %3012 = vmatprep.subr.mxu0 0.0
    %3013 = vmatpush1.msra.mxu0 0.0
    %3014 = vmatprep.subr.mxu0 0.0
    %3015 = vmatpush1.msra.mxu0 0.0
    %3016 = vmatprep.subr.mxu0 0.0
    %3017 = vmatpush1.msra.mxu0 0.0
    %3018 = vmatprep.subr.mxu0 0.0
    %3019 = vmatpush1.msra.mxu0 0.0
    %3020 = vmatprep.subr.mxu0 0.0
    %3021 = vmatpush1.msra.mxu0 0.0
    %3022 = vmatprep.subr.mxu0 0.0
    %3023 = vmatpush1.msra.mxu0 0.0
    %3024 = vmatprep.subr.mxu0 0.0
    %3025 = vmatpush1.msra.mxu0 0.0
    %3026 = vmatprep.subr.mxu0 0.0
    %3027 = vmatpush1.msra.mxu0 0.0
    %3028 = vmatprep.subr.mxu0 0.0
    %3029 = vmatpush1.msra.mxu0 0.0
    %3030 = vmatprep.subr.mxu0 0.0
    %3031 = vmatpush1.msra.mxu0 0.0
    %3032 = vmatprep.subr.mxu0 0.0
    %3033 = vmatpush1.msra.mxu0 0.0
    %3034 = vmatprep.subr.mxu0 0.0
    %3035 = vmatpush1.msra.mxu0 0.0
    %3036 = vmatprep.subr.mxu0 0.0
    %3037 = vmatpush1.msra.mxu0 0.0
    %3038 = vmatprep.subr.mxu0 0.0
    %3039 = vmatpush1.msra.mxu0 0.0
    %3040 = vmatprep.subr.mxu0 0.0
    %3041 = vmatpush1.msra.mxu0 0.0
    %3042 = vmatprep.subr.mxu0 0.0
    %3043 = vmatpush1.msra.mxu0 0.0
    %3044 = vmatprep.subr.mxu0 0.0
    %3045 = vmatpush1.msra.mxu0 0.0
    %3046 = vmatprep.subr.mxu0 0.0
    %3047 = vmatpush1.msra.mxu0 0.0
    %3048 = vmatprep.subr.mxu0 0.0
    %3049 = vmatpush1.msra.mxu0 0.0
    %3050 = vmatprep.subr.mxu0 0.0
    %3051 = vmatpush1.msra.mxu0 0.0
    %3052 = vmatprep.subr.mxu0 0.0
    %3053 = vmatpush1.msra.mxu0 0.0
    %3054 = vmatprep.subr.mxu0 0.0
    %3055 = vmatpush1.msra.mxu0 0.0
    %3056 = vmatprep.subr.mxu0 0.0
    %3057 = vmatpush1.msra.mxu0 0.0
    %3058 = vmatprep.subr.mxu0 0.0
    %3059 = vmatpush1.msra.mxu0 0.0
    %3060 = vmatprep.subr.mxu0 0.0
    %3061 = vmatpush1.msra.mxu0 0.0
    %3062 = vmatprep.subr.mxu0 0.0
    %3063 = vmatpush1.msra.mxu0 0.0
    %3064 = vmatprep.mubr.f32.mxu0 0.0
    %3065 = vmatmul.mubr.f32.gmra.mrb[0].mxu0 %v2995
    %v3066 = vpop.f32.mrb[0].mxu0
    %v3067 = vadd.f32 0.0, %v3066
    %v3068 = vpop.f32.mrb[0].mxu0
    %3069 = vmatprep.mubr.f32.mxu0 0.0
    %3070 = vmatmul.mubr.f32.gmra.mrb[0].mxu0 %v2998
    %v3071 = vpop.f32.mrb[0].mxu0
    %v3072 = vadd.f32 0.0, %v3071
    %v3073 = vpop.f32.mrb[0].mxu0
    %3074 = vdwg.mxu0
    %v3075 = vadd.f32 %v2389, %v3067
    %v3076 = vadd.f32 %v2390, %v3072
    %v3077 = vld [vmem:[%s27] sm:$0x1]
    %v3079 = vlaneseq
    %v3080 = vshrl.u32 %v3079, 7
    %v3081 = vsub.s32 0, %v3080
    %v3082 = vrot.slane %v3077, %v3081
    %v3084 = vadd.f32 %v3075, %v3082
    %v3085 = vadd.f32 %v3076, %v3082
    %v3086 = vadd.f32 %v3084, %v320
    %v3087 = vadd.f32 %v3085, %v321
    %v3088 = vld [vmem:[%s29] sm:$0x1]
    %v3089 = vld [vmem:[%s31] sm:$0x1]
    %v3090 = vsel %vm278, %v3086, 0.0
    %3091 = vadd.xlane.f32.xlu0 %v3090
    %v3092 = vpop.xlane.xlu0 %3091
    %v3093 = vsel %vm278, %v3087, 0.0
    %3094 = vadd.xlane.f32.xlu0 %v3093
    %v3095 = vpop.xlane.xlu0 %3094
    %v3096 = vmul.f32 %v3092, %v285
    %v3097 = vmul.f32 %v3095, %v285
    %v3098 = vsub.f32 %v3086, %v3096
    %v3099 = vsub.f32 %v3087, %v3097
    %v3100 = vmul.f32 %v3098, %v3098
    %v3101 = vmul.f32 %v3099, %v3099
    %v3102 = vsel %vm278, %v3100, 0.0
    %3103 = vadd.xlane.f32.xlu0 %v3102
    %v3104 = vpop.xlane.xlu0 %3103
    %v3105 = vsel %vm278, %v3101, 0.0
    %3106 = vadd.xlane.f32.xlu0 %v3105
    %v3107 = vpop.xlane.xlu0 %3106
    %v3108 = vmul.f32 %v3104, %v285
    %v3109 = vmul.f32 %v3107, %v285
    %v3110 = vadd.f32 %v3108, 1e-12
    %v3111 = vadd.f32 %v3109, 1e-12
    %v3112 = vrsqrt.pop %v3110
    %v3113 = vrsqrt.pop %v3111
    %v3114 = vmul.f32 %v3098, %v3112
    %v3115 = vmul.f32 %v3099, %v3113
    %v3117 = vlaneseq
    %v3118 = vshrl.u32 %v3117, 7
    %v3119 = vsub.s32 0, %v3118
    %v3120 = vrot.slane %v3088, %v3119
    %v3122 = vmul.f32 %v3114, %v3120
    %v3123 = vmul.f32 %v3115, %v3120
    %v3125 = vlaneseq
    %v3126 = vshrl.u32 %v3125, 7
    %v3127 = vsub.s32 0, %v3126
    %v3128 = vrot.slane %v3089, %v3127
    %v3130 = vadd.f32 %v3122, %v3128
    %v3131 = vadd.f32 %v3123, %v3128
    %v3132 = vld [vmem:[%s33] sm:$0xff]
    %v3133 = vld [vmem:[%s33 + $0x8] sm:$0xff]
    %v3134 = vld [vmem:[%s33 + $0x10] sm:$0xff]
    %v3135 = vld [vmem:[%s33 + $0x18] sm:$0xff]
    %v3136 = vld [vmem:[%s33 + $0x20] sm:$0xff]
    %v3137 = vld [vmem:[%s33 + $0x28] sm:$0xff]
    %v3138 = vld [vmem:[%s33 + $0x30] sm:$0xff]
    %v3139 = vld [vmem:[%s33 + $0x38] sm:$0xff]
    %v3140 = vld [vmem:[%s35] sm:$0x1]
    %v3142 = vlaneseq
    %v3143 = vshrl.u32 %v3142, 7
    %v3144 = vsub.s32 0, %v3143
    %v3145 = vrot.slane %v3140, %v3144
    %v3148 = vsel %vm278, %v3130, 0
    %v3151 = vsel %vm278, %v3131, 0
    %3153 = vmatprep.subr.mxu0 0.0
    %3154 = vmatpush1.msra.mxu0 %v3132
    %3155 = vmatprep.subr.mxu0 0.0
    %3156 = vmatpush1.msra.mxu0 %v3133
    %3157 = vmatprep.subr.mxu0 0.0
    %3158 = vmatpush1.msra.mxu0 %v3134
    %3159 = vmatprep.subr.mxu0 0.0
    %3160 = vmatpush1.msra.mxu0 %v3135
    %3161 = vmatprep.subr.mxu0 0.0
    %3162 = vmatpush1.msra.mxu0 %v3136
    %3163 = vmatprep.subr.mxu0 0.0
    %3164 = vmatpush1.msra.mxu0 %v3137
    %3165 = vmatprep.subr.mxu0 0.0
    %3166 = vmatpush1.msra.mxu0 %v3138
    %3167 = vmatprep.subr.mxu0 0.0
    %3168 = vmatpush1.msra.mxu0 %v3139
    %3169 = vmatprep.subr.mxu0 0.0
    %3170 = vmatpush1.msra.mxu0 0.0
    %3171 = vmatprep.subr.mxu0 0.0
    %3172 = vmatpush1.msra.mxu0 0.0
    %3173 = vmatprep.subr.mxu0 0.0
    %3174 = vmatpush1.msra.mxu0 0.0
    %3175 = vmatprep.subr.mxu0 0.0
    %3176 = vmatpush1.msra.mxu0 0.0
    %3177 = vmatprep.subr.mxu0 0.0
    %3178 = vmatpush1.msra.mxu0 0.0
    %3179 = vmatprep.subr.mxu0 0.0
    %3180 = vmatpush1.msra.mxu0 0.0
    %3181 = vmatprep.subr.mxu0 0.0
    %3182 = vmatpush1.msra.mxu0 0.0
    %3183 = vmatprep.subr.mxu0 0.0
    %3184 = vmatpush1.msra.mxu0 0.0
    %3185 = vmatprep.subr.mxu0 0.0
    %3186 = vmatpush1.msra.mxu0 0.0
    %3187 = vmatprep.subr.mxu0 0.0
    %3188 = vmatpush1.msra.mxu0 0.0
    %3189 = vmatprep.subr.mxu0 0.0
    %3190 = vmatpush1.msra.mxu0 0.0
    %3191 = vmatprep.subr.mxu0 0.0
    %3192 = vmatpush1.msra.mxu0 0.0
    %3193 = vmatprep.subr.mxu0 0.0
    %3194 = vmatpush1.msra.mxu0 0.0
    %3195 = vmatprep.subr.mxu0 0.0
    %3196 = vmatpush1.msra.mxu0 0.0
    %3197 = vmatprep.subr.mxu0 0.0
    %3198 = vmatpush1.msra.mxu0 0.0
    %3199 = vmatprep.subr.mxu0 0.0
    %3200 = vmatpush1.msra.mxu0 0.0
    %3201 = vmatprep.subr.mxu0 0.0
    %3202 = vmatpush1.msra.mxu0 0.0
    %3203 = vmatprep.subr.mxu0 0.0
    %3204 = vmatpush1.msra.mxu0 0.0
    %3205 = vmatprep.subr.mxu0 0.0
    %3206 = vmatpush1.msra.mxu0 0.0
    %3207 = vmatprep.subr.mxu0 0.0
    %3208 = vmatpush1.msra.mxu0 0.0
    %3209 = vmatprep.subr.mxu0 0.0
    %3210 = vmatpush1.msra.mxu0 0.0
    %3211 = vmatprep.subr.mxu0 0.0
    %3212 = vmatpush1.msra.mxu0 0.0
    %3213 = vmatprep.subr.mxu0 0.0
    %3214 = vmatpush1.msra.mxu0 0.0
    %3215 = vmatprep.subr.mxu0 0.0
    %3216 = vmatpush1.msra.mxu0 0.0
    %3217 = vmatprep.mubr.f32.mxu0 0.0
    %3218 = vmatmul.mubr.f32.gmra.mrb[0].mxu0 %v3148
    %v3219 = vpop.f32.mrb[0].mxu0
    %v3220 = vadd.f32 %v3145, %v3219
    %v3221 = vpop.f32.mrb[0].mxu0
    %3222 = vmatprep.mubr.f32.mxu0 0.0
    %3223 = vmatmul.mubr.f32.gmra.mrb[0].mxu0 %v3151
    %v3224 = vpop.f32.mrb[0].mxu0
    %v3225 = vadd.f32 %v3145, %v3224
    %v3226 = vpop.f32.mrb[0].mxu0
    %3227 = vdwg.mxu0
    %v3228 = vmul.f32 %v3220, %v3220
    %v3229 = vmul.f32 %v3225, %v3225
    %v3230 = vmul.f32 %v3220, %v3228
    %v3231 = vmul.f32 %v3225, %v3229
    %v3232 = vmul.f32 %v3230, 0.044715
    %v3233 = vmul.f32 %v3231, 0.044715
    %v3234 = vadd.f32 %v3220, %v3232
    %v3235 = vadd.f32 %v3225, %v3233
    %v3236 = vmul.f32 %v3234, 0.7978846
    %v3237 = vmul.f32 %v3235, 0.7978846
    %v3238 = vtanh.pop %v3236
    %v3239 = vtanh.pop %v3237
    %v3240 = vadd.f32 %v3238, 1.0
    %v3241 = vadd.f32 %v3239, 1.0
    %v3242 = vmul.f32 %v3240, 0.5
    %v3243 = vmul.f32 %v3241, 0.5
    %v3244 = vmul.f32 %v3220, %v3242
    %v3245 = vmul.f32 %v3225, %v3243
    %v3246 = vld [vmem:[%s37] sm:$0xff]
    %v3247 = vld [vmem:[%s37 + $0x8] sm:$0xff]
    %v3248 = vld [vmem:[%s37 + $0x10] sm:$0xff]
    %v3249 = vld [vmem:[%s37 + $0x18] sm:$0xff]
    %v3250 = vld [vmem:[%s37 + $0x20] sm:$0xff]
    %v3251 = vld [vmem:[%s37 + $0x28] sm:$0xff]
    %v3252 = vld [vmem:[%s37 + $0x30] sm:$0xff]
    %v3253 = vld [vmem:[%s37 + $0x38] sm:$0xff]
    %v3254 = vld [vmem:[%s37 + $0x40] sm:$0xff]
    %v3255 = vld [vmem:[%s37 + $0x48] sm:$0xff]
    %v3256 = vld [vmem:[%s37 + $0x50] sm:$0xff]
    %v3257 = vld [vmem:[%s37 + $0x58] sm:$0xff]
    %v3258 = vld [vmem:[%s37 + $0x60] sm:$0xff]
    %v3259 = vld [vmem:[%s37 + $0x68] sm:$0xff]
    %v3260 = vld [vmem:[%s37 + $0x70] sm:$0xff]
    %v3261 = vld [vmem:[%s37 + $0x78] sm:$0xff]
    %v3262 = vld [vmem:[%s39] sm:$0x1]
    %v3264 = vlaneseq
    %v3265 = vshrl.u32 %v3264, 7
    %v3266 = vsub.s32 0, %v3265
    %v3267 = vrot.slane %v3262, %v3266
    %3269 = vmatprep.subr.mxu0 0.0
    %3270 = vmatpush1.msra.mxu0 %v3246
    %3271 = vmatprep.subr.mxu0 0.0
    %3272 = vmatpush1.msra.mxu0 %v3247
    %3273 = vmatprep.subr.mxu0 0.0
    %3274 = vmatpush1.msra.mxu0 %v3248
    %3275 = vmatprep.subr.mxu0 0.0
    %3276 = vmatpush1.msra.mxu0 %v3249
    %3277 = vmatprep.subr.mxu0 0.0
    %3278 = vmatpush1.msra.mxu0 %v3250
    %3279 = vmatprep.subr.mxu0 0.0
    %3280 = vmatpush1.msra.mxu0 %v3251
    %3281 = vmatprep.subr.mxu0 0.0
    %3282 = vmatpush1.msra.mxu0 %v3252
    %3283 = vmatprep.subr.mxu0 0.0
    %3284 = vmatpush1.msra.mxu0 %v3253
    %3285 = vmatprep.subr.mxu0 0.0
    %3286 = vmatpush1.msra.mxu0 %v3254
    %3287 = vmatprep.subr.mxu0 0.0
    %3288 = vmatpush1.msra.mxu0 %v3255
    %3289 = vmatprep.subr.mxu0 0.0
    %3290 = vmatpush1.msra.mxu0 %v3256
    %3291 = vmatprep.subr.mxu0 0.0
    %3292 = vmatpush1.msra.mxu0 %v3257
    %3293 = vmatprep.subr.mxu0 0.0
    %3294 = vmatpush1.msra.mxu0 %v3258
    %3295 = vmatprep.subr.mxu0 0.0
    %3296 = vmatpush1.msra.mxu0 %v3259
    %3297 = vmatprep.subr.mxu0 0.0
    %3298 = vmatpush1.msra.mxu0 %v3260
    %3299 = vmatprep.subr.mxu0 0.0
    %3300 = vmatpush1.msra.mxu0 %v3261
    %3301 = vmatprep.subr.mxu0 0.0
    %3302 = vmatpush1.msra.mxu0 0.0
    %3303 = vmatprep.subr.mxu0 0.0
    %3304 = vmatpush1.msra.mxu0 0.0
    %3305 = vmatprep.subr.mxu0 0.0
    %3306 = vmatpush1.msra.mxu0 0.0
    %3307 = vmatprep.subr.mxu0 0.0
    %3308 = vmatpush1.msra.mxu0 0.0
    %3309 = vmatprep.subr.mxu0 0.0
    %3310 = vmatpush1.msra.mxu0 0.0
    %3311 = vmatprep.subr.mxu0 0.0
    %3312 = vmatpush1.msra.mxu0 0.0
    %3313 = vmatprep.subr.mxu0 0.0
    %3314 = vmatpush1.msra.mxu0 0.0
    %3315 = vmatprep.subr.mxu0 0.0
    %3316 = vmatpush1.msra.mxu0 0.0
    %3317 = vmatprep.subr.mxu0 0.0
    %3318 = vmatpush1.msra.mxu0 0.0
    %3319 = vmatprep.subr.mxu0 0.0
    %3320 = vmatpush1.msra.mxu0 0.0
    %3321 = vmatprep.subr.mxu0 0.0
    %3322 = vmatpush1.msra.mxu0 0.0
    %3323 = vmatprep.subr.mxu0 0.0
    %3324 = vmatpush1.msra.mxu0 0.0
    %3325 = vmatprep.subr.mxu0 0.0
    %3326 = vmatpush1.msra.mxu0 0.0
    %3327 = vmatprep.subr.mxu0 0.0
    %3328 = vmatpush1.msra.mxu0 0.0
    %3329 = vmatprep.subr.mxu0 0.0
    %3330 = vmatpush1.msra.mxu0 0.0
    %3331 = vmatprep.subr.mxu0 0.0
    %3332 = vmatpush1.msra.mxu0 0.0
    %3333 = vmatprep.mubr.f32.mxu0 0.0
    %3334 = vmatmul.mubr.f32.gmra.mrb[0].mxu0 %v3244
    %v3335 = vpop.f32.mrb[0].mxu0
    %v3336 = vadd.f32 %v3267, %v3335
    %v3337 = vpop.f32.mrb[0].mxu0
    %3338 = vmatprep.mubr.f32.mxu0 0.0
    %3339 = vmatmul.mubr.f32.gmra.mrb[0].mxu0 %v3245
    %v3340 = vpop.f32.mrb[0].mxu0
    %v3341 = vadd.f32 %v3267, %v3340
    %v3342 = vpop.f32.mrb[0].mxu0
    %3343 = vdwg.mxu0
    %v3344 = vadd.f32 %v3336, %v3130
    %v3345 = vadd.f32 %v3341, %v3131
    %v3346 = vld [vmem:[%s41] sm:$0x1]
    %v3347 = vld [vmem:[%s43] sm:$0x1]
    %v3348 = vsel %vm278, %v3344, 0.0
    %3349 = vadd.xlane.f32.xlu0 %v3348
    %v3350 = vpop.xlane.xlu0 %3349
    %v3351 = vsel %vm278, %v3345, 0.0
    %3352 = vadd.xlane.f32.xlu0 %v3351
    %v3353 = vpop.xlane.xlu0 %3352
    %v3354 = vmul.f32 %v3350, %v285
    %v3355 = vmul.f32 %v3353, %v285
    %v3356 = vsub.f32 %v3344, %v3354
    %v3357 = vsub.f32 %v3345, %v3355
    %v3358 = vmul.f32 %v3356, %v3356
    %v3359 = vmul.f32 %v3357, %v3357
    %v3360 = vsel %vm278, %v3358, 0.0
    %3361 = vadd.xlane.f32.xlu0 %v3360
    %v3362 = vpop.xlane.xlu0 %3361
    %v3363 = vsel %vm278, %v3359, 0.0
    %3364 = vadd.xlane.f32.xlu0 %v3363
    %v3365 = vpop.xlane.xlu0 %3364
    %v3366 = vmul.f32 %v3362, %v285
    %v3367 = vmul.f32 %v3365, %v285
    %v3368 = vadd.f32 %v3366, 1e-12
    %v3369 = vadd.f32 %v3367, 1e-12
    %v3370 = vrsqrt.pop %v3368
    %v3371 = vrsqrt.pop %v3369
    %v3372 = vmul.f32 %v3356, %v3370
    %v3373 = vmul.f32 %v3357, %v3371
    %v3375 = vlaneseq
    %v3376 = vshrl.u32 %v3375, 7
    %v3377 = vsub.s32 0, %v3376
    %v3378 = vrot.slane %v3346, %v3377
    %v3380 = vmul.f32 %v3372, %v3378
    %v3381 = vmul.f32 %v3373, %v3378
    %v3383 = vlaneseq
    %v3384 = vshrl.u32 %v3383, 7
    %v3385 = vsub.s32 0, %v3384
    %v3386 = vrot.slane %v3347, %v3385
    %v3388 = vadd.f32 %v3380, %v3386
    %v3389 = vadd.f32 %v3381, %v3386
    %v3390 = vld [vmem:[%s45] sm:$0xff]
    %v3391 = vld [vmem:[%s45 + $0x8] sm:$0xff]
    %v3392 = vld [vmem:[%s45 + $0x10] sm:$0xff]
    %v3393 = vld [vmem:[%s45 + $0x18] sm:$0xff]
    %v3394 = vld [vmem:[%s45 + $0x20] sm:$0xff]
    %v3395 = vld [vmem:[%s45 + $0x28] sm:$0xff]
    %v3396 = vld [vmem:[%s45 + $0x30] sm:$0xff]
    %v3397 = vld [vmem:[%s45 + $0x38] sm:$0xff]
    %v3398 = vld [vmem:[%s47] sm:$0x1]
    %v3400 = vlaneseq
    %v3401 = vshrl.u32 %v3400, 7
    %v3402 = vsub.s32 0, %v3401
    %v3403 = vrot.slane %v3398, %v3402
    %v3406 = vsel %vm278, %v3388, 0
    %v3409 = vsel %vm278, %v3389, 0
    %3411 = vmatprep.subr.mxu0 0.0
    %3412 = vmatpush1.msra.mxu0 %v3390
    %3413 = vmatprep.subr.mxu0 0.0
    %3414 = vmatpush1.msra.mxu0 %v3391
    %3415 = vmatprep.subr.mxu0 0.0
    %3416 = vmatpush1.msra.mxu0 %v3392
    %3417 = vmatprep.subr.mxu0 0.0
    %3418 = vmatpush1.msra.mxu0 %v3393
    %3419 = vmatprep.subr.mxu0 0.0
    %3420 = vmatpush1.msra.mxu0 %v3394
    %3421 = vmatprep.subr.mxu0 0.0
    %3422 = vmatpush1.msra.mxu0 %v3395
    %3423 = vmatprep.subr.mxu0 0.0
    %3424 = vmatpush1.msra.mxu0 %v3396
    %3425 = vmatprep.subr.mxu0 0.0
    %3426 = vmatpush1.msra.mxu0 %v3397
    %3427 = vmatprep.subr.mxu0 0.0
    %3428 = vmatpush1.msra.mxu0 0.0
    %3429 = vmatprep.subr.mxu0 0.0
    %3430 = vmatpush1.msra.mxu0 0.0
    %3431 = vmatprep.subr.mxu0 0.0
    %3432 = vmatpush1.msra.mxu0 0.0
    %3433 = vmatprep.subr.mxu0 0.0
    %3434 = vmatpush1.msra.mxu0 0.0
    %3435 = vmatprep.subr.mxu0 0.0
    %3436 = vmatpush1.msra.mxu0 0.0
    %3437 = vmatprep.subr.mxu0 0.0
    %3438 = vmatpush1.msra.mxu0 0.0
    %3439 = vmatprep.subr.mxu0 0.0
    %3440 = vmatpush1.msra.mxu0 0.0
    %3441 = vmatprep.subr.mxu0 0.0
    %3442 = vmatpush1.msra.mxu0 0.0
    %3443 = vmatprep.subr.mxu0 0.0
    %3444 = vmatpush1.msra.mxu0 0.0
    %3445 = vmatprep.subr.mxu0 0.0
    %3446 = vmatpush1.msra.mxu0 0.0
    %3447 = vmatprep.subr.mxu0 0.0
    %3448 = vmatpush1.msra.mxu0 0.0
    %3449 = vmatprep.subr.mxu0 0.0
    %3450 = vmatpush1.msra.mxu0 0.0
    %3451 = vmatprep.subr.mxu0 0.0
    %3452 = vmatpush1.msra.mxu0 0.0
    %3453 = vmatprep.subr.mxu0 0.0
    %3454 = vmatpush1.msra.mxu0 0.0
    %3455 = vmatprep.subr.mxu0 0.0
    %3456 = vmatpush1.msra.mxu0 0.0
    %3457 = vmatprep.subr.mxu0 0.0
    %3458 = vmatpush1.msra.mxu0 0.0
    %3459 = vmatprep.subr.mxu0 0.0
    %3460 = vmatpush1.msra.mxu0 0.0
    %3461 = vmatprep.subr.mxu0 0.0
    %3462 = vmatpush1.msra.mxu0 0.0
    %3463 = vmatprep.subr.mxu0 0.0
    %3464 = vmatpush1.msra.mxu0 0.0
    %3465 = vmatprep.subr.mxu0 0.0
    %3466 = vmatpush1.msra.mxu0 0.0
    %3467 = vmatprep.subr.mxu0 0.0
    %3468 = vmatpush1.msra.mxu0 0.0
    %3469 = vmatprep.subr.mxu0 0.0
    %3470 = vmatpush1.msra.mxu0 0.0
    %3471 = vmatprep.subr.mxu0 0.0
    %3472 = vmatpush1.msra.mxu0 0.0
    %3473 = vmatprep.subr.mxu0 0.0
    %3474 = vmatpush1.msra.mxu0 0.0
    %3475 = vmatprep.mubr.f32.mxu0 0.0
    %3476 = vmatmul.mubr.f32.gmra.mrb[0].mxu0 %v3406
    %v3477 = vpop.f32.mrb[0].mxu0
    %v3478 = vadd.f32 %v3403, %v3477
    %v3479 = vpop.f32.mrb[0].mxu0
    %3480 = vmatprep.mubr.f32.mxu0 0.0
    %3481 = vmatmul.mubr.f32.gmra.mrb[0].mxu0 %v3409
    %v3482 = vpop.f32.mrb[0].mxu0
    %v3483 = vadd.f32 %v3403, %v3482
    %v3484 = vpop.f32.mrb[0].mxu0
    %3485 = vdwg.mxu0
    %v3486 = vld [vmem:[%s49] sm:$0xff]
    %v3487 = vld [vmem:[%s49 + $0x8] sm:$0xff]
    %v3488 = vld [vmem:[%s49 + $0x10] sm:$0xff]
    %v3489 = vld [vmem:[%s49 + $0x18] sm:$0xff]
    %v3490 = vld [vmem:[%s49 + $0x20] sm:$0xff]
    %v3491 = vld [vmem:[%s49 + $0x28] sm:$0xff]
    %v3492 = vld [vmem:[%s49 + $0x30] sm:$0xff]
    %v3493 = vld [vmem:[%s49 + $0x38] sm:$0xff]
    %v3494 = vld [vmem:[%s51] sm:$0x1]
    %v3496 = vlaneseq
    %v3497 = vshrl.u32 %v3496, 7
    %v3498 = vsub.s32 0, %v3497
    %v3499 = vrot.slane %v3494, %v3498
    %3501 = vmatprep.subr.mxu0 0.0
    %3502 = vmatpush1.msra.mxu0 %v3486
    %3503 = vmatprep.subr.mxu0 0.0
    %3504 = vmatpush1.msra.mxu0 %v3487
    %3505 = vmatprep.subr.mxu0 0.0
    %3506 = vmatpush1.msra.mxu0 %v3488
    %3507 = vmatprep.subr.mxu0 0.0
    %3508 = vmatpush1.msra.mxu0 %v3489
    %3509 = vmatprep.subr.mxu0 0.0
    %3510 = vmatpush1.msra.mxu0 %v3490
    %3511 = vmatprep.subr.mxu0 0.0
    %3512 = vmatpush1.msra.mxu0 %v3491
    %3513 = vmatprep.subr.mxu0 0.0
    %3514 = vmatpush1.msra.mxu0 %v3492
    %3515 = vmatprep.subr.mxu0 0.0
    %3516 = vmatpush1.msra.mxu0 %v3493
    %3517 = vmatprep.subr.mxu0 0.0
    %3518 = vmatpush1.msra.mxu0 0.0
    %3519 = vmatprep.subr.mxu0 0.0
    %3520 = vmatpush1.msra.mxu0 0.0
    %3521 = vmatprep.subr.mxu0 0.0
    %3522 = vmatpush1.msra.mxu0 0.0
    %3523 = vmatprep.subr.mxu0 0.0
    %3524 = vmatpush1.msra.mxu0 0.0
    %3525 = vmatprep.subr.mxu0 0.0
    %3526 = vmatpush1.msra.mxu0 0.0
    %3527 = vmatprep.subr.mxu0 0.0
    %3528 = vmatpush1.msra.mxu0 0.0
    %3529 = vmatprep.subr.mxu0 0.0
    %3530 = vmatpush1.msra.mxu0 0.0
    %3531 = vmatprep.subr.mxu0 0.0
    %3532 = vmatpush1.msra.mxu0 0.0
    %3533 = vmatprep.subr.mxu0 0.0
    %3534 = vmatpush1.msra.mxu0 0.0
    %3535 = vmatprep.subr.mxu0 0.0
    %3536 = vmatpush1.msra.mxu0 0.0
    %3537 = vmatprep.subr.mxu0 0.0
    %3538 = vmatpush1.msra.mxu0 0.0
    %3539 = vmatprep.subr.mxu0 0.0
    %3540 = vmatpush1.msra.mxu0 0.0
    %3541 = vmatprep.subr.mxu0 0.0
    %3542 = vmatpush1.msra.mxu0 0.0
    %3543 = vmatprep.subr.mxu0 0.0
    %3544 = vmatpush1.msra.mxu0 0.0
    %3545 = vmatprep.subr.mxu0 0.0
    %3546 = vmatpush1.msra.mxu0 0.0
    %3547 = vmatprep.subr.mxu0 0.0
    %3548 = vmatpush1.msra.mxu0 0.0
    %3549 = vmatprep.subr.mxu0 0.0
    %3550 = vmatpush1.msra.mxu0 0.0
    %3551 = vmatprep.subr.mxu0 0.0
    %3552 = vmatpush1.msra.mxu0 0.0
    %3553 = vmatprep.subr.mxu0 0.0
    %3554 = vmatpush1.msra.mxu0 0.0
    %3555 = vmatprep.subr.mxu0 0.0
    %3556 = vmatpush1.msra.mxu0 0.0
    %3557 = vmatprep.subr.mxu0 0.0
    %3558 = vmatpush1.msra.mxu0 0.0
    %3559 = vmatprep.subr.mxu0 0.0
    %3560 = vmatpush1.msra.mxu0 0.0
    %3561 = vmatprep.subr.mxu0 0.0
    %3562 = vmatpush1.msra.mxu0 0.0
    %3563 = vmatprep.subr.mxu0 0.0
    %3564 = vmatpush1.msra.mxu0 0.0
    %3565 = vmatprep.mubr.f32.mxu0 0.0
    %3566 = vmatmul.mubr.f32.gmra.mrb[0].mxu0 %v3406
    %v3567 = vpop.f32.mrb[0].mxu0
    %v3568 = vadd.f32 %v3499, %v3567
    %v3569 = vpop.f32.mrb[0].mxu0
    %3570 = vmatprep.mubr.f32.mxu0 0.0
    %3571 = vmatmul.mubr.f32.gmra.mrb[0].mxu0 %v3409
    %v3572 = vpop.f32.mrb[0].mxu0
    %v3573 = vadd.f32 %v3499, %v3572
    %v3574 = vpop.f32.mrb[0].mxu0
    %3575 = vdwg.mxu0
    %v3576 = vld [vmem:[%s53] sm:$0xff]
    %v3577 = vld [vmem:[%s53 + $0x8] sm:$0xff]
    %v3578 = vld [vmem:[%s53 + $0x10] sm:$0xff]
    %v3579 = vld [vmem:[%s53 + $0x18] sm:$0xff]
    %v3580 = vld [vmem:[%s53 + $0x20] sm:$0xff]
    %v3581 = vld [vmem:[%s53 + $0x28] sm:$0xff]
    %v3582 = vld [vmem:[%s53 + $0x30] sm:$0xff]
    %v3583 = vld [vmem:[%s53 + $0x38] sm:$0xff]
    %v3584 = vld [vmem:[%s55] sm:$0x1]
    %v3586 = vlaneseq
    %v3587 = vshrl.u32 %v3586, 7
    %v3588 = vsub.s32 0, %v3587
    %v3589 = vrot.slane %v3584, %v3588
    %3591 = vmatprep.subr.mxu0 0.0
    %3592 = vmatpush1.msra.mxu0 %v3576
    %3593 = vmatprep.subr.mxu0 0.0
    %3594 = vmatpush1.msra.mxu0 %v3577
    %3595 = vmatprep.subr.mxu0 0.0
    %3596 = vmatpush1.msra.mxu0 %v3578
    %3597 = vmatprep.subr.mxu0 0.0
    %3598 = vmatpush1.msra.mxu0 %v3579
    %3599 = vmatprep.subr.mxu0 0.0
    %3600 = vmatpush1.msra.mxu0 %v3580
    %3601 = vmatprep.subr.mxu0 0.0
    %3602 = vmatpush1.msra.mxu0 %v3581
    %3603 = vmatprep.subr.mxu0 0.0
    %3604 = vmatpush1.msra.mxu0 %v3582
    %3605 = vmatprep.subr.mxu0 0.0
    %3606 = vmatpush1.msra.mxu0 %v3583
    %3607 = vmatprep.subr.mxu0 0.0
    %3608 = vmatpush1.msra.mxu0 0.0
    %3609 = vmatprep.subr.mxu0 0.0
    %3610 = vmatpush1.msra.mxu0 0.0
    %3611 = vmatprep.subr.mxu0 0.0
    %3612 = vmatpush1.msra.mxu0 0.0
    %3613 = vmatprep.subr.mxu0 0.0
    %3614 = vmatpush1.msra.mxu0 0.0
    %3615 = vmatprep.subr.mxu0 0.0
    %3616 = vmatpush1.msra.mxu0 0.0
    %3617 = vmatprep.subr.mxu0 0.0
    %3618 = vmatpush1.msra.mxu0 0.0
    %3619 = vmatprep.subr.mxu0 0.0
    %3620 = vmatpush1.msra.mxu0 0.0
    %3621 = vmatprep.subr.mxu0 0.0
    %3622 = vmatpush1.msra.mxu0 0.0
    %3623 = vmatprep.subr.mxu0 0.0
    %3624 = vmatpush1.msra.mxu0 0.0
    %3625 = vmatprep.subr.mxu0 0.0
    %3626 = vmatpush1.msra.mxu0 0.0
    %3627 = vmatprep.subr.mxu0 0.0
    %3628 = vmatpush1.msra.mxu0 0.0
    %3629 = vmatprep.subr.mxu0 0.0
    %3630 = vmatpush1.msra.mxu0 0.0
    %3631 = vmatprep.subr.mxu0 0.0
    %3632 = vmatpush1.msra.mxu0 0.0
    %3633 = vmatprep.subr.mxu0 0.0
    %3634 = vmatpush1.msra.mxu0 0.0
    %3635 = vmatprep.subr.mxu0 0.0
    %3636 = vmatpush1.msra.mxu0 0.0
    %3637 = vmatprep.subr.mxu0 0.0
    %3638 = vmatpush1.msra.mxu0 0.0
    %3639 = vmatprep.subr.mxu0 0.0
    %3640 = vmatpush1.msra.mxu0 0.0
    %3641 = vmatprep.subr.mxu0 0.0
    %3642 = vmatpush1.msra.mxu0 0.0
    %3643 = vmatprep.subr.mxu0 0.0
    %3644 = vmatpush1.msra.mxu0 0.0
    %3645 = vmatprep.subr.mxu0 0.0
    %3646 = vmatpush1.msra.mxu0 0.0
    %3647 = vmatprep.subr.mxu0 0.0
    %3648 = vmatpush1.msra.mxu0 0.0
    %3649 = vmatprep.subr.mxu0 0.0
    %3650 = vmatpush1.msra.mxu0 0.0
    %3651 = vmatprep.subr.mxu0 0.0
    %3652 = vmatpush1.msra.mxu0 0.0
    %3653 = vmatprep.subr.mxu0 0.0
    %3654 = vmatpush1.msra.mxu0 0.0
    %3655 = vmatprep.mubr.f32.mxu0 0.0
    %3656 = vmatmul.mubr.f32.gmra.mrb[0].mxu0 %v3406
    %v3657 = vpop.f32.mrb[0].mxu0
    %v3658 = vadd.f32 %v3589, %v3657
    %v3659 = vpop.f32.mrb[0].mxu0
    %3660 = vmatprep.mubr.f32.mxu0 0.0
    %3661 = vmatmul.mubr.f32.gmra.mrb[0].mxu0 %v3409
    %v3662 = vpop.f32.mrb[0].mxu0
    %v3663 = vadd.f32 %v3589, %v3662
    %v3664 = vpop.f32.mrb[0].mxu0
    %3665 = vdwg.mxu0
    %v3667 = vsel %vm600, %v3478, 0
    %v3670 = vsel %vm600, %v3568, 0
    %3672 = vmatprep.subr.mxu0 0.0
    %3673 = vmatpush1.xpose.msra.mxu0 %v3670
    %3674 = vmatprep.subr.mxu0 0.0
    %3675 = vmatpush1.xpose.msra.mxu0 0.0
    %3676 = vmatprep.subr.mxu0 0.0
    %3677 = vmatpush1.xpose.msra.mxu0 0.0
    %3678 = vmatprep.subr.mxu0 0.0
    %3679 = vmatpush1.xpose.msra.mxu0 0.0
    %3680 = vmatprep.subr.mxu0 0.0
    %3681 = vmatpush1.xpose.msra.mxu0 0.0
    %3682 = vmatprep.subr.mxu0 0.0
    %3683 = vmatpush1.xpose.msra.mxu0 0.0
    %3684 = vmatprep.subr.mxu0 0.0
    %3685 = vmatpush1.xpose.msra.mxu0 0.0
    %3686 = vmatprep.subr.mxu0 0.0
    %3687 = vmatpush1.xpose.msra.mxu0 0.0
    %3688 = vmatprep.subr.mxu0 0.0
    %3689 = vmatpush1.xpose.msra.mxu0 0.0
    %3690 = vmatprep.subr.mxu0 0.0
    %3691 = vmatpush1.xpose.msra.mxu0 0.0
    %3692 = vmatprep.subr.mxu0 0.0
    %3693 = vmatpush1.xpose.msra.mxu0 0.0
    %3694 = vmatprep.subr.mxu0 0.0
    %3695 = vmatpush1.xpose.msra.mxu0 0.0
    %3696 = vmatprep.subr.mxu0 0.0
    %3697 = vmatpush1.xpose.msra.mxu0 0.0
    %3698 = vmatprep.subr.mxu0 0.0
    %3699 = vmatpush1.xpose.msra.mxu0 0.0
    %3700 = vmatprep.subr.mxu0 0.0
    %3701 = vmatpush1.xpose.msra.mxu0 0.0
    %3702 = vmatprep.subr.mxu0 0.0
    %3703 = vmatpush1.xpose.msra.mxu0 0.0
    %3704 = vmatprep.subr.mxu0 0.0
    %3705 = vmatpush1.xpose.msra.mxu0 0.0
    %3706 = vmatprep.subr.mxu0 0.0
    %3707 = vmatpush1.xpose.msra.mxu0 0.0
    %3708 = vmatprep.subr.mxu0 0.0
    %3709 = vmatpush1.xpose.msra.mxu0 0.0
    %3710 = vmatprep.subr.mxu0 0.0
    %3711 = vmatpush1.xpose.msra.mxu0 0.0
    %3712 = vmatprep.subr.mxu0 0.0
    %3713 = vmatpush1.xpose.msra.mxu0 0.0
    %3714 = vmatprep.subr.mxu0 0.0
    %3715 = vmatpush1.xpose.msra.mxu0 0.0
    %3716 = vmatprep.subr.mxu0 0.0
    %3717 = vmatpush1.xpose.msra.mxu0 0.0
    %3718 = vmatprep.subr.mxu0 0.0
    %3719 = vmatpush1.xpose.msra.mxu0 0.0
    %3720 = vmatprep.subr.mxu0 0.0
    %3721 = vmatpush1.xpose.msra.mxu0 0.0
    %3722 = vmatprep.subr.mxu0 0.0
    %3723 = vmatpush1.xpose.msra.mxu0 0.0
    %3724 = vmatprep.subr.mxu0 0.0
    %3725 = vmatpush1.xpose.msra.mxu0 0.0
    %3726 = vmatprep.subr.mxu0 0.0
    %3727 = vmatpush1.xpose.msra.mxu0 0.0
    %3728 = vmatprep.subr.mxu0 0.0
    %3729 = vmatpush1.xpose.msra.mxu0 0.0
    %3730 = vmatprep.subr.mxu0 0.0
    %3731 = vmatpush1.xpose.msra.mxu0 0.0
    %3732 = vmatprep.subr.mxu0 0.0
    %3733 = vmatpush1.xpose.msra.mxu0 0.0
    %3734 = vmatprep.subr.mxu0 0.0
    %3735 = vmatpush1.xpose.msra.mxu0 0.0
    %3736 = vmatprep.mubr.f32.mxu0 0.0
    %3737 = vmatmul.mubr.f32.gmra.mrb[0].mxu0 %v3667
    %v3738 = vpop.f32.mrb[0].mxu0
    %v3739 = vadd.f32 0.0, %v3738
    %v3740 = vpop.f32.mrb[0].mxu0
    %3741 = vdwg.mxu0
    %v3743 = vsel %vm600, %v3483, 0
    %v3746 = vsel %vm600, %v3573, 0
    %3748 = vmatprep.subr.mxu0 0.0
    %3749 = vmatpush1.xpose.msra.mxu0 %v3746
    %3750 = vmatprep.subr.mxu0 0.0
    %3751 = vmatpush1.xpose.msra.mxu0 0.0
    %3752 = vmatprep.subr.mxu0 0.0
    %3753 = vmatpush1.xpose.msra.mxu0 0.0
    %3754 = vmatprep.subr.mxu0 0.0
    %3755 = vmatpush1.xpose.msra.mxu0 0.0
    %3756 = vmatprep.subr.mxu0 0.0
    %3757 = vmatpush1.xpose.msra.mxu0 0.0
    %3758 = vmatprep.subr.mxu0 0.0
    %3759 = vmatpush1.xpose.msra.mxu0 0.0
    %3760 = vmatprep.subr.mxu0 0.0
    %3761 = vmatpush1.xpose.msra.mxu0 0.0
    %3762 = vmatprep.subr.mxu0 0.0
    %3763 = vmatpush1.xpose.msra.mxu0 0.0
    %3764 = vmatprep.subr.mxu0 0.0
    %3765 = vmatpush1.xpose.msra.mxu0 0.0
    %3766 = vmatprep.subr.mxu0 0.0
    %3767 = vmatpush1.xpose.msra.mxu0 0.0
    %3768 = vmatprep.subr.mxu0 0.0
    %3769 = vmatpush1.xpose.msra.mxu0 0.0
    %3770 = vmatprep.subr.mxu0 0.0
    %3771 = vmatpush1.xpose.msra.mxu0 0.0
    %3772 = vmatprep.subr.mxu0 0.0
    %3773 = vmatpush1.xpose.msra.mxu0 0.0
    %3774 = vmatprep.subr.mxu0 0.0
    %3775 = vmatpush1.xpose.msra.mxu0 0.0
    %3776 = vmatprep.subr.mxu0 0.0
    %3777 = vmatpush1.xpose.msra.mxu0 0.0
    %3778 = vmatprep.subr.mxu0 0.0
    %3779 = vmatpush1.xpose.msra.mxu0 0.0
    %3780 = vmatprep.subr.mxu0 0.0
    %3781 = vmatpush1.xpose.msra.mxu0 0.0
    %3782 = vmatprep.subr.mxu0 0.0
    %3783 = vmatpush1.xpose.msra.mxu0 0.0
    %3784 = vmatprep.subr.mxu0 0.0
    %3785 = vmatpush1.xpose.msra.mxu0 0.0
    %3786 = vmatprep.subr.mxu0 0.0
    %3787 = vmatpush1.xpose.msra.mxu0 0.0
    %3788 = vmatprep.subr.mxu0 0.0
    %3789 = vmatpush1.xpose.msra.mxu0 0.0
    %3790 = vmatprep.subr.mxu0 0.0
    %3791 = vmatpush1.xpose.msra.mxu0 0.0
    %3792 = vmatprep.subr.mxu0 0.0
    %3793 = vmatpush1.xpose.msra.mxu0 0.0
    %3794 = vmatprep.subr.mxu0 0.0
    %3795 = vmatpush1.xpose.msra.mxu0 0.0
    %3796 = vmatprep.subr.mxu0 0.0
    %3797 = vmatpush1.xpose.msra.mxu0 0.0
    %3798 = vmatprep.subr.mxu0 0.0
    %3799 = vmatpush1.xpose.msra.mxu0 0.0
    %3800 = vmatprep.subr.mxu0 0.0
    %3801 = vmatpush1.xpose.msra.mxu0 0.0
    %3802 = vmatprep.subr.mxu0 0.0
    %3803 = vmatpush1.xpose.msra.mxu0 0.0
    %3804 = vmatprep.subr.mxu0 0.0
    %3805 = vmatpush1.xpose.msra.mxu0 0.0
    %3806 = vmatprep.subr.mxu0 0.0
    %3807 = vmatpush1.xpose.msra.mxu0 0.0
    %3808 = vmatprep.subr.mxu0 0.0
    %3809 = vmatpush1.xpose.msra.mxu0 0.0
    %3810 = vmatprep.subr.mxu0 0.0
    %3811 = vmatpush1.xpose.msra.mxu0 0.0
    %3812 = vmatprep.mubr.f32.mxu0 0.0
    %3813 = vmatmul.mubr.f32.gmra.mrb[0].mxu0 %v3743
    %v3814 = vpop.f32.mrb[0].mxu0
    %v3815 = vadd.f32 0.0, %v3814
    %v3816 = vpop.f32.mrb[0].mxu0
    %3817 = vdwg.mxu0
    %v3818 = vmul.f32 %v3739, 0.25
    %v3819 = vmul.f32 %v3815, 0.25
    %v3820 = vadd.f32 %v3818, %v760
    %v3821 = vadd.f32 %v3819, %v764
    %v3822 = vsel %vm769, %v3820, -inf
    %3823 = vmax.xlane.f32.xlu0 %v3822
    %v3824 = vpop.xlane.xlu0 %3823
    %v3825 = vsel %vm769, %v3821, -inf
    %3826 = vmax.xlane.f32.xlu0 %v3825
    %v3827 = vpop.xlane.xlu0 %3826
    %v3828 = vsub.f32 %v3820, %v3824
    %v3829 = vsub.f32 %v3821, %v3827
    %v3830 = vmul.f32 %v3828, 1.442695
    %v3831 = vpow.pop %v3830
    %v3832 = vmul.f32 %v3829, 1.442695
    %v3833 = vpow.pop %v3832
    %v3834 = vsel %vm769, %v3831, 0.0
    %3835 = vadd.xlane.f32.xlu0 %v3834
    %v3836 = vpop.xlane.xlu0 %3835
    %v3837 = vsel %vm769, %v3833, 0.0
    %3838 = vadd.xlane.f32.xlu0 %v3837
    %v3839 = vpop.xlane.xlu0 %3838
    %v3840 = vrcp.pop %v3836
    %v3841 = vrcp.pop %v3839
    %v3842 = vmul.f32 %v3831, %v3840
    %v3843 = vmul.f32 %v3833, %v3841
    %v3845 = vsel %vm769, %v3842, 0
    %3847 = vmatprep.subr.mxu0 0.0
    %3848 = vmatpush1.msra.mxu0 %v3658
    %3849 = vmatprep.subr.mxu0 0.0
    %3850 = vmatpush1.msra.mxu0 0.0
    %3851 = vmatprep.subr.mxu0 0.0
    %3852 = vmatpush1.msra.mxu0 0.0
    %3853 = vmatprep.subr.mxu0 0.0
    %3854 = vmatpush1.msra.mxu0 0.0
    %3855 = vmatprep.subr.mxu0 0.0
    %3856 = vmatpush1.msra.mxu0 0.0
    %3857 = vmatprep.subr.mxu0 0.0
    %3858 = vmatpush1.msra.mxu0 0.0
    %3859 = vmatprep.subr.mxu0 0.0
    %3860 = vmatpush1.msra.mxu0 0.0
    %3861 = vmatprep.subr.mxu0 0.0
    %3862 = vmatpush1.msra.mxu0 0.0
    %3863 = vmatprep.subr.mxu0 0.0
    %3864 = vmatpush1.msra.mxu0 0.0
    %3865 = vmatprep.subr.mxu0 0.0
    %3866 = vmatpush1.msra.mxu0 0.0
    %3867 = vmatprep.subr.mxu0 0.0
    %3868 = vmatpush1.msra.mxu0 0.0
    %3869 = vmatprep.subr.mxu0 0.0
    %3870 = vmatpush1.msra.mxu0 0.0
    %3871 = vmatprep.subr.mxu0 0.0
    %3872 = vmatpush1.msra.mxu0 0.0
    %3873 = vmatprep.subr.mxu0 0.0
    %3874 = vmatpush1.msra.mxu0 0.0
    %3875 = vmatprep.subr.mxu0 0.0
    %3876 = vmatpush1.msra.mxu0 0.0
    %3877 = vmatprep.subr.mxu0 0.0
    %3878 = vmatpush1.msra.mxu0 0.0
    %3879 = vmatprep.subr.mxu0 0.0
    %3880 = vmatpush1.msra.mxu0 0.0
    %3881 = vmatprep.subr.mxu0 0.0
    %3882 = vmatpush1.msra.mxu0 0.0
    %3883 = vmatprep.subr.mxu0 0.0
    %3884 = vmatpush1.msra.mxu0 0.0
    %3885 = vmatprep.subr.mxu0 0.0
    %3886 = vmatpush1.msra.mxu0 0.0
    %3887 = vmatprep.subr.mxu0 0.0
    %3888 = vmatpush1.msra.mxu0 0.0
    %3889 = vmatprep.subr.mxu0 0.0
    %3890 = vmatpush1.msra.mxu0 0.0
    %3891 = vmatprep.subr.mxu0 0.0
    %3892 = vmatpush1.msra.mxu0 0.0
    %3893 = vmatprep.subr.mxu0 0.0
    %3894 = vmatpush1.msra.mxu0 0.0
    %3895 = vmatprep.subr.mxu0 0.0
    %3896 = vmatpush1.msra.mxu0 0.0
    %3897 = vmatprep.subr.mxu0 0.0
    %3898 = vmatpush1.msra.mxu0 0.0
    %3899 = vmatprep.subr.mxu0 0.0
    %3900 = vmatpush1.msra.mxu0 0.0
    %3901 = vmatprep.subr.mxu0 0.0
    %3902 = vmatpush1.msra.mxu0 0.0
    %3903 = vmatprep.subr.mxu0 0.0
    %3904 = vmatpush1.msra.mxu0 0.0
    %3905 = vmatprep.subr.mxu0 0.0
    %3906 = vmatpush1.msra.mxu0 0.0
    %3907 = vmatprep.subr.mxu0 0.0
    %3908 = vmatpush1.msra.mxu0 0.0
    %3909 = vmatprep.subr.mxu0 0.0
    %3910 = vmatpush1.msra.mxu0 0.0
    %3911 = vmatprep.mubr.f32.mxu0 0.0
    %3912 = vmatmul.mubr.f32.gmra.mrb[0].mxu0 %v3845
    %v3913 = vpop.f32.mrb[0].mxu0
    %v3914 = vadd.f32 0.0, %v3913
    %v3915 = vpop.f32.mrb[0].mxu0
    %3916 = vdwg.mxu0
    %v3918 = vsel %vm769, %v3843, 0
    %3920 = vmatprep.subr.mxu0 0.0
    %3921 = vmatpush1.msra.mxu0 %v3663
    %3922 = vmatprep.subr.mxu0 0.0
    %3923 = vmatpush1.msra.mxu0 0.0
    %3924 = vmatprep.subr.mxu0 0.0
    %3925 = vmatpush1.msra.mxu0 0.0
    %3926 = vmatprep.subr.mxu0 0.0
    %3927 = vmatpush1.msra.mxu0 0.0
    %3928 = vmatprep.subr.mxu0 0.0
    %3929 = vmatpush1.msra.mxu0 0.0
    %3930 = vmatprep.subr.mxu0 0.0
    %3931 = vmatpush1.msra.mxu0 0.0
    %3932 = vmatprep.subr.mxu0 0.0
    %3933 = vmatpush1.msra.mxu0 0.0
    %3934 = vmatprep.subr.mxu0 0.0
    %3935 = vmatpush1.msra.mxu0 0.0
    %3936 = vmatprep.subr.mxu0 0.0
    %3937 = vmatpush1.msra.mxu0 0.0
    %3938 = vmatprep.subr.mxu0 0.0
    %3939 = vmatpush1.msra.mxu0 0.0
    %3940 = vmatprep.subr.mxu0 0.0
    %3941 = vmatpush1.msra.mxu0 0.0
    %3942 = vmatprep.subr.mxu0 0.0
    %3943 = vmatpush1.msra.mxu0 0.0
    %3944 = vmatprep.subr.mxu0 0.0
    %3945 = vmatpush1.msra.mxu0 0.0
    %3946 = vmatprep.subr.mxu0 0.0
    %3947 = vmatpush1.msra.mxu0 0.0
    %3948 = vmatprep.subr.mxu0 0.0
    %3949 = vmatpush1.msra.mxu0 0.0
    %3950 = vmatprep.subr.mxu0 0.0
    %3951 = vmatpush1.msra.mxu0 0.0
    %3952 = vmatprep.subr.mxu0 0.0
    %3953 = vmatpush1.msra.mxu0 0.0
    %3954 = vmatprep.subr.mxu0 0.0
    %3955 = vmatpush1.msra.mxu0 0.0
    %3956 = vmatprep.subr.mxu0 0.0
    %3957 = vmatpush1.msra.mxu0 0.0
    %3958 = vmatprep.subr.mxu0 0.0
    %3959 = vmatpush1.msra.mxu0 0.0
    %3960 = vmatprep.subr.mxu0 0.0
    %3961 = vmatpush1.msra.mxu0 0.0
    %3962 = vmatprep.subr.mxu0 0.0
    %3963 = vmatpush1.msra.mxu0 0.0
    %3964 = vmatprep.subr.mxu0 0.0
    %3965 = vmatpush1.msra.mxu0 0.0
    %3966 = vmatprep.subr.mxu0 0.0
    %3967 = vmatpush1.msra.mxu0 0.0
    %3968 = vmatprep.subr.mxu0 0.0
    %3969 = vmatpush1.msra.mxu0 0.0
    %3970 = vmatprep.subr.mxu0 0.0
    %3971 = vmatpush1.msra.mxu0 0.0
    %3972 = vmatprep.subr.mxu0 0.0
    %3973 = vmatpush1.msra.mxu0 0.0
    %3974 = vmatprep.subr.mxu0 0.0
    %3975 = vmatpush1.msra.mxu0 0.0
    %3976 = vmatprep.subr.mxu0 0.0
    %3977 = vmatpush1.msra.mxu0 0.0
    %3978 = vmatprep.subr.mxu0 0.0
    %3979 = vmatpush1.msra.mxu0 0.0
    %3980 = vmatprep.subr.mxu0 0.0
    %3981 = vmatpush1.msra.mxu0 0.0
    %3982 = vmatprep.subr.mxu0 0.0
    %3983 = vmatpush1.msra.mxu0 0.0
    %3984 = vmatprep.mubr.f32.mxu0 0.0
    %3985 = vmatmul.mubr.f32.gmra.mrb[0].mxu0 %v3918
    %v3986 = vpop.f32.mrb[0].mxu0
    %v3987 = vadd.f32 0.0, %v3986
    %v3988 = vpop.f32.mrb[0].mxu0
    %3989 = vdwg.mxu0
    %v3990 = vld [vmem:[%s57] sm:$0xff]
    %v3991 = vld [vmem:[%s57 + $0x8] sm:$0xff]
    %s3992 = scalar_lea.vmem %s45, 64
    %v3993 = vld [vmem:[%s3992] sm:$0xff]
    %v3994 = vld [vmem:[%s3992 + $0x8] sm:$0xff]
    %v3995 = vld [vmem:[%s3992 + $0x10] sm:$0xff]
    %v3996 = vld [vmem:[%s3992 + $0x18] sm:$0xff]
    %v3997 = vld [vmem:[%s3992 + $0x20] sm:$0xff]
    %v3998 = vld [vmem:[%s3992 + $0x28] sm:$0xff]
    %v3999 = vld [vmem:[%s3992 + $0x30] sm:$0xff]
    %v4000 = vld [vmem:[%s3992 + $0x38] sm:$0xff]
    %s4001 = scalar_lea.vmem %s47, 1
    %v4002 = vld [vmem:[%s4001] sm:$0x1]
    %v4004 = vlaneseq
    %v4005 = vshrl.u32 %v4004, 7
    %v4006 = vsub.s32 0, %v4005
    %v4007 = vrot.slane %v4002, %v4006
    %4009 = vmatprep.subr.mxu0 0.0
    %4010 = vmatpush1.msra.mxu0 %v3993
    %4011 = vmatprep.subr.mxu0 0.0
    %4012 = vmatpush1.msra.mxu0 %v3994
    %4013 = vmatprep.subr.mxu0 0.0
    %4014 = vmatpush1.msra.mxu0 %v3995
    %4015 = vmatprep.subr.mxu0 0.0
    %4016 = vmatpush1.msra.mxu0 %v3996
    %4017 = vmatprep.subr.mxu0 0.0
    %4018 = vmatpush1.msra.mxu0 %v3997
    %4019 = vmatprep.subr.mxu0 0.0
    %4020 = vmatpush1.msra.mxu0 %v3998
    %4021 = vmatprep.subr.mxu0 0.0
    %4022 = vmatpush1.msra.mxu0 %v3999
    %4023 = vmatprep.subr.mxu0 0.0
    %4024 = vmatpush1.msra.mxu0 %v4000
    %4025 = vmatprep.subr.mxu0 0.0
    %4026 = vmatpush1.msra.mxu0 0.0
    %4027 = vmatprep.subr.mxu0 0.0
    %4028 = vmatpush1.msra.mxu0 0.0
    %4029 = vmatprep.subr.mxu0 0.0
    %4030 = vmatpush1.msra.mxu0 0.0
    %4031 = vmatprep.subr.mxu0 0.0
    %4032 = vmatpush1.msra.mxu0 0.0
    %4033 = vmatprep.subr.mxu0 0.0
    %4034 = vmatpush1.msra.mxu0 0.0
    %4035 = vmatprep.subr.mxu0 0.0
    %4036 = vmatpush1.msra.mxu0 0.0
    %4037 = vmatprep.subr.mxu0 0.0
    %4038 = vmatpush1.msra.mxu0 0.0
    %4039 = vmatprep.subr.mxu0 0.0
    %4040 = vmatpush1.msra.mxu0 0.0
    %4041 = vmatprep.subr.mxu0 0.0
    %4042 = vmatpush1.msra.mxu0 0.0
    %4043 = vmatprep.subr.mxu0 0.0
    %4044 = vmatpush1.msra.mxu0 0.0
    %4045 = vmatprep.subr.mxu0 0.0
    %4046 = vmatpush1.msra.mxu0 0.0
    %4047 = vmatprep.subr.mxu0 0.0
    %4048 = vmatpush1.msra.mxu0 0.0
    %4049 = vmatprep.subr.mxu0 0.0
    %4050 = vmatpush1.msra.mxu0 0.0
    %4051 = vmatprep.subr.mxu0 0.0
    %4052 = vmatpush1.msra.mxu0 0.0
    %4053 = vmatprep.subr.mxu0 0.0
    %4054 = vmatpush1.msra.mxu0 0.0
    %4055 = vmatprep.subr.mxu0 0.0
    %4056 = vmatpush1.msra.mxu0 0.0
    %4057 = vmatprep.subr.mxu0 0.0
    %4058 = vmatpush1.msra.mxu0 0.0
    %4059 = vmatprep.subr.mxu0 0.0
    %4060 = vmatpush1.msra.mxu0 0.0
    %4061 = vmatprep.subr.mxu0 0.0
    %4062 = vmatpush1.msra.mxu0 0.0
    %4063 = vmatprep.subr.mxu0 0.0
    %4064 = vmatpush1.msra.mxu0 0.0
    %4065 = vmatprep.subr.mxu0 0.0
    %4066 = vmatpush1.msra.mxu0 0.0
    %4067 = vmatprep.subr.mxu0 0.0
    %4068 = vmatpush1.msra.mxu0 0.0
    %4069 = vmatprep.subr.mxu0 0.0
    %4070 = vmatpush1.msra.mxu0 0.0
    %4071 = vmatprep.subr.mxu0 0.0
    %4072 = vmatpush1.msra.mxu0 0.0
    %4073 = vmatprep.mubr.f32.mxu0 0.0
    %4074 = vmatmul.mubr.f32.gmra.mrb[0].mxu0 %v3406
    %v4075 = vpop.f32.mrb[0].mxu0
    %v4076 = vadd.f32 %v4007, %v4075
    %v4077 = vpop.f32.mrb[0].mxu0
    %4078 = vmatprep.mubr.f32.mxu0 0.0
    %4079 = vmatmul.mubr.f32.gmra.mrb[0].mxu0 %v3409
    %v4080 = vpop.f32.mrb[0].mxu0
    %v4081 = vadd.f32 %v4007, %v4080
    %v4082 = vpop.f32.mrb[0].mxu0
    %4083 = vdwg.mxu0
    %s4084 = scalar_lea.vmem %s49, 64
    %v4085 = vld [vmem:[%s4084] sm:$0xff]
    %v4086 = vld [vmem:[%s4084 + $0x8] sm:$0xff]
    %v4087 = vld [vmem:[%s4084 + $0x10] sm:$0xff]
    %v4088 = vld [vmem:[%s4084 + $0x18] sm:$0xff]
    %v4089 = vld [vmem:[%s4084 + $0x20] sm:$0xff]
    %v4090 = vld [vmem:[%s4084 + $0x28] sm:$0xff]
    %v4091 = vld [vmem:[%s4084 + $0x30] sm:$0xff]
    %v4092 = vld [vmem:[%s4084 + $0x38] sm:$0xff]
    %s4093 = scalar_lea.vmem %s51, 1
    %v4094 = vld [vmem:[%s4093] sm:$0x1]
    %v4096 = vlaneseq
    %v4097 = vshrl.u32 %v4096, 7
    %v4098 = vsub.s32 0, %v4097
    %v4099 = vrot.slane %v4094, %v4098
    %4101 = vmatprep.subr.mxu0 0.0
    %4102 = vmatpush1.msra.mxu0 %v4085
    %4103 = vmatprep.subr.mxu0 0.0
    %4104 = vmatpush1.msra.mxu0 %v4086
    %4105 = vmatprep.subr.mxu0 0.0
    %4106 = vmatpush1.msra.mxu0 %v4087
    %4107 = vmatprep.subr.mxu0 0.0
    %4108 = vmatpush1.msra.mxu0 %v4088
    %4109 = vmatprep.subr.mxu0 0.0
    %4110 = vmatpush1.msra.mxu0 %v4089
    %4111 = vmatprep.subr.mxu0 0.0
    %4112 = vmatpush1.msra.mxu0 %v4090
    %4113 = vmatprep.subr.mxu0 0.0
    %4114 = vmatpush1.msra.mxu0 %v4091
    %4115 = vmatprep.subr.mxu0 0.0
    %4116 = vmatpush1.msra.mxu0 %v4092
    %4117 = vmatprep.subr.mxu0 0.0
    %4118 = vmatpush1.msra.mxu0 0.0
    %4119 = vmatprep.subr.mxu0 0.0
    %4120 = vmatpush1.msra.mxu0 0.0
    %4121 = vmatprep.subr.mxu0 0.0
    %4122 = vmatpush1.msra.mxu0 0.0
    %4123 = vmatprep.subr.mxu0 0.0
    %4124 = vmatpush1.msra.mxu0 0.0
    %4125 = vmatprep.subr.mxu0 0.0
    %4126 = vmatpush1.msra.mxu0 0.0
    %4127 = vmatprep.subr.mxu0 0.0
    %4128 = vmatpush1.msra.mxu0 0.0
    %4129 = vmatprep.subr.mxu0 0.0
    %4130 = vmatpush1.msra.mxu0 0.0
    %4131 = vmatprep.subr.mxu0 0.0
    %4132 = vmatpush1.msra.mxu0 0.0
    %4133 = vmatprep.subr.mxu0 0.0
    %4134 = vmatpush1.msra.mxu0 0.0
    %4135 = vmatprep.subr.mxu0 0.0
    %4136 = vmatpush1.msra.mxu0 0.0
    %4137 = vmatprep.subr.mxu0 0.0
    %4138 = vmatpush1.msra.mxu0 0.0
    %4139 = vmatprep.subr.mxu0 0.0
    %4140 = vmatpush1.msra.mxu0 0.0
    %4141 = vmatprep.subr.mxu0 0.0
    %4142 = vmatpush1.msra.mxu0 0.0
    %4143 = vmatprep.subr.mxu0 0.0
    %4144 = vmatpush1.msra.mxu0 0.0
    %4145 = vmatprep.subr.mxu0 0.0
    %4146 = vmatpush1.msra.mxu0 0.0
    %4147 = vmatprep.subr.mxu0 0.0
    %4148 = vmatpush1.msra.mxu0 0.0
    %4149 = vmatprep.subr.mxu0 0.0
    %4150 = vmatpush1.msra.mxu0 0.0
    %4151 = vmatprep.subr.mxu0 0.0
    %4152 = vmatpush1.msra.mxu0 0.0
    %4153 = vmatprep.subr.mxu0 0.0
    %4154 = vmatpush1.msra.mxu0 0.0
    %4155 = vmatprep.subr.mxu0 0.0
    %4156 = vmatpush1.msra.mxu0 0.0
    %4157 = vmatprep.subr.mxu0 0.0
    %4158 = vmatpush1.msra.mxu0 0.0
    %4159 = vmatprep.subr.mxu0 0.0
    %4160 = vmatpush1.msra.mxu0 0.0
    %4161 = vmatprep.subr.mxu0 0.0
    %4162 = vmatpush1.msra.mxu0 0.0
    %4163 = vmatprep.subr.mxu0 0.0
    %4164 = vmatpush1.msra.mxu0 0.0
    %4165 = vmatprep.mubr.f32.mxu0 0.0
    %4166 = vmatmul.mubr.f32.gmra.mrb[0].mxu0 %v3406
    %v4167 = vpop.f32.mrb[0].mxu0
    %v4168 = vadd.f32 %v4099, %v4167
    %v4169 = vpop.f32.mrb[0].mxu0
    %4170 = vmatprep.mubr.f32.mxu0 0.0
    %4171 = vmatmul.mubr.f32.gmra.mrb[0].mxu0 %v3409
    %v4172 = vpop.f32.mrb[0].mxu0
    %v4173 = vadd.f32 %v4099, %v4172
    %v4174 = vpop.f32.mrb[0].mxu0
    %4175 = vdwg.mxu0
    %s4176 = scalar_lea.vmem %s53, 64
    %v4177 = vld [vmem:[%s4176] sm:$0xff]
    %v4178 = vld [vmem:[%s4176 + $0x8] sm:$0xff]
    %v4179 = vld [vmem:[%s4176 + $0x10] sm:$0xff]
    %v4180 = vld [vmem:[%s4176 + $0x18] sm:$0xff]
    %v4181 = vld [vmem:[%s4176 + $0x20] sm:$0xff]
    %v4182 = vld [vmem:[%s4176 + $0x28] sm:$0xff]
    %v4183 = vld [vmem:[%s4176 + $0x30] sm:$0xff]
    %v4184 = vld [vmem:[%s4176 + $0x38] sm:$0xff]
    %s4185 = scalar_lea.vmem %s55, 1
    %v4186 = vld [vmem:[%s4185] sm:$0x1]
    %v4188 = vlaneseq
    %v4189 = vshrl.u32 %v4188, 7
    %v4190 = vsub.s32 0, %v4189
    %v4191 = vrot.slane %v4186, %v4190
    %4193 = vmatprep.subr.mxu0 0.0
    %4194 = vmatpush1.msra.mxu0 %v4177
    %4195 = vmatprep.subr.mxu0 0.0
    %4196 = vmatpush1.msra.mxu0 %v4178
    %4197 = vmatprep.subr.mxu0 0.0
    %4198 = vmatpush1.msra.mxu0 %v4179
    %4199 = vmatprep.subr.mxu0 0.0
    %4200 = vmatpush1.msra.mxu0 %v4180
    %4201 = vmatprep.subr.mxu0 0.0
    %4202 = vmatpush1.msra.mxu0 %v4181
    %4203 = vmatprep.subr.mxu0 0.0
    %4204 = vmatpush1.msra.mxu0 %v4182
    %4205 = vmatprep.subr.mxu0 0.0
    %4206 = vmatpush1.msra.mxu0 %v4183
    %4207 = vmatprep.subr.mxu0 0.0
    %4208 = vmatpush1.msra.mxu0 %v4184
    %4209 = vmatprep.subr.mxu0 0.0
    %4210 = vmatpush1.msra.mxu0 0.0
    %4211 = vmatprep.subr.mxu0 0.0
    %4212 = vmatpush1.msra.mxu0 0.0
    %4213 = vmatprep.subr.mxu0 0.0
    %4214 = vmatpush1.msra.mxu0 0.0
    %4215 = vmatprep.subr.mxu0 0.0
    %4216 = vmatpush1.msra.mxu0 0.0
    %4217 = vmatprep.subr.mxu0 0.0
    %4218 = vmatpush1.msra.mxu0 0.0
    %4219 = vmatprep.subr.mxu0 0.0
    %4220 = vmatpush1.msra.mxu0 0.0
    %4221 = vmatprep.subr.mxu0 0.0
    %4222 = vmatpush1.msra.mxu0 0.0
    %4223 = vmatprep.subr.mxu0 0.0
    %4224 = vmatpush1.msra.mxu0 0.0
    %4225 = vmatprep.subr.mxu0 0.0
    %4226 = vmatpush1.msra.mxu0 0.0
    %4227 = vmatprep.subr.mxu0 0.0
    %4228 = vmatpush1.msra.mxu0 0.0
    %4229 = vmatprep.subr.mxu0 0.0
    %4230 = vmatpush1.msra.mxu0 0.0
    %4231 = vmatprep.subr.mxu0 0.0
    %4232 = vmatpush1.msra.mxu0 0.0
    %4233 = vmatprep.subr.mxu0 0.0
    %4234 = vmatpush1.msra.mxu0 0.0
    %4235 = vmatprep.subr.mxu0 0.0
    %4236 = vmatpush1.msra.mxu0 0.0
    %4237 = vmatprep.subr.mxu0 0.0
    %4238 = vmatpush1.msra.mxu0 0.0
    %4239 = vmatprep.subr.mxu0 0.0
    %4240 = vmatpush1.msra.mxu0 0.0
    %4241 = vmatprep.subr.mxu0 0.0
    %4242 = vmatpush1.msra.mxu0 0.0
    %4243 = vmatprep.subr.mxu0 0.0
    %4244 = vmatpush1.msra.mxu0 0.0
    %4245 = vmatprep.subr.mxu0 0.0
    %4246 = vmatpush1.msra.mxu0 0.0
    %4247 = vmatprep.subr.mxu0 0.0
    %4248 = vmatpush1.msra.mxu0 0.0
    %4249 = vmatprep.subr.mxu0 0.0
    %4250 = vmatpush1.msra.mxu0 0.0
    %4251 = vmatprep.subr.mxu0 0.0
    %4252 = vmatpush1.msra.mxu0 0.0
    %4253 = vmatprep.subr.mxu0 0.0
    %4254 = vmatpush1.msra.mxu0 0.0
    %4255 = vmatprep.subr.mxu0 0.0
    %4256 = vmatpush1.msra.mxu0 0.0
    %4257 = vmatprep.mubr.f32.mxu0 0.0
    %4258 = vmatmul.mubr.f32.gmra.mrb[0].mxu0 %v3406
    %v4259 = vpop.f32.mrb[0].mxu0
    %v4260 = vadd.f32 %v4191, %v4259
    %v4261 = vpop.f32.mrb[0].mxu0
    %4262 = vmatprep.mubr.f32.mxu0 0.0
    %4263 = vmatmul.mubr.f32.gmra.mrb[0].mxu0 %v3409
    %v4264 = vpop.f32.mrb[0].mxu0
    %v4265 = vadd.f32 %v4191, %v4264
    %v4266 = vpop.f32.mrb[0].mxu0
    %4267 = vdwg.mxu0
    %v4269 = vsel %vm600, %v4076, 0
    %v4272 = vsel %vm600, %v4168, 0
    %4274 = vmatprep.subr.mxu0 0.0
    %4275 = vmatpush1.xpose.msra.mxu0 %v4272
    %4276 = vmatprep.subr.mxu0 0.0
    %4277 = vmatpush1.xpose.msra.mxu0 0.0
    %4278 = vmatprep.subr.mxu0 0.0
    %4279 = vmatpush1.xpose.msra.mxu0 0.0
    %4280 = vmatprep.subr.mxu0 0.0
    %4281 = vmatpush1.xpose.msra.mxu0 0.0
    %4282 = vmatprep.subr.mxu0 0.0
    %4283 = vmatpush1.xpose.msra.mxu0 0.0
    %4284 = vmatprep.subr.mxu0 0.0
    %4285 = vmatpush1.xpose.msra.mxu0 0.0
    %4286 = vmatprep.subr.mxu0 0.0
    %4287 = vmatpush1.xpose.msra.mxu0 0.0
    %4288 = vmatprep.subr.mxu0 0.0
    %4289 = vmatpush1.xpose.msra.mxu0 0.0
    %4290 = vmatprep.subr.mxu0 0.0
    %4291 = vmatpush1.xpose.msra.mxu0 0.0
    %4292 = vmatprep.subr.mxu0 0.0
    %4293 = vmatpush1.xpose.msra.mxu0 0.0
    %4294 = vmatprep.subr.mxu0 0.0
    %4295 = vmatpush1.xpose.msra.mxu0 0.0
    %4296 = vmatprep.subr.mxu0 0.0
    %4297 = vmatpush1.xpose.msra.mxu0 0.0
    %4298 = vmatprep.subr.mxu0 0.0
    %4299 = vmatpush1.xpose.msra.mxu0 0.0
    %4300 = vmatprep.subr.mxu0 0.0
    %4301 = vmatpush1.xpose.msra.mxu0 0.0
    %4302 = vmatprep.subr.mxu0 0.0
    %4303 = vmatpush1.xpose.msra.mxu0 0.0
    %4304 = vmatprep.subr.mxu0 0.0
    %4305 = vmatpush1.xpose.msra.mxu0 0.0
    %4306 = vmatprep.subr.mxu0 0.0
    %4307 = vmatpush1.xpose.msra.mxu0 0.0
    %4308 = vmatprep.subr.mxu0 0.0
    %4309 = vmatpush1.xpose.msra.mxu0 0.0
    %4310 = vmatprep.subr.mxu0 0.0
    %4311 = vmatpush1.xpose.msra.mxu0 0.0
    %4312 = vmatprep.subr.mxu0 0.0
    %4313 = vmatpush1.xpose.msra.mxu0 0.0
    %4314 = vmatprep.subr.mxu0 0.0
    %4315 = vmatpush1.xpose.msra.mxu0 0.0
    %4316 = vmatprep.subr.mxu0 0.0
    %4317 = vmatpush1.xpose.msra.mxu0 0.0
    %4318 = vmatprep.subr.mxu0 0.0
    %4319 = vmatpush1.xpose.msra.mxu0 0.0
    %4320 = vmatprep.subr.mxu0 0.0
    %4321 = vmatpush1.xpose.msra.mxu0 0.0
    %4322 = vmatprep.subr.mxu0 0.0
    %4323 = vmatpush1.xpose.msra.mxu0 0.0
    %4324 = vmatprep.subr.mxu0 0.0
    %4325 = vmatpush1.xpose.msra.mxu0 0.0
    %4326 = vmatprep.subr.mxu0 0.0
    %4327 = vmatpush1.xpose.msra.mxu0 0.0
    %4328 = vmatprep.subr.mxu0 0.0
    %4329 = vmatpush1.xpose.msra.mxu0 0.0
    %4330 = vmatprep.subr.mxu0 0.0
    %4331 = vmatpush1.xpose.msra.mxu0 0.0
    %4332 = vmatprep.subr.mxu0 0.0
    %4333 = vmatpush1.xpose.msra.mxu0 0.0
    %4334 = vmatprep.subr.mxu0 0.0
    %4335 = vmatpush1.xpose.msra.mxu0 0.0
    %4336 = vmatprep.subr.mxu0 0.0
    %4337 = vmatpush1.xpose.msra.mxu0 0.0
    %4338 = vmatprep.mubr.f32.mxu0 0.0
    %4339 = vmatmul.mubr.f32.gmra.mrb[0].mxu0 %v4269
    %v4340 = vpop.f32.mrb[0].mxu0
    %v4341 = vadd.f32 0.0, %v4340
    %v4342 = vpop.f32.mrb[0].mxu0
    %4343 = vdwg.mxu0
    %v4345 = vsel %vm600, %v4081, 0
    %v4348 = vsel %vm600, %v4173, 0
    %4350 = vmatprep.subr.mxu0 0.0
    %4351 = vmatpush1.xpose.msra.mxu0 %v4348
    %4352 = vmatprep.subr.mxu0 0.0
    %4353 = vmatpush1.xpose.msra.mxu0 0.0
    %4354 = vmatprep.subr.mxu0 0.0
    %4355 = vmatpush1.xpose.msra.mxu0 0.0
    %4356 = vmatprep.subr.mxu0 0.0
    %4357 = vmatpush1.xpose.msra.mxu0 0.0
    %4358 = vmatprep.subr.mxu0 0.0
    %4359 = vmatpush1.xpose.msra.mxu0 0.0
    %4360 = vmatprep.subr.mxu0 0.0
    %4361 = vmatpush1.xpose.msra.mxu0 0.0
    %4362 = vmatprep.subr.mxu0 0.0
    %4363 = vmatpush1.xpose.msra.mxu0 0.0
    %4364 = vmatprep.subr.mxu0 0.0
    %4365 = vmatpush1.xpose.msra.mxu0 0.0
    %4366 = vmatprep.subr.mxu0 0.0
    %4367 = vmatpush1.xpose.msra.mxu0 0.0
    %4368 = vmatprep.subr.mxu0 0.0
    %4369 = vmatpush1.xpose.msra.mxu0 0.0
    %4370 = vmatprep.subr.mxu0 0.0
    %4371 = vmatpush1.xpose.msra.mxu0 0.0
    %4372 = vmatprep.subr.mxu0 0.0
    %4373 = vmatpush1.xpose.msra.mxu0 0.0
    %4374 = vmatprep.subr.mxu0 0.0
    %4375 = vmatpush1.xpose.msra.mxu0 0.0
    %4376 = vmatprep.subr.mxu0 0.0
    %4377 = vmatpush1.xpose.msra.mxu0 0.0
    %4378 = vmatprep.subr.mxu0 0.0
    %4379 = vmatpush1.xpose.msra.mxu0 0.0
    %4380 = vmatprep.subr.mxu0 0.0
    %4381 = vmatpush1.xpose.msra.mxu0 0.0
    %4382 = vmatprep.subr.mxu0 0.0
    %4383 = vmatpush1.xpose.msra.mxu0 0.0
    %4384 = vmatprep.subr.mxu0 0.0
    %4385 = vmatpush1.xpose.msra.mxu0 0.0
    %4386 = vmatprep.subr.mxu0 0.0
    %4387 = vmatpush1.xpose.msra.mxu0 0.0
    %4388 = vmatprep.subr.mxu0 0.0
    %4389 = vmatpush1.xpose.msra.mxu0 0.0
    %4390 = vmatprep.subr.mxu0 0.0
    %4391 = vmatpush1.xpose.msra.mxu0 0.0
    %4392 = vmatprep.subr.mxu0 0.0
    %4393 = vmatpush1.xpose.msra.mxu0 0.0
    %4394 = vmatprep.subr.mxu0 0.0
    %4395 = vmatpush1.xpose.msra.mxu0 0.0
    %4396 = vmatprep.subr.mxu0 0.0
    %4397 = vmatpush1.xpose.msra.mxu0 0.0
    %4398 = vmatprep.subr.mxu0 0.0
    %4399 = vmatpush1.xpose.msra.mxu0 0.0
    %4400 = vmatprep.subr.mxu0 0.0
    %4401 = vmatpush1.xpose.msra.mxu0 0.0
    %4402 = vmatprep.subr.mxu0 0.0
    %4403 = vmatpush1.xpose.msra.mxu0 0.0
    %4404 = vmatprep.subr.mxu0 0.0
    %4405 = vmatpush1.xpose.msra.mxu0 0.0
    %4406 = vmatprep.subr.mxu0 0.0
    %4407 = vmatpush1.xpose.msra.mxu0 0.0
    %4408 = vmatprep.subr.mxu0 0.0
    %4409 = vmatpush1.xpose.msra.mxu0 0.0
    %4410 = vmatprep.subr.mxu0 0.0
    %4411 = vmatpush1.xpose.msra.mxu0 0.0
    %4412 = vmatprep.subr.mxu0 0.0
    %4413 = vmatpush1.xpose.msra.mxu0 0.0
    %4414 = vmatprep.mubr.f32.mxu0 0.0
    %4415 = vmatmul.mubr.f32.gmra.mrb[0].mxu0 %v4345
    %v4416 = vpop.f32.mrb[0].mxu0
    %v4417 = vadd.f32 0.0, %v4416
    %v4418 = vpop.f32.mrb[0].mxu0
    %4419 = vdwg.mxu0
    %v4420 = vmul.f32 %v4341, 0.25
    %v4421 = vmul.f32 %v4417, 0.25
    %v4422 = vadd.f32 %v4420, %v760
    %v4423 = vadd.f32 %v4421, %v764
    %v4424 = vsel %vm769, %v4422, -inf
    %4425 = vmax.xlane.f32.xlu0 %v4424
    %v4426 = vpop.xlane.xlu0 %4425
    %v4427 = vsel %vm769, %v4423, -inf
    %4428 = vmax.xlane.f32.xlu0 %v4427
    %v4429 = vpop.xlane.xlu0 %4428
    %v4430 = vsub.f32 %v4422, %v4426
    %v4431 = vsub.f32 %v4423, %v4429
    %v4432 = vmul.f32 %v4430, 1.442695
    %v4433 = vpow.pop %v4432
    %v4434 = vmul.f32 %v4431, 1.442695
    %v4435 = vpow.pop %v4434
    %v4436 = vsel %vm769, %v4433, 0.0
    %4437 = vadd.xlane.f32.xlu0 %v4436
    %v4438 = vpop.xlane.xlu0 %4437
    %v4439 = vsel %vm769, %v4435, 0.0
    %4440 = vadd.xlane.f32.xlu0 %v4439
    %v4441 = vpop.xlane.xlu0 %4440
    %v4442 = vrcp.pop %v4438
    %v4443 = vrcp.pop %v4441
    %v4444 = vmul.f32 %v4433, %v4442
    %v4445 = vmul.f32 %v4435, %v4443
    %v4447 = vsel %vm769, %v4444, 0
    %4449 = vmatprep.subr.mxu0 0.0
    %4450 = vmatpush1.msra.mxu0 %v4260
    %4451 = vmatprep.subr.mxu0 0.0
    %4452 = vmatpush1.msra.mxu0 0.0
    %4453 = vmatprep.subr.mxu0 0.0
    %4454 = vmatpush1.msra.mxu0 0.0
    %4455 = vmatprep.subr.mxu0 0.0
    %4456 = vmatpush1.msra.mxu0 0.0
    %4457 = vmatprep.subr.mxu0 0.0
    %4458 = vmatpush1.msra.mxu0 0.0
    %4459 = vmatprep.subr.mxu0 0.0
    %4460 = vmatpush1.msra.mxu0 0.0
    %4461 = vmatprep.subr.mxu0 0.0
    %4462 = vmatpush1.msra.mxu0 0.0
    %4463 = vmatprep.subr.mxu0 0.0
    %4464 = vmatpush1.msra.mxu0 0.0
    %4465 = vmatprep.subr.mxu0 0.0
    %4466 = vmatpush1.msra.mxu0 0.0
    %4467 = vmatprep.subr.mxu0 0.0
    %4468 = vmatpush1.msra.mxu0 0.0
    %4469 = vmatprep.subr.mxu0 0.0
    %4470 = vmatpush1.msra.mxu0 0.0
    %4471 = vmatprep.subr.mxu0 0.0
    %4472 = vmatpush1.msra.mxu0 0.0
    %4473 = vmatprep.subr.mxu0 0.0
    %4474 = vmatpush1.msra.mxu0 0.0
    %4475 = vmatprep.subr.mxu0 0.0
    %4476 = vmatpush1.msra.mxu0 0.0
    %4477 = vmatprep.subr.mxu0 0.0
    %4478 = vmatpush1.msra.mxu0 0.0
    %4479 = vmatprep.subr.mxu0 0.0
    %4480 = vmatpush1.msra.mxu0 0.0
    %4481 = vmatprep.subr.mxu0 0.0
    %4482 = vmatpush1.msra.mxu0 0.0
    %4483 = vmatprep.subr.mxu0 0.0
    %4484 = vmatpush1.msra.mxu0 0.0
    %4485 = vmatprep.subr.mxu0 0.0
    %4486 = vmatpush1.msra.mxu0 0.0
    %4487 = vmatprep.subr.mxu0 0.0
    %4488 = vmatpush1.msra.mxu0 0.0
    %4489 = vmatprep.subr.mxu0 0.0
    %4490 = vmatpush1.msra.mxu0 0.0
    %4491 = vmatprep.subr.mxu0 0.0
    %4492 = vmatpush1.msra.mxu0 0.0
    %4493 = vmatprep.subr.mxu0 0.0
    %4494 = vmatpush1.msra.mxu0 0.0
    %4495 = vmatprep.subr.mxu0 0.0
    %4496 = vmatpush1.msra.mxu0 0.0
    %4497 = vmatprep.subr.mxu0 0.0
    %4498 = vmatpush1.msra.mxu0 0.0
    %4499 = vmatprep.subr.mxu0 0.0
    %4500 = vmatpush1.msra.mxu0 0.0
    %4501 = vmatprep.subr.mxu0 0.0
    %4502 = vmatpush1.msra.mxu0 0.0
    %4503 = vmatprep.subr.mxu0 0.0
    %4504 = vmatpush1.msra.mxu0 0.0
    %4505 = vmatprep.subr.mxu0 0.0
    %4506 = vmatpush1.msra.mxu0 0.0
    %4507 = vmatprep.subr.mxu0 0.0
    %4508 = vmatpush1.msra.mxu0 0.0
    %4509 = vmatprep.subr.mxu0 0.0
    %4510 = vmatpush1.msra.mxu0 0.0
    %4511 = vmatprep.subr.mxu0 0.0
    %4512 = vmatpush1.msra.mxu0 0.0
    %4513 = vmatprep.mubr.f32.mxu0 0.0
    %4514 = vmatmul.mubr.f32.gmra.mrb[0].mxu0 %v4447
    %v4515 = vpop.f32.mrb[0].mxu0
    %v4516 = vadd.f32 0.0, %v4515
    %v4517 = vpop.f32.mrb[0].mxu0
    %4518 = vdwg.mxu0
    %v4520 = vsel %vm769, %v4445, 0
    %4522 = vmatprep.subr.mxu0 0.0
    %4523 = vmatpush1.msra.mxu0 %v4265
    %4524 = vmatprep.subr.mxu0 0.0
    %4525 = vmatpush1.msra.mxu0 0.0
    %4526 = vmatprep.subr.mxu0 0.0
    %4527 = vmatpush1.msra.mxu0 0.0
    %4528 = vmatprep.subr.mxu0 0.0
    %4529 = vmatpush1.msra.mxu0 0.0
    %4530 = vmatprep.subr.mxu0 0.0
    %4531 = vmatpush1.msra.mxu0 0.0
    %4532 = vmatprep.subr.mxu0 0.0
    %4533 = vmatpush1.msra.mxu0 0.0
    %4534 = vmatprep.subr.mxu0 0.0
    %4535 = vmatpush1.msra.mxu0 0.0
    %4536 = vmatprep.subr.mxu0 0.0
    %4537 = vmatpush1.msra.mxu0 0.0
    %4538 = vmatprep.subr.mxu0 0.0
    %4539 = vmatpush1.msra.mxu0 0.0
    %4540 = vmatprep.subr.mxu0 0.0
    %4541 = vmatpush1.msra.mxu0 0.0
    %4542 = vmatprep.subr.mxu0 0.0
    %4543 = vmatpush1.msra.mxu0 0.0
    %4544 = vmatprep.subr.mxu0 0.0
    %4545 = vmatpush1.msra.mxu0 0.0
    %4546 = vmatprep.subr.mxu0 0.0
    %4547 = vmatpush1.msra.mxu0 0.0
    %4548 = vmatprep.subr.mxu0 0.0
    %4549 = vmatpush1.msra.mxu0 0.0
    %4550 = vmatprep.subr.mxu0 0.0
    %4551 = vmatpush1.msra.mxu0 0.0
    %4552 = vmatprep.subr.mxu0 0.0
    %4553 = vmatpush1.msra.mxu0 0.0
    %4554 = vmatprep.subr.mxu0 0.0
    %4555 = vmatpush1.msra.mxu0 0.0
    %4556 = vmatprep.subr.mxu0 0.0
    %4557 = vmatpush1.msra.mxu0 0.0
    %4558 = vmatprep.subr.mxu0 0.0
    %4559 = vmatpush1.msra.mxu0 0.0
    %4560 = vmatprep.subr.mxu0 0.0
    %4561 = vmatpush1.msra.mxu0 0.0
    %4562 = vmatprep.subr.mxu0 0.0
    %4563 = vmatpush1.msra.mxu0 0.0
    %4564 = vmatprep.subr.mxu0 0.0
    %4565 = vmatpush1.msra.mxu0 0.0
    %4566 = vmatprep.subr.mxu0 0.0
    %4567 = vmatpush1.msra.mxu0 0.0
    %4568 = vmatprep.subr.mxu0 0.0
    %4569 = vmatpush1.msra.mxu0 0.0
    %4570 = vmatprep.subr.mxu0 0.0
    %4571 = vmatpush1.msra.mxu0 0.0
    %4572 = vmatprep.subr.mxu0 0.0
    %4573 = vmatpush1.msra.mxu0 0.0
    %4574 = vmatprep.subr.mxu0 0.0
    %4575 = vmatpush1.msra.mxu0 0.0
    %4576 = vmatprep.subr.mxu0 0.0
    %4577 = vmatpush1.msra.mxu0 0.0
    %4578 = vmatprep.subr.mxu0 0.0
    %4579 = vmatpush1.msra.mxu0 0.0
    %4580 = vmatprep.subr.mxu0 0.0
    %4581 = vmatpush1.msra.mxu0 0.0
    %4582 = vmatprep.subr.mxu0 0.0
    %4583 = vmatpush1.msra.mxu0 0.0
    %4584 = vmatprep.subr.mxu0 0.0
    %4585 = vmatpush1.msra.mxu0 0.0
    %4586 = vmatprep.mubr.f32.mxu0 0.0
    %4587 = vmatmul.mubr.f32.gmra.mrb[0].mxu0 %v4520
    %v4588 = vpop.f32.mrb[0].mxu0
    %v4589 = vadd.f32 0.0, %v4588
    %v4590 = vpop.f32.mrb[0].mxu0
    %4591 = vdwg.mxu0
    %s4592 = scalar_lea.vmem %s57, 16
    %v4593 = vld [vmem:[%s4592] sm:$0xff]
    %v4594 = vld [vmem:[%s4592 + $0x8] sm:$0xff]
    %v4596 = vsel %vm600, %v4516, 0
    %v4599 = vsel %vm600, %v4589, 0
    %4601 = vmatprep.subr.mxu0 0.0
    %4602 = vmatpush1.msra.mxu0 %v4593
    %4603 = vmatprep.subr.mxu0 0.0
    %4604 = vmatpush1.msra.mxu0 %v4594
    %4605 = vmatprep.subr.mxu0 0.0
    %4606 = vmatpush1.msra.mxu0 0.0
    %4607 = vmatprep.subr.mxu0 0.0
    %4608 = vmatpush1.msra.mxu0 0.0
    %4609 = vmatprep.subr.mxu0 0.0
    %4610 = vmatpush1.msra.mxu0 0.0
    %4611 = vmatprep.subr.mxu0 0.0
    %4612 = vmatpush1.msra.mxu0 0.0
    %4613 = vmatprep.subr.mxu0 0.0
    %4614 = vmatpush1.msra.mxu0 0.0
    %4615 = vmatprep.subr.mxu0 0.0
    %4616 = vmatpush1.msra.mxu0 0.0
    %4617 = vmatprep.subr.mxu0 0.0
    %4618 = vmatpush1.msra.mxu0 0.0
    %4619 = vmatprep.subr.mxu0 0.0
    %4620 = vmatpush1.msra.mxu0 0.0
    %4621 = vmatprep.subr.mxu0 0.0
    %4622 = vmatpush1.msra.mxu0 0.0
    %4623 = vmatprep.subr.mxu0 0.0
    %4624 = vmatpush1.msra.mxu0 0.0
    %4625 = vmatprep.subr.mxu0 0.0
    %4626 = vmatpush1.msra.mxu0 0.0
    %4627 = vmatprep.subr.mxu0 0.0
    %4628 = vmatpush1.msra.mxu0 0.0
    %4629 = vmatprep.subr.mxu0 0.0
    %4630 = vmatpush1.msra.mxu0 0.0
    %4631 = vmatprep.subr.mxu0 0.0
    %4632 = vmatpush1.msra.mxu0 0.0
    %4633 = vmatprep.subr.mxu0 0.0
    %4634 = vmatpush1.msra.mxu0 0.0
    %4635 = vmatprep.subr.mxu0 0.0
    %4636 = vmatpush1.msra.mxu0 0.0
    %4637 = vmatprep.subr.mxu0 0.0
    %4638 = vmatpush1.msra.mxu0 0.0
    %4639 = vmatprep.subr.mxu0 0.0
    %4640 = vmatpush1.msra.mxu0 0.0
    %4641 = vmatprep.subr.mxu0 0.0
    %4642 = vmatpush1.msra.mxu0 0.0
    %4643 = vmatprep.subr.mxu0 0.0
    %4644 = vmatpush1.msra.mxu0 0.0
    %4645 = vmatprep.subr.mxu0 0.0
    %4646 = vmatpush1.msra.mxu0 0.0
    %4647 = vmatprep.subr.mxu0 0.0
    %4648 = vmatpush1.msra.mxu0 0.0
    %4649 = vmatprep.subr.mxu0 0.0
    %4650 = vmatpush1.msra.mxu0 0.0
    %4651 = vmatprep.subr.mxu0 0.0
    %4652 = vmatpush1.msra.mxu0 0.0
    %4653 = vmatprep.subr.mxu0 0.0
    %4654 = vmatpush1.msra.mxu0 0.0
    %4655 = vmatprep.subr.mxu0 0.0
    %4656 = vmatpush1.msra.mxu0 0.0
    %4657 = vmatprep.subr.mxu0 0.0
    %4658 = vmatpush1.msra.mxu0 0.0
    %4659 = vmatprep.subr.mxu0 0.0
    %4660 = vmatpush1.msra.mxu0 0.0
    %4661 = vmatprep.subr.mxu0 0.0
    %4662 = vmatpush1.msra.mxu0 0.0
    %4663 = vmatprep.subr.mxu0 0.0
    %4664 = vmatpush1.msra.mxu0 0.0
    %4665 = vmatprep.mubr.f32.mxu0 0.0
    %4666 = vmatmul.mubr.f32.gmra.mrb[0].mxu0 %v4596
    %v4667 = vpop.f32.mrb[0].mxu0
    %v4668 = vadd.f32 0.0, %v4667
    %v4669 = vpop.f32.mrb[0].mxu0
    %4670 = vmatprep.mubr.f32.mxu0 0.0
    %4671 = vmatmul.mubr.f32.gmra.mrb[0].mxu0 %v4599
    %v4672 = vpop.f32.mrb[0].mxu0
    %v4673 = vadd.f32 0.0, %v4672
    %v4674 = vpop.f32.mrb[0].mxu0
    %4675 = vdwg.mxu0
    %v4677 = vsel %vm600, %v3914, 0
    %v4680 = vsel %vm600, %v3987, 0
    %4682 = vmatprep.subr.mxu0 0.0
    %4683 = vmatpush1.msra.mxu0 %v3990
    %4684 = vmatprep.subr.mxu0 0.0
    %4685 = vmatpush1.msra.mxu0 %v3991
    %4686 = vmatprep.subr.mxu0 0.0
    %4687 = vmatpush1.msra.mxu0 0.0
    %4688 = vmatprep.subr.mxu0 0.0
    %4689 = vmatpush1.msra.mxu0 0.0
    %4690 = vmatprep.subr.mxu0 0.0
    %4691 = vmatpush1.msra.mxu0 0.0
    %4692 = vmatprep.subr.mxu0 0.0
    %4693 = vmatpush1.msra.mxu0 0.0
    %4694 = vmatprep.subr.mxu0 0.0
    %4695 = vmatpush1.msra.mxu0 0.0
    %4696 = vmatprep.subr.mxu0 0.0
    %4697 = vmatpush1.msra.mxu0 0.0
    %4698 = vmatprep.subr.mxu0 0.0
    %4699 = vmatpush1.msra.mxu0 0.0
    %4700 = vmatprep.subr.mxu0 0.0
    %4701 = vmatpush1.msra.mxu0 0.0
    %4702 = vmatprep.subr.mxu0 0.0
    %4703 = vmatpush1.msra.mxu0 0.0
    %4704 = vmatprep.subr.mxu0 0.0
    %4705 = vmatpush1.msra.mxu0 0.0
    %4706 = vmatprep.subr.mxu0 0.0
    %4707 = vmatpush1.msra.mxu0 0.0
    %4708 = vmatprep.subr.mxu0 0.0
    %4709 = vmatpush1.msra.mxu0 0.0
    %4710 = vmatprep.subr.mxu0 0.0
    %4711 = vmatpush1.msra.mxu0 0.0
    %4712 = vmatprep.subr.mxu0 0.0
    %4713 = vmatpush1.msra.mxu0 0.0
    %4714 = vmatprep.subr.mxu0 0.0
    %4715 = vmatpush1.msra.mxu0 0.0
    %4716 = vmatprep.subr.mxu0 0.0
    %4717 = vmatpush1.msra.mxu0 0.0
    %4718 = vmatprep.subr.mxu0 0.0
    %4719 = vmatpush1.msra.mxu0 0.0
    %4720 = vmatprep.subr.mxu0 0.0
    %4721 = vmatpush1.msra.mxu0 0.0
    %4722 = vmatprep.subr.mxu0 0.0
    %4723 = vmatpush1.msra.mxu0 0.0
    %4724 = vmatprep.subr.mxu0 0.0
    %4725 = vmatpush1.msra.mxu0 0.0
    %4726 = vmatprep.subr.mxu0 0.0
    %4727 = vmatpush1.msra.mxu0 0.0
    %4728 = vmatprep.subr.mxu0 0.0
    %4729 = vmatpush1.msra.mxu0 0.0
    %4730 = vmatprep.subr.mxu0 0.0
    %4731 = vmatpush1.msra.mxu0 0.0
    %4732 = vmatprep.subr.mxu0 0.0
    %4733 = vmatpush1.msra.mxu0 0.0
    %4734 = vmatprep.subr.mxu0 0.0
    %4735 = vmatpush1.msra.mxu0 0.0
    %4736 = vmatprep.subr.mxu0 0.0
    %4737 = vmatpush1.msra.mxu0 0.0
    %4738 = vmatprep.subr.mxu0 0.0
    %4739 = vmatpush1.msra.mxu0 0.0
    %4740 = vmatprep.subr.mxu0 0.0
    %4741 = vmatpush1.msra.mxu0 0.0
    %4742 = vmatprep.subr.mxu0 0.0
    %4743 = vmatpush1.msra.mxu0 0.0
    %4744 = vmatprep.subr.mxu0 0.0
    %4745 = vmatpush1.msra.mxu0 0.0
    %4746 = vmatprep.mubr.f32.mxu0 0.0
    %4747 = vmatmul.mubr.f32.gmra.mrb[0].mxu0 %v4677
    %v4748 = vpop.f32.mrb[0].mxu0
    %v4749 = vadd.f32 %v4668, %v4748
    %v4750 = vpop.f32.mrb[0].mxu0
    %4751 = vmatprep.mubr.f32.mxu0 0.0
    %4752 = vmatmul.mubr.f32.gmra.mrb[0].mxu0 %v4680
    %v4753 = vpop.f32.mrb[0].mxu0
    %v4754 = vadd.f32 %v4673, %v4753
    %v4755 = vpop.f32.mrb[0].mxu0
    %4756 = vdwg.mxu0
    %s4757 = scalar_lea.vmem %s45, 128
    %v4758 = vld [vmem:[%s4757] sm:$0xff]
    %v4759 = vld [vmem:[%s4757 + $0x8] sm:$0xff]
    %v4760 = vld [vmem:[%s4757 + $0x10] sm:$0xff]
    %v4761 = vld [vmem:[%s4757 + $0x18] sm:$0xff]
    %v4762 = vld [vmem:[%s4757 + $0x20] sm:$0xff]
    %v4763 = vld [vmem:[%s4757 + $0x28] sm:$0xff]
    %v4764 = vld [vmem:[%s4757 + $0x30] sm:$0xff]
    %v4765 = vld [vmem:[%s4757 + $0x38] sm:$0xff]
    %s4766 = scalar_lea.vmem %s47, 2
    %v4767 = vld [vmem:[%s4766] sm:$0x1]
    %v4769 = vlaneseq
    %v4770 = vshrl.u32 %v4769, 7
    %v4771 = vsub.s32 0, %v4770
    %v4772 = vrot.slane %v4767, %v4771
    %4774 = vmatprep.subr.mxu0 0.0
    %4775 = vmatpush1.msra.mxu0 %v4758
    %4776 = vmatprep.subr.mxu0 0.0
    %4777 = vmatpush1.msra.mxu0 %v4759
    %4778 = vmatprep.subr.mxu0 0.0
    %4779 = vmatpush1.msra.mxu0 %v4760
    %4780 = vmatprep.subr.mxu0 0.0
    %4781 = vmatpush1.msra.mxu0 %v4761
    %4782 = vmatprep.subr.mxu0 0.0
    %4783 = vmatpush1.msra.mxu0 %v4762
    %4784 = vmatprep.subr.mxu0 0.0
    %4785 = vmatpush1.msra.mxu0 %v4763
    %4786 = vmatprep.subr.mxu0 0.0
    %4787 = vmatpush1.msra.mxu0 %v4764
    %4788 = vmatprep.subr.mxu0 0.0
    %4789 = vmatpush1.msra.mxu0 %v4765
    %4790 = vmatprep.subr.mxu0 0.0
    %4791 = vmatpush1.msra.mxu0 0.0
    %4792 = vmatprep.subr.mxu0 0.0
    %4793 = vmatpush1.msra.mxu0 0.0
    %4794 = vmatprep.subr.mxu0 0.0
    %4795 = vmatpush1.msra.mxu0 0.0
    %4796 = vmatprep.subr.mxu0 0.0
    %4797 = vmatpush1.msra.mxu0 0.0
    %4798 = vmatprep.subr.mxu0 0.0
    %4799 = vmatpush1.msra.mxu0 0.0
    %4800 = vmatprep.subr.mxu0 0.0
    %4801 = vmatpush1.msra.mxu0 0.0
    %4802 = vmatprep.subr.mxu0 0.0
    %4803 = vmatpush1.msra.mxu0 0.0
    %4804 = vmatprep.subr.mxu0 0.0
    %4805 = vmatpush1.msra.mxu0 0.0
    %4806 = vmatprep.subr.mxu0 0.0
    %4807 = vmatpush1.msra.mxu0 0.0
    %4808 = vmatprep.subr.mxu0 0.0
    %4809 = vmatpush1.msra.mxu0 0.0
    %4810 = vmatprep.subr.mxu0 0.0
    %4811 = vmatpush1.msra.mxu0 0.0
    %4812 = vmatprep.subr.mxu0 0.0
    %4813 = vmatpush1.msra.mxu0 0.0
    %4814 = vmatprep.subr.mxu0 0.0
    %4815 = vmatpush1.msra.mxu0 0.0
    %4816 = vmatprep.subr.mxu0 0.0
    %4817 = vmatpush1.msra.mxu0 0.0
    %4818 = vmatprep.subr.mxu0 0.0
    %4819 = vmatpush1.msra.mxu0 0.0
    %4820 = vmatprep.subr.mxu0 0.0
    %4821 = vmatpush1.msra.mxu0 0.0
    %4822 = vmatprep.subr.mxu0 0.0
    %4823 = vmatpush1.msra.mxu0 0.0
    %4824 = vmatprep.subr.mxu0 0.0
    %4825 = vmatpush1.msra.mxu0 0.0
    %4826 = vmatprep.subr.mxu0 0.0
    %4827 = vmatpush1.msra.mxu0 0.0
    %4828 = vmatprep.subr.mxu0 0.0
    %4829 = vmatpush1.msra.mxu0 0.0
    %4830 = vmatprep.subr.mxu0 0.0
    %4831 = vmatpush1.msra.mxu0 0.0
    %4832 = vmatprep.subr.mxu0 0.0
    %4833 = vmatpush1.msra.mxu0 0.0
    %4834 = vmatprep.subr.mxu0 0.0
    %4835 = vmatpush1.msra.mxu0 0.0
    %4836 = vmatprep.subr.mxu0 0.0
    %4837 = vmatpush1.msra.mxu0 0.0
    %4838 = vmatprep.mubr.f32.mxu0 0.0
    %4839 = vmatmul.mubr.f32.gmra.mrb[0].mxu0 %v3406
    %v4840 = vpop.f32.mrb[0].mxu0
    %v4841 = vadd.f32 %v4772, %v4840
    %v4842 = vpop.f32.mrb[0].mxu0
    %4843 = vmatprep.mubr.f32.mxu0 0.0
    %4844 = vmatmul.mubr.f32.gmra.mrb[0].mxu0 %v3409
    %v4845 = vpop.f32.mrb[0].mxu0
    %v4846 = vadd.f32 %v4772, %v4845
    %v4847 = vpop.f32.mrb[0].mxu0
    %4848 = vdwg.mxu0
    %s4849 = scalar_lea.vmem %s49, 128
    %v4850 = vld [vmem:[%s4849] sm:$0xff]
    %v4851 = vld [vmem:[%s4849 + $0x8] sm:$0xff]
    %v4852 = vld [vmem:[%s4849 + $0x10] sm:$0xff]
    %v4853 = vld [vmem:[%s4849 + $0x18] sm:$0xff]
    %v4854 = vld [vmem:[%s4849 + $0x20] sm:$0xff]
    %v4855 = vld [vmem:[%s4849 + $0x28] sm:$0xff]
    %v4856 = vld [vmem:[%s4849 + $0x30] sm:$0xff]
    %v4857 = vld [vmem:[%s4849 + $0x38] sm:$0xff]
    %s4858 = scalar_lea.vmem %s51, 2
    %v4859 = vld [vmem:[%s4858] sm:$0x1]
    %v4861 = vlaneseq
    %v4862 = vshrl.u32 %v4861, 7
    %v4863 = vsub.s32 0, %v4862
    %v4864 = vrot.slane %v4859, %v4863
    %4866 = vmatprep.subr.mxu0 0.0
    %4867 = vmatpush1.msra.mxu0 %v4850
    %4868 = vmatprep.subr.mxu0 0.0
    %4869 = vmatpush1.msra.mxu0 %v4851
    %4870 = vmatprep.subr.mxu0 0.0
    %4871 = vmatpush1.msra.mxu0 %v4852
    %4872 = vmatprep.subr.mxu0 0.0
    %4873 = vmatpush1.msra.mxu0 %v4853
    %4874 = vmatprep.subr.mxu0 0.0
    %4875 = vmatpush1.msra.mxu0 %v4854
    %4876 = vmatprep.subr.mxu0 0.0
    %4877 = vmatpush1.msra.mxu0 %v4855
    %4878 = vmatprep.subr.mxu0 0.0
    %4879 = vmatpush1.msra.mxu0 %v4856
    %4880 = vmatprep.subr.mxu0 0.0
    %4881 = vmatpush1.msra.mxu0 %v4857
    %4882 = vmatprep.subr.mxu0 0.0
    %4883 = vmatpush1.msra.mxu0 0.0
    %4884 = vmatprep.subr.mxu0 0.0
    %4885 = vmatpush1.msra.mxu0 0.0
    %4886 = vmatprep.subr.mxu0 0.0
    %4887 = vmatpush1.msra.mxu0 0.0
    %4888 = vmatprep.subr.mxu0 0.0
    %4889 = vmatpush1.msra.mxu0 0.0
    %4890 = vmatprep.subr.mxu0 0.0
    %4891 = vmatpush1.msra.mxu0 0.0
    %4892 = vmatprep.subr.mxu0 0.0
    %4893 = vmatpush1.msra.mxu0 0.0
    %4894 = vmatprep.subr.mxu0 0.0
    %4895 = vmatpush1.msra.mxu0 0.0
    %4896 = vmatprep.subr.mxu0 0.0
    %4897 = vmatpush1.msra.mxu0 0.0
    %4898 = vmatprep.subr.mxu0 0.0
    %4899 = vmatpush1.msra.mxu0 0.0
    %4900 = vmatprep.subr.mxu0 0.0
    %4901 = vmatpush1.msra.mxu0 0.0
    %4902 = vmatprep.subr.mxu0 0.0
    %4903 = vmatpush1.msra.mxu0 0.0
    %4904 = vmatprep.subr.mxu0 0.0
    %4905 = vmatpush1.msra.mxu0 0.0
    %4906 = vmatprep.subr.mxu0 0.0
    %4907 = vmatpush1.msra.mxu0 0.0
    %4908 = vmatprep.subr.mxu0 0.0
    %4909 = vmatpush1.msra.mxu0 0.0
    %4910 = vmatprep.subr.mxu0 0.0
    %4911 = vmatpush1.msra.mxu0 0.0
    %4912 = vmatprep.subr.mxu0 0.0
    %4913 = vmatpush1.msra.mxu0 0.0
    %4914 = vmatprep.subr.mxu0 0.0
    %4915 = vmatpush1.msra.mxu0 0.0
    %4916 = vmatprep.subr.mxu0 0.0
    %4917 = vmatpush1.msra.mxu0 0.0
    %4918 = vmatprep.subr.mxu0 0.0
    %4919 = vmatpush1.msra.mxu0 0.0
    %4920 = vmatprep.subr.mxu0 0.0
    %4921 = vmatpush1.msra.mxu0 0.0
    %4922 = vmatprep.subr.mxu0 0.0
    %4923 = vmatpush1.msra.mxu0 0.0
    %4924 = vmatprep.subr.mxu0 0.0
    %4925 = vmatpush1.msra.mxu0 0.0
    %4926 = vmatprep.subr.mxu0 0.0
    %4927 = vmatpush1.msra.mxu0 0.0
    %4928 = vmatprep.subr.mxu0 0.0
    %4929 = vmatpush1.msra.mxu0 0.0
    %4930 = vmatprep.mubr.f32.mxu0 0.0
    %4931 = vmatmul.mubr.f32.gmra.mrb[0].mxu0 %v3406
    %v4932 = vpop.f32.mrb[0].mxu0
    %v4933 = vadd.f32 %v4864, %v4932
    %v4934 = vpop.f32.mrb[0].mxu0
    %4935 = vmatprep.mubr.f32.mxu0 0.0
    %4936 = vmatmul.mubr.f32.gmra.mrb[0].mxu0 %v3409
    %v4937 = vpop.f32.mrb[0].mxu0
    %v4938 = vadd.f32 %v4864, %v4937
    %v4939 = vpop.f32.mrb[0].mxu0
    %4940 = vdwg.mxu0
    %s4941 = scalar_lea.vmem %s53, 128
    %v4942 = vld [vmem:[%s4941] sm:$0xff]
    %v4943 = vld [vmem:[%s4941 + $0x8] sm:$0xff]
    %v4944 = vld [vmem:[%s4941 + $0x10] sm:$0xff]
    %v4945 = vld [vmem:[%s4941 + $0x18] sm:$0xff]
    %v4946 = vld [vmem:[%s4941 + $0x20] sm:$0xff]
    %v4947 = vld [vmem:[%s4941 + $0x28] sm:$0xff]
    %v4948 = vld [vmem:[%s4941 + $0x30] sm:$0xff]
    %v4949 = vld [vmem:[%s4941 + $0x38] sm:$0xff]
    %s4950 = scalar_lea.vmem %s55, 2
    %v4951 = vld [vmem:[%s4950] sm:$0x1]
    %v4953 = vlaneseq
    %v4954 = vshrl.u32 %v4953, 7
    %v4955 = vsub.s32 0, %v4954
    %v4956 = vrot.slane %v4951, %v4955
    %4958 = vmatprep.subr.mxu0 0.0
    %4959 = vmatpush1.msra.mxu0 %v4942
    %4960 = vmatprep.subr.mxu0 0.0
    %4961 = vmatpush1.msra.mxu0 %v4943
    %4962 = vmatprep.subr.mxu0 0.0
    %4963 = vmatpush1.msra.mxu0 %v4944
    %4964 = vmatprep.subr.mxu0 0.0
    %4965 = vmatpush1.msra.mxu0 %v4945
    %4966 = vmatprep.subr.mxu0 0.0
    %4967 = vmatpush1.msra.mxu0 %v4946
    %4968 = vmatprep.subr.mxu0 0.0
    %4969 = vmatpush1.msra.mxu0 %v4947
    %4970 = vmatprep.subr.mxu0 0.0
    %4971 = vmatpush1.msra.mxu0 %v4948
    %4972 = vmatprep.subr.mxu0 0.0
    %4973 = vmatpush1.msra.mxu0 %v4949
    %4974 = vmatprep.subr.mxu0 0.0
    %4975 = vmatpush1.msra.mxu0 0.0
    %4976 = vmatprep.subr.mxu0 0.0
    %4977 = vmatpush1.msra.mxu0 0.0
    %4978 = vmatprep.subr.mxu0 0.0
    %4979 = vmatpush1.msra.mxu0 0.0
    %4980 = vmatprep.subr.mxu0 0.0
    %4981 = vmatpush1.msra.mxu0 0.0
    %4982 = vmatprep.subr.mxu0 0.0
    %4983 = vmatpush1.msra.mxu0 0.0
    %4984 = vmatprep.subr.mxu0 0.0
    %4985 = vmatpush1.msra.mxu0 0.0
    %4986 = vmatprep.subr.mxu0 0.0
    %4987 = vmatpush1.msra.mxu0 0.0
    %4988 = vmatprep.subr.mxu0 0.0
    %4989 = vmatpush1.msra.mxu0 0.0
    %4990 = vmatprep.subr.mxu0 0.0
    %4991 = vmatpush1.msra.mxu0 0.0
    %4992 = vmatprep.subr.mxu0 0.0
    %4993 = vmatpush1.msra.mxu0 0.0
    %4994 = vmatprep.subr.mxu0 0.0
    %4995 = vmatpush1.msra.mxu0 0.0
    %4996 = vmatprep.subr.mxu0 0.0
    %4997 = vmatpush1.msra.mxu0 0.0
    %4998 = vmatprep.subr.mxu0 0.0
    %4999 = vmatpush1.msra.mxu0 0.0
    %5000 = vmatprep.subr.mxu0 0.0
    %5001 = vmatpush1.msra.mxu0 0.0
    %5002 = vmatprep.subr.mxu0 0.0
    %5003 = vmatpush1.msra.mxu0 0.0
    %5004 = vmatprep.subr.mxu0 0.0
    %5005 = vmatpush1.msra.mxu0 0.0
    %5006 = vmatprep.subr.mxu0 0.0
    %5007 = vmatpush1.msra.mxu0 0.0
    %5008 = vmatprep.subr.mxu0 0.0
    %5009 = vmatpush1.msra.mxu0 0.0
    %5010 = vmatprep.subr.mxu0 0.0
    %5011 = vmatpush1.msra.mxu0 0.0
    %5012 = vmatprep.subr.mxu0 0.0
    %5013 = vmatpush1.msra.mxu0 0.0
    %5014 = vmatprep.subr.mxu0 0.0
    %5015 = vmatpush1.msra.mxu0 0.0
    %5016 = vmatprep.subr.mxu0 0.0
    %5017 = vmatpush1.msra.mxu0 0.0
    %5018 = vmatprep.subr.mxu0 0.0
    %5019 = vmatpush1.msra.mxu0 0.0
    %5020 = vmatprep.subr.mxu0 0.0
    %5021 = vmatpush1.msra.mxu0 0.0
    %5022 = vmatprep.mubr.f32.mxu0 0.0
    %5023 = vmatmul.mubr.f32.gmra.mrb[0].mxu0 %v3406
    %v5024 = vpop.f32.mrb[0].mxu0
    %v5025 = vadd.f32 %v4956, %v5024
    %v5026 = vpop.f32.mrb[0].mxu0
    %5027 = vmatprep.mubr.f32.mxu0 0.0
    %5028 = vmatmul.mubr.f32.gmra.mrb[0].mxu0 %v3409
    %v5029 = vpop.f32.mrb[0].mxu0
    %v5030 = vadd.f32 %v4956, %v5029
    %v5031 = vpop.f32.mrb[0].mxu0
    %5032 = vdwg.mxu0
    %v5034 = vsel %vm600, %v4841, 0
    %v5037 = vsel %vm600, %v4933, 0
    %5039 = vmatprep.subr.mxu0 0.0
    %5040 = vmatpush1.xpose.msra.mxu0 %v5037
    %5041 = vmatprep.subr.mxu0 0.0
    %5042 = vmatpush1.xpose.msra.mxu0 0.0
    %5043 = vmatprep.subr.mxu0 0.0
    %5044 = vmatpush1.xpose.msra.mxu0 0.0
    %5045 = vmatprep.subr.mxu0 0.0
    %5046 = vmatpush1.xpose.msra.mxu0 0.0
    %5047 = vmatprep.subr.mxu0 0.0
    %5048 = vmatpush1.xpose.msra.mxu0 0.0
    %5049 = vmatprep.subr.mxu0 0.0
    %5050 = vmatpush1.xpose.msra.mxu0 0.0
    %5051 = vmatprep.subr.mxu0 0.0
    %5052 = vmatpush1.xpose.msra.mxu0 0.0
    %5053 = vmatprep.subr.mxu0 0.0
    %5054 = vmatpush1.xpose.msra.mxu0 0.0
    %5055 = vmatprep.subr.mxu0 0.0
    %5056 = vmatpush1.xpose.msra.mxu0 0.0
    %5057 = vmatprep.subr.mxu0 0.0
    %5058 = vmatpush1.xpose.msra.mxu0 0.0
    %5059 = vmatprep.subr.mxu0 0.0
    %5060 = vmatpush1.xpose.msra.mxu0 0.0
    %5061 = vmatprep.subr.mxu0 0.0
    %5062 = vmatpush1.xpose.msra.mxu0 0.0
    %5063 = vmatprep.subr.mxu0 0.0
    %5064 = vmatpush1.xpose.msra.mxu0 0.0
    %5065 = vmatprep.subr.mxu0 0.0
    %5066 = vmatpush1.xpose.msra.mxu0 0.0
    %5067 = vmatprep.subr.mxu0 0.0
    %5068 = vmatpush1.xpose.msra.mxu0 0.0
    %5069 = vmatprep.subr.mxu0 0.0
    %5070 = vmatpush1.xpose.msra.mxu0 0.0
    %5071 = vmatprep.subr.mxu0 0.0
    %5072 = vmatpush1.xpose.msra.mxu0 0.0
    %5073 = vmatprep.subr.mxu0 0.0
    %5074 = vmatpush1.xpose.msra.mxu0 0.0
    %5075 = vmatprep.subr.mxu0 0.0
    %5076 = vmatpush1.xpose.msra.mxu0 0.0
    %5077 = vmatprep.subr.mxu0 0.0
    %5078 = vmatpush1.xpose.msra.mxu0 0.0
    %5079 = vmatprep.subr.mxu0 0.0
    %5080 = vmatpush1.xpose.msra.mxu0 0.0
    %5081 = vmatprep.subr.mxu0 0.0
    %5082 = vmatpush1.xpose.msra.mxu0 0.0
    %5083 = vmatprep.subr.mxu0 0.0
    %5084 = vmatpush1.xpose.msra.mxu0 0.0
    %5085 = vmatprep.subr.mxu0 0.0
    %5086 = vmatpush1.xpose.msra.mxu0 0.0
    %5087 = vmatprep.subr.mxu0 0.0
    %5088 = vmatpush1.xpose.msra.mxu0 0.0
    %5089 = vmatprep.subr.mxu0 0.0
    %5090 = vmatpush1.xpose.msra.mxu0 0.0
    %5091 = vmatprep.subr.mxu0 0.0
    %5092 = vmatpush1.xpose.msra.mxu0 0.0
    %5093 = vmatprep.subr.mxu0 0.0
    %5094 = vmatpush1.xpose.msra.mxu0 0.0
    %5095 = vmatprep.subr.mxu0 0.0
    %5096 = vmatpush1.xpose.msra.mxu0 0.0
    %5097 = vmatprep.subr.mxu0 0.0
    %5098 = vmatpush1.xpose.msra.mxu0 0.0
    %5099 = vmatprep.subr.mxu0 0.0
    %5100 = vmatpush1.xpose.msra.mxu0 0.0
    %5101 = vmatprep.subr.mxu0 0.0
    %5102 = vmatpush1.xpose.msra.mxu0 0.0
    %5103 = vmatprep.mubr.f32.mxu0 0.0
    %5104 = vmatmul.mubr.f32.gmra.mrb[0].mxu0 %v5034
    %v5105 = vpop.f32.mrb[0].mxu0
    %v5106 = vadd.f32 0.0, %v5105
    %v5107 = vpop.f32.mrb[0].mxu0
    %5108 = vdwg.mxu0
    %v5110 = vsel %vm600, %v4846, 0
    %v5113 = vsel %vm600, %v4938, 0
    %5115 = vmatprep.subr.mxu0 0.0
    %5116 = vmatpush1.xpose.msra.mxu0 %v5113
    %5117 = vmatprep.subr.mxu0 0.0
    %5118 = vmatpush1.xpose.msra.mxu0 0.0
    %5119 = vmatprep.subr.mxu0 0.0
    %5120 = vmatpush1.xpose.msra.mxu0 0.0
    %5121 = vmatprep.subr.mxu0 0.0
    %5122 = vmatpush1.xpose.msra.mxu0 0.0
    %5123 = vmatprep.subr.mxu0 0.0
    %5124 = vmatpush1.xpose.msra.mxu0 0.0
    %5125 = vmatprep.subr.mxu0 0.0
    %5126 = vmatpush1.xpose.msra.mxu0 0.0
    %5127 = vmatprep.subr.mxu0 0.0
    %5128 = vmatpush1.xpose.msra.mxu0 0.0
    %5129 = vmatprep.subr.mxu0 0.0
    %5130 = vmatpush1.xpose.msra.mxu0 0.0
    %5131 = vmatprep.subr.mxu0 0.0
    %5132 = vmatpush1.xpose.msra.mxu0 0.0
    %5133 = vmatprep.subr.mxu0 0.0
    %5134 = vmatpush1.xpose.msra.mxu0 0.0
    %5135 = vmatprep.subr.mxu0 0.0
    %5136 = vmatpush1.xpose.msra.mxu0 0.0
    %5137 = vmatprep.subr.mxu0 0.0
    %5138 = vmatpush1.xpose.msra.mxu0 0.0
    %5139 = vmatprep.subr.mxu0 0.0
    %5140 = vmatpush1.xpose.msra.mxu0 0.0
    %5141 = vmatprep.subr.mxu0 0.0
    %5142 = vmatpush1.xpose.msra.mxu0 0.0
    %5143 = vmatprep.subr.mxu0 0.0
    %5144 = vmatpush1.xpose.msra.mxu0 0.0
    %5145 = vmatprep.subr.mxu0 0.0
    %5146 = vmatpush1.xpose.msra.mxu0 0.0
    %5147 = vmatprep.subr.mxu0 0.0
    %5148 = vmatpush1.xpose.msra.mxu0 0.0
    %5149 = vmatprep.subr.mxu0 0.0
    %5150 = vmatpush1.xpose.msra.mxu0 0.0
    %5151 = vmatprep.subr.mxu0 0.0
    %5152 = vmatpush1.xpose.msra.mxu0 0.0
    %5153 = vmatprep.subr.mxu0 0.0
    %5154 = vmatpush1.xpose.msra.mxu0 0.0
    %5155 = vmatprep.subr.mxu0 0.0
    %5156 = vmatpush1.xpose.msra.mxu0 0.0
    %5157 = vmatprep.subr.mxu0 0.0
    %5158 = vmatpush1.xpose.msra.mxu0 0.0
    %5159 = vmatprep.subr.mxu0 0.0
    %5160 = vmatpush1.xpose.msra.mxu0 0.0
    %5161 = vmatprep.subr.mxu0 0.0
    %5162 = vmatpush1.xpose.msra.mxu0 0.0
    %5163 = vmatprep.subr.mxu0 0.0
    %5164 = vmatpush1.xpose.msra.mxu0 0.0
    %5165 = vmatprep.subr.mxu0 0.0
    %5166 = vmatpush1.xpose.msra.mxu0 0.0
    %5167 = vmatprep.subr.mxu0 0.0
    %5168 = vmatpush1.xpose.msra.mxu0 0.0
    %5169 = vmatprep.subr.mxu0 0.0
    %5170 = vmatpush1.xpose.msra.mxu0 0.0
    %5171 = vmatprep.subr.mxu0 0.0
    %5172 = vmatpush1.xpose.msra.mxu0 0.0
    %5173 = vmatprep.subr.mxu0 0.0
    %5174 = vmatpush1.xpose.msra.mxu0 0.0
    %5175 = vmatprep.subr.mxu0 0.0
    %5176 = vmatpush1.xpose.msra.mxu0 0.0
    %5177 = vmatprep.subr.mxu0 0.0
    %5178 = vmatpush1.xpose.msra.mxu0 0.0
    %5179 = vmatprep.mubr.f32.mxu0 0.0
    %5180 = vmatmul.mubr.f32.gmra.mrb[0].mxu0 %v5110
    %v5181 = vpop.f32.mrb[0].mxu0
    %v5182 = vadd.f32 0.0, %v5181
    %v5183 = vpop.f32.mrb[0].mxu0
    %5184 = vdwg.mxu0
    %v5185 = vmul.f32 %v5106, 0.25
    %v5186 = vmul.f32 %v5182, 0.25
    %v5187 = vadd.f32 %v5185, %v760
    %v5188 = vadd.f32 %v5186, %v764
    %v5189 = vsel %vm769, %v5187, -inf
    %5190 = vmax.xlane.f32.xlu0 %v5189
    %v5191 = vpop.xlane.xlu0 %5190
    %v5192 = vsel %vm769, %v5188, -inf
    %5193 = vmax.xlane.f32.xlu0 %v5192
    %v5194 = vpop.xlane.xlu0 %5193
    %v5195 = vsub.f32 %v5187, %v5191
    %v5196 = vsub.f32 %v5188, %v5194
    %v5197 = vmul.f32 %v5195, 1.442695
    %v5198 = vpow.pop %v5197
    %v5199 = vmul.f32 %v5196, 1.442695
    %v5200 = vpow.pop %v5199
    %v5201 = vsel %vm769, %v5198, 0.0
    %5202 = vadd.xlane.f32.xlu0 %v5201
    %v5203 = vpop.xlane.xlu0 %5202
    %v5204 = vsel %vm769, %v5200, 0.0
    %5205 = vadd.xlane.f32.xlu0 %v5204
    %v5206 = vpop.xlane.xlu0 %5205
    %v5207 = vrcp.pop %v5203
    %v5208 = vrcp.pop %v5206
    %v5209 = vmul.f32 %v5198, %v5207
    %v5210 = vmul.f32 %v5200, %v5208
    %v5212 = vsel %vm769, %v5209, 0
    %5214 = vmatprep.subr.mxu0 0.0
    %5215 = vmatpush1.msra.mxu0 %v5025
    %5216 = vmatprep.subr.mxu0 0.0
    %5217 = vmatpush1.msra.mxu0 0.0
    %5218 = vmatprep.subr.mxu0 0.0
    %5219 = vmatpush1.msra.mxu0 0.0
    %5220 = vmatprep.subr.mxu0 0.0
    %5221 = vmatpush1.msra.mxu0 0.0
    %5222 = vmatprep.subr.mxu0 0.0
    %5223 = vmatpush1.msra.mxu0 0.0
    %5224 = vmatprep.subr.mxu0 0.0
    %5225 = vmatpush1.msra.mxu0 0.0
    %5226 = vmatprep.subr.mxu0 0.0
    %5227 = vmatpush1.msra.mxu0 0.0
    %5228 = vmatprep.subr.mxu0 0.0
    %5229 = vmatpush1.msra.mxu0 0.0
    %5230 = vmatprep.subr.mxu0 0.0
    %5231 = vmatpush1.msra.mxu0 0.0
    %5232 = vmatprep.subr.mxu0 0.0
    %5233 = vmatpush1.msra.mxu0 0.0
    %5234 = vmatprep.subr.mxu0 0.0
    %5235 = vmatpush1.msra.mxu0 0.0
    %5236 = vmatprep.subr.mxu0 0.0
    %5237 = vmatpush1.msra.mxu0 0.0
    %5238 = vmatprep.subr.mxu0 0.0
    %5239 = vmatpush1.msra.mxu0 0.0
    %5240 = vmatprep.subr.mxu0 0.0
    %5241 = vmatpush1.msra.mxu0 0.0
    %5242 = vmatprep.subr.mxu0 0.0
    %5243 = vmatpush1.msra.mxu0 0.0
    %5244 = vmatprep.subr.mxu0 0.0
    %5245 = vmatpush1.msra.mxu0 0.0
    %5246 = vmatprep.subr.mxu0 0.0
    %5247 = vmatpush1.msra.mxu0 0.0
    %5248 = vmatprep.subr.mxu0 0.0
    %5249 = vmatpush1.msra.mxu0 0.0
    %5250 = vmatprep.subr.mxu0 0.0
    %5251 = vmatpush1.msra.mxu0 0.0
    %5252 = vmatprep.subr.mxu0 0.0
    %5253 = vmatpush1.msra.mxu0 0.0
    %5254 = vmatprep.subr.mxu0 0.0
    %5255 = vmatpush1.msra.mxu0 0.0
    %5256 = vmatprep.subr.mxu0 0.0
    %5257 = vmatpush1.msra.mxu0 0.0
    %5258 = vmatprep.subr.mxu0 0.0
    %5259 = vmatpush1.msra.mxu0 0.0
    %5260 = vmatprep.subr.mxu0 0.0
    %5261 = vmatpush1.msra.mxu0 0.0
    %5262 = vmatprep.subr.mxu0 0.0
    %5263 = vmatpush1.msra.mxu0 0.0
    %5264 = vmatprep.subr.mxu0 0.0
    %5265 = vmatpush1.msra.mxu0 0.0
    %5266 = vmatprep.subr.mxu0 0.0
    %5267 = vmatpush1.msra.mxu0 0.0
    %5268 = vmatprep.subr.mxu0 0.0
    %5269 = vmatpush1.msra.mxu0 0.0
    %5270 = vmatprep.subr.mxu0 0.0
    %5271 = vmatpush1.msra.mxu0 0.0
    %5272 = vmatprep.subr.mxu0 0.0
    %5273 = vmatpush1.msra.mxu0 0.0
    %5274 = vmatprep.subr.mxu0 0.0
    %5275 = vmatpush1.msra.mxu0 0.0
    %5276 = vmatprep.subr.mxu0 0.0
    %5277 = vmatpush1.msra.mxu0 0.0
    %5278 = vmatprep.mubr.f32.mxu0 0.0
    %5279 = vmatmul.mubr.f32.gmra.mrb[0].mxu0 %v5212
    %v5280 = vpop.f32.mrb[0].mxu0
    %v5281 = vadd.f32 0.0, %v5280
    %v5282 = vpop.f32.mrb[0].mxu0
    %5283 = vdwg.mxu0
    %v5285 = vsel %vm769, %v5210, 0
    %5287 = vmatprep.subr.mxu0 0.0
    %5288 = vmatpush1.msra.mxu0 %v5030
    %5289 = vmatprep.subr.mxu0 0.0
    %5290 = vmatpush1.msra.mxu0 0.0
    %5291 = vmatprep.subr.mxu0 0.0
    %5292 = vmatpush1.msra.mxu0 0.0
    %5293 = vmatprep.subr.mxu0 0.0
    %5294 = vmatpush1.msra.mxu0 0.0
    %5295 = vmatprep.subr.mxu0 0.0
    %5296 = vmatpush1.msra.mxu0 0.0
    %5297 = vmatprep.subr.mxu0 0.0
    %5298 = vmatpush1.msra.mxu0 0.0
    %5299 = vmatprep.subr.mxu0 0.0
    %5300 = vmatpush1.msra.mxu0 0.0
    %5301 = vmatprep.subr.mxu0 0.0
    %5302 = vmatpush1.msra.mxu0 0.0
    %5303 = vmatprep.subr.mxu0 0.0
    %5304 = vmatpush1.msra.mxu0 0.0
    %5305 = vmatprep.subr.mxu0 0.0
    %5306 = vmatpush1.msra.mxu0 0.0
    %5307 = vmatprep.subr.mxu0 0.0
    %5308 = vmatpush1.msra.mxu0 0.0
    %5309 = vmatprep.subr.mxu0 0.0
    %5310 = vmatpush1.msra.mxu0 0.0
    %5311 = vmatprep.subr.mxu0 0.0
    %5312 = vmatpush1.msra.mxu0 0.0
    %5313 = vmatprep.subr.mxu0 0.0
    %5314 = vmatpush1.msra.mxu0 0.0
    %5315 = vmatprep.subr.mxu0 0.0
    %5316 = vmatpush1.msra.mxu0 0.0
    %5317 = vmatprep.subr.mxu0 0.0
    %5318 = vmatpush1.msra.mxu0 0.0
    %5319 = vmatprep.subr.mxu0 0.0
    %5320 = vmatpush1.msra.mxu0 0.0
    %5321 = vmatprep.subr.mxu0 0.0
    %5322 = vmatpush1.msra.mxu0 0.0
    %5323 = vmatprep.subr.mxu0 0.0
    %5324 = vmatpush1.msra.mxu0 0.0
    %5325 = vmatprep.subr.mxu0 0.0
    %5326 = vmatpush1.msra.mxu0 0.0
    %5327 = vmatprep.subr.mxu0 0.0
    %5328 = vmatpush1.msra.mxu0 0.0
    %5329 = vmatprep.subr.mxu0 0.0
    %5330 = vmatpush1.msra.mxu0 0.0
    %5331 = vmatprep.subr.mxu0 0.0
    %5332 = vmatpush1.msra.mxu0 0.0
    %5333 = vmatprep.subr.mxu0 0.0
    %5334 = vmatpush1.msra.mxu0 0.0
    %5335 = vmatprep.subr.mxu0 0.0
    %5336 = vmatpush1.msra.mxu0 0.0
    %5337 = vmatprep.subr.mxu0 0.0
    %5338 = vmatpush1.msra.mxu0 0.0
    %5339 = vmatprep.subr.mxu0 0.0
    %5340 = vmatpush1.msra.mxu0 0.0
    %5341 = vmatprep.subr.mxu0 0.0
    %5342 = vmatpush1.msra.mxu0 0.0
    %5343 = vmatprep.subr.mxu0 0.0
    %5344 = vmatpush1.msra.mxu0 0.0
    %5345 = vmatprep.subr.mxu0 0.0
    %5346 = vmatpush1.msra.mxu0 0.0
    %5347 = vmatprep.subr.mxu0 0.0
    %5348 = vmatpush1.msra.mxu0 0.0
    %5349 = vmatprep.subr.mxu0 0.0
    %5350 = vmatpush1.msra.mxu0 0.0
    %5351 = vmatprep.mubr.f32.mxu0 0.0
    %5352 = vmatmul.mubr.f32.gmra.mrb[0].mxu0 %v5285
    %v5353 = vpop.f32.mrb[0].mxu0
    %v5354 = vadd.f32 0.0, %v5353
    %v5355 = vpop.f32.mrb[0].mxu0
    %5356 = vdwg.mxu0
    %s5357 = scalar_lea.vmem %s57, 32
    %v5358 = vld [vmem:[%s5357] sm:$0xff]
    %v5359 = vld [vmem:[%s5357 + $0x8] sm:$0xff]
    %v5361 = vsel %vm600, %v5281, 0
    %v5364 = vsel %vm600, %v5354, 0
    %5366 = vmatprep.subr.mxu0 0.0
    %5367 = vmatpush1.msra.mxu0 %v5358
    %5368 = vmatprep.subr.mxu0 0.0
    %5369 = vmatpush1.msra.mxu0 %v5359
    %5370 = vmatprep.subr.mxu0 0.0
    %5371 = vmatpush1.msra.mxu0 0.0
    %5372 = vmatprep.subr.mxu0 0.0
    %5373 = vmatpush1.msra.mxu0 0.0
    %5374 = vmatprep.subr.mxu0 0.0
    %5375 = vmatpush1.msra.mxu0 0.0
    %5376 = vmatprep.subr.mxu0 0.0
    %5377 = vmatpush1.msra.mxu0 0.0
    %5378 = vmatprep.subr.mxu0 0.0
    %5379 = vmatpush1.msra.mxu0 0.0
    %5380 = vmatprep.subr.mxu0 0.0
    %5381 = vmatpush1.msra.mxu0 0.0
    %5382 = vmatprep.subr.mxu0 0.0
    %5383 = vmatpush1.msra.mxu0 0.0
    %5384 = vmatprep.subr.mxu0 0.0
    %5385 = vmatpush1.msra.mxu0 0.0
    %5386 = vmatprep.subr.mxu0 0.0
    %5387 = vmatpush1.msra.mxu0 0.0
    %5388 = vmatprep.subr.mxu0 0.0
    %5389 = vmatpush1.msra.mxu0 0.0
    %5390 = vmatprep.subr.mxu0 0.0
    %5391 = vmatpush1.msra.mxu0 0.0
    %5392 = vmatprep.subr.mxu0 0.0
    %5393 = vmatpush1.msra.mxu0 0.0
    %5394 = vmatprep.subr.mxu0 0.0
    %5395 = vmatpush1.msra.mxu0 0.0
    %5396 = vmatprep.subr.mxu0 0.0
    %5397 = vmatpush1.msra.mxu0 0.0
    %5398 = vmatprep.subr.mxu0 0.0
    %5399 = vmatpush1.msra.mxu0 0.0
    %5400 = vmatprep.subr.mxu0 0.0
    %5401 = vmatpush1.msra.mxu0 0.0
    %5402 = vmatprep.subr.mxu0 0.0
    %5403 = vmatpush1.msra.mxu0 0.0
    %5404 = vmatprep.subr.mxu0 0.0
    %5405 = vmatpush1.msra.mxu0 0.0
    %5406 = vmatprep.subr.mxu0 0.0
    %5407 = vmatpush1.msra.mxu0 0.0
    %5408 = vmatprep.subr.mxu0 0.0
    %5409 = vmatpush1.msra.mxu0 0.0
    %5410 = vmatprep.subr.mxu0 0.0
    %5411 = vmatpush1.msra.mxu0 0.0
    %5412 = vmatprep.subr.mxu0 0.0
    %5413 = vmatpush1.msra.mxu0 0.0
    %5414 = vmatprep.subr.mxu0 0.0
    %5415 = vmatpush1.msra.mxu0 0.0
    %5416 = vmatprep.subr.mxu0 0.0
    %5417 = vmatpush1.msra.mxu0 0.0
    %5418 = vmatprep.subr.mxu0 0.0
    %5419 = vmatpush1.msra.mxu0 0.0
    %5420 = vmatprep.subr.mxu0 0.0
    %5421 = vmatpush1.msra.mxu0 0.0
    %5422 = vmatprep.subr.mxu0 0.0
    %5423 = vmatpush1.msra.mxu0 0.0
    %5424 = vmatprep.subr.mxu0 0.0
    %5425 = vmatpush1.msra.mxu0 0.0
    %5426 = vmatprep.subr.mxu0 0.0
    %5427 = vmatpush1.msra.mxu0 0.0
    %5428 = vmatprep.subr.mxu0 0.0
    %5429 = vmatpush1.msra.mxu0 0.0
    %5430 = vmatprep.mubr.f32.mxu0 0.0
    %5431 = vmatmul.mubr.f32.gmra.mrb[0].mxu0 %v5361
    %v5432 = vpop.f32.mrb[0].mxu0
    %v5433 = vadd.f32 0.0, %v5432
    %v5434 = vpop.f32.mrb[0].mxu0
    %5435 = vmatprep.mubr.f32.mxu0 0.0
    %5436 = vmatmul.mubr.f32.gmra.mrb[0].mxu0 %v5364
    %v5437 = vpop.f32.mrb[0].mxu0
    %v5438 = vadd.f32 0.0, %v5437
    %v5439 = vpop.f32.mrb[0].mxu0
    %5440 = vdwg.mxu0
    %v5441 = vadd.f32 %v4749, %v5433
    %v5442 = vadd.f32 %v4754, %v5438
    %s5443 = scalar_lea.vmem %s45, 192
    %v5444 = vld [vmem:[%s5443] sm:$0xff]
    %v5445 = vld [vmem:[%s5443 + $0x8] sm:$0xff]
    %v5446 = vld [vmem:[%s5443 + $0x10] sm:$0xff]
    %v5447 = vld [vmem:[%s5443 + $0x18] sm:$0xff]
    %v5448 = vld [vmem:[%s5443 + $0x20] sm:$0xff]
    %v5449 = vld [vmem:[%s5443 + $0x28] sm:$0xff]
    %v5450 = vld [vmem:[%s5443 + $0x30] sm:$0xff]
    %v5451 = vld [vmem:[%s5443 + $0x38] sm:$0xff]
    %s5452 = scalar_lea.vmem %s47, 3
    %v5453 = vld [vmem:[%s5452] sm:$0x1]
    %v5455 = vlaneseq
    %v5456 = vshrl.u32 %v5455, 7
    %v5457 = vsub.s32 0, %v5456
    %v5458 = vrot.slane %v5453, %v5457
    %5460 = vmatprep.subr.mxu0 0.0
    %5461 = vmatpush1.msra.mxu0 %v5444
    %5462 = vmatprep.subr.mxu0 0.0
    %5463 = vmatpush1.msra.mxu0 %v5445
    %5464 = vmatprep.subr.mxu0 0.0
    %5465 = vmatpush1.msra.mxu0 %v5446
    %5466 = vmatprep.subr.mxu0 0.0
    %5467 = vmatpush1.msra.mxu0 %v5447
    %5468 = vmatprep.subr.mxu0 0.0
    %5469 = vmatpush1.msra.mxu0 %v5448
    %5470 = vmatprep.subr.mxu0 0.0
    %5471 = vmatpush1.msra.mxu0 %v5449
    %5472 = vmatprep.subr.mxu0 0.0
    %5473 = vmatpush1.msra.mxu0 %v5450
    %5474 = vmatprep.subr.mxu0 0.0
    %5475 = vmatpush1.msra.mxu0 %v5451
    %5476 = vmatprep.subr.mxu0 0.0
    %5477 = vmatpush1.msra.mxu0 0.0
    %5478 = vmatprep.subr.mxu0 0.0
    %5479 = vmatpush1.msra.mxu0 0.0
    %5480 = vmatprep.subr.mxu0 0.0
    %5481 = vmatpush1.msra.mxu0 0.0
    %5482 = vmatprep.subr.mxu0 0.0
    %5483 = vmatpush1.msra.mxu0 0.0
    %5484 = vmatprep.subr.mxu0 0.0
    %5485 = vmatpush1.msra.mxu0 0.0
    %5486 = vmatprep.subr.mxu0 0.0
    %5487 = vmatpush1.msra.mxu0 0.0
    %5488 = vmatprep.subr.mxu0 0.0
    %5489 = vmatpush1.msra.mxu0 0.0
    %5490 = vmatprep.subr.mxu0 0.0
    %5491 = vmatpush1.msra.mxu0 0.0
    %5492 = vmatprep.subr.mxu0 0.0
    %5493 = vmatpush1.msra.mxu0 0.0
    %5494 = vmatprep.subr.mxu0 0.0
    %5495 = vmatpush1.msra.mxu0 0.0
    %5496 = vmatprep.subr.mxu0 0.0
    %5497 = vmatpush1.msra.mxu0 0.0
    %5498 = vmatprep.subr.mxu0 0.0
    %5499 = vmatpush1.msra.mxu0 0.0
    %5500 = vmatprep.subr.mxu0 0.0
    %5501 = vmatpush1.msra.mxu0 0.0
    %5502 = vmatprep.subr.mxu0 0.0
    %5503 = vmatpush1.msra.mxu0 0.0
    %5504 = vmatprep.subr.mxu0 0.0
    %5505 = vmatpush1.msra.mxu0 0.0
    %5506 = vmatprep.subr.mxu0 0.0
    %5507 = vmatpush1.msra.mxu0 0.0
    %5508 = vmatprep.subr.mxu0 0.0
    %5509 = vmatpush1.msra.mxu0 0.0
    %5510 = vmatprep.subr.mxu0 0.0
    %5511 = vmatpush1.msra.mxu0 0.0
    %5512 = vmatprep.subr.mxu0 0.0
    %5513 = vmatpush1.msra.mxu0 0.0
    %5514 = vmatprep.subr.mxu0 0.0
    %5515 = vmatpush1.msra.mxu0 0.0
    %5516 = vmatprep.subr.mxu0 0.0
    %5517 = vmatpush1.msra.mxu0 0.0
    %5518 = vmatprep.subr.mxu0 0.0
    %5519 = vmatpush1.msra.mxu0 0.0
    %5520 = vmatprep.subr.mxu0 0.0
    %5521 = vmatpush1.msra.mxu0 0.0
    %5522 = vmatprep.subr.mxu0 0.0
    %5523 = vmatpush1.msra.mxu0 0.0
    %5524 = vmatprep.mubr.f32.mxu0 0.0
    %5525 = vmatmul.mubr.f32.gmra.mrb[0].mxu0 %v3406
    %v5526 = vpop.f32.mrb[0].mxu0
    %v5527 = vadd.f32 %v5458, %v5526
    %v5528 = vpop.f32.mrb[0].mxu0
    %5529 = vmatprep.mubr.f32.mxu0 0.0
    %5530 = vmatmul.mubr.f32.gmra.mrb[0].mxu0 %v3409
    %v5531 = vpop.f32.mrb[0].mxu0
    %v5532 = vadd.f32 %v5458, %v5531
    %v5533 = vpop.f32.mrb[0].mxu0
    %5534 = vdwg.mxu0
    %s5535 = scalar_lea.vmem %s49, 192
    %v5536 = vld [vmem:[%s5535] sm:$0xff]
    %v5537 = vld [vmem:[%s5535 + $0x8] sm:$0xff]
    %v5538 = vld [vmem:[%s5535 + $0x10] sm:$0xff]
    %v5539 = vld [vmem:[%s5535 + $0x18] sm:$0xff]
    %v5540 = vld [vmem:[%s5535 + $0x20] sm:$0xff]
    %v5541 = vld [vmem:[%s5535 + $0x28] sm:$0xff]
    %v5542 = vld [vmem:[%s5535 + $0x30] sm:$0xff]
    %v5543 = vld [vmem:[%s5535 + $0x38] sm:$0xff]
    %s5544 = scalar_lea.vmem %s51, 3
    %v5545 = vld [vmem:[%s5544] sm:$0x1]
    %v5547 = vlaneseq
    %v5548 = vshrl.u32 %v5547, 7
    %v5549 = vsub.s32 0, %v5548
    %v5550 = vrot.slane %v5545, %v5549
    %5552 = vmatprep.subr.mxu0 0.0
    %5553 = vmatpush1.msra.mxu0 %v5536
    %5554 = vmatprep.subr.mxu0 0.0
    %5555 = vmatpush1.msra.mxu0 %v5537
    %5556 = vmatprep.subr.mxu0 0.0
    %5557 = vmatpush1.msra.mxu0 %v5538
    %5558 = vmatprep.subr.mxu0 0.0
    %5559 = vmatpush1.msra.mxu0 %v5539
    %5560 = vmatprep.subr.mxu0 0.0
    %5561 = vmatpush1.msra.mxu0 %v5540
    %5562 = vmatprep.subr.mxu0 0.0
    %5563 = vmatpush1.msra.mxu0 %v5541
    %5564 = vmatprep.subr.mxu0 0.0
    %5565 = vmatpush1.msra.mxu0 %v5542
    %5566 = vmatprep.subr.mxu0 0.0
    %5567 = vmatpush1.msra.mxu0 %v5543
    %5568 = vmatprep.subr.mxu0 0.0
    %5569 = vmatpush1.msra.mxu0 0.0
    %5570 = vmatprep.subr.mxu0 0.0
    %5571 = vmatpush1.msra.mxu0 0.0
    %5572 = vmatprep.subr.mxu0 0.0
    %5573 = vmatpush1.msra.mxu0 0.0
    %5574 = vmatprep.subr.mxu0 0.0
    %5575 = vmatpush1.msra.mxu0 0.0
    %5576 = vmatprep.subr.mxu0 0.0
    %5577 = vmatpush1.msra.mxu0 0.0
    %5578 = vmatprep.subr.mxu0 0.0
    %5579 = vmatpush1.msra.mxu0 0.0
    %5580 = vmatprep.subr.mxu0 0.0
    %5581 = vmatpush1.msra.mxu0 0.0
    %5582 = vmatprep.subr.mxu0 0.0
    %5583 = vmatpush1.msra.mxu0 0.0
    %5584 = vmatprep.subr.mxu0 0.0
    %5585 = vmatpush1.msra.mxu0 0.0
    %5586 = vmatprep.subr.mxu0 0.0
    %5587 = vmatpush1.msra.mxu0 0.0
    %5588 = vmatprep.subr.mxu0 0.0
    %5589 = vmatpush1.msra.mxu0 0.0
    %5590 = vmatprep.subr.mxu0 0.0
    %5591 = vmatpush1.msra.mxu0 0.0
    %5592 = vmatprep.subr.mxu0 0.0
    %5593 = vmatpush1.msra.mxu0 0.0
    %5594 = vmatprep.subr.mxu0 0.0
    %5595 = vmatpush1.msra.mxu0 0.0
    %5596 = vmatprep.subr.mxu0 0.0
    %5597 = vmatpush1.msra.mxu0 0.0
    %5598 = vmatprep.subr.mxu0 0.0
    %5599 = vmatpush1.msra.mxu0 0.0
    %5600 = vmatprep.subr.mxu0 0.0
    %5601 = vmatpush1.msra.mxu0 0.0
    %5602 = vmatprep.subr.mxu0 0.0
    %5603 = vmatpush1.msra.mxu0 0.0
    %5604 = vmatprep.subr.mxu0 0.0
    %5605 = vmatpush1.msra.mxu0 0.0
    %5606 = vmatprep.subr.mxu0 0.0
    %5607 = vmatpush1.msra.mxu0 0.0
    %5608 = vmatprep.subr.mxu0 0.0
    %5609 = vmatpush1.msra.mxu0 0.0
    %5610 = vmatprep.subr.mxu0 0.0
    %5611 = vmatpush1.msra.mxu0 0.0
    %5612 = vmatprep.subr.mxu0 0.0
    %5613 = vmatpush1.msra.mxu0 0.0
    %5614 = vmatprep.subr.mxu0 0.0
    %5615 = vmatpush1.msra.mxu0 0.0
    %5616 = vmatprep.mubr.f32.mxu0 0.0
    %5617 = vmatmul.mubr.f32.gmra.mrb[0].mxu0 %v3406
    %v5618 = vpop.f32.mrb[0].mxu0
    %v5619 = vadd.f32 %v5550, %v5618
    %v5620 = vpop.f32.mrb[0].mxu0
    %5621 = vmatprep.mubr.f32.mxu0 0.0
    %5622 = vmatmul.mubr.f32.gmra.mrb[0].mxu0 %v3409
    %v5623 = vpop.f32.mrb[0].mxu0
    %v5624 = vadd.f32 %v5550, %v5623
    %v5625 = vpop.f32.mrb[0].mxu0
    %5626 = vdwg.mxu0
    %s5627 = scalar_lea.vmem %s53, 192
    %v5628 = vld [vmem:[%s5627] sm:$0xff]
    %v5629 = vld [vmem:[%s5627 + $0x8] sm:$0xff]
    %v5630 = vld [vmem:[%s5627 + $0x10] sm:$0xff]
    %v5631 = vld [vmem:[%s5627 + $0x18] sm:$0xff]
    %v5632 = vld [vmem:[%s5627 + $0x20] sm:$0xff]
    %v5633 = vld [vmem:[%s5627 + $0x28] sm:$0xff]
    %v5634 = vld [vmem:[%s5627 + $0x30] sm:$0xff]
    %v5635 = vld [vmem:[%s5627 + $0x38] sm:$0xff]
    %s5636 = scalar_lea.vmem %s55, 3
    %v5637 = vld [vmem:[%s5636] sm:$0x1]
    %v5639 = vlaneseq
    %v5640 = vshrl.u32 %v5639, 7
    %v5641 = vsub.s32 0, %v5640
    %v5642 = vrot.slane %v5637, %v5641
    %5644 = vmatprep.subr.mxu0 0.0
    %5645 = vmatpush1.msra.mxu0 %v5628
    %5646 = vmatprep.subr.mxu0 0.0
    %5647 = vmatpush1.msra.mxu0 %v5629
    %5648 = vmatprep.subr.mxu0 0.0
    %5649 = vmatpush1.msra.mxu0 %v5630
    %5650 = vmatprep.subr.mxu0 0.0
    %5651 = vmatpush1.msra.mxu0 %v5631
    %5652 = vmatprep.subr.mxu0 0.0
    %5653 = vmatpush1.msra.mxu0 %v5632
    %5654 = vmatprep.subr.mxu0 0.0
    %5655 = vmatpush1.msra.mxu0 %v5633
    %5656 = vmatprep.subr.mxu0 0.0
    %5657 = vmatpush1.msra.mxu0 %v5634
    %5658 = vmatprep.subr.mxu0 0.0
    %5659 = vmatpush1.msra.mxu0 %v5635
    %5660 = vmatprep.subr.mxu0 0.0
    %5661 = vmatpush1.msra.mxu0 0.0
    %5662 = vmatprep.subr.mxu0 0.0
    %5663 = vmatpush1.msra.mxu0 0.0
    %5664 = vmatprep.subr.mxu0 0.0
    %5665 = vmatpush1.msra.mxu0 0.0
    %5666 = vmatprep.subr.mxu0 0.0
    %5667 = vmatpush1.msra.mxu0 0.0
    %5668 = vmatprep.subr.mxu0 0.0
    %5669 = vmatpush1.msra.mxu0 0.0
    %5670 = vmatprep.subr.mxu0 0.0
    %5671 = vmatpush1.msra.mxu0 0.0
    %5672 = vmatprep.subr.mxu0 0.0
    %5673 = vmatpush1.msra.mxu0 0.0
    %5674 = vmatprep.subr.mxu0 0.0
    %5675 = vmatpush1.msra.mxu0 0.0
    %5676 = vmatprep.subr.mxu0 0.0
    %5677 = vmatpush1.msra.mxu0 0.0
    %5678 = vmatprep.subr.mxu0 0.0
    %5679 = vmatpush1.msra.mxu0 0.0
    %5680 = vmatprep.subr.mxu0 0.0
    %5681 = vmatpush1.msra.mxu0 0.0
    %5682 = vmatprep.subr.mxu0 0.0
    %5683 = vmatpush1.msra.mxu0 0.0
    %5684 = vmatprep.subr.mxu0 0.0
    %5685 = vmatpush1.msra.mxu0 0.0
    %5686 = vmatprep.subr.mxu0 0.0
    %5687 = vmatpush1.msra.mxu0 0.0
    %5688 = vmatprep.subr.mxu0 0.0
    %5689 = vmatpush1.msra.mxu0 0.0
    %5690 = vmatprep.subr.mxu0 0.0
    %5691 = vmatpush1.msra.mxu0 0.0
    %5692 = vmatprep.subr.mxu0 0.0
    %5693 = vmatpush1.msra.mxu0 0.0
    %5694 = vmatprep.subr.mxu0 0.0
    %5695 = vmatpush1.msra.mxu0 0.0
    %5696 = vmatprep.subr.mxu0 0.0
    %5697 = vmatpush1.msra.mxu0 0.0
    %5698 = vmatprep.subr.mxu0 0.0
    %5699 = vmatpush1.msra.mxu0 0.0
    %5700 = vmatprep.subr.mxu0 0.0
    %5701 = vmatpush1.msra.mxu0 0.0
    %5702 = vmatprep.subr.mxu0 0.0
    %5703 = vmatpush1.msra.mxu0 0.0
    %5704 = vmatprep.subr.mxu0 0.0
    %5705 = vmatpush1.msra.mxu0 0.0
    %5706 = vmatprep.subr.mxu0 0.0
    %5707 = vmatpush1.msra.mxu0 0.0
    %5708 = vmatprep.mubr.f32.mxu0 0.0
    %5709 = vmatmul.mubr.f32.gmra.mrb[0].mxu0 %v3406
    %v5710 = vpop.f32.mrb[0].mxu0
    %v5711 = vadd.f32 %v5642, %v5710
    %v5712 = vpop.f32.mrb[0].mxu0
    %5713 = vmatprep.mubr.f32.mxu0 0.0
    %5714 = vmatmul.mubr.f32.gmra.mrb[0].mxu0 %v3409
    %v5715 = vpop.f32.mrb[0].mxu0
    %v5716 = vadd.f32 %v5642, %v5715
    %v5717 = vpop.f32.mrb[0].mxu0
    %5718 = vdwg.mxu0
    %v5720 = vsel %vm600, %v5527, 0
    %v5723 = vsel %vm600, %v5619, 0
    %5725 = vmatprep.subr.mxu0 0.0
    %5726 = vmatpush1.xpose.msra.mxu0 %v5723
    %5727 = vmatprep.subr.mxu0 0.0
    %5728 = vmatpush1.xpose.msra.mxu0 0.0
    %5729 = vmatprep.subr.mxu0 0.0
    %5730 = vmatpush1.xpose.msra.mxu0 0.0
    %5731 = vmatprep.subr.mxu0 0.0
    %5732 = vmatpush1.xpose.msra.mxu0 0.0
    %5733 = vmatprep.subr.mxu0 0.0
    %5734 = vmatpush1.xpose.msra.mxu0 0.0
    %5735 = vmatprep.subr.mxu0 0.0
    %5736 = vmatpush1.xpose.msra.mxu0 0.0
    %5737 = vmatprep.subr.mxu0 0.0
    %5738 = vmatpush1.xpose.msra.mxu0 0.0
    %5739 = vmatprep.subr.mxu0 0.0
    %5740 = vmatpush1.xpose.msra.mxu0 0.0
    %5741 = vmatprep.subr.mxu0 0.0
    %5742 = vmatpush1.xpose.msra.mxu0 0.0
    %5743 = vmatprep.subr.mxu0 0.0
    %5744 = vmatpush1.xpose.msra.mxu0 0.0
    %5745 = vmatprep.subr.mxu0 0.0
    %5746 = vmatpush1.xpose.msra.mxu0 0.0
    %5747 = vmatprep.subr.mxu0 0.0
    %5748 = vmatpush1.xpose.msra.mxu0 0.0
    %5749 = vmatprep.subr.mxu0 0.0
    %5750 = vmatpush1.xpose.msra.mxu0 0.0
    %5751 = vmatprep.subr.mxu0 0.0
    %5752 = vmatpush1.xpose.msra.mxu0 0.0
    %5753 = vmatprep.subr.mxu0 0.0
    %5754 = vmatpush1.xpose.msra.mxu0 0.0
    %5755 = vmatprep.subr.mxu0 0.0
    %5756 = vmatpush1.xpose.msra.mxu0 0.0
    %5757 = vmatprep.subr.mxu0 0.0
    %5758 = vmatpush1.xpose.msra.mxu0 0.0
    %5759 = vmatprep.subr.mxu0 0.0
    %5760 = vmatpush1.xpose.msra.mxu0 0.0
    %5761 = vmatprep.subr.mxu0 0.0
    %5762 = vmatpush1.xpose.msra.mxu0 0.0
    %5763 = vmatprep.subr.mxu0 0.0
    %5764 = vmatpush1.xpose.msra.mxu0 0.0
    %5765 = vmatprep.subr.mxu0 0.0
    %5766 = vmatpush1.xpose.msra.mxu0 0.0
    %5767 = vmatprep.subr.mxu0 0.0
    %5768 = vmatpush1.xpose.msra.mxu0 0.0
    %5769 = vmatprep.subr.mxu0 0.0
    %5770 = vmatpush1.xpose.msra.mxu0 0.0
    %5771 = vmatprep.subr.mxu0 0.0
    %5772 = vmatpush1.xpose.msra.mxu0 0.0
    %5773 = vmatprep.subr.mxu0 0.0
    %5774 = vmatpush1.xpose.msra.mxu0 0.0
    %5775 = vmatprep.subr.mxu0 0.0
    %5776 = vmatpush1.xpose.msra.mxu0 0.0
    %5777 = vmatprep.subr.mxu0 0.0
    %5778 = vmatpush1.xpose.msra.mxu0 0.0
    %5779 = vmatprep.subr.mxu0 0.0
    %5780 = vmatpush1.xpose.msra.mxu0 0.0
    %5781 = vmatprep.subr.mxu0 0.0
    %5782 = vmatpush1.xpose.msra.mxu0 0.0
    %5783 = vmatprep.subr.mxu0 0.0
    %5784 = vmatpush1.xpose.msra.mxu0 0.0
    %5785 = vmatprep.subr.mxu0 0.0
    %5786 = vmatpush1.xpose.msra.mxu0 0.0
    %5787 = vmatprep.subr.mxu0 0.0
    %5788 = vmatpush1.xpose.msra.mxu0 0.0
    %5789 = vmatprep.mubr.f32.mxu0 0.0
    %5790 = vmatmul.mubr.f32.gmra.mrb[0].mxu0 %v5720
    %v5791 = vpop.f32.mrb[0].mxu0
    %v5792 = vadd.f32 0.0, %v5791
    %v5793 = vpop.f32.mrb[0].mxu0
    %5794 = vdwg.mxu0
    %v5796 = vsel %vm600, %v5532, 0
    %v5799 = vsel %vm600, %v5624, 0
    %5801 = vmatprep.subr.mxu0 0.0
    %5802 = vmatpush1.xpose.msra.mxu0 %v5799
    %5803 = vmatprep.subr.mxu0 0.0
    %5804 = vmatpush1.xpose.msra.mxu0 0.0
    %5805 = vmatprep.subr.mxu0 0.0
    %5806 = vmatpush1.xpose.msra.mxu0 0.0
    %5807 = vmatprep.subr.mxu0 0.0
    %5808 = vmatpush1.xpose.msra.mxu0 0.0
    %5809 = vmatprep.subr.mxu0 0.0
    %5810 = vmatpush1.xpose.msra.mxu0 0.0
    %5811 = vmatprep.subr.mxu0 0.0
    %5812 = vmatpush1.xpose.msra.mxu0 0.0
    %5813 = vmatprep.subr.mxu0 0.0
    %5814 = vmatpush1.xpose.msra.mxu0 0.0
    %5815 = vmatprep.subr.mxu0 0.0
    %5816 = vmatpush1.xpose.msra.mxu0 0.0
    %5817 = vmatprep.subr.mxu0 0.0
    %5818 = vmatpush1.xpose.msra.mxu0 0.0
    %5819 = vmatprep.subr.mxu0 0.0
    %5820 = vmatpush1.xpose.msra.mxu0 0.0
    %5821 = vmatprep.subr.mxu0 0.0
    %5822 = vmatpush1.xpose.msra.mxu0 0.0
    %5823 = vmatprep.subr.mxu0 0.0
    %5824 = vmatpush1.xpose.msra.mxu0 0.0
    %5825 = vmatprep.subr.mxu0 0.0
    %5826 = vmatpush1.xpose.msra.mxu0 0.0
    %5827 = vmatprep.subr.mxu0 0.0
    %5828 = vmatpush1.xpose.msra.mxu0 0.0
    %5829 = vmatprep.subr.mxu0 0.0
    %5830 = vmatpush1.xpose.msra.mxu0 0.0
    %5831 = vmatprep.subr.mxu0 0.0
    %5832 = vmatpush1.xpose.msra.mxu0 0.0
    %5833 = vmatprep.subr.mxu0 0.0
    %5834 = vmatpush1.xpose.msra.mxu0 0.0
    %5835 = vmatprep.subr.mxu0 0.0
    %5836 = vmatpush1.xpose.msra.mxu0 0.0
    %5837 = vmatprep.subr.mxu0 0.0
    %5838 = vmatpush1.xpose.msra.mxu0 0.0
    %5839 = vmatprep.subr.mxu0 0.0
    %5840 = vmatpush1.xpose.msra.mxu0 0.0
    %5841 = vmatprep.subr.mxu0 0.0
    %5842 = vmatpush1.xpose.msra.mxu0 0.0
    %5843 = vmatprep.subr.mxu0 0.0
    %5844 = vmatpush1.xpose.msra.mxu0 0.0
    %5845 = vmatprep.subr.mxu0 0.0
    %5846 = vmatpush1.xpose.msra.mxu0 0.0
    %5847 = vmatprep.subr.mxu0 0.0
    %5848 = vmatpush1.xpose.msra.mxu0 0.0
    %5849 = vmatprep.subr.mxu0 0.0
    %5850 = vmatpush1.xpose.msra.mxu0 0.0
    %5851 = vmatprep.subr.mxu0 0.0
    %5852 = vmatpush1.xpose.msra.mxu0 0.0
    %5853 = vmatprep.subr.mxu0 0.0
    %5854 = vmatpush1.xpose.msra.mxu0 0.0
    %5855 = vmatprep.subr.mxu0 0.0
    %5856 = vmatpush1.xpose.msra.mxu0 0.0
    %5857 = vmatprep.subr.mxu0 0.0
    %5858 = vmatpush1.xpose.msra.mxu0 0.0
    %5859 = vmatprep.subr.mxu0 0.0
    %5860 = vmatpush1.xpose.msra.mxu0 0.0
    %5861 = vmatprep.subr.mxu0 0.0
    %5862 = vmatpush1.xpose.msra.mxu0 0.0
    %5863 = vmatprep.subr.mxu0 0.0
    %5864 = vmatpush1.xpose.msra.mxu0 0.0
    %5865 = vmatprep.mubr.f32.mxu0 0.0
    %5866 = vmatmul.mubr.f32.gmra.mrb[0].mxu0 %v5796
    %v5867 = vpop.f32.mrb[0].mxu0
    %v5868 = vadd.f32 0.0, %v5867
    %v5869 = vpop.f32.mrb[0].mxu0
    %5870 = vdwg.mxu0
    %v5871 = vmul.f32 %v5792, 0.25
    %v5872 = vmul.f32 %v5868, 0.25
    %v5873 = vadd.f32 %v5871, %v760
    %v5874 = vadd.f32 %v5872, %v764
    %v5875 = vsel %vm769, %v5873, -inf
    %5876 = vmax.xlane.f32.xlu0 %v5875
    %v5877 = vpop.xlane.xlu0 %5876
    %v5878 = vsel %vm769, %v5874, -inf
    %5879 = vmax.xlane.f32.xlu0 %v5878
    %v5880 = vpop.xlane.xlu0 %5879
    %v5881 = vsub.f32 %v5873, %v5877
    %v5882 = vsub.f32 %v5874, %v5880
    %v5883 = vmul.f32 %v5881, 1.442695
    %v5884 = vpow.pop %v5883
    %v5885 = vmul.f32 %v5882, 1.442695
    %v5886 = vpow.pop %v5885
    %v5887 = vsel %vm769, %v5884, 0.0
    %5888 = vadd.xlane.f32.xlu0 %v5887
    %v5889 = vpop.xlane.xlu0 %5888
    %v5890 = vsel %vm769, %v5886, 0.0
    %5891 = vadd.xlane.f32.xlu0 %v5890
    %v5892 = vpop.xlane.xlu0 %5891
    %v5893 = vrcp.pop %v5889
    %v5894 = vrcp.pop %v5892
    %v5895 = vmul.f32 %v5884, %v5893
    %v5896 = vmul.f32 %v5886, %v5894
    %v5898 = vsel %vm769, %v5895, 0
    %5900 = vmatprep.subr.mxu0 0.0
    %5901 = vmatpush1.msra.mxu0 %v5711
    %5902 = vmatprep.subr.mxu0 0.0
    %5903 = vmatpush1.msra.mxu0 0.0
    %5904 = vmatprep.subr.mxu0 0.0
    %5905 = vmatpush1.msra.mxu0 0.0
    %5906 = vmatprep.subr.mxu0 0.0
    %5907 = vmatpush1.msra.mxu0 0.0
    %5908 = vmatprep.subr.mxu0 0.0
    %5909 = vmatpush1.msra.mxu0 0.0
    %5910 = vmatprep.subr.mxu0 0.0
    %5911 = vmatpush1.msra.mxu0 0.0
    %5912 = vmatprep.subr.mxu0 0.0
    %5913 = vmatpush1.msra.mxu0 0.0
    %5914 = vmatprep.subr.mxu0 0.0
    %5915 = vmatpush1.msra.mxu0 0.0
    %5916 = vmatprep.subr.mxu0 0.0
    %5917 = vmatpush1.msra.mxu0 0.0
    %5918 = vmatprep.subr.mxu0 0.0
    %5919 = vmatpush1.msra.mxu0 0.0
    %5920 = vmatprep.subr.mxu0 0.0
    %5921 = vmatpush1.msra.mxu0 0.0
    %5922 = vmatprep.subr.mxu0 0.0
    %5923 = vmatpush1.msra.mxu0 0.0
    %5924 = vmatprep.subr.mxu0 0.0
    %5925 = vmatpush1.msra.mxu0 0.0
    %5926 = vmatprep.subr.mxu0 0.0
    %5927 = vmatpush1.msra.mxu0 0.0
    %5928 = vmatprep.subr.mxu0 0.0
    %5929 = vmatpush1.msra.mxu0 0.0
    %5930 = vmatprep.subr.mxu0 0.0
    %5931 = vmatpush1.msra.mxu0 0.0
    %5932 = vmatprep.subr.mxu0 0.0
    %5933 = vmatpush1.msra.mxu0 0.0
    %5934 = vmatprep.subr.mxu0 0.0
    %5935 = vmatpush1.msra.mxu0 0.0
    %5936 = vmatprep.subr.mxu0 0.0
    %5937 = vmatpush1.msra.mxu0 0.0
    %5938 = vmatprep.subr.mxu0 0.0
    %5939 = vmatpush1.msra.mxu0 0.0
    %5940 = vmatprep.subr.mxu0 0.0
    %5941 = vmatpush1.msra.mxu0 0.0
    %5942 = vmatprep.subr.mxu0 0.0
    %5943 = vmatpush1.msra.mxu0 0.0
    %5944 = vmatprep.subr.mxu0 0.0
    %5945 = vmatpush1.msra.mxu0 0.0
    %5946 = vmatprep.subr.mxu0 0.0
    %5947 = vmatpush1.msra.mxu0 0.0
    %5948 = vmatprep.subr.mxu0 0.0
    %5949 = vmatpush1.msra.mxu0 0.0
    %5950 = vmatprep.subr.mxu0 0.0
    %5951 = vmatpush1.msra.mxu0 0.0
    %5952 = vmatprep.subr.mxu0 0.0
    %5953 = vmatpush1.msra.mxu0 0.0
    %5954 = vmatprep.subr.mxu0 0.0
    %5955 = vmatpush1.msra.mxu0 0.0
    %5956 = vmatprep.subr.mxu0 0.0
    %5957 = vmatpush1.msra.mxu0 0.0
    %5958 = vmatprep.subr.mxu0 0.0
    %5959 = vmatpush1.msra.mxu0 0.0
    %5960 = vmatprep.subr.mxu0 0.0
    %5961 = vmatpush1.msra.mxu0 0.0
    %5962 = vmatprep.subr.mxu0 0.0
    %5963 = vmatpush1.msra.mxu0 0.0
    %5964 = vmatprep.mubr.f32.mxu0 0.0
    %5965 = vmatmul.mubr.f32.gmra.mrb[0].mxu0 %v5898
    %v5966 = vpop.f32.mrb[0].mxu0
    %v5967 = vadd.f32 0.0, %v5966
    %v5968 = vpop.f32.mrb[0].mxu0
    %5969 = vdwg.mxu0
    %v5971 = vsel %vm769, %v5896, 0
    %5973 = vmatprep.subr.mxu0 0.0
    %5974 = vmatpush1.msra.mxu0 %v5716
    %5975 = vmatprep.subr.mxu0 0.0
    %5976 = vmatpush1.msra.mxu0 0.0
    %5977 = vmatprep.subr.mxu0 0.0
    %5978 = vmatpush1.msra.mxu0 0.0
    %5979 = vmatprep.subr.mxu0 0.0
    %5980 = vmatpush1.msra.mxu0 0.0
    %5981 = vmatprep.subr.mxu0 0.0
    %5982 = vmatpush1.msra.mxu0 0.0
    %5983 = vmatprep.subr.mxu0 0.0
    %5984 = vmatpush1.msra.mxu0 0.0
    %5985 = vmatprep.subr.mxu0 0.0
    %5986 = vmatpush1.msra.mxu0 0.0
    %5987 = vmatprep.subr.mxu0 0.0
    %5988 = vmatpush1.msra.mxu0 0.0
    %5989 = vmatprep.subr.mxu0 0.0
    %5990 = vmatpush1.msra.mxu0 0.0
    %5991 = vmatprep.subr.mxu0 0.0
    %5992 = vmatpush1.msra.mxu0 0.0
    %5993 = vmatprep.subr.mxu0 0.0
    %5994 = vmatpush1.msra.mxu0 0.0
    %5995 = vmatprep.subr.mxu0 0.0
    %5996 = vmatpush1.msra.mxu0 0.0
    %5997 = vmatprep.subr.mxu0 0.0
    %5998 = vmatpush1.msra.mxu0 0.0
    %5999 = vmatprep.subr.mxu0 0.0
    %6000 = vmatpush1.msra.mxu0 0.0
    %6001 = vmatprep.subr.mxu0 0.0
    %6002 = vmatpush1.msra.mxu0 0.0
    %6003 = vmatprep.subr.mxu0 0.0
    %6004 = vmatpush1.msra.mxu0 0.0
    %6005 = vmatprep.subr.mxu0 0.0
    %6006 = vmatpush1.msra.mxu0 0.0
    %6007 = vmatprep.subr.mxu0 0.0
    %6008 = vmatpush1.msra.mxu0 0.0
    %6009 = vmatprep.subr.mxu0 0.0
    %6010 = vmatpush1.msra.mxu0 0.0
    %6011 = vmatprep.subr.mxu0 0.0
    %6012 = vmatpush1.msra.mxu0 0.0
    %6013 = vmatprep.subr.mxu0 0.0
    %6014 = vmatpush1.msra.mxu0 0.0
    %6015 = vmatprep.subr.mxu0 0.0
    %6016 = vmatpush1.msra.mxu0 0.0
    %6017 = vmatprep.subr.mxu0 0.0
    %6018 = vmatpush1.msra.mxu0 0.0
    %6019 = vmatprep.subr.mxu0 0.0
    %6020 = vmatpush1.msra.mxu0 0.0
    %6021 = vmatprep.subr.mxu0 0.0
    %6022 = vmatpush1.msra.mxu0 0.0
    %6023 = vmatprep.subr.mxu0 0.0
    %6024 = vmatpush1.msra.mxu0 0.0
    %6025 = vmatprep.subr.mxu0 0.0
    %6026 = vmatpush1.msra.mxu0 0.0
    %6027 = vmatprep.subr.mxu0 0.0
    %6028 = vmatpush1.msra.mxu0 0.0
    %6029 = vmatprep.subr.mxu0 0.0
    %6030 = vmatpush1.msra.mxu0 0.0
    %6031 = vmatprep.subr.mxu0 0.0
    %6032 = vmatpush1.msra.mxu0 0.0
    %6033 = vmatprep.subr.mxu0 0.0
    %6034 = vmatpush1.msra.mxu0 0.0
    %6035 = vmatprep.subr.mxu0 0.0
    %6036 = vmatpush1.msra.mxu0 0.0
    %6037 = vmatprep.mubr.f32.mxu0 0.0
    %6038 = vmatmul.mubr.f32.gmra.mrb[0].mxu0 %v5971
    %v6039 = vpop.f32.mrb[0].mxu0
    %v6040 = vadd.f32 0.0, %v6039
    %v6041 = vpop.f32.mrb[0].mxu0
    %6042 = vdwg.mxu0
    %s6043 = scalar_lea.vmem %s57, 48
    %v6044 = vld [vmem:[%s6043] sm:$0xff]
    %v6045 = vld [vmem:[%s6043 + $0x8] sm:$0xff]
    %v6047 = vsel %vm600, %v5967, 0
    %v6050 = vsel %vm600, %v6040, 0
    %6052 = vmatprep.subr.mxu0 0.0
    %6053 = vmatpush1.msra.mxu0 %v6044
    %6054 = vmatprep.subr.mxu0 0.0
    %6055 = vmatpush1.msra.mxu0 %v6045
    %6056 = vmatprep.subr.mxu0 0.0
    %6057 = vmatpush1.msra.mxu0 0.0
    %6058 = vmatprep.subr.mxu0 0.0
    %6059 = vmatpush1.msra.mxu0 0.0
    %6060 = vmatprep.subr.mxu0 0.0
    %6061 = vmatpush1.msra.mxu0 0.0
    %6062 = vmatprep.subr.mxu0 0.0
    %6063 = vmatpush1.msra.mxu0 0.0
    %6064 = vmatprep.subr.mxu0 0.0
    %6065 = vmatpush1.msra.mxu0 0.0
    %6066 = vmatprep.subr.mxu0 0.0
    %6067 = vmatpush1.msra.mxu0 0.0
    %6068 = vmatprep.subr.mxu0 0.0
    %6069 = vmatpush1.msra.mxu0 0.0
    %6070 = vmatprep.subr.mxu0 0.0
    %6071 = vmatpush1.msra.mxu0 0.0
    %6072 = vmatprep.subr.mxu0 0.0
    %6073 = vmatpush1.msra.mxu0 0.0
    %6074 = vmatprep.subr.mxu0 0.0
    %6075 = vmatpush1.msra.mxu0 0.0
    %6076 = vmatprep.subr.mxu0 0.0
    %6077 = vmatpush1.msra.mxu0 0.0
    %6078 = vmatprep.subr.mxu0 0.0
    %6079 = vmatpush1.msra.mxu0 0.0
    %6080 = vmatprep.subr.mxu0 0.0
    %6081 = vmatpush1.msra.mxu0 0.0
    %6082 = vmatprep.subr.mxu0 0.0
    %6083 = vmatpush1.msra.mxu0 0.0
    %6084 = vmatprep.subr.mxu0 0.0
    %6085 = vmatpush1.msra.mxu0 0.0
    %6086 = vmatprep.subr.mxu0 0.0
    %6087 = vmatpush1.msra.mxu0 0.0
    %6088 = vmatprep.subr.mxu0 0.0
    %6089 = vmatpush1.msra.mxu0 0.0
    %6090 = vmatprep.subr.mxu0 0.0
    %6091 = vmatpush1.msra.mxu0 0.0
    %6092 = vmatprep.subr.mxu0 0.0
    %6093 = vmatpush1.msra.mxu0 0.0
    %6094 = vmatprep.subr.mxu0 0.0
    %6095 = vmatpush1.msra.mxu0 0.0
    %6096 = vmatprep.subr.mxu0 0.0
    %6097 = vmatpush1.msra.mxu0 0.0
    %6098 = vmatprep.subr.mxu0 0.0
    %6099 = vmatpush1.msra.mxu0 0.0
    %6100 = vmatprep.subr.mxu0 0.0
    %6101 = vmatpush1.msra.mxu0 0.0
    %6102 = vmatprep.subr.mxu0 0.0
    %6103 = vmatpush1.msra.mxu0 0.0
    %6104 = vmatprep.subr.mxu0 0.0
    %6105 = vmatpush1.msra.mxu0 0.0
    %6106 = vmatprep.subr.mxu0 0.0
    %6107 = vmatpush1.msra.mxu0 0.0
    %6108 = vmatprep.subr.mxu0 0.0
    %6109 = vmatpush1.msra.mxu0 0.0
    %6110 = vmatprep.subr.mxu0 0.0
    %6111 = vmatpush1.msra.mxu0 0.0
    %6112 = vmatprep.subr.mxu0 0.0
    %6113 = vmatpush1.msra.mxu0 0.0
    %6114 = vmatprep.subr.mxu0 0.0
    %6115 = vmatpush1.msra.mxu0 0.0
    %6116 = vmatprep.mubr.f32.mxu0 0.0
    %6117 = vmatmul.mubr.f32.gmra.mrb[0].mxu0 %v6047
    %v6118 = vpop.f32.mrb[0].mxu0
    %v6119 = vadd.f32 0.0, %v6118
    %v6120 = vpop.f32.mrb[0].mxu0
    %6121 = vmatprep.mubr.f32.mxu0 0.0
    %6122 = vmatmul.mubr.f32.gmra.mrb[0].mxu0 %v6050
    %v6123 = vpop.f32.mrb[0].mxu0
    %v6124 = vadd.f32 0.0, %v6123
    %v6125 = vpop.f32.mrb[0].mxu0
    %6126 = vdwg.mxu0
    %v6127 = vadd.f32 %v5441, %v6119
    %v6128 = vadd.f32 %v5442, %v6124
    %v6129 = vld [vmem:[%s59] sm:$0x1]
    %v6131 = vlaneseq
    %v6132 = vshrl.u32 %v6131, 7
    %v6133 = vsub.s32 0, %v6132
    %v6134 = vrot.slane %v6129, %v6133
    %v6136 = vadd.f32 %v6127, %v6134
    %v6137 = vadd.f32 %v6128, %v6134
    %v6138 = vadd.f32 %v6136, %v3388
    %v6139 = vadd.f32 %v6137, %v3389
    %v6140 = vld [vmem:[%s61] sm:$0x1]
    %v6141 = vld [vmem:[%s63] sm:$0x1]
    %v6142 = vsel %vm278, %v6138, 0.0
    %6143 = vadd.xlane.f32.xlu0 %v6142
    %v6144 = vpop.xlane.xlu0 %6143
    %v6145 = vsel %vm278, %v6139, 0.0
    %6146 = vadd.xlane.f32.xlu0 %v6145
    %v6147 = vpop.xlane.xlu0 %6146
    %v6148 = vmul.f32 %v6144, %v285
    %v6149 = vmul.f32 %v6147, %v285
    %v6150 = vsub.f32 %v6138, %v6148
    %v6151 = vsub.f32 %v6139, %v6149
    %v6152 = vmul.f32 %v6150, %v6150
    %v6153 = vmul.f32 %v6151, %v6151
    %v6154 = vsel %vm278, %v6152, 0.0
    %6155 = vadd.xlane.f32.xlu0 %v6154
    %v6156 = vpop.xlane.xlu0 %6155
    %v6157 = vsel %vm278, %v6153, 0.0
    %6158 = vadd.xlane.f32.xlu0 %v6157
    %v6159 = vpop.xlane.xlu0 %6158
    %v6160 = vmul.f32 %v6156, %v285
    %v6161 = vmul.f32 %v6159, %v285
    %v6162 = vadd.f32 %v6160, 1e-12
    %v6163 = vadd.f32 %v6161, 1e-12
    %v6164 = vrsqrt.pop %v6162
    %v6165 = vrsqrt.pop %v6163
    %v6166 = vmul.f32 %v6150, %v6164
    %v6167 = vmul.f32 %v6151, %v6165
    %v6169 = vlaneseq
    %v6170 = vshrl.u32 %v6169, 7
    %v6171 = vsub.s32 0, %v6170
    %v6172 = vrot.slane %v6140, %v6171
    %v6174 = vmul.f32 %v6166, %v6172
    %v6175 = vmul.f32 %v6167, %v6172
    %v6177 = vlaneseq
    %v6178 = vshrl.u32 %v6177, 7
    %v6179 = vsub.s32 0, %v6178
    %v6180 = vrot.slane %v6141, %v6179
    %v6182 = vadd.f32 %v6174, %v6180
    %v6183 = vadd.f32 %v6175, %v6180
    %v6184 = vld [vmem:[%s65] sm:$0xff]
    %v6185 = vld [vmem:[%s65 + $0x8] sm:$0xff]
    %v6186 = vld [vmem:[%s65 + $0x10] sm:$0xff]
    %v6187 = vld [vmem:[%s65 + $0x18] sm:$0xff]
    %v6188 = vld [vmem:[%s65 + $0x20] sm:$0xff]
    %v6189 = vld [vmem:[%s65 + $0x28] sm:$0xff]
    %v6190 = vld [vmem:[%s65 + $0x30] sm:$0xff]
    %v6191 = vld [vmem:[%s65 + $0x38] sm:$0xff]
    %v6192 = vld [vmem:[%s67] sm:$0x1]
    %v6194 = vlaneseq
    %v6195 = vshrl.u32 %v6194, 7
    %v6196 = vsub.s32 0, %v6195
    %v6197 = vrot.slane %v6192, %v6196
    %v6200 = vsel %vm278, %v6182, 0
    %v6203 = vsel %vm278, %v6183, 0
    %6205 = vmatprep.subr.mxu0 0.0
    %6206 = vmatpush1.msra.mxu0 %v6184
    %6207 = vmatprep.subr.mxu0 0.0
    %6208 = vmatpush1.msra.mxu0 %v6185
    %6209 = vmatprep.subr.mxu0 0.0
    %6210 = vmatpush1.msra.mxu0 %v6186
    %6211 = vmatprep.subr.mxu0 0.0
    %6212 = vmatpush1.msra.mxu0 %v6187
    %6213 = vmatprep.subr.mxu0 0.0
    %6214 = vmatpush1.msra.mxu0 %v6188
    %6215 = vmatprep.subr.mxu0 0.0
    %6216 = vmatpush1.msra.mxu0 %v6189
    %6217 = vmatprep.subr.mxu0 0.0
    %6218 = vmatpush1.msra.mxu0 %v6190
    %6219 = vmatprep.subr.mxu0 0.0
    %6220 = vmatpush1.msra.mxu0 %v6191
    %6221 = vmatprep.subr.mxu0 0.0
    %6222 = vmatpush1.msra.mxu0 0.0
    %6223 = vmatprep.subr.mxu0 0.0
    %6224 = vmatpush1.msra.mxu0 0.0
    %6225 = vmatprep.subr.mxu0 0.0
    %6226 = vmatpush1.msra.mxu0 0.0
    %6227 = vmatprep.subr.mxu0 0.0
    %6228 = vmatpush1.msra.mxu0 0.0
    %6229 = vmatprep.subr.mxu0 0.0
    %6230 = vmatpush1.msra.mxu0 0.0
    %6231 = vmatprep.subr.mxu0 0.0
    %6232 = vmatpush1.msra.mxu0 0.0
    %6233 = vmatprep.subr.mxu0 0.0
    %6234 = vmatpush1.msra.mxu0 0.0
    %6235 = vmatprep.subr.mxu0 0.0
    %6236 = vmatpush1.msra.mxu0 0.0
    %6237 = vmatprep.subr.mxu0 0.0
    %6238 = vmatpush1.msra.mxu0 0.0
    %6239 = vmatprep.subr.mxu0 0.0
    %6240 = vmatpush1.msra.mxu0 0.0
    %6241 = vmatprep.subr.mxu0 0.0
    %6242 = vmatpush1.msra.mxu0 0.0
    %6243 = vmatprep.subr.mxu0 0.0
    %6244 = vmatpush1.msra.mxu0 0.0
    %6245 = vmatprep.subr.mxu0 0.0
    %6246 = vmatpush1.msra.mxu0 0.0
    %6247 = vmatprep.subr.mxu0 0.0
    %6248 = vmatpush1.msra.mxu0 0.0
    %6249 = vmatprep.subr.mxu0 0.0
    %6250 = vmatpush1.msra.mxu0 0.0
    %6251 = vmatprep.subr.mxu0 0.0
    %6252 = vmatpush1.msra.mxu0 0.0
    %6253 = vmatprep.subr.mxu0 0.0
    %6254 = vmatpush1.msra.mxu0 0.0
    %6255 = vmatprep.subr.mxu0 0.0
    %6256 = vmatpush1.msra.mxu0 0.0
    %6257 = vmatprep.subr.mxu0 0.0
    %6258 = vmatpush1.msra.mxu0 0.0
    %6259 = vmatprep.subr.mxu0 0.0
    %6260 = vmatpush1.msra.mxu0 0.0
    %6261 = vmatprep.subr.mxu0 0.0
    %6262 = vmatpush1.msra.mxu0 0.0
    %6263 = vmatprep.subr.mxu0 0.0
    %6264 = vmatpush1.msra.mxu0 0.0
    %6265 = vmatprep.subr.mxu0 0.0
    %6266 = vmatpush1.msra.mxu0 0.0
    %6267 = vmatprep.subr.mxu0 0.0
    %6268 = vmatpush1.msra.mxu0 0.0
    %6269 = vmatprep.mubr.f32.mxu0 0.0
    %6270 = vmatmul.mubr.f32.gmra.mrb[0].mxu0 %v6200
    %v6271 = vpop.f32.mrb[0].mxu0
    %v6272 = vadd.f32 %v6197, %v6271
    %v6273 = vpop.f32.mrb[0].mxu0
    %6274 = vmatprep.mubr.f32.mxu0 0.0
    %6275 = vmatmul.mubr.f32.gmra.mrb[0].mxu0 %v6203
    %v6276 = vpop.f32.mrb[0].mxu0
    %v6277 = vadd.f32 %v6197, %v6276
    %v6278 = vpop.f32.mrb[0].mxu0
    %6279 = vdwg.mxu0
    %v6280 = vmul.f32 %v6272, %v6272
    %v6281 = vmul.f32 %v6277, %v6277
    %v6282 = vmul.f32 %v6272, %v6280
    %v6283 = vmul.f32 %v6277, %v6281
    %v6284 = vmul.f32 %v6282, 0.044715
    %v6285 = vmul.f32 %v6283, 0.044715
    %v6286 = vadd.f32 %v6272, %v6284
    %v6287 = vadd.f32 %v6277, %v6285
    %v6288 = vmul.f32 %v6286, 0.7978846
    %v6289 = vmul.f32 %v6287, 0.7978846
    %v6290 = vtanh.pop %v6288
    %v6291 = vtanh.pop %v6289
    %v6292 = vadd.f32 %v6290, 1.0
    %v6293 = vadd.f32 %v6291, 1.0
    %v6294 = vmul.f32 %v6292, 0.5
    %v6295 = vmul.f32 %v6293, 0.5
    %v6296 = vmul.f32 %v6272, %v6294
    %v6297 = vmul.f32 %v6277, %v6295
    %v6298 = vld [vmem:[%s69] sm:$0xff]
    %v6299 = vld [vmem:[%s69 + $0x8] sm:$0xff]
    %v6300 = vld [vmem:[%s69 + $0x10] sm:$0xff]
    %v6301 = vld [vmem:[%s69 + $0x18] sm:$0xff]
    %v6302 = vld [vmem:[%s69 + $0x20] sm:$0xff]
    %v6303 = vld [vmem:[%s69 + $0x28] sm:$0xff]
    %v6304 = vld [vmem:[%s69 + $0x30] sm:$0xff]
    %v6305 = vld [vmem:[%s69 + $0x38] sm:$0xff]
    %v6306 = vld [vmem:[%s69 + $0x40] sm:$0xff]
    %v6307 = vld [vmem:[%s69 + $0x48] sm:$0xff]
    %v6308 = vld [vmem:[%s69 + $0x50] sm:$0xff]
    %v6309 = vld [vmem:[%s69 + $0x58] sm:$0xff]
    %v6310 = vld [vmem:[%s69 + $0x60] sm:$0xff]
    %v6311 = vld [vmem:[%s69 + $0x68] sm:$0xff]
    %v6312 = vld [vmem:[%s69 + $0x70] sm:$0xff]
    %v6313 = vld [vmem:[%s69 + $0x78] sm:$0xff]
    %v6314 = vld [vmem:[%s71] sm:$0x1]
    %v6316 = vlaneseq
    %v6317 = vshrl.u32 %v6316, 7
    %v6318 = vsub.s32 0, %v6317
    %v6319 = vrot.slane %v6314, %v6318
    %6321 = vmatprep.subr.mxu0 0.0
    %6322 = vmatpush1.msra.mxu0 %v6298
    %6323 = vmatprep.subr.mxu0 0.0
    %6324 = vmatpush1.msra.mxu0 %v6299
    %6325 = vmatprep.subr.mxu0 0.0
    %6326 = vmatpush1.msra.mxu0 %v6300
    %6327 = vmatprep.subr.mxu0 0.0
    %6328 = vmatpush1.msra.mxu0 %v6301
    %6329 = vmatprep.subr.mxu0 0.0
    %6330 = vmatpush1.msra.mxu0 %v6302
    %6331 = vmatprep.subr.mxu0 0.0
    %6332 = vmatpush1.msra.mxu0 %v6303
    %6333 = vmatprep.subr.mxu0 0.0
    %6334 = vmatpush1.msra.mxu0 %v6304
    %6335 = vmatprep.subr.mxu0 0.0
    %6336 = vmatpush1.msra.mxu0 %v6305
    %6337 = vmatprep.subr.mxu0 0.0
    %6338 = vmatpush1.msra.mxu0 %v6306
    %6339 = vmatprep.subr.mxu0 0.0
    %6340 = vmatpush1.msra.mxu0 %v6307
    %6341 = vmatprep.subr.mxu0 0.0
    %6342 = vmatpush1.msra.mxu0 %v6308
    %6343 = vmatprep.subr.mxu0 0.0
    %6344 = vmatpush1.msra.mxu0 %v6309
    %6345 = vmatprep.subr.mxu0 0.0
    %6346 = vmatpush1.msra.mxu0 %v6310
    %6347 = vmatprep.subr.mxu0 0.0
    %6348 = vmatpush1.msra.mxu0 %v6311
    %6349 = vmatprep.subr.mxu0 0.0
    %6350 = vmatpush1.msra.mxu0 %v6312
    %6351 = vmatprep.subr.mxu0 0.0
    %6352 = vmatpush1.msra.mxu0 %v6313
    %6353 = vmatprep.subr.mxu0 0.0
    %6354 = vmatpush1.msra.mxu0 0.0
    %6355 = vmatprep.subr.mxu0 0.0
    %6356 = vmatpush1.msra.mxu0 0.0
    %6357 = vmatprep.subr.mxu0 0.0
    %6358 = vmatpush1.msra.mxu0 0.0
    %6359 = vmatprep.subr.mxu0 0.0
    %6360 = vmatpush1.msra.mxu0 0.0
    %6361 = vmatprep.subr.mxu0 0.0
    %6362 = vmatpush1.msra.mxu0 0.0
    %6363 = vmatprep.subr.mxu0 0.0
    %6364 = vmatpush1.msra.mxu0 0.0
    %6365 = vmatprep.subr.mxu0 0.0
    %6366 = vmatpush1.msra.mxu0 0.0
    %6367 = vmatprep.subr.mxu0 0.0
    %6368 = vmatpush1.msra.mxu0 0.0
    %6369 = vmatprep.subr.mxu0 0.0
    %6370 = vmatpush1.msra.mxu0 0.0
    %6371 = vmatprep.subr.mxu0 0.0
    %6372 = vmatpush1.msra.mxu0 0.0
    %6373 = vmatprep.subr.mxu0 0.0
    %6374 = vmatpush1.msra.mxu0 0.0
    %6375 = vmatprep.subr.mxu0 0.0
    %6376 = vmatpush1.msra.mxu0 0.0
    %6377 = vmatprep.subr.mxu0 0.0
    %6378 = vmatpush1.msra.mxu0 0.0
    %6379 = vmatprep.subr.mxu0 0.0
    %6380 = vmatpush1.msra.mxu0 0.0
    %6381 = vmatprep.subr.mxu0 0.0
    %6382 = vmatpush1.msra.mxu0 0.0
    %6383 = vmatprep.subr.mxu0 0.0
    %6384 = vmatpush1.msra.mxu0 0.0
    %6385 = vmatprep.mubr.f32.mxu0 0.0
    %6386 = vmatmul.mubr.f32.gmra.mrb[0].mxu0 %v6296
    %v6387 = vpop.f32.mrb[0].mxu0
    %v6388 = vadd.f32 %v6319, %v6387
    %v6389 = vpop.f32.mrb[0].mxu0
    %6390 = vmatprep.mubr.f32.mxu0 0.0
    %6391 = vmatmul.mubr.f32.gmra.mrb[0].mxu0 %v6297
    %v6392 = vpop.f32.mrb[0].mxu0
    %v6393 = vadd.f32 %v6319, %v6392
    %v6394 = vpop.f32.mrb[0].mxu0
    %6395 = vdwg.mxu0
    %v6396 = vadd.f32 %v6388, %v6182
    %v6397 = vadd.f32 %v6393, %v6183
    %v6398 = vld [vmem:[%s73] sm:$0x1]
    %v6399 = vld [vmem:[%s75] sm:$0x1]
    %v6400 = vsel %vm278, %v6396, 0.0
    %6401 = vadd.xlane.f32.xlu0 %v6400
    %v6402 = vpop.xlane.xlu0 %6401
    %v6403 = vsel %vm278, %v6397, 0.0
    %6404 = vadd.xlane.f32.xlu0 %v6403
    %v6405 = vpop.xlane.xlu0 %6404
    %v6406 = vmul.f32 %v6402, %v285
    %v6407 = vmul.f32 %v6405, %v285
    %v6408 = vsub.f32 %v6396, %v6406
    %v6409 = vsub.f32 %v6397, %v6407
    %v6410 = vmul.f32 %v6408, %v6408
    %v6411 = vmul.f32 %v6409, %v6409
    %v6412 = vsel %vm278, %v6410, 0.0
    %6413 = vadd.xlane.f32.xlu0 %v6412
    %v6414 = vpop.xlane.xlu0 %6413
    %v6415 = vsel %vm278, %v6411, 0.0
    %6416 = vadd.xlane.f32.xlu0 %v6415
    %v6417 = vpop.xlane.xlu0 %6416
    %v6418 = vmul.f32 %v6414, %v285
    %v6419 = vmul.f32 %v6417, %v285
    %v6420 = vadd.f32 %v6418, 1e-12
    %v6421 = vadd.f32 %v6419, 1e-12
    %v6422 = vrsqrt.pop %v6420
    %v6423 = vrsqrt.pop %v6421
    %v6424 = vmul.f32 %v6408, %v6422
    %v6425 = vmul.f32 %v6409, %v6423
    %v6427 = vlaneseq
    %v6428 = vshrl.u32 %v6427, 7
    %v6429 = vsub.s32 0, %v6428
    %v6430 = vrot.slane %v6398, %v6429
    %v6432 = vmul.f32 %v6424, %v6430
    %v6433 = vmul.f32 %v6425, %v6430
    %v6435 = vlaneseq
    %v6436 = vshrl.u32 %v6435, 7
    %v6437 = vsub.s32 0, %v6436
    %v6438 = vrot.slane %v6399, %v6437
    %v6440 = vadd.f32 %v6432, %v6438
    %v6441 = vadd.f32 %v6433, %v6438
    %v6442 = vsel %vm278, %v6440, 0.0
    %v6443 = vrot.slane %v6442, 4
    %v6444 = vadd.f32 %v6442, %v6443
    %v6445 = vrot.slane %v6444, 2
    %v6446 = vadd.f32 %v6444, %v6445
    %v6447 = vrot.slane %v6446, 1
    %v6448 = vadd.f32 %v6446, %v6447
    %v6449 = vsel %vm278, %v6441, 0.0
    %v6450 = vrot.slane %v6449, 4
    %v6451 = vadd.f32 %v6449, %v6450
    %v6452 = vrot.slane %v6451, 2
    %v6453 = vadd.f32 %v6451, %v6452
    %v6454 = vrot.slane %v6453, 1
    %v6455 = vadd.f32 %v6453, %v6454
    %v6456 = vrcp.pop 8.0
    %v6457 = vmul.f32 %v6448, %v6456
    %v6458 = vmul.f32 %v6455, %v6456
    %v6459 = vld [vmem:[%s77] sm:$0xff]
    %v6460 = vld [vmem:[%s77 + $0x8] sm:$0xff]
    %v6461 = vld [vmem:[%s77 + $0x10] sm:$0xff]
    %v6462 = vld [vmem:[%s77 + $0x18] sm:$0xff]
    %v6463 = vld [vmem:[%s77 + $0x20] sm:$0xff]
    %v6464 = vld [vmem:[%s77 + $0x28] sm:$0xff]
    %v6465 = vld [vmem:[%s77 + $0x30] sm:$0xff]
    %v6466 = vld [vmem:[%s77 + $0x38] sm:$0xff]
    %v6467 = vld [vmem:[%s79] sm:$0x1]
    %v6469 = vlaneseq
    %v6470 = vshrl.u32 %v6469, 7
    %v6471 = vsub.s32 0, %v6470
    %v6472 = vrot.slane %v6467, %v6471
    %vm6476 = vcmask 1041409
    %v6477 = vsel %vm6476, %v6458, %v6457
    %v6478 = vsel %vm278, %v6477, 0
    %6480 = vmatprep.subr.mxu0 0.0
    %6481 = vmatpush1.msra.mxu0 %v6459
    %6482 = vmatprep.subr.mxu0 0.0
    %6483 = vmatpush1.msra.mxu0 %v6460
    %6484 = vmatprep.subr.mxu0 0.0
    %6485 = vmatpush1.msra.mxu0 %v6461
    %6486 = vmatprep.subr.mxu0 0.0
    %6487 = vmatpush1.msra.mxu0 %v6462
    %6488 = vmatprep.subr.mxu0 0.0
    %6489 = vmatpush1.msra.mxu0 %v6463
    %6490 = vmatprep.subr.mxu0 0.0
    %6491 = vmatpush1.msra.mxu0 %v6464
    %6492 = vmatprep.subr.mxu0 0.0
    %6493 = vmatpush1.msra.mxu0 %v6465
    %6494 = vmatprep.subr.mxu0 0.0
    %6495 = vmatpush1.msra.mxu0 %v6466
    %6496 = vmatprep.subr.mxu0 0.0
    %6497 = vmatpush1.msra.mxu0 0.0
    %6498 = vmatprep.subr.mxu0 0.0
    %6499 = vmatpush1.msra.mxu0 0.0
    %6500 = vmatprep.subr.mxu0 0.0
    %6501 = vmatpush1.msra.mxu0 0.0
    %6502 = vmatprep.subr.mxu0 0.0
    %6503 = vmatpush1.msra.mxu0 0.0
    %6504 = vmatprep.subr.mxu0 0.0
    %6505 = vmatpush1.msra.mxu0 0.0
    %6506 = vmatprep.subr.mxu0 0.0
    %6507 = vmatpush1.msra.mxu0 0.0
    %6508 = vmatprep.subr.mxu0 0.0
    %6509 = vmatpush1.msra.mxu0 0.0
    %6510 = vmatprep.subr.mxu0 0.0
    %6511 = vmatpush1.msra.mxu0 0.0
    %6512 = vmatprep.subr.mxu0 0.0
    %6513 = vmatpush1.msra.mxu0 0.0
    %6514 = vmatprep.subr.mxu0 0.0
    %6515 = vmatpush1.msra.mxu0 0.0
    %6516 = vmatprep.subr.mxu0 0.0
    %6517 = vmatpush1.msra.mxu0 0.0
    %6518 = vmatprep.subr.mxu0 0.0
    %6519 = vmatpush1.msra.mxu0 0.0
    %6520 = vmatprep.subr.mxu0 0.0
    %6521 = vmatpush1.msra.mxu0 0.0
    %6522 = vmatprep.subr.mxu0 0.0
    %6523 = vmatpush1.msra.mxu0 0.0
    %6524 = vmatprep.subr.mxu0 0.0
    %6525 = vmatpush1.msra.mxu0 0.0
    %6526 = vmatprep.subr.mxu0 0.0
    %6527 = vmatpush1.msra.mxu0 0.0
    %6528 = vmatprep.subr.mxu0 0.0
    %6529 = vmatpush1.msra.mxu0 0.0
    %6530 = vmatprep.subr.mxu0 0.0
    %6531 = vmatpush1.msra.mxu0 0.0
    %6532 = vmatprep.subr.mxu0 0.0
    %6533 = vmatpush1.msra.mxu0 0.0
    %6534 = vmatprep.subr.mxu0 0.0
    %6535 = vmatpush1.msra.mxu0 0.0
    %6536 = vmatprep.subr.mxu0 0.0
    %6537 = vmatpush1.msra.mxu0 0.0
    %6538 = vmatprep.subr.mxu0 0.0
    %6539 = vmatpush1.msra.mxu0 0.0
    %6540 = vmatprep.subr.mxu0 0.0
    %6541 = vmatpush1.msra.mxu0 0.0
    %6542 = vmatprep.subr.mxu0 0.0
    %6543 = vmatpush1.msra.mxu0 0.0
    %6544 = vmatprep.mubr.f32.mxu0 0.0
    %6545 = vmatmul.mubr.f32.gmra.mrb[0].mxu0 %v6478
    %v6546 = vpop.f32.mrb[0].mxu0
    %v6547 = vadd.f32 %v6472, %v6546
    %v6548 = vpop.f32.mrb[0].mxu0
    %6549 = vdwg.mxu0
    %v6550 = vmax.f32 %v6547, 0.0
    %6551 = vst [vmem:[#allocation2] sm:$0x3] %v6550
    // Predicated region
    $region162: #{distilbert_classifier_forward.1} parent=1 // pred_check
      _
    $region163: #{distilbert_classifier_forward.1} parent=1 // pred_check_branch
      %6553 = sbr.rel (0) target = $region165
    $region164: #{distilbert_classifier_forward.1} parent=1 // pred_region
      %s6555 = ssub.s32 32, 32
      %6556 = vsyncadd [#allocation3], %s6555
      %s6558 = sshll.u32 [#allocation2], 4
      %s6559 = int_to_ptr.vmem [resolvable:$true] %s6558
      %6561 = dma.vmem_to_hbm [thread:$0]  %s6559, 32, %s81, [#allocation3]
    $region165: #{distilbert_classifier_forward.1} parent=1 // pred_fallthru
      _
    // Predicated region
    $region166: #{distilbert_classifier_forward.1} parent=1 // pred_check
      _
    $region167: #{distilbert_classifier_forward.1} parent=1 // pred_check_branch
      %6563 = sbr.rel (0) target = $region169
    $region168: #{distilbert_classifier_forward.1} parent=1 // pred_region
      %6564 = dma.done [#allocation3], 32
    $region169: #{distilbert_classifier_forward.1} parent=1 // pred_fallthru
      _
    %6565 = vsyncpa [#allocation3], 1

</llo_original>
